<compile_context>
chip_gen: v7x
topology: tpu7x:2x2x1
jax: 0.10.0
libtpu: 0.0.40
codegen_flags: <defaults>
</compile_context>

<pallas_src>
import functools

import jax
import jax.numpy as jnp
import numpy as np
from jax.experimental import pallas as pl
from jax.experimental.pallas import tpu as pltpu

BN_EPS = 1e-5


def _round_up(x, m):
    return (x + m - 1) // m * m


# ---------------------------------------------------------------------------
# The fused kernel: conv3x3+BN+ReLU (template & search, both branches) ->
# depthwise xcorr -> 1x1 conv (+folded BN) + ReLU -> 1x1 conv + bias.  One batch / step.
# ---------------------------------------------------------------------------
def _rpn_fused_kernel(dims, zs_ref, xs_ref, wk_ref, ws_ref, ksc_ref, kbi_ref,
                      ssc_ref, sbi_ref, w1_ref, hbi_ref, w2_ref, b2_ref, o_ref):
    HK, WK, WKP, HS, WS, WSP = dims
    HK2, WK2 = HK - 2, WK - 2            # template feature (valid 3x3 conv) spatial dims
    HS2, WS2 = HS - 2, WS - 2            # search feature spatial dims
    HO, WO = HS2 - HK2 + 1, WS2 - WK2 + 1
    C2 = wk_ref.shape[-1]                # 2 * hidden (cls channels then loc channels)

    def conv3_bn_relu(x_ref, w_ref, scale, bias, Wp, Ho):
        # x_ref: (1, 3, H*Wp, Cin) bf16 pre-shifted copies; w_ref: (9, Cin, C2) bf16.
        acc = None
        for q in range(3):
            xq = x_ref[0, q]                             # (H*Wp, Cin)  leading-dim index
            for p in range(3):
                patch = xq[p * Wp:(p + Ho) * Wp, :]      # aligned slice (Wp % 16 == 0)
                t = jnp.dot(patch, w_ref[3 * p + q],     # per-tap weight load (no big value)
                            preferred_element_type=jnp.float32)   # bf16 MXU, f32 accumulate
                acc = t if acc is None else acc + t
        return jnp.maximum(acc * scale + bias, 0.0)      # folded BN (eval) + ReLU, f32

    kf = conv3_bn_relu(zs_ref, wk_ref, ksc_ref[...], kbi_ref[...], WKP, HK2)  # (HK2*WKP, C2)
    sf = conv3_bn_relu(xs_ref, ws_ref, ssc_ref[...], sbi_ref[...], WSP, HS2)  # (HS2*WSP, C2)

    # layout-preserving reshapes (WKP, WSP multiples of 16 >= 8)
    kf3 = kf.reshape(HK2, WKP, C2)
    sf3 = sf.reshape(HS2, WSP, C2)

    # depthwise cross-correlation: out[i,j,c] = sum_{p,q} sf[i+p, j+q, c] * kf[p, q, c]
    feat = None
    for q in range(WK2):
        sq = sf3[:, q:q + WO, :]                         # one W slice per q (5 total, not 25)
        for p in range(HK2):
            t = sq[p:p + HO] * kf3[p:p + 1, q:q + 1, :]  # leading-axis slice + VPU MAC (f32)
            feat = t if feat is None else feat + t       # (HO, WO, C2)

    # head: 1x1 conv (block-diag, BN scale folded) + bias + ReLU + 1x1 conv (+bias)
    f2 = feat.reshape(HO * WO, C2)
    h = jnp.dot(f2, w1_ref[...], preferred_element_type=jnp.float32)
    h = jnp.maximum(h + hbi_ref[...], 0.0)
    o_ref[0] = jnp.dot(h, w2_ref[...], preferred_element_type=jnp.float32) + b2_ref[...]


# ---------------------------------------------------------------------------
# Wrapper-side layout plumbing (pure XLA, cheap): NCHW->NHWC, shifted copies,
# weight fusion (cls||loc), BN folding, lane padding of the head output.
# ---------------------------------------------------------------------------
def _shifted_flat(x_nhwc, mult=16):
    # (N, H, W, Cin) -> (N, 3, H*Wp, Cin) bf16, copy q holds x[..., j+q, :] (zero padded).
    N, H, W, Cin = x_nhwc.shape
    Wp = _round_up(W, mult)
    xpad = jnp.pad(x_nhwc, ((0, 0), (0, 0), (0, Wp + 2 - W), (0, 0)))
    shifted = jnp.stack([xpad[:, :, q:q + Wp, :] for q in range(3)], axis=1)
    return shifted.reshape(N, 3, H * Wp, Cin).astype(jnp.bfloat16), Wp


def _bn_fold(gamma, beta, mean, var):
    s = gamma / jnp.sqrt(var + BN_EPS)
    return s, beta - mean * s


def _bn_fold_cat(bn_cls, bn_loc):
    s1, b1 = _bn_fold(*bn_cls)
    s2, b2 = _bn_fold(*bn_loc)
    return (jnp.concatenate([s1, s2]).reshape(1, -1).astype(jnp.float32),
            jnp.concatenate([b1, b2]).reshape(1, -1).astype(jnp.float32))


def _conv_w_fused(w_cls, w_loc):
    # OIHW (hidden, Cin, 3, 3) x2  ->  (9, Cin, 2*hidden) bf16 (tap index = 3*p + q)
    def prep(w):
        return jnp.transpose(w, (2, 3, 1, 0)).reshape(9, w.shape[1], w.shape[0])
    return jnp.concatenate([prep(w_cls), prep(w_loc)], axis=-1).astype(jnp.bfloat16)


def _head_w_fused(p_cls, p_loc, hidden):
    h = hidden
    w1c = p_cls["h1_w"][:, :, 0, 0].T        # (in, out)
    w1l = p_loc["h1_w"][:, :, 0, 0].T
    w1 = jnp.zeros((2 * h, 2 * h), jnp.float32)
    w1 = w1.at[:h, :h].set(w1c).at[h:, h:].set(w1l)          # block-diagonal

    oc = p_cls["h2_w"].shape[0]
    ol = p_loc["h2_w"].shape[0]
    cop = _round_up(oc + ol, 128)                            # lane-dense output
    w2 = jnp.zeros((2 * h, cop), jnp.float32)
    w2 = w2.at[:h, :oc].set(p_cls["h2_w"][:, :, 0, 0].T)
    w2 = w2.at[h:, oc:oc + ol].set(p_loc["h2_w"][:, :, 0, 0].T)
    b2 = jnp.zeros((1, cop), jnp.float32)
    b2 = b2.at[0, :oc].set(p_cls["h2_b"]).at[0, oc:oc + ol].set(p_loc["h2_b"])
    return w1, w2, b2, oc, ol


@jax.jit
def depthwise_rpn_forward(z_f, x_f, params):
    p_cls, p_loc = params["cls"], params["loc"]
    hidden = p_cls["ck_w"].shape[0]
    N, CIN, HK, WK = z_f.shape
    _, _, HS, WS = x_f.shape

    # cast to bf16 before the shifted-copy build (halves intermediate HBM footprint)
    z_nhwc = jnp.transpose(z_f, (0, 2, 3, 1)).astype(jnp.bfloat16)
    x_nhwc = jnp.transpose(x_f, (0, 2, 3, 1)).astype(jnp.bfloat16)
    zs, WKP = _shifted_flat(z_nhwc)
    xs, WSP = _shifted_flat(x_nhwc)

    wk = _conv_w_fused(p_cls["ck_w"], p_loc["ck_w"])
    ws = _conv_w_fused(p_cls["cs_w"], p_loc["cs_w"])
    ksc, kbi = _bn_fold_cat(p_cls["ck_bn"], p_loc["ck_bn"])
    ssc, sbi = _bn_fold_cat(p_cls["cs_bn"], p_loc["cs_bn"])
    hsc, hbi = _bn_fold_cat(p_cls["h1_bn"], p_loc["h1_bn"])
    w1, w2, b2, oc, ol = _head_w_fused(p_cls, p_loc, hidden)
    w1 = w1 * hsc                                           # fold head-BN scale (exact, f32)

    C2 = 2 * hidden
    COP = w2.shape[-1]
    HO, WO = HS - HK + 1, WS - WK + 1

    kernel = functools.partial(_rpn_fused_kernel, (HK, WK, WKP, HS, WS, WSP))
    out = pl.pallas_call(
        kernel,
        out_shape=jax.ShapeDtypeStruct((N, HO * WO, COP), jnp.float32),
        grid=(N,),
        in_specs=[
            pl.BlockSpec((1, 3, HK * WKP, CIN), lambda n: (n, 0, 0, 0)),   # zs
            pl.BlockSpec((1, 3, HS * WSP, CIN), lambda n: (n, 0, 0, 0)),   # xs
            pl.BlockSpec((9, CIN, C2), lambda n: (0, 0, 0)),               # wk
            pl.BlockSpec((9, CIN, C2), lambda n: (0, 0, 0)),               # ws
            pl.BlockSpec((1, C2), lambda n: (0, 0)),                       # ksc
            pl.BlockSpec((1, C2), lambda n: (0, 0)),                       # kbi
            pl.BlockSpec((1, C2), lambda n: (0, 0)),                       # ssc
            pl.BlockSpec((1, C2), lambda n: (0, 0)),                       # sbi
            pl.BlockSpec((C2, C2), lambda n: (0, 0)),                      # w1 (scale folded)
            pl.BlockSpec((1, C2), lambda n: (0, 0)),                       # hbi
            pl.BlockSpec((C2, COP), lambda n: (0, 0)),                     # w2
            pl.BlockSpec((1, COP), lambda n: (0, 0)),                      # b2
        ],
        out_specs=pl.BlockSpec((1, HO * WO, COP), lambda n: (n, 0, 0)),
        compiler_params=pltpu.CompilerParams(dimension_semantics=("parallel",)),
    )(zs, xs, wk, ws, ksc, kbi, ssc, sbi, w1, hbi, w2, b2)

    out = out.reshape(N, HO, WO, COP)
    cls = jnp.transpose(out[..., :oc], (0, 3, 1, 2))             # back to NCHW
    loc = jnp.transpose(out[..., oc:oc + ol], (0, 3, 1, 2))
    return cls, loc


# ---------------------------------------------------------------------------
# Deterministic parameter init (PyTorch-style shapes) for both branches.
# ---------------------------------------------------------------------------
def _conv_weight(key, cout, cin, kh, kw):
    bound = 1.0 / np.sqrt(cin * kh * kw)
    return jax.random.uniform(key, (cout, cin, kh, kw), jnp.float32, -bound, bound)


def _bn_params(key, c):
    k1, k2, k3, k4 = jax.random.split(key, 4)
    return (jax.random.uniform(k1, (c,), jnp.float32, 0.5, 1.5),
            jax.random.uniform(k2, (c,), jnp.float32, -0.5, 0.5),
            jax.random.normal(k3, (c,), jnp.float32) * 0.1,
            jax.random.uniform(k4, (c,), jnp.float32, 0.5, 1.5))


def init_branch(key, in_channels, hidden, out_channels):
    ks = jax.random.split(key, 8)
    p = {}
    p["ck_w"] = _conv_weight(ks[0], hidden, in_channels, 3, 3)    # conv_kernel
    p["ck_bn"] = _bn_params(ks[1], hidden)
    p["cs_w"] = _conv_weight(ks[2], hidden, in_channels, 3, 3)    # conv_search
    p["cs_bn"] = _bn_params(ks[3], hidden)
    p["h1_w"] = _conv_weight(ks[4], hidden, hidden, 1, 1)         # head conv1 (no bias)
    p["h1_bn"] = _bn_params(ks[5], hidden)
    p["h2_w"] = _conv_weight(ks[6], out_channels, hidden, 1, 1)   # head conv2 (with bias)
    b_bound = 1.0 / np.sqrt(hidden)
    p["h2_b"] = jax.random.uniform(ks[7], (out_channels,), jnp.float32, -b_bound, b_bound)
    return p


def init_params(key, in_channels, hidden, anchor_num):
    kc, kl = jax.random.split(key)
    return {"cls": init_branch(kc, in_channels, hidden, 2 * anchor_num),
            "loc": init_branch(kl, in_channels, hidden, 4 * anchor_num)}


# ---------------------------------------------------------------------------
# Pure-JAX reference (NCHW, same semantics as the PyTorch module in eval mode)
# ---------------------------------------------------------------------------
def _ref_bn(x, gamma, beta, mean, var):
    inv = gamma / jnp.sqrt(var + BN_EPS)
    return x * inv[None, :, None, None] + (beta - mean * inv)[None, :, None, None]


def _ref_branch(z, x, p):
    conv = lambda a, w: jax.lax.conv_general_dilated(
        a, w, (1, 1), "VALID", dimension_numbers=("NCHW", "OIHW", "NCHW"))
    kf = jax.nn.relu(_ref_bn(conv(z, p["ck_w"]), *p["ck_bn"]))
    sf = jax.nn.relu(_ref_bn(conv(x, p["cs_w"]), *p["cs_bn"]))
    N, C, Hk, Wk = kf.shape
    Hs, Ws = sf.shape[2], sf.shape[3]
    Ho, Wo = Hs - Hk + 1, Ws - Wk + 1
    feat = jnp.zeros((N, C, Ho, Wo), jnp.float32)
    for pp in range(Hk):
        for qq in range(Wk):
            feat = feat + sf[:, :, pp:pp + Ho, qq:qq + Wo] * kf[:, :, pp:pp + 1, qq:qq + 1]
    h = jnp.einsum("nchw,oc->nohw", feat, p["h1_w"][:, :, 0, 0])
    h = jax.nn.relu(_ref_bn(h, *p["h1_bn"]))
    out = jnp.einsum("nchw,oc->nohw", h, p["h2_w"][:, :, 0, 0])
    return out + p["h2_b"][None, :, None, None]


def reference_forward(z, x, params):
    return _ref_branch(z, x, params["cls"]), _ref_branch(z, x, params["loc"])


# ---------------------------------------------------------------------------
if __name__ == "__main__":
    in_channels, hidden, anchor_num = 8, 16, 5
    batch = 2
    key = jax.random.PRNGKey(0)
    kp, kz, kx = jax.random.split(key, 3)

    params = init_params(kp, in_channels, hidden, anchor_num)
    z_f = jax.random.normal(kz, (batch, in_channels, 7, 7), jnp.float32)     # template feature
    x_f = jax.random.normal(kx, (batch, in_channels, 15, 15), jnp.float32)   # search feature

    cls, loc = depthwise_rpn_forward(z_f, x_f, params)
    cls, loc = jax.block_until_ready((cls, loc))

    cls_ref, loc_ref = reference_forward(z_f, x_f, params)
    assert cls.shape == (batch, 2 * anchor_num, 9, 9), cls.shape
    assert loc.shape == (batch, 4 * anchor_num, 9, 9), loc.shape
    np.testing.assert_allclose(np.asarray(cls), np.asarray(cls_ref), rtol=2e-2, atol=2e-2)
    np.testing.assert_allclose(np.asarray(loc), np.asarray(loc_ref), rtol=2e-2, atol=2e-2)

    print("KERNEL_OK")
</pallas_src>

<mosaic_0001>
module attributes {stable_mosaic.version = 11 : i64} {
  func.func @_rpn_fused_kernel(%arg0: i32, %arg1: memref<1x3x112x8xbf16, #tpu.memory_space<vmem>>, %arg2: memref<1x3x240x8xbf16, #tpu.memory_space<vmem>>, %arg3: memref<9x8x32xbf16, #tpu.memory_space<vmem>>, %arg4: memref<9x8x32xbf16, #tpu.memory_space<vmem>>, %arg5: memref<1x32xf32, #tpu.memory_space<vmem>>, %arg6: memref<1x32xf32, #tpu.memory_space<vmem>>, %arg7: memref<1x32xf32, #tpu.memory_space<vmem>>, %arg8: memref<1x32xf32, #tpu.memory_space<vmem>>, %arg9: memref<32x32xf32, #tpu.memory_space<vmem>>, %arg10: memref<1x32xf32, #tpu.memory_space<vmem>>, %arg11: memref<32x128xf32, #tpu.memory_space<vmem>>, %arg12: memref<1x128xf32, #tpu.memory_space<vmem>>, %arg13: memref<1x81x128xf32, #tpu.memory_space<vmem>>) attributes {dimension_semantics = [#tpu.dimension_semantics<parallel>], iteration_bounds = array<i64: 2>, scalar_prefetch = 0 : i64, scratch_operands = 0 : i64, tpu.core_type = #tpu.core_type<tc>, window_params = [{transform_indices = @transform_0, window_bounds = array<i64: 1, 3, 112, 8>}, {transform_indices = @transform_1, window_bounds = array<i64: 1, 3, 240, 8>}, {pipeline_mode = #tpu.pipeline_mode<synchronous>, transform_indices = @transform_2, window_bounds = array<i64: 9, 8, 32>}, {pipeline_mode = #tpu.pipeline_mode<synchronous>, transform_indices = @transform_3, window_bounds = array<i64: 9, 8, 32>}, {pipeline_mode = #tpu.pipeline_mode<synchronous>, transform_indices = @transform_4, window_bounds = array<i64: 1, 32>}, {pipeline_mode = #tpu.pipeline_mode<synchronous>, transform_indices = @transform_5, window_bounds = array<i64: 1, 32>}, {pipeline_mode = #tpu.pipeline_mode<synchronous>, transform_indices = @transform_6, window_bounds = array<i64: 1, 32>}, {pipeline_mode = #tpu.pipeline_mode<synchronous>, transform_indices = @transform_7, window_bounds = array<i64: 1, 32>}, {pipeline_mode = #tpu.pipeline_mode<synchronous>, transform_indices = @transform_8, window_bounds = array<i64: 32, 32>}, {pipeline_mode = #tpu.pipeline_mode<synchronous>, transform_indices = @transform_9, window_bounds = array<i64: 1, 32>}, {pipeline_mode = #tpu.pipeline_mode<synchronous>, transform_indices = @transform_10, window_bounds = array<i64: 32, 128>}, {pipeline_mode = #tpu.pipeline_mode<synchronous>, transform_indices = @transform_11, window_bounds = array<i64: 1, 128>}, {transform_indices = @transform_12, window_bounds = array<i64: 1, 81, 128>}]} {
    %c0 = arith.constant 0 : index
    %c0_0 = arith.constant 0 : index
    %0 = vector.load %arg5[%c0, %c0_0] : memref<1x32xf32, #tpu.memory_space<vmem>>, vector<1x32xf32>
    %c0_1 = arith.constant 0 : index
    %c0_2 = arith.constant 0 : index
    %1 = vector.load %arg6[%c0_1, %c0_2] : memref<1x32xf32, #tpu.memory_space<vmem>>, vector<1x32xf32>
    %c0_3 = arith.constant 0 : index
    %c0_4 = arith.constant 0 : index
    %c0_5 = arith.constant 0 : index
    %c0_6 = arith.constant 0 : index
    %2 = vector.load %arg1[%c0_3, %c0_4, %c0_5, %c0_6] : memref<1x3x112x8xbf16, #tpu.memory_space<vmem>>, vector<1x1x112x8xbf16>
    %3 = vector.shape_cast %2 : vector<1x1x112x8xbf16> to vector<112x8xbf16>
    %4 = vector.extract_strided_slice %3 {offsets = [0, 0], sizes = [80, 8], strides = [1, 1]} : vector<112x8xbf16> to vector<80x8xbf16>
    %c0_7 = arith.constant 0 : index
    %c0_8 = arith.constant 0 : index
    %c0_9 = arith.constant 0 : index
    %5 = vector.load %arg3[%c0_7, %c0_8, %c0_9] : memref<9x8x32xbf16, #tpu.memory_space<vmem>>, vector<1x8x32xbf16>
    %6 = vector.shape_cast %5 : vector<1x8x32xbf16> to vector<8x32xbf16>
    %cst = arith.constant dense<0.000000e+00> : vector<80x32xf32>
    %7 = tpu.matmul %4, %6, %cst {dimension_numbers = #tpu.dot_dimension_numbers<[1], [0], [0], [1], [0, 0, 1, 1], [], []>} : vector<80x8xbf16>, vector<8x32xbf16>, vector<80x32xf32> -> vector<80x32xf32>
    %8 = vector.extract_strided_slice %3 {offsets = [16, 0], sizes = [80, 8], strides = [1, 1]} : vector<112x8xbf16> to vector<80x8xbf16>
    %c3 = arith.constant 3 : index
    %c0_10 = arith.constant 0 : index
    %c0_11 = arith.constant 0 : index
    %9 = vector.load %arg3[%c3, %c0_10, %c0_11] : memref<9x8x32xbf16, #tpu.memory_space<vmem>>, vector<1x8x32xbf16>
    %10 = vector.shape_cast %9 : vector<1x8x32xbf16> to vector<8x32xbf16>
    %cst_12 = arith.constant dense<0.000000e+00> : vector<80x32xf32>
    %11 = tpu.matmul %8, %10, %cst_12 {dimension_numbers = #tpu.dot_dimension_numbers<[1], [0], [0], [1], [0, 0, 1, 1], [], []>} : vector<80x8xbf16>, vector<8x32xbf16>, vector<80x32xf32> -> vector<80x32xf32>
    %12 = arith.addf %7, %11 : vector<80x32xf32>
    %13 = vector.extract_strided_slice %3 {offsets = [32, 0], sizes = [80, 8], strides = [1, 1]} : vector<112x8xbf16> to vector<80x8xbf16>
    %c6 = arith.constant 6 : index
    %c0_13 = arith.constant 0 : index
    %c0_14 = arith.constant 0 : index
    %14 = vector.load %arg3[%c6, %c0_13, %c0_14] : memref<9x8x32xbf16, #tpu.memory_space<vmem>>, vector<1x8x32xbf16>
    %15 = vector.shape_cast %14 : vector<1x8x32xbf16> to vector<8x32xbf16>
    %cst_15 = arith.constant dense<0.000000e+00> : vector<80x32xf32>
    %16 = tpu.matmul %13, %15, %cst_15 {dimension_numbers = #tpu.dot_dimension_numbers<[1], [0], [0], [1], [0, 0, 1, 1], [], []>} : vector<80x8xbf16>, vector<8x32xbf16>, vector<80x32xf32> -> vector<80x32xf32>
    %17 = arith.addf %12, %16 : vector<80x32xf32>
    %c0_16 = arith.constant 0 : index
    %c1 = arith.constant 1 : index
    %c0_17 = arith.constant 0 : index
    %c0_18 = arith.constant 0 : index
    %18 = vector.load %arg1[%c0_16, %c1, %c0_17, %c0_18] : memref<1x3x112x8xbf16, #tpu.memory_space<vmem>>, vector<1x1x112x8xbf16>
    %19 = vector.shape_cast %18 : vector<1x1x112x8xbf16> to vector<112x8xbf16>
    %20 = vector.extract_strided_slice %19 {offsets = [0, 0], sizes = [80, 8], strides = [1, 1]} : vector<112x8xbf16> to vector<80x8xbf16>
    %c1_19 = arith.constant 1 : index
    %c0_20 = arith.constant 0 : index
    %c0_21 = arith.constant 0 : index
    %21 = vector.load %arg3[%c1_19, %c0_20, %c0_21] : memref<9x8x32xbf16, #tpu.memory_space<vmem>>, vector<1x8x32xbf16>
    %22 = vector.shape_cast %21 : vector<1x8x32xbf16> to vector<8x32xbf16>
    %cst_22 = arith.constant dense<0.000000e+00> : vector<80x32xf32>
    %23 = tpu.matmul %20, %22, %cst_22 {dimension_numbers = #tpu.dot_dimension_numbers<[1], [0], [0], [1], [0, 0, 1, 1], [], []>} : vector<80x8xbf16>, vector<8x32xbf16>, vector<80x32xf32> -> vector<80x32xf32>
    %24 = arith.addf %17, %23 : vector<80x32xf32>
    %25 = vector.extract_strided_slice %19 {offsets = [16, 0], sizes = [80, 8], strides = [1, 1]} : vector<112x8xbf16> to vector<80x8xbf16>
    %c4 = arith.constant 4 : index
    %c0_23 = arith.constant 0 : index
    %c0_24 = arith.constant 0 : index
    %26 = vector.load %arg3[%c4, %c0_23, %c0_24] : memref<9x8x32xbf16, #tpu.memory_space<vmem>>, vector<1x8x32xbf16>
    %27 = vector.shape_cast %26 : vector<1x8x32xbf16> to vector<8x32xbf16>
    %cst_25 = arith.constant dense<0.000000e+00> : vector<80x32xf32>
    %28 = tpu.matmul %25, %27, %cst_25 {dimension_numbers = #tpu.dot_dimension_numbers<[1], [0], [0], [1], [0, 0, 1, 1], [], []>} : vector<80x8xbf16>, vector<8x32xbf16>, vector<80x32xf32> -> vector<80x32xf32>
    %29 = arith.addf %24, %28 : vector<80x32xf32>
    %30 = vector.extract_strided_slice %19 {offsets = [32, 0], sizes = [80, 8], strides = [1, 1]} : vector<112x8xbf16> to vector<80x8xbf16>
    %c7 = arith.constant 7 : index
    %c0_26 = arith.constant 0 : index
    %c0_27 = arith.constant 0 : index
    %31 = vector.load %arg3[%c7, %c0_26, %c0_27] : memref<9x8x32xbf16, #tpu.memory_space<vmem>>, vector<1x8x32xbf16>
    %32 = vector.shape_cast %31 : vector<1x8x32xbf16> to vector<8x32xbf16>
    %cst_28 = arith.constant dense<0.000000e+00> : vector<80x32xf32>
    %33 = tpu.matmul %30, %32, %cst_28 {dimension_numbers = #tpu.dot_dimension_numbers<[1], [0], [0], [1], [0, 0, 1, 1], [], []>} : vector<80x8xbf16>, vector<8x32xbf16>, vector<80x32xf32> -> vector<80x32xf32>
    %34 = arith.addf %29, %33 : vector<80x32xf32>
    %c0_29 = arith.constant 0 : index
    %c2 = arith.constant 2 : index
    %c0_30 = arith.constant 0 : index
    %c0_31 = arith.constant 0 : index
    %35 = vector.load %arg1[%c0_29, %c2, %c0_30, %c0_31] : memref<1x3x112x8xbf16, #tpu.memory_space<vmem>>, vector<1x1x112x8xbf16>
    %36 = vector.shape_cast %35 : vector<1x1x112x8xbf16> to vector<112x8xbf16>
    %37 = vector.extract_strided_slice %36 {offsets = [0, 0], sizes = [80, 8], strides = [1, 1]} : vector<112x8xbf16> to vector<80x8xbf16>
    %c2_32 = arith.constant 2 : index
    %c0_33 = arith.constant 0 : index
    %c0_34 = arith.constant 0 : index
    %38 = vector.load %arg3[%c2_32, %c0_33, %c0_34] : memref<9x8x32xbf16, #tpu.memory_space<vmem>>, vector<1x8x32xbf16>
    %39 = vector.shape_cast %38 : vector<1x8x32xbf16> to vector<8x32xbf16>
    %cst_35 = arith.constant dense<0.000000e+00> : vector<80x32xf32>
    %40 = tpu.matmul %37, %39, %cst_35 {dimension_numbers = #tpu.dot_dimension_numbers<[1], [0], [0], [1], [0, 0, 1, 1], [], []>} : vector<80x8xbf16>, vector<8x32xbf16>, vector<80x32xf32> -> vector<80x32xf32>
    %41 = arith.addf %34, %40 : vector<80x32xf32>
    %42 = vector.extract_strided_slice %36 {offsets = [16, 0], sizes = [80, 8], strides = [1, 1]} : vector<112x8xbf16> to vector<80x8xbf16>
    %c5 = arith.constant 5 : index
    %c0_36 = arith.constant 0 : index
    %c0_37 = arith.constant 0 : index
    %43 = vector.load %arg3[%c5, %c0_36, %c0_37] : memref<9x8x32xbf16, #tpu.memory_space<vmem>>, vector<1x8x32xbf16>
    %44 = vector.shape_cast %43 : vector<1x8x32xbf16> to vector<8x32xbf16>
    %cst_38 = arith.constant dense<0.000000e+00> : vector<80x32xf32>
    %45 = tpu.matmul %42, %44, %cst_38 {dimension_numbers = #tpu.dot_dimension_numbers<[1], [0], [0], [1], [0, 0, 1, 1], [], []>} : vector<80x8xbf16>, vector<8x32xbf16>, vector<80x32xf32> -> vector<80x32xf32>
    %46 = arith.addf %41, %45 : vector<80x32xf32>
    %47 = vector.extract_strided_slice %36 {offsets = [32, 0], sizes = [80, 8], strides = [1, 1]} : vector<112x8xbf16> to vector<80x8xbf16>
    %c8 = arith.constant 8 : index
    %c0_39 = arith.constant 0 : index
    %c0_40 = arith.constant 0 : index
    %48 = vector.load %arg3[%c8, %c0_39, %c0_40] : memref<9x8x32xbf16, #tpu.memory_space<vmem>>, vector<1x8x32xbf16>
    %49 = vector.shape_cast %48 : vector<1x8x32xbf16> to vector<8x32xbf16>
    %cst_41 = arith.constant dense<0.000000e+00> : vector<80x32xf32>
    %50 = tpu.matmul %47, %49, %cst_41 {dimension_numbers = #tpu.dot_dimension_numbers<[1], [0], [0], [1], [0, 0, 1, 1], [], []>} : vector<80x8xbf16>, vector<8x32xbf16>, vector<80x32xf32> -> vector<80x32xf32>
    %51 = arith.addf %46, %50 : vector<80x32xf32>
    %52 = vector.broadcast %0 : vector<1x32xf32> to vector<80x32xf32>
    %53 = arith.mulf %51, %52 : vector<80x32xf32>
    %54 = vector.broadcast %1 : vector<1x32xf32> to vector<80x32xf32>
    %55 = arith.addf %53, %54 : vector<80x32xf32>
    %cst_42 = arith.constant 0.000000e+00 : f32
    %56 = vector.broadcast %cst_42 : f32 to vector<80x32xf32>
    %57 = arith.maximumf %55, %56 : vector<80x32xf32>
    %c0_43 = arith.constant 0 : index
    %c0_44 = arith.constant 0 : index
    %58 = vector.load %arg7[%c0_43, %c0_44] : memref<1x32xf32, #tpu.memory_space<vmem>>, vector<1x32xf32>
    %c0_45 = arith.constant 0 : index
    %c0_46 = arith.constant 0 : index
    %59 = vector.load %arg8[%c0_45, %c0_46] : memref<1x32xf32, #tpu.memory_space<vmem>>, vector<1x32xf32>
    %c0_47 = arith.constant 0 : index
    %c0_48 = arith.constant 0 : index
    %c0_49 = arith.constant 0 : index
    %c0_50 = arith.constant 0 : index
    %60 = vector.load %arg2[%c0_47, %c0_48, %c0_49, %c0_50] : memref<1x3x240x8xbf16, #tpu.memory_space<vmem>>, vector<1x1x240x8xbf16>
    %61 = vector.shape_cast %60 : vector<1x1x240x8xbf16> to vector<240x8xbf16>
    %62 = vector.extract_strided_slice %61 {offsets = [0, 0], sizes = [208, 8], strides = [1, 1]} : vector<240x8xbf16> to vector<208x8xbf16>
    %c0_51 = arith.constant 0 : index
    %c0_52 = arith.constant 0 : index
    %c0_53 = arith.constant 0 : index
    %63 = vector.load %arg4[%c0_51, %c0_52, %c0_53] : memref<9x8x32xbf16, #tpu.memory_space<vmem>>, vector<1x8x32xbf16>
    %64 = vector.shape_cast %63 : vector<1x8x32xbf16> to vector<8x32xbf16>
    %cst_54 = arith.constant dense<0.000000e+00> : vector<208x32xf32>
    %65 = tpu.matmul %62, %64, %cst_54 {dimension_numbers = #tpu.dot_dimension_numbers<[1], [0], [0], [1], [0, 0, 1, 1], [], []>} : vector<208x8xbf16>, vector<8x32xbf16>, vector<208x32xf32> -> vector<208x32xf32>
    %66 = vector.extract_strided_slice %61 {offsets = [16, 0], sizes = [208, 8], strides = [1, 1]} : vector<240x8xbf16> to vector<208x8xbf16>
    %c3_55 = arith.constant 3 : index
    %c0_56 = arith.constant 0 : index
    %c0_57 = arith.constant 0 : index
    %67 = vector.load %arg4[%c3_55, %c0_56, %c0_57] : memref<9x8x32xbf16, #tpu.memory_space<vmem>>, vector<1x8x32xbf16>
    %68 = vector.shape_cast %67 : vector<1x8x32xbf16> to vector<8x32xbf16>
    %cst_58 = arith.constant dense<0.000000e+00> : vector<208x32xf32>
    %69 = tpu.matmul %66, %68, %cst_58 {dimension_numbers = #tpu.dot_dimension_numbers<[1], [0], [0], [1], [0, 0, 1, 1], [], []>} : vector<208x8xbf16>, vector<8x32xbf16>, vector<208x32xf32> -> vector<208x32xf32>
    %70 = arith.addf %65, %69 : vector<208x32xf32>
    %71 = vector.extract_strided_slice %61 {offsets = [32, 0], sizes = [208, 8], strides = [1, 1]} : vector<240x8xbf16> to vector<208x8xbf16>
    %c6_59 = arith.constant 6 : index
    %c0_60 = arith.constant 0 : index
    %c0_61 = arith.constant 0 : index
    %72 = vector.load %arg4[%c6_59, %c0_60, %c0_61] : memref<9x8x32xbf16, #tpu.memory_space<vmem>>, vector<1x8x32xbf16>
    %73 = vector.shape_cast %72 : vector<1x8x32xbf16> to vector<8x32xbf16>
    %cst_62 = arith.constant dense<0.000000e+00> : vector<208x32xf32>
    %74 = tpu.matmul %71, %73, %cst_62 {dimension_numbers = #tpu.dot_dimension_numbers<[1], [0], [0], [1], [0, 0, 1, 1], [], []>} : vector<208x8xbf16>, vector<8x32xbf16>, vector<208x32xf32> -> vector<208x32xf32>
    %75 = arith.addf %70, %74 : vector<208x32xf32>
    %c0_63 = arith.constant 0 : index
    %c1_64 = arith.constant 1 : index
    %c0_65 = arith.constant 0 : index
    %c0_66 = arith.constant 0 : index
    %76 = vector.load %arg2[%c0_63, %c1_64, %c0_65, %c0_66] : memref<1x3x240x8xbf16, #tpu.memory_space<vmem>>, vector<1x1x240x8xbf16>
    %77 = vector.shape_cast %76 : vector<1x1x240x8xbf16> to vector<240x8xbf16>
    %78 = vector.extract_strided_slice %77 {offsets = [0, 0], sizes = [208, 8], strides = [1, 1]} : vector<240x8xbf16> to vector<208x8xbf16>
    %c1_67 = arith.constant 1 : index
    %c0_68 = arith.constant 0 : index
    %c0_69 = arith.constant 0 : index
    %79 = vector.load %arg4[%c1_67, %c0_68, %c0_69] : memref<9x8x32xbf16, #tpu.memory_space<vmem>>, vector<1x8x32xbf16>
    %80 = vector.shape_cast %79 : vector<1x8x32xbf16> to vector<8x32xbf16>
    %cst_70 = arith.constant dense<0.000000e+00> : vector<208x32xf32>
    %81 = tpu.matmul %78, %80, %cst_70 {dimension_numbers = #tpu.dot_dimension_numbers<[1], [0], [0], [1], [0, 0, 1, 1], [], []>} : vector<208x8xbf16>, vector<8x32xbf16>, vector<208x32xf32> -> vector<208x32xf32>
    %82 = arith.addf %75, %81 : vector<208x32xf32>
    %83 = vector.extract_strided_slice %77 {offsets = [16, 0], sizes = [208, 8], strides = [1, 1]} : vector<240x8xbf16> to vector<208x8xbf16>
    %c4_71 = arith.constant 4 : index
    %c0_72 = arith.constant 0 : index
    %c0_73 = arith.constant 0 : index
    %84 = vector.load %arg4[%c4_71, %c0_72, %c0_73] : memref<9x8x32xbf16, #tpu.memory_space<vmem>>, vector<1x8x32xbf16>
    %85 = vector.shape_cast %84 : vector<1x8x32xbf16> to vector<8x32xbf16>
    %cst_74 = arith.constant dense<0.000000e+00> : vector<208x32xf32>
    %86 = tpu.matmul %83, %85, %cst_74 {dimension_numbers = #tpu.dot_dimension_numbers<[1], [0], [0], [1], [0, 0, 1, 1], [], []>} : vector<208x8xbf16>, vector<8x32xbf16>, vector<208x32xf32> -> vector<208x32xf32>
    %87 = arith.addf %82, %86 : vector<208x32xf32>
    %88 = vector.extract_strided_slice %77 {offsets = [32, 0], sizes = [208, 8], strides = [1, 1]} : vector<240x8xbf16> to vector<208x8xbf16>
    %c7_75 = arith.constant 7 : index
    %c0_76 = arith.constant 0 : index
    %c0_77 = arith.constant 0 : index
    %89 = vector.load %arg4[%c7_75, %c0_76, %c0_77] : memref<9x8x32xbf16, #tpu.memory_space<vmem>>, vector<1x8x32xbf16>
    %90 = vector.shape_cast %89 : vector<1x8x32xbf16> to vector<8x32xbf16>
    %cst_78 = arith.constant dense<0.000000e+00> : vector<208x32xf32>
    %91 = tpu.matmul %88, %90, %cst_78 {dimension_numbers = #tpu.dot_dimension_numbers<[1], [0], [0], [1], [0, 0, 1, 1], [], []>} : vector<208x8xbf16>, vector<8x32xbf16>, vector<208x32xf32> -> vector<208x32xf32>
    %92 = arith.addf %87, %91 : vector<208x32xf32>
    %c0_79 = arith.constant 0 : index
    %c2_80 = arith.constant 2 : index
    %c0_81 = arith.constant 0 : index
    %c0_82 = arith.constant 0 : index
    %93 = vector.load %arg2[%c0_79, %c2_80, %c0_81, %c0_82] : memref<1x3x240x8xbf16, #tpu.memory_space<vmem>>, vector<1x1x240x8xbf16>
    %94 = vector.shape_cast %93 : vector<1x1x240x8xbf16> to vector<240x8xbf16>
    %95 = vector.extract_strided_slice %94 {offsets = [0, 0], sizes = [208, 8], strides = [1, 1]} : vector<240x8xbf16> to vector<208x8xbf16>
    %c2_83 = arith.constant 2 : index
    %c0_84 = arith.constant 0 : index
    %c0_85 = arith.constant 0 : index
    %96 = vector.load %arg4[%c2_83, %c0_84, %c0_85] : memref<9x8x32xbf16, #tpu.memory_space<vmem>>, vector<1x8x32xbf16>
    %97 = vector.shape_cast %96 : vector<1x8x32xbf16> to vector<8x32xbf16>
    %cst_86 = arith.constant dense<0.000000e+00> : vector<208x32xf32>
    %98 = tpu.matmul %95, %97, %cst_86 {dimension_numbers = #tpu.dot_dimension_numbers<[1], [0], [0], [1], [0, 0, 1, 1], [], []>} : vector<208x8xbf16>, vector<8x32xbf16>, vector<208x32xf32> -> vector<208x32xf32>
    %99 = arith.addf %92, %98 : vector<208x32xf32>
    %100 = vector.extract_strided_slice %94 {offsets = [16, 0], sizes = [208, 8], strides = [1, 1]} : vector<240x8xbf16> to vector<208x8xbf16>
    %c5_87 = arith.constant 5 : index
    %c0_88 = arith.constant 0 : index
    %c0_89 = arith.constant 0 : index
    %101 = vector.load %arg4[%c5_87, %c0_88, %c0_89] : memref<9x8x32xbf16, #tpu.memory_space<vmem>>, vector<1x8x32xbf16>
    %102 = vector.shape_cast %101 : vector<1x8x32xbf16> to vector<8x32xbf16>
    %cst_90 = arith.constant dense<0.000000e+00> : vector<208x32xf32>
    %103 = tpu.matmul %100, %102, %cst_90 {dimension_numbers = #tpu.dot_dimension_numbers<[1], [0], [0], [1], [0, 0, 1, 1], [], []>} : vector<208x8xbf16>, vector<8x32xbf16>, vector<208x32xf32> -> vector<208x32xf32>
    %104 = arith.addf %99, %103 : vector<208x32xf32>
    %105 = vector.extract_strided_slice %94 {offsets = [32, 0], sizes = [208, 8], strides = [1, 1]} : vector<240x8xbf16> to vector<208x8xbf16>
    %c8_91 = arith.constant 8 : index
    %c0_92 = arith.constant 0 : index
    %c0_93 = arith.constant 0 : index
    %106 = vector.load %arg4[%c8_91, %c0_92, %c0_93] : memref<9x8x32xbf16, #tpu.memory_space<vmem>>, vector<1x8x32xbf16>
    %107 = vector.shape_cast %106 : vector<1x8x32xbf16> to vector<8x32xbf16>
    %cst_94 = arith.constant dense<0.000000e+00> : vector<208x32xf32>
    %108 = tpu.matmul %105, %107, %cst_94 {dimension_numbers = #tpu.dot_dimension_numbers<[1], [0], [0], [1], [0, 0, 1, 1], [], []>} : vector<208x8xbf16>, vector<8x32xbf16>, vector<208x32xf32> -> vector<208x32xf32>
    %109 = arith.addf %104, %108 : vector<208x32xf32>
    %110 = vector.broadcast %58 : vector<1x32xf32> to vector<208x32xf32>
    %111 = arith.mulf %109, %110 : vector<208x32xf32>
    %112 = vector.broadcast %59 : vector<1x32xf32> to vector<208x32xf32>
    %113 = arith.addf %111, %112 : vector<208x32xf32>
    %cst_95 = arith.constant 0.000000e+00 : f32
    %114 = vector.broadcast %cst_95 : f32 to vector<208x32xf32>
    %115 = arith.maximumf %113, %114 : vector<208x32xf32>
    %116 = vector.shape_cast %57 : vector<80x32xf32> to vector<5x16x32xf32>
    %117 = vector.shape_cast %115 : vector<208x32xf32> to vector<13x16x32xf32>
    %118 = vector.extract_strided_slice %117 {offsets = [0, 0, 0], sizes = [13, 9, 32], strides = [1, 1, 1]} : vector<13x16x32xf32> to vector<13x9x32xf32>
    %119 = vector.extract_strided_slice %118 {offsets = [0, 0, 0], sizes = [9, 9, 32], strides = [1, 1, 1]} : vector<13x9x32xf32> to vector<9x9x32xf32>
    %120 = vector.extract_strided_slice %116 {offsets = [0, 0, 0], sizes = [1, 1, 32], strides = [1, 1, 1]} : vector<5x16x32xf32> to vector<1x1x32xf32>
    %121 = vector.broadcast %120 : vector<1x1x32xf32> to vector<9x9x32xf32>
    %122 = arith.mulf %119, %121 : vector<9x9x32xf32>
    %123 = vector.extract_strided_slice %118 {offsets = [1, 0, 0], sizes = [9, 9, 32], strides = [1, 1, 1]} : vector<13x9x32xf32> to vector<9x9x32xf32>
    %124 = vector.extract_strided_slice %116 {offsets = [1, 0, 0], sizes = [1, 1, 32], strides = [1, 1, 1]} : vector<5x16x32xf32> to vector<1x1x32xf32>
    %125 = vector.broadcast %124 : vector<1x1x32xf32> to vector<9x9x32xf32>
    %126 = arith.mulf %123, %125 : vector<9x9x32xf32>
    %127 = arith.addf %122, %126 : vector<9x9x32xf32>
    %128 = vector.extract_strided_slice %118 {offsets = [2, 0, 0], sizes = [9, 9, 32], strides = [1, 1, 1]} : vector<13x9x32xf32> to vector<9x9x32xf32>
    %129 = vector.extract_strided_slice %116 {offsets = [2, 0, 0], sizes = [1, 1, 32], strides = [1, 1, 1]} : vector<5x16x32xf32> to vector<1x1x32xf32>
    %130 = vector.broadcast %129 : vector<1x1x32xf32> to vector<9x9x32xf32>
    %131 = arith.mulf %128, %130 : vector<9x9x32xf32>
    %132 = arith.addf %127, %131 : vector<9x9x32xf32>
    %133 = vector.extract_strided_slice %118 {offsets = [3, 0, 0], sizes = [9, 9, 32], strides = [1, 1, 1]} : vector<13x9x32xf32> to vector<9x9x32xf32>
    %134 = vector.extract_strided_slice %116 {offsets = [3, 0, 0], sizes = [1, 1, 32], strides = [1, 1, 1]} : vector<5x16x32xf32> to vector<1x1x32xf32>
    %135 = vector.broadcast %134 : vector<1x1x32xf32> to vector<9x9x32xf32>
    %136 = arith.mulf %133, %135 : vector<9x9x32xf32>
    %137 = arith.addf %132, %136 : vector<9x9x32xf32>
    %138 = vector.extract_strided_slice %118 {offsets = [4, 0, 0], sizes = [9, 9, 32], strides = [1, 1, 1]} : vector<13x9x32xf32> to vector<9x9x32xf32>
    %139 = vector.extract_strided_slice %116 {offsets = [4, 0, 0], sizes = [1, 1, 32], strides = [1, 1, 1]} : vector<5x16x32xf32> to vector<1x1x32xf32>
    %140 = vector.broadcast %139 : vector<1x1x32xf32> to vector<9x9x32xf32>
    %141 = arith.mulf %138, %140 : vector<9x9x32xf32>
    %142 = arith.addf %137, %141 : vector<9x9x32xf32>
    %143 = vector.extract_strided_slice %117 {offsets = [0, 1, 0], sizes = [13, 9, 32], strides = [1, 1, 1]} : vector<13x16x32xf32> to vector<13x9x32xf32>
    %144 = vector.extract_strided_slice %143 {offsets = [0, 0, 0], sizes = [9, 9, 32], strides = [1, 1, 1]} : vector<13x9x32xf32> to vector<9x9x32xf32>
    %145 = vector.extract_strided_slice %116 {offsets = [0, 1, 0], sizes = [1, 1, 32], strides = [1, 1, 1]} : vector<5x16x32xf32> to vector<1x1x32xf32>
    %146 = vector.broadcast %145 : vector<1x1x32xf32> to vector<9x9x32xf32>
    %147 = arith.mulf %144, %146 : vector<9x9x32xf32>
    %148 = arith.addf %142, %147 : vector<9x9x32xf32>
    %149 = vector.extract_strided_slice %143 {offsets = [1, 0, 0], sizes = [9, 9, 32], strides = [1, 1, 1]} : vector<13x9x32xf32> to vector<9x9x32xf32>
    %150 = vector.extract_strided_slice %116 {offsets = [1, 1, 0], sizes = [1, 1, 32], strides = [1, 1, 1]} : vector<5x16x32xf32> to vector<1x1x32xf32>
    %151 = vector.broadcast %150 : vector<1x1x32xf32> to vector<9x9x32xf32>
    %152 = arith.mulf %149, %151 : vector<9x9x32xf32>
    %153 = arith.addf %148, %152 : vector<9x9x32xf32>
    %154 = vector.extract_strided_slice %143 {offsets = [2, 0, 0], sizes = [9, 9, 32], strides = [1, 1, 1]} : vector<13x9x32xf32> to vector<9x9x32xf32>
    %155 = vector.extract_strided_slice %116 {offsets = [2, 1, 0], sizes = [1, 1, 32], strides = [1, 1, 1]} : vector<5x16x32xf32> to vector<1x1x32xf32>
    %156 = vector.broadcast %155 : vector<1x1x32xf32> to vector<9x9x32xf32>
    %157 = arith.mulf %154, %156 : vector<9x9x32xf32>
    %158 = arith.addf %153, %157 : vector<9x9x32xf32>
    %159 = vector.extract_strided_slice %143 {offsets = [3, 0, 0], sizes = [9, 9, 32], strides = [1, 1, 1]} : vector<13x9x32xf32> to vector<9x9x32xf32>
    %160 = vector.extract_strided_slice %116 {offsets = [3, 1, 0], sizes = [1, 1, 32], strides = [1, 1, 1]} : vector<5x16x32xf32> to vector<1x1x32xf32>
    %161 = vector.broadcast %160 : vector<1x1x32xf32> to vector<9x9x32xf32>
    %162 = arith.mulf %159, %161 : vector<9x9x32xf32>
    %163 = arith.addf %158, %162 : vector<9x9x32xf32>
    %164 = vector.extract_strided_slice %143 {offsets = [4, 0, 0], sizes = [9, 9, 32], strides = [1, 1, 1]} : vector<13x9x32xf32> to vector<9x9x32xf32>
    %165 = vector.extract_strided_slice %116 {offsets = [4, 1, 0], sizes = [1, 1, 32], strides = [1, 1, 1]} : vector<5x16x32xf32> to vector<1x1x32xf32>
    %166 = vector.broadcast %165 : vector<1x1x32xf32> to vector<9x9x32xf32>
    %167 = arith.mulf %164, %166 : vector<9x9x32xf32>
    %168 = arith.addf %163, %167 : vector<9x9x32xf32>
    %169 = vector.extract_strided_slice %117 {offsets = [0, 2, 0], sizes = [13, 9, 32], strides = [1, 1, 1]} : vector<13x16x32xf32> to vector<13x9x32xf32>
    %170 = vector.extract_strided_slice %169 {offsets = [0, 0, 0], sizes = [9, 9, 32], strides = [1, 1, 1]} : vector<13x9x32xf32> to vector<9x9x32xf32>
    %171 = vector.extract_strided_slice %116 {offsets = [0, 2, 0], sizes = [1, 1, 32], strides = [1, 1, 1]} : vector<5x16x32xf32> to vector<1x1x32xf32>
    %172 = vector.broadcast %171 : vector<1x1x32xf32> to vector<9x9x32xf32>
    %173 = arith.mulf %170, %172 : vector<9x9x32xf32>
    %174 = arith.addf %168, %173 : vector<9x9x32xf32>
    %175 = vector.extract_strided_slice %169 {offsets = [1, 0, 0], sizes = [9, 9, 32], strides = [1, 1, 1]} : vector<13x9x32xf32> to vector<9x9x32xf32>
    %176 = vector.extract_strided_slice %116 {offsets = [1, 2, 0], sizes = [1, 1, 32], strides = [1, 1, 1]} : vector<5x16x32xf32> to vector<1x1x32xf32>
    %177 = vector.broadcast %176 : vector<1x1x32xf32> to vector<9x9x32xf32>
    %178 = arith.mulf %175, %177 : vector<9x9x32xf32>
    %179 = arith.addf %174, %178 : vector<9x9x32xf32>
    %180 = vector.extract_strided_slice %169 {offsets = [2, 0, 0], sizes = [9, 9, 32], strides = [1, 1, 1]} : vector<13x9x32xf32> to vector<9x9x32xf32>
    %181 = vector.extract_strided_slice %116 {offsets = [2, 2, 0], sizes = [1, 1, 32], strides = [1, 1, 1]} : vector<5x16x32xf32> to vector<1x1x32xf32>
    %182 = vector.broadcast %181 : vector<1x1x32xf32> to vector<9x9x32xf32>
    %183 = arith.mulf %180, %182 : vector<9x9x32xf32>
    %184 = arith.addf %179, %183 : vector<9x9x32xf32>
    %185 = vector.extract_strided_slice %169 {offsets = [3, 0, 0], sizes = [9, 9, 32], strides = [1, 1, 1]} : vector<13x9x32xf32> to vector<9x9x32xf32>
    %186 = vector.extract_strided_slice %116 {offsets = [3, 2, 0], sizes = [1, 1, 32], strides = [1, 1, 1]} : vector<5x16x32xf32> to vector<1x1x32xf32>
    %187 = vector.broadcast %186 : vector<1x1x32xf32> to vector<9x9x32xf32>
    %188 = arith.mulf %185, %187 : vector<9x9x32xf32>
    %189 = arith.addf %184, %188 : vector<9x9x32xf32>
    %190 = vector.extract_strided_slice %169 {offsets = [4, 0, 0], sizes = [9, 9, 32], strides = [1, 1, 1]} : vector<13x9x32xf32> to vector<9x9x32xf32>
    %191 = vector.extract_strided_slice %116 {offsets = [4, 2, 0], sizes = [1, 1, 32], strides = [1, 1, 1]} : vector<5x16x32xf32> to vector<1x1x32xf32>
    %192 = vector.broadcast %191 : vector<1x1x32xf32> to vector<9x9x32xf32>
    %193 = arith.mulf %190, %192 : vector<9x9x32xf32>
    %194 = arith.addf %189, %193 : vector<9x9x32xf32>
    %195 = vector.extract_strided_slice %117 {offsets = [0, 3, 0], sizes = [13, 9, 32], strides = [1, 1, 1]} : vector<13x16x32xf32> to vector<13x9x32xf32>
    %196 = vector.extract_strided_slice %195 {offsets = [0, 0, 0], sizes = [9, 9, 32], strides = [1, 1, 1]} : vector<13x9x32xf32> to vector<9x9x32xf32>
    %197 = vector.extract_strided_slice %116 {offsets = [0, 3, 0], sizes = [1, 1, 32], strides = [1, 1, 1]} : vector<5x16x32xf32> to vector<1x1x32xf32>
    %198 = vector.broadcast %197 : vector<1x1x32xf32> to vector<9x9x32xf32>
    %199 = arith.mulf %196, %198 : vector<9x9x32xf32>
    %200 = arith.addf %194, %199 : vector<9x9x32xf32>
    %201 = vector.extract_strided_slice %195 {offsets = [1, 0, 0], sizes = [9, 9, 32], strides = [1, 1, 1]} : vector<13x9x32xf32> to vector<9x9x32xf32>
    %202 = vector.extract_strided_slice %116 {offsets = [1, 3, 0], sizes = [1, 1, 32], strides = [1, 1, 1]} : vector<5x16x32xf32> to vector<1x1x32xf32>
    %203 = vector.broadcast %202 : vector<1x1x32xf32> to vector<9x9x32xf32>
    %204 = arith.mulf %201, %203 : vector<9x9x32xf32>
    %205 = arith.addf %200, %204 : vector<9x9x32xf32>
    %206 = vector.extract_strided_slice %195 {offsets = [2, 0, 0], sizes = [9, 9, 32], strides = [1, 1, 1]} : vector<13x9x32xf32> to vector<9x9x32xf32>
    %207 = vector.extract_strided_slice %116 {offsets = [2, 3, 0], sizes = [1, 1, 32], strides = [1, 1, 1]} : vector<5x16x32xf32> to vector<1x1x32xf32>
    %208 = vector.broadcast %207 : vector<1x1x32xf32> to vector<9x9x32xf32>
    %209 = arith.mulf %206, %208 : vector<9x9x32xf32>
    %210 = arith.addf %205, %209 : vector<9x9x32xf32>
    %211 = vector.extract_strided_slice %195 {offsets = [3, 0, 0], sizes = [9, 9, 32], strides = [1, 1, 1]} : vector<13x9x32xf32> to vector<9x9x32xf32>
    %212 = vector.extract_strided_slice %116 {offsets = [3, 3, 0], sizes = [1, 1, 32], strides = [1, 1, 1]} : vector<5x16x32xf32> to vector<1x1x32xf32>
    %213 = vector.broadcast %212 : vector<1x1x32xf32> to vector<9x9x32xf32>
    %214 = arith.mulf %211, %213 : vector<9x9x32xf32>
    %215 = arith.addf %210, %214 : vector<9x9x32xf32>
    %216 = vector.extract_strided_slice %195 {offsets = [4, 0, 0], sizes = [9, 9, 32], strides = [1, 1, 1]} : vector<13x9x32xf32> to vector<9x9x32xf32>
    %217 = vector.extract_strided_slice %116 {offsets = [4, 3, 0], sizes = [1, 1, 32], strides = [1, 1, 1]} : vector<5x16x32xf32> to vector<1x1x32xf32>
    %218 = vector.broadcast %217 : vector<1x1x32xf32> to vector<9x9x32xf32>
    %219 = arith.mulf %216, %218 : vector<9x9x32xf32>
    %220 = arith.addf %215, %219 : vector<9x9x32xf32>
    %221 = vector.extract_strided_slice %117 {offsets = [0, 4, 0], sizes = [13, 9, 32], strides = [1, 1, 1]} : vector<13x16x32xf32> to vector<13x9x32xf32>
    %222 = vector.extract_strided_slice %221 {offsets = [0, 0, 0], sizes = [9, 9, 32], strides = [1, 1, 1]} : vector<13x9x32xf32> to vector<9x9x32xf32>
    %223 = vector.extract_strided_slice %116 {offsets = [0, 4, 0], sizes = [1, 1, 32], strides = [1, 1, 1]} : vector<5x16x32xf32> to vector<1x1x32xf32>
    %224 = vector.broadcast %223 : vector<1x1x32xf32> to vector<9x9x32xf32>
    %225 = arith.mulf %222, %224 : vector<9x9x32xf32>
    %226 = arith.addf %220, %225 : vector<9x9x32xf32>
    %227 = vector.extract_strided_slice %221 {offsets = [1, 0, 0], sizes = [9, 9, 32], strides = [1, 1, 1]} : vector<13x9x32xf32> to vector<9x9x32xf32>
    %228 = vector.extract_strided_slice %116 {offsets = [1, 4, 0], sizes = [1, 1, 32], strides = [1, 1, 1]} : vector<5x16x32xf32> to vector<1x1x32xf32>
    %229 = vector.broadcast %228 : vector<1x1x32xf32> to vector<9x9x32xf32>
    %230 = arith.mulf %227, %229 : vector<9x9x32xf32>
    %231 = arith.addf %226, %230 : vector<9x9x32xf32>
    %232 = vector.extract_strided_slice %221 {offsets = [2, 0, 0], sizes = [9, 9, 32], strides = [1, 1, 1]} : vector<13x9x32xf32> to vector<9x9x32xf32>
    %233 = vector.extract_strided_slice %116 {offsets = [2, 4, 0], sizes = [1, 1, 32], strides = [1, 1, 1]} : vector<5x16x32xf32> to vector<1x1x32xf32>
    %234 = vector.broadcast %233 : vector<1x1x32xf32> to vector<9x9x32xf32>
    %235 = arith.mulf %232, %234 : vector<9x9x32xf32>
    %236 = arith.addf %231, %235 : vector<9x9x32xf32>
    %237 = vector.extract_strided_slice %221 {offsets = [3, 0, 0], sizes = [9, 9, 32], strides = [1, 1, 1]} : vector<13x9x32xf32> to vector<9x9x32xf32>
    %238 = vector.extract_strided_slice %116 {offsets = [3, 4, 0], sizes = [1, 1, 32], strides = [1, 1, 1]} : vector<5x16x32xf32> to vector<1x1x32xf32>
    %239 = vector.broadcast %238 : vector<1x1x32xf32> to vector<9x9x32xf32>
    %240 = arith.mulf %237, %239 : vector<9x9x32xf32>
    %241 = arith.addf %236, %240 : vector<9x9x32xf32>
    %242 = vector.extract_strided_slice %221 {offsets = [4, 0, 0], sizes = [9, 9, 32], strides = [1, 1, 1]} : vector<13x9x32xf32> to vector<9x9x32xf32>
    %243 = vector.extract_strided_slice %116 {offsets = [4, 4, 0], sizes = [1, 1, 32], strides = [1, 1, 1]} : vector<5x16x32xf32> to vector<1x1x32xf32>
    %244 = vector.broadcast %243 : vector<1x1x32xf32> to vector<9x9x32xf32>
    %245 = arith.mulf %242, %244 : vector<9x9x32xf32>
    %246 = arith.addf %241, %245 : vector<9x9x32xf32>
    %247 = vector.shape_cast %246 : vector<9x9x32xf32> to vector<81x32xf32>
    %c0_96 = arith.constant 0 : index
    %c0_97 = arith.constant 0 : index
    %248 = vector.load %arg9[%c0_96, %c0_97] : memref<32x32xf32, #tpu.memory_space<vmem>>, vector<32x32xf32>
    %cst_98 = arith.constant dense<0.000000e+00> : vector<81x32xf32>
    %249 = tpu.matmul %247, %248, %cst_98 {dimension_numbers = #tpu.dot_dimension_numbers<[1], [0], [0], [1], [0, 0, 1, 1], [], []>} : vector<81x32xf32>, vector<32x32xf32>, vector<81x32xf32> -> vector<81x32xf32>
    %c0_99 = arith.constant 0 : index
    %c0_100 = arith.constant 0 : index
    %250 = vector.load %arg10[%c0_99, %c0_100] : memref<1x32xf32, #tpu.memory_space<vmem>>, vector<1x32xf32>
    %251 = vector.broadcast %250 : vector<1x32xf32> to vector<81x32xf32>
    %252 = arith.addf %249, %251 : vector<81x32xf32>
    %cst_101 = arith.constant 0.000000e+00 : f32
    %253 = vector.broadcast %cst_101 : f32 to vector<81x32xf32>
    %254 = arith.maximumf %252, %253 : vector<81x32xf32>
    %c0_102 = arith.constant 0 : index
    %c0_103 = arith.constant 0 : index
    %255 = vector.load %arg11[%c0_102, %c0_103] : memref<32x128xf32, #tpu.memory_space<vmem>>, vector<32x128xf32>
    %cst_104 = arith.constant dense<0.000000e+00> : vector<81x128xf32>
    %256 = tpu.matmul %254, %255, %cst_104 {dimension_numbers = #tpu.dot_dimension_numbers<[1], [0], [0], [1], [0, 0, 1, 1], [], []>} : vector<81x32xf32>, vector<32x128xf32>, vector<81x128xf32> -> vector<81x128xf32>
    %c0_105 = arith.constant 0 : index
    %c0_106 = arith.constant 0 : index
    %257 = vector.load %arg12[%c0_105, %c0_106] : memref<1x128xf32, #tpu.memory_space<vmem>>, vector<1x128xf32>
    %258 = vector.broadcast %257 : vector<1x128xf32> to vector<81x128xf32>
    %259 = arith.addf %256, %258 : vector<81x128xf32>
    %c0_107 = arith.constant 0 : index
    %c0_108 = arith.constant 0 : index
    %c0_109 = arith.constant 0 : index
    %260 = vector.load %arg13[%c0_107, %c0_108, %c0_109] : memref<1x81x128xf32, #tpu.memory_space<vmem>>, vector<1x81x128xf32>
    %261 = vector.shape_cast %260 : vector<1x81x128xf32> to vector<81x128xf32>
    %262 = vector.shape_cast %259 : vector<81x128xf32> to vector<1x81x128xf32>
    tpu.vector_store %arg13[%c0_107, %c0_108, %c0_109], %262 {strides = array<i32>} : memref<1x81x128xf32, #tpu.memory_space<vmem>>, vector<1x81x128xf32>,
    return
  }
  func.func @transform_0(%arg0: i32) -> (i32, i32, i32, i32) {
    %c0_i32 = arith.constant 0 : i32
    %c0_i32_0 = arith.constant 0 : i32
    %c0_i32_1 = arith.constant 0 : i32
    %c0_i32_2 = arith.constant 0 : i32
    return %arg0, %c0_i32, %c0_i32_0, %c0_i32_1 : i32, i32, i32, i32
  }
  func.func @transform_1(%arg0: i32) -> (i32, i32, i32, i32) {
    %c0_i32 = arith.constant 0 : i32
    %c0_i32_0 = arith.constant 0 : i32
    %c0_i32_1 = arith.constant 0 : i32
    %c0_i32_2 = arith.constant 0 : i32
    return %arg0, %c0_i32, %c0_i32_0, %c0_i32_1 : i32, i32, i32, i32
  }
  func.func @transform_2(%arg0: i32) -> (i32, i32, i32) {
    %c0_i32 = arith.constant 0 : i32
    %c0_i32_0 = arith.constant 0 : i32
    %c0_i32_1 = arith.constant 0 : i32
    %c0_i32_2 = arith.constant 0 : i32
    return %c0_i32, %c0_i32_0, %c0_i32_1 : i32, i32, i32
  }
  func.func @transform_3(%arg0: i32) -> (i32, i32, i32) {
    %c0_i32 = arith.constant 0 : i32
    %c0_i32_0 = arith.constant 0 : i32
    %c0_i32_1 = arith.constant 0 : i32
    %c0_i32_2 = arith.constant 0 : i32
    return %c0_i32, %c0_i32_0, %c0_i32_1 : i32, i32, i32
  }
  func.func @transform_4(%arg0: i32) -> (i32, i32) {
    %c0_i32 = arith.constant 0 : i32
    %c0_i32_0 = arith.constant 0 : i32
    %c0_i32_1 = arith.constant 0 : i32
    return %c0_i32, %c0_i32_0 : i32, i32
  }
  func.func @transform_5(%arg0: i32) -> (i32, i32) {
    %c0_i32 = arith.constant 0 : i32
    %c0_i32_0 = arith.constant 0 : i32
    %c0_i32_1 = arith.constant 0 : i32
    return %c0_i32, %c0_i32_0 : i32, i32
  }
  func.func @transform_6(%arg0: i32) -> (i32, i32) {
    %c0_i32 = arith.constant 0 : i32
    %c0_i32_0 = arith.constant 0 : i32
    %c0_i32_1 = arith.constant 0 : i32
    return %c0_i32, %c0_i32_0 : i32, i32
  }
  func.func @transform_7(%arg0: i32) -> (i32, i32) {
    %c0_i32 = arith.constant 0 : i32
    %c0_i32_0 = arith.constant 0 : i32
    %c0_i32_1 = arith.constant 0 : i32
    return %c0_i32, %c0_i32_0 : i32, i32
  }
  func.func @transform_8(%arg0: i32) -> (i32, i32) {
    %c0_i32 = arith.constant 0 : i32
    %c0_i32_0 = arith.constant 0 : i32
    %c0_i32_1 = arith.constant 0 : i32
    return %c0_i32, %c0_i32_0 : i32, i32
  }
  func.func @transform_9(%arg0: i32) -> (i32, i32) {
    %c0_i32 = arith.constant 0 : i32
    %c0_i32_0 = arith.constant 0 : i32
    %c0_i32_1 = arith.constant 0 : i32
    return %c0_i32, %c0_i32_0 : i32, i32
  }
  func.func @transform_10(%arg0: i32) -> (i32, i32) {
    %c0_i32 = arith.constant 0 : i32
    %c0_i32_0 = arith.constant 0 : i32
    %c0_i32_1 = arith.constant 0 : i32
    return %c0_i32, %c0_i32_0 : i32, i32
  }
  func.func @transform_11(%arg0: i32) -> (i32, i32) {
    %c0_i32 = arith.constant 0 : i32
    %c0_i32_0 = arith.constant 0 : i32
    %c0_i32_1 = arith.constant 0 : i32
    return %c0_i32, %c0_i32_0 : i32, i32
  }
  func.func @transform_12(%arg0: i32) -> (i32, i32, i32) {
    %c0_i32 = arith.constant 0 : i32
    %c0_i32_0 = arith.constant 0 : i32
    %c0_i32_1 = arith.constant 0 : i32
    return %arg0, %c0_i32, %c0_i32_0 : i32, i32, i32
  }
}

</mosaic_0001>

<llo_original>
// kernel: depthwise_rpn_forward.1
$region0: #{depthwise_rpn_forward.1}
  #allocation0 [shape = 'u32[]', space=smem, size = 0x4, offset = 0x4, fixed_abs, tag = 'smem constant byte address 0x4 - core index']
  #allocation1 [shape = 'u32[144,128]{1,0:T(1,128)}', space=vmem, size = 0x12000, scoped, tag = 'internal scratch']
  %s0 = inlined_call_operand.vmem [shape: bf16[2,3,112,8], index: 0, kind: input, shape index: {}]
  %s1 = inlined_call_operand.vmem [shape: bf16[2,3,240,8], index: 1, kind: input, shape index: {}]
  %s2 = inlined_call_operand.vmem [shape: bf16[9,8,32], index: 2, kind: input, shape index: {}]
  %s3 = inlined_call_operand.vmem [shape: bf16[9,8,32], index: 3, kind: input, shape index: {}]
  %s4 = inlined_call_operand.vmem [shape: f32[1,32], index: 4, kind: input, shape index: {}]
  %s5 = inlined_call_operand.vmem [shape: f32[1,32], index: 5, kind: input, shape index: {}]
  %s6 = inlined_call_operand.vmem [shape: f32[1,32], index: 6, kind: input, shape index: {}]
  %s7 = inlined_call_operand.vmem [shape: f32[1,32], index: 7, kind: input, shape index: {}]
  %s8 = inlined_call_operand.vmem [shape: f32[32,32], index: 8, kind: input, shape index: {}]
  %s9 = inlined_call_operand.vmem [shape: f32[1,32], index: 9, kind: input, shape index: {}]
  %s10 = inlined_call_operand.vmem [shape: f32[32,128], index: 10, kind: input, shape index: {}]
  %s11 = inlined_call_operand.vmem [shape: f32[1,128], index: 11, kind: input, shape index: {}]
  %s12 = inlined_call_operand.vmem [shape: f32[2,81,128], index: 12, kind: output, shape index: {}]
  %s13 = sld [smem:[#allocation0]]
  $region81: #{depthwise_rpn_forward.1} parent=0
    _
  %s15 = ssub.s32 1, %s13
  %s16 = scalar_select 0, %s15, %s13
  loop: start=0, step=1, limit=4
  $region2: #{depthwise_rpn_forward.1} parent=0 // loop_pre_header
    _
  $region3: #{depthwise_rpn_forward.1} parent=0 // loop_header
    %s18 = sphi 0, %s22
    %p19 = scmp.ge.s32.totalorder %s18, 4
    %s28 = sphi 0, %s30
    %s31 = sphi 0, %s28
    %s32 = sphi 0, %s31
    %s48 = sphi 0, %s32
    %s54 = sphi 0, %s56
    %s57 = sphi 0, %s54
    %s58 = sphi 0, %s57
    %s74 = sphi 0, %s58
    %s78 = sphi 0, %s78
    %s80 = sphi 0, %s78
    %s81 = sphi 0, %s80
    %s95 = sphi 0, %s81
    %s99 = sphi 0, %s99
    %s101 = sphi 0, %s99
    %s102 = sphi 0, %s101
    %s116 = sphi 0, %s102
    %s120 = sphi 0, %s120
    %s122 = sphi 0, %s120
    %s123 = sphi 0, %s122
    %s137 = sphi 0, %s123
    %s141 = sphi 0, %s141
    %s143 = sphi 0, %s141
    %s144 = sphi 0, %s143
    %s158 = sphi 0, %s144
    %s162 = sphi 0, %s162
    %s164 = sphi 0, %s162
    %s165 = sphi 0, %s164
    %s179 = sphi 0, %s165
    %s183 = sphi 0, %s183
    %s185 = sphi 0, %s183
    %s186 = sphi 0, %s185
    %s200 = sphi 0, %s186
    %s204 = sphi 0, %s204
    %s206 = sphi 0, %s204
    %s207 = sphi 0, %s206
    %s221 = sphi 0, %s207
    %s225 = sphi 0, %s225
    %s227 = sphi 0, %s225
    %s228 = sphi 0, %s227
    %s242 = sphi 0, %s228
    %s246 = sphi 0, %s246
    %s248 = sphi 0, %s246
    %s249 = sphi 0, %s248
    %s263 = sphi 0, %s249
    %s267 = sphi 0, %s267
    %s269 = sphi 0, %s267
    %s270 = sphi 0, %s269
    %s284 = sphi 0, %s270
    %s290 = sphi 0, %s292
    %s293 = sphi 0, %s290
    %s294 = sphi 0, %s293
    %s310 = sphi 0, %s294
  $region4: #{depthwise_rpn_forward.1} parent=0 // loop_header_branch
    %21 = sbr.rel (%p19) target = $region8
  $region5: #{depthwise_rpn_forward.1} parent=0 // loop_body
    %s23 = ssub.s32 %s18, 1
    %s24 = ssub.s32 %s18, 2
    %s25 = sadd.s32 %s18, 1
    %s26 = ssub.s32 %s18, %s25
    %p27 = scmp.eq.s32.totalorder %s26, 0
    %s29 = sadd.s32 %s28, 1
    %s30 = scalar_select %p27, %s28, %s29
    %p33 = pneg %p27
    %p34 = scmp.eq.s32.totalorder %s18, 1
    %p35 = por %p33, %p34
    %p36 = scmp.ne.s32.totalorder %s28, %s31
    %p37 = scmp.eq.s32.totalorder %s18, 0
    %p38 = por %p36, %p37
    %p39 = scmp.ne.s32.totalorder %s28, %s31
    %p40 = scmp.eq.s32.totalorder %s23, 1
    %p41 = por %p39, %p40
    %p42 = scmp.ne.s32.totalorder %s31, %s32
    %p43 = scmp.eq.s32.totalorder %s23, 0
    %p44 = por %p42, %p43
    %p45 = scmp.ne.s32.totalorder %s31, %s32
    %p46 = scmp.eq.s32.totalorder %s24, 1
    %p47 = por %p45, %p46
    %p49 = scmp.ne.s32.totalorder %s32, %s48
    %p50 = scmp.eq.s32.totalorder %s24, 0
    %p51 = por %p49, %p50
    %s52 = ssub.s32 %s18, %s25
    %p53 = scmp.eq.s32.totalorder %s52, 0
    %s55 = sadd.s32 %s54, 1
    %s56 = scalar_select %p53, %s54, %s55
    %p59 = pneg %p53
    %p60 = scmp.eq.s32.totalorder %s18, 1
    %p61 = por %p59, %p60
    %p62 = scmp.ne.s32.totalorder %s54, %s57
    %p63 = scmp.eq.s32.totalorder %s18, 0
    %p64 = por %p62, %p63
    %p65 = scmp.ne.s32.totalorder %s54, %s57
    %p66 = scmp.eq.s32.totalorder %s23, 1
    %p67 = por %p65, %p66
    %p68 = scmp.ne.s32.totalorder %s57, %s58
    %p69 = scmp.eq.s32.totalorder %s23, 0
    %p70 = por %p68, %p69
    %p71 = scmp.ne.s32.totalorder %s57, %s58
    %p72 = scmp.eq.s32.totalorder %s24, 1
    %p73 = por %p71, %p72
    %p75 = scmp.ne.s32.totalorder %s58, %s74
    %p76 = scmp.eq.s32.totalorder %s24, 0
    %p77 = por %p75, %p76
    %s79 = sadd.s32 %s78, 1
    %p82 = scmp.eq.s32.totalorder %s18, 1
    %p83 = scmp.ne.s32.totalorder %s78, %s80
    %p84 = scmp.eq.s32.totalorder %s18, 0
    %p85 = por %p83, %p84
    %p86 = scmp.ne.s32.totalorder %s78, %s80
    %p87 = scmp.eq.s32.totalorder %s23, 1
    %p88 = por %p86, %p87
    %p89 = scmp.ne.s32.totalorder %s80, %s81
    %p90 = scmp.eq.s32.totalorder %s23, 0
    %p91 = por %p89, %p90
    %p92 = scmp.ne.s32.totalorder %s80, %s81
    %p93 = scmp.eq.s32.totalorder %s24, 1
    %p94 = por %p92, %p93
    %p96 = scmp.ne.s32.totalorder %s81, %s95
    %p97 = scmp.eq.s32.totalorder %s24, 0
    %p98 = por %p96, %p97
    %s100 = sadd.s32 %s99, 1
    %p103 = scmp.eq.s32.totalorder %s18, 1
    %p104 = scmp.ne.s32.totalorder %s99, %s101
    %p105 = scmp.eq.s32.totalorder %s18, 0
    %p106 = por %p104, %p105
    %p107 = scmp.ne.s32.totalorder %s99, %s101
    %p108 = scmp.eq.s32.totalorder %s23, 1
    %p109 = por %p107, %p108
    %p110 = scmp.ne.s32.totalorder %s101, %s102
    %p111 = scmp.eq.s32.totalorder %s23, 0
    %p112 = por %p110, %p111
    %p113 = scmp.ne.s32.totalorder %s101, %s102
    %p114 = scmp.eq.s32.totalorder %s24, 1
    %p115 = por %p113, %p114
    %p117 = scmp.ne.s32.totalorder %s102, %s116
    %p118 = scmp.eq.s32.totalorder %s24, 0
    %p119 = por %p117, %p118
    %s121 = sadd.s32 %s120, 1
    %p124 = scmp.eq.s32.totalorder %s18, 1
    %p125 = scmp.ne.s32.totalorder %s120, %s122
    %p126 = scmp.eq.s32.totalorder %s18, 0
    %p127 = por %p125, %p126
    %p128 = scmp.ne.s32.totalorder %s120, %s122
    %p129 = scmp.eq.s32.totalorder %s23, 1
    %p130 = por %p128, %p129
    %p131 = scmp.ne.s32.totalorder %s122, %s123
    %p132 = scmp.eq.s32.totalorder %s23, 0
    %p133 = por %p131, %p132
    %p134 = scmp.ne.s32.totalorder %s122, %s123
    %p135 = scmp.eq.s32.totalorder %s24, 1
    %p136 = por %p134, %p135
    %p138 = scmp.ne.s32.totalorder %s123, %s137
    %p139 = scmp.eq.s32.totalorder %s24, 0
    %p140 = por %p138, %p139
    %s142 = sadd.s32 %s141, 1
    %p145 = scmp.eq.s32.totalorder %s18, 1
    %p146 = scmp.ne.s32.totalorder %s141, %s143
    %p147 = scmp.eq.s32.totalorder %s18, 0
    %p148 = por %p146, %p147
    %p149 = scmp.ne.s32.totalorder %s141, %s143
    %p150 = scmp.eq.s32.totalorder %s23, 1
    %p151 = por %p149, %p150
    %p152 = scmp.ne.s32.totalorder %s143, %s144
    %p153 = scmp.eq.s32.totalorder %s23, 0
    %p154 = por %p152, %p153
    %p155 = scmp.ne.s32.totalorder %s143, %s144
    %p156 = scmp.eq.s32.totalorder %s24, 1
    %p157 = por %p155, %p156
    %p159 = scmp.ne.s32.totalorder %s144, %s158
    %p160 = scmp.eq.s32.totalorder %s24, 0
    %p161 = por %p159, %p160
    %s163 = sadd.s32 %s162, 1
    %p166 = scmp.eq.s32.totalorder %s18, 1
    %p167 = scmp.ne.s32.totalorder %s162, %s164
    %p168 = scmp.eq.s32.totalorder %s18, 0
    %p169 = por %p167, %p168
    %p170 = scmp.ne.s32.totalorder %s162, %s164
    %p171 = scmp.eq.s32.totalorder %s23, 1
    %p172 = por %p170, %p171
    %p173 = scmp.ne.s32.totalorder %s164, %s165
    %p174 = scmp.eq.s32.totalorder %s23, 0
    %p175 = por %p173, %p174
    %p176 = scmp.ne.s32.totalorder %s164, %s165
    %p177 = scmp.eq.s32.totalorder %s24, 1
    %p178 = por %p176, %p177
    %p180 = scmp.ne.s32.totalorder %s165, %s179
    %p181 = scmp.eq.s32.totalorder %s24, 0
    %p182 = por %p180, %p181
    %s184 = sadd.s32 %s183, 1
    %p187 = scmp.eq.s32.totalorder %s18, 1
    %p188 = scmp.ne.s32.totalorder %s183, %s185
    %p189 = scmp.eq.s32.totalorder %s18, 0
    %p190 = por %p188, %p189
    %p191 = scmp.ne.s32.totalorder %s183, %s185
    %p192 = scmp.eq.s32.totalorder %s23, 1
    %p193 = por %p191, %p192
    %p194 = scmp.ne.s32.totalorder %s185, %s186
    %p195 = scmp.eq.s32.totalorder %s23, 0
    %p196 = por %p194, %p195
    %p197 = scmp.ne.s32.totalorder %s185, %s186
    %p198 = scmp.eq.s32.totalorder %s24, 1
    %p199 = por %p197, %p198
    %p201 = scmp.ne.s32.totalorder %s186, %s200
    %p202 = scmp.eq.s32.totalorder %s24, 0
    %p203 = por %p201, %p202
    %s205 = sadd.s32 %s204, 1
    %p208 = scmp.eq.s32.totalorder %s18, 1
    %p209 = scmp.ne.s32.totalorder %s204, %s206
    %p210 = scmp.eq.s32.totalorder %s18, 0
    %p211 = por %p209, %p210
    %p212 = scmp.ne.s32.totalorder %s204, %s206
    %p213 = scmp.eq.s32.totalorder %s23, 1
    %p214 = por %p212, %p213
    %p215 = scmp.ne.s32.totalorder %s206, %s207
    %p216 = scmp.eq.s32.totalorder %s23, 0
    %p217 = por %p215, %p216
    %p218 = scmp.ne.s32.totalorder %s206, %s207
    %p219 = scmp.eq.s32.totalorder %s24, 1
    %p220 = por %p218, %p219
    %p222 = scmp.ne.s32.totalorder %s207, %s221
    %p223 = scmp.eq.s32.totalorder %s24, 0
    %p224 = por %p222, %p223
    %s226 = sadd.s32 %s225, 1
    %p229 = scmp.eq.s32.totalorder %s18, 1
    %p230 = scmp.ne.s32.totalorder %s225, %s227
    %p231 = scmp.eq.s32.totalorder %s18, 0
    %p232 = por %p230, %p231
    %p233 = scmp.ne.s32.totalorder %s225, %s227
    %p234 = scmp.eq.s32.totalorder %s23, 1
    %p235 = por %p233, %p234
    %p236 = scmp.ne.s32.totalorder %s227, %s228
    %p237 = scmp.eq.s32.totalorder %s23, 0
    %p238 = por %p236, %p237
    %p239 = scmp.ne.s32.totalorder %s227, %s228
    %p240 = scmp.eq.s32.totalorder %s24, 1
    %p241 = por %p239, %p240
    %p243 = scmp.ne.s32.totalorder %s228, %s242
    %p244 = scmp.eq.s32.totalorder %s24, 0
    %p245 = por %p243, %p244
    %s247 = sadd.s32 %s246, 1
    %p250 = scmp.eq.s32.totalorder %s18, 1
    %p251 = scmp.ne.s32.totalorder %s246, %s248
    %p252 = scmp.eq.s32.totalorder %s18, 0
    %p253 = por %p251, %p252
    %p254 = scmp.ne.s32.totalorder %s246, %s248
    %p255 = scmp.eq.s32.totalorder %s23, 1
    %p256 = por %p254, %p255
    %p257 = scmp.ne.s32.totalorder %s248, %s249
    %p258 = scmp.eq.s32.totalorder %s23, 0
    %p259 = por %p257, %p258
    %p260 = scmp.ne.s32.totalorder %s248, %s249
    %p261 = scmp.eq.s32.totalorder %s24, 1
    %p262 = por %p260, %p261
    %p264 = scmp.ne.s32.totalorder %s249, %s263
    %p265 = scmp.eq.s32.totalorder %s24, 0
    %p266 = por %p264, %p265
    %s268 = sadd.s32 %s267, 1
    %p271 = scmp.eq.s32.totalorder %s18, 1
    %p272 = scmp.ne.s32.totalorder %s267, %s269
    %p273 = scmp.eq.s32.totalorder %s18, 0
    %p274 = por %p272, %p273
    %p275 = scmp.ne.s32.totalorder %s267, %s269
    %p276 = scmp.eq.s32.totalorder %s23, 1
    %p277 = por %p275, %p276
    %p278 = scmp.ne.s32.totalorder %s269, %s270
    %p279 = scmp.eq.s32.totalorder %s23, 0
    %p280 = por %p278, %p279
    %p281 = scmp.ne.s32.totalorder %s269, %s270
    %p282 = scmp.eq.s32.totalorder %s24, 1
    %p283 = por %p281, %p282
    %p285 = scmp.ne.s32.totalorder %s270, %s284
    %p286 = scmp.eq.s32.totalorder %s24, 0
    %p287 = por %p285, %p286
    %s288 = ssub.s32 %s18, %s25
    %p289 = scmp.eq.s32.totalorder %s288, 0
    %s291 = sadd.s32 %s290, 1
    %s292 = scalar_select %p289, %s290, %s291
    %p295 = pneg %p289
    %p296 = scmp.eq.s32.totalorder %s18, 1
    %p297 = por %p295, %p296
    %p298 = scmp.ne.s32.totalorder %s290, %s293
    %p299 = scmp.eq.s32.totalorder %s18, 0
    %p300 = por %p298, %p299
    %p301 = scmp.ne.s32.totalorder %s290, %s293
    %p302 = scmp.eq.s32.totalorder %s23, 1
    %p303 = por %p301, %p302
    %p304 = scmp.ne.s32.totalorder %s293, %s294
    %p305 = scmp.eq.s32.totalorder %s23, 0
    %p306 = por %p304, %p305
    %p307 = scmp.ne.s32.totalorder %s293, %s294
    %p308 = scmp.eq.s32.totalorder %s24, 1
    %p309 = por %p307, %p308
    %p311 = scmp.ne.s32.totalorder %s294, %s310
    %p312 = scmp.eq.s32.totalorder %s24, 0
    %p313 = por %p311, %p312
    %p314 = scmp.le.s32.totalorder 1, %s18
    %p315 = scmp.lt.s32.totalorder %s18, 3
    %p316 = pnand %p314, %p315
    %p317 = pneg %p316
    // Predicated region
    $region9: #{depthwise_rpn_forward.1} parent=5 // pred_check
      _
    $region10: #{depthwise_rpn_forward.1} parent=5 // pred_check_branch
      %319 = sbr.rel (%p316) target = $region12
    $region11: #{depthwise_rpn_forward.1} parent=5 // pred_region
      %s320 = ssub.s32 %s18, 1
      // Predicated region
      $region13: #{depthwise_rpn_forward.1} parent=11 // pred_check
        %p321 = pneg %p91
      $region14: #{depthwise_rpn_forward.1} parent=11 // pred_check_branch
        %323 = sbr.rel (%p321) target = $region16
      $region15: #{depthwise_rpn_forward.1} parent=11 // pred_region
        _
      $region16: #{depthwise_rpn_forward.1} parent=11 // pred_fallthru
        _
      // Predicated region
      $region17: #{depthwise_rpn_forward.1} parent=11 // pred_check
        %p324 = pneg %p112
      $region18: #{depthwise_rpn_forward.1} parent=11 // pred_check_branch
        %326 = sbr.rel (%p324) target = $region20
      $region19: #{depthwise_rpn_forward.1} parent=11 // pred_region
        _
      $region20: #{depthwise_rpn_forward.1} parent=11 // pred_fallthru
        _
      // Predicated region
      $region21: #{depthwise_rpn_forward.1} parent=11 // pred_check
        %p327 = pneg %p133
      $region22: #{depthwise_rpn_forward.1} parent=11 // pred_check_branch
        %329 = sbr.rel (%p327) target = $region24
      $region23: #{depthwise_rpn_forward.1} parent=11 // pred_region
        _
      $region24: #{depthwise_rpn_forward.1} parent=11 // pred_fallthru
        _
      // Predicated region
      $region25: #{depthwise_rpn_forward.1} parent=11 // pred_check
        %p330 = pneg %p154
      $region26: #{depthwise_rpn_forward.1} parent=11 // pred_check_branch
        %332 = sbr.rel (%p330) target = $region28
      $region27: #{depthwise_rpn_forward.1} parent=11 // pred_region
        _
      $region28: #{depthwise_rpn_forward.1} parent=11 // pred_fallthru
        _
      // Predicated region
      $region29: #{depthwise_rpn_forward.1} parent=11 // pred_check
        %p333 = pneg %p175
      $region30: #{depthwise_rpn_forward.1} parent=11 // pred_check_branch
        %335 = sbr.rel (%p333) target = $region32
      $region31: #{depthwise_rpn_forward.1} parent=11 // pred_region
        _
      $region32: #{depthwise_rpn_forward.1} parent=11 // pred_fallthru
        _
      // Predicated region
      $region33: #{depthwise_rpn_forward.1} parent=11 // pred_check
        %p336 = pneg %p196
      $region34: #{depthwise_rpn_forward.1} parent=11 // pred_check_branch
        %338 = sbr.rel (%p336) target = $region36
      $region35: #{depthwise_rpn_forward.1} parent=11 // pred_region
        _
      $region36: #{depthwise_rpn_forward.1} parent=11 // pred_fallthru
        _
      // Predicated region
      $region37: #{depthwise_rpn_forward.1} parent=11 // pred_check
        %p339 = pneg %p217
      $region38: #{depthwise_rpn_forward.1} parent=11 // pred_check_branch
        %341 = sbr.rel (%p339) target = $region40
      $region39: #{depthwise_rpn_forward.1} parent=11 // pred_region
        _
      $region40: #{depthwise_rpn_forward.1} parent=11 // pred_fallthru
        _
      // Predicated region
      $region41: #{depthwise_rpn_forward.1} parent=11 // pred_check
        %p342 = pneg %p238
      $region42: #{depthwise_rpn_forward.1} parent=11 // pred_check_branch
        %344 = sbr.rel (%p342) target = $region44
      $region43: #{depthwise_rpn_forward.1} parent=11 // pred_region
        _
      $region44: #{depthwise_rpn_forward.1} parent=11 // pred_fallthru
        _
      // Predicated region
      $region45: #{depthwise_rpn_forward.1} parent=11 // pred_check
        %p345 = pneg %p259
      $region46: #{depthwise_rpn_forward.1} parent=11 // pred_check_branch
        %347 = sbr.rel (%p345) target = $region48
      $region47: #{depthwise_rpn_forward.1} parent=11 // pred_region
        _
      $region48: #{depthwise_rpn_forward.1} parent=11 // pred_fallthru
        _
      // Predicated region
      $region49: #{depthwise_rpn_forward.1} parent=11 // pred_check
        %p348 = pneg %p280
      $region50: #{depthwise_rpn_forward.1} parent=11 // pred_check_branch
        %350 = sbr.rel (%p348) target = $region52
      $region51: #{depthwise_rpn_forward.1} parent=11 // pred_region
        _
      $region52: #{depthwise_rpn_forward.1} parent=11 // pred_fallthru
        _
    $region12: #{depthwise_rpn_forward.1} parent=5 // pred_fallthru
      _
    %p351 = scmp.lt.s32.totalorder %s18, 2
    // Predicated region
    $region53: #{depthwise_rpn_forward.1} parent=5 // pred_check
      %p352 = pneg %p351
    $region54: #{depthwise_rpn_forward.1} parent=5 // pred_check_branch
      %354 = sbr.rel (%p352) target = $region56
    $region55: #{depthwise_rpn_forward.1} parent=5 // pred_region
      // Predicated region
      $region57: #{depthwise_rpn_forward.1} parent=55 // pred_check
        %p355 = pneg %p38
      $region58: #{depthwise_rpn_forward.1} parent=55 // pred_check_branch
        %357 = sbr.rel (%p355) target = $region60
      $region59: #{depthwise_rpn_forward.1} parent=55 // pred_region
        %p358 = scmp.lt.s32.totalorder %s18, 1
        %s359 = scalar_select %p358, %s18, 1
        %s360 = smul.addr %s359, 42
        %s361 = smul.addr %s360, 4
        %s362 = scalar_lea.vmem %s0, %s361
      $region60: #{depthwise_rpn_forward.1} parent=55 // pred_fallthru
        _
      // Predicated region
      $region61: #{depthwise_rpn_forward.1} parent=55 // pred_check
        %p363 = pneg %p64
      $region62: #{depthwise_rpn_forward.1} parent=55 // pred_check_branch
        %365 = sbr.rel (%p363) target = $region64
      $region63: #{depthwise_rpn_forward.1} parent=55 // pred_region
        %p366 = scmp.lt.s32.totalorder %s18, 1
        %s367 = scalar_select %p366, %s18, 1
        %s368 = smul.addr %s367, 90
        %s369 = smul.addr %s368, 4
        %s370 = scalar_lea.vmem %s1, %s369
      $region64: #{depthwise_rpn_forward.1} parent=55 // pred_fallthru
        _
    $region56: #{depthwise_rpn_forward.1} parent=5 // pred_fallthru
      _
    %p371 = scmp.le.s32.totalorder 1, %s18
    %p372 = scmp.lt.s32.totalorder %s18, 3
    %p373 = pnand %p371, %p372
    %p374 = pneg %p373
    // Predicated region
    $region65: #{depthwise_rpn_forward.1} parent=5 // pred_check
      _
    $region66: #{depthwise_rpn_forward.1} parent=5 // pred_check_branch
      %376 = sbr.rel (%p373) target = $region68
    $region67: #{depthwise_rpn_forward.1} parent=5 // pred_region
      %s377 = ssub.s32 %s18, 1
      %p378 = scmp.lt.s32.totalorder %s23, 1
      %s379 = scalar_select %p378, %s23, 1
      %s380 = smul.addr %s379, 42
      %s381 = smul.addr %s380, 4
      %s382 = scalar_lea.vmem %s0, %s381
      %p383 = pneg %p44
      %p384 = pneg %p41
      %p385 = scmp.lt.s32.totalorder %s23, 1
      %s386 = scalar_select %p385, %s23, 1
      %s387 = smul.addr %s386, 90
      %s388 = smul.addr %s387, 4
      %s389 = scalar_lea.vmem %s1, %s388
      %p390 = pneg %p70
      %p391 = pneg %p67
      %p392 = pneg %p91
      %p393 = pneg %p88
      %p394 = pneg %p112
      %p395 = pneg %p109
      %p396 = pneg %p133
      %p397 = pneg %p130
      %p398 = pneg %p154
      %p399 = pneg %p151
      %p400 = pneg %p175
      %p401 = pneg %p172
      %p402 = pneg %p196
      %p403 = pneg %p193
      %p404 = pneg %p217
      %p405 = pneg %p214
      %p406 = pneg %p238
      %p407 = pneg %p235
      %p408 = pneg %p259
      %p409 = pneg %p256
      %p410 = pneg %p280
      %p411 = pneg %p277
      %p412 = pneg %p306
      %p413 = pneg %p303
      %p414 = scmp.lt.s32.totalorder %s23, 1
      %s415 = scalar_select %p414, %s23, 1
      %s416 = smul.addr %s415, 11
      %s417 = smul.addr %s416, 8
      %s418 = scalar_lea.vmem %s12, %s417
      %p419 = scmp.lt.s32.totalorder %s23, 1
      %s420 = scalar_select %p419, %s23, 1
      %s421 = smul.addr %s420, 42
      %s422 = smul.addr %s421, 4
      %s423 = scalar_lea.vmem %s0, %s422
      %p424 = scmp.lt.s32.totalorder %s23, 1
      %s425 = scalar_select %p424, %s23, 1
      %s426 = smul.addr %s425, 90
      %s427 = smul.addr %s426, 4
      %s428 = scalar_lea.vmem %s1, %s427
      %p429 = scmp.lt.s32.totalorder %s23, 1
      %s430 = scalar_select %p429, %s23, 1
      %s431 = smul.addr %s430, 11
      %s432 = smul.addr %s431, 8
      %s433 = scalar_lea.vmem %s12, %s432
      %v435 = vld [vmem:[%s4] sm:$0x1]
      %v436 = vld [vmem:[%s5] sm:$0x1]
      %v437 = vld [vmem:[%s423] sm:$0xf]
      %v438 = vld [vmem:[%s423 + $0x4] sm:$0xf]
      %v439 = vld [vmem:[%s423 + $0x8] sm:$0xf]
      %v440 = vld [vmem:[%s423 + $0xc] sm:$0xf]
      %v441 = vld [vmem:[%s423 + $0x10] sm:$0xf]
      %v442 = vld [vmem:[%s423 + $0x14] sm:$0xf]
      %v443 = vld [vmem:[%s423 + $0x18] sm:$0xf]
      %v444 = vld [vmem:[%s423 + $0x1c] sm:$0xf]
      %v445 = vld [vmem:[%s423 + $0x20] sm:$0xf]
      %v446 = vld [vmem:[%s423 + $0x24] sm:$0xf]
      %v447 = vld [vmem:[%s423 + $0x28] sm:$0xf]
      %v448 = vld [vmem:[%s423 + $0x2c] sm:$0xf]
      %v449 = vld [vmem:[%s423 + $0x30] sm:$0xf]
      %v450 = vld [vmem:[%s423 + $0x34] sm:$0xf]
      %v451 = vld [vmem:[%s2] sm:$0xf]
      %s452 = scalar_lea.vmem %s2, 12
      %v453 = vld [vmem:[%s452] sm:$0xf]
      %v464 = vunpack.c.l.b16 %v439
      %v465 = vunpack.c.l.b16 %v440
      %v466 = vunpack.c.l.b16 %v441
      %v467 = vunpack.c.l.b16 %v442
      %v468 = vunpack.c.l.b16 %v443
      %v469 = vunpack.c.l.b16 %v444
      %v470 = vunpack.c.l.b16 %v445
      %v471 = vunpack.c.l.b16 %v446
      %v472 = vunpack.c.l.b16 %v447
      %v473 = vunpack.c.l.b16 %v448
      %v474 = vpack.c.b16 %v465, %v464
      %v475 = vpack.c.b16 %v467, %v466
      %v476 = vpack.c.b16 %v469, %v468
      %v477 = vpack.c.b16 %v471, %v470
      %v478 = vpack.c.b16 %v473, %v472
      %vm479 = vcmask 64512
      %v481 = vsel %vm479, %v474, 0
      %v484 = vsel %vm479, %v475, 0
      %v487 = vsel %vm479, %v476, 0
      %v490 = vsel %vm479, %v477, 0
      %v493 = vsel %vm479, %v478, 0
      %vm495 = vcmask 1043456
      %v497 = vsel %vm495, %v453, 0
      %499 = vmatprep.subr.bf16.mxu0 0
      %500 = vmatpush1.bf16.msra.mxu0 %v497
      %501 = vmatprep.subr.bf16.mxu0 0
      %502 = vmatpush1.bf16.msra.mxu0 0
      %503 = vmatprep.subr.bf16.mxu0 0
      %504 = vmatpush1.bf16.msra.mxu0 0
      %505 = vmatprep.subr.bf16.mxu0 0
      %506 = vmatpush1.bf16.msra.mxu0 0
      %507 = vmatprep.subr.bf16.mxu0 0
      %508 = vmatpush1.bf16.msra.mxu0 0
      %509 = vmatprep.subr.bf16.mxu0 0
      %510 = vmatpush1.bf16.msra.mxu0 0
      %511 = vmatprep.subr.bf16.mxu0 0
      %512 = vmatpush1.bf16.msra.mxu0 0
      %513 = vmatprep.subr.bf16.mxu0 0
      %514 = vmatpush1.bf16.msra.mxu0 0
      %515 = vmatprep.subr.bf16.mxu0 0
      %516 = vmatpush1.bf16.msra.mxu0 0
      %517 = vmatprep.subr.bf16.mxu0 0
      %518 = vmatpush1.bf16.msra.mxu0 0
      %519 = vmatprep.subr.bf16.mxu0 0
      %520 = vmatpush1.bf16.msra.mxu0 0
      %521 = vmatprep.subr.bf16.mxu0 0
      %522 = vmatpush1.bf16.msra.mxu0 0
      %523 = vmatprep.subr.bf16.mxu0 0
      %524 = vmatpush1.bf16.msra.mxu0 0
      %525 = vmatprep.subr.bf16.mxu0 0
      %526 = vmatpush1.bf16.msra.mxu0 0
      %527 = vmatprep.subr.bf16.mxu0 0
      %528 = vmatpush1.bf16.msra.mxu0 0
      %529 = vmatprep.subr.bf16.mxu0 0
      %530 = vmatpush1.bf16.msra.mxu0 0
      %531 = vmatprep.mubr.bf16.mxu0 0
      %532 = vmatmul.mubr.bf16.gmra.mrb[0].mxu0 %v481
      %v533 = vpop.f32.mrb[0].mxu0
      %v534 = vadd.f32 0.0, %v533
      %v535 = vpop.f32.mrb[0].mxu0
      %v536 = vpop.f32.mrb[0].mxu0
      %v537 = vpop.f32.mrb[0].mxu0
      %538 = vmatprep.mubr.bf16.mxu0 0
      %539 = vmatmul.mubr.bf16.gmra.mrb[0].mxu0 %v484
      %v540 = vpop.f32.mrb[0].mxu0
      %v541 = vadd.f32 0.0, %v540
      %v542 = vpop.f32.mrb[0].mxu0
      %v543 = vpop.f32.mrb[0].mxu0
      %v544 = vpop.f32.mrb[0].mxu0
      %545 = vmatprep.mubr.bf16.mxu0 0
      %546 = vmatmul.mubr.bf16.gmra.mrb[0].mxu0 %v487
      %v547 = vpop.f32.mrb[0].mxu0
      %v548 = vadd.f32 0.0, %v547
      %v549 = vpop.f32.mrb[0].mxu0
      %v550 = vpop.f32.mrb[0].mxu0
      %v551 = vpop.f32.mrb[0].mxu0
      %552 = vmatprep.mubr.bf16.mxu0 0
      %553 = vmatmul.mubr.bf16.gmra.mrb[0].mxu0 %v490
      %v554 = vpop.f32.mrb[0].mxu0
      %v555 = vadd.f32 0.0, %v554
      %v556 = vpop.f32.mrb[0].mxu0
      %v557 = vpop.f32.mrb[0].mxu0
      %v558 = vpop.f32.mrb[0].mxu0
      %559 = vmatprep.mubr.bf16.mxu0 0
      %560 = vmatmul.mubr.bf16.gmra.mrb[0].mxu0 %v493
      %v561 = vpop.f32.mrb[0].mxu0
      %v562 = vadd.f32 0.0, %v561
      %v563 = vpop.f32.mrb[0].mxu0
      %v564 = vpop.f32.mrb[0].mxu0
      %v565 = vpop.f32.mrb[0].mxu0
      %566 = vdwg.mxu0
      %v569 = vunpack.c.l.b16 %v437
      %v570 = vunpack.c.l.b16 %v438
      %v571 = vpack.c.b16 %v570, %v569
      %v573 = vsel %vm479, %v571, 0
      %v576 = vsel %vm495, %v451, 0
      %578 = vmatprep.subr.bf16.mxu0 0
      %579 = vmatpush1.bf16.msra.mxu0 %v576
      %580 = vmatprep.subr.bf16.mxu0 0
      %581 = vmatpush1.bf16.msra.mxu0 0
      %582 = vmatprep.subr.bf16.mxu0 0
      %583 = vmatpush1.bf16.msra.mxu0 0
      %584 = vmatprep.subr.bf16.mxu0 0
      %585 = vmatpush1.bf16.msra.mxu0 0
      %586 = vmatprep.subr.bf16.mxu0 0
      %587 = vmatpush1.bf16.msra.mxu0 0
      %588 = vmatprep.subr.bf16.mxu0 0
      %589 = vmatpush1.bf16.msra.mxu0 0
      %590 = vmatprep.subr.bf16.mxu0 0
      %591 = vmatpush1.bf16.msra.mxu0 0
      %592 = vmatprep.subr.bf16.mxu0 0
      %593 = vmatpush1.bf16.msra.mxu0 0
      %594 = vmatprep.subr.bf16.mxu0 0
      %595 = vmatpush1.bf16.msra.mxu0 0
      %596 = vmatprep.subr.bf16.mxu0 0
      %597 = vmatpush1.bf16.msra.mxu0 0
      %598 = vmatprep.subr.bf16.mxu0 0
      %599 = vmatpush1.bf16.msra.mxu0 0
      %600 = vmatprep.subr.bf16.mxu0 0
      %601 = vmatpush1.bf16.msra.mxu0 0
      %602 = vmatprep.subr.bf16.mxu0 0
      %603 = vmatpush1.bf16.msra.mxu0 0
      %604 = vmatprep.subr.bf16.mxu0 0
      %605 = vmatpush1.bf16.msra.mxu0 0
      %606 = vmatprep.subr.bf16.mxu0 0
      %607 = vmatpush1.bf16.msra.mxu0 0
      %608 = vmatprep.subr.bf16.mxu0 0
      %609 = vmatpush1.bf16.msra.mxu0 0
      %610 = vmatprep.mubr.bf16.mxu0 0
      %611 = vmatmul.mubr.bf16.gmra.mrb[0].mxu0 %v573
      %v612 = vpop.f32.mrb[0].mxu0
      %v613 = vadd.f32 %v534, %v612
      %v614 = vpop.f32.mrb[0].mxu0
      %v615 = vpop.f32.mrb[0].mxu0
      %v616 = vpop.f32.mrb[0].mxu0
      %617 = vmatprep.mubr.bf16.mxu0 0
      %618 = vmatmul.mubr.bf16.gmra.mrb[0].mxu0 %v481
      %v619 = vpop.f32.mrb[0].mxu0
      %v620 = vadd.f32 %v541, %v619
      %v621 = vpop.f32.mrb[0].mxu0
      %v622 = vpop.f32.mrb[0].mxu0
      %v623 = vpop.f32.mrb[0].mxu0
      %624 = vmatprep.mubr.bf16.mxu0 0
      %625 = vmatmul.mubr.bf16.gmra.mrb[0].mxu0 %v484
      %v626 = vpop.f32.mrb[0].mxu0
      %v627 = vadd.f32 %v548, %v626
      %v628 = vpop.f32.mrb[0].mxu0
      %v629 = vpop.f32.mrb[0].mxu0
      %v630 = vpop.f32.mrb[0].mxu0
      %631 = vmatprep.mubr.bf16.mxu0 0
      %632 = vmatmul.mubr.bf16.gmra.mrb[0].mxu0 %v487
      %v633 = vpop.f32.mrb[0].mxu0
      %v634 = vadd.f32 %v555, %v633
      %v635 = vpop.f32.mrb[0].mxu0
      %v636 = vpop.f32.mrb[0].mxu0
      %v637 = vpop.f32.mrb[0].mxu0
      %638 = vmatprep.mubr.bf16.mxu0 0
      %639 = vmatmul.mubr.bf16.gmra.mrb[0].mxu0 %v490
      %v640 = vpop.f32.mrb[0].mxu0
      %v641 = vadd.f32 %v562, %v640
      %v642 = vpop.f32.mrb[0].mxu0
      %v643 = vpop.f32.mrb[0].mxu0
      %v644 = vpop.f32.mrb[0].mxu0
      %645 = vdwg.mxu0
      %s646 = scalar_lea.vmem %s2, 24
      %v647 = vld [vmem:[%s646] sm:$0xf]
      %v650 = vunpack.c.l.b16 %v449
      %v651 = vunpack.c.l.b16 %v450
      %v652 = vpack.c.b16 %v651, %v650
      %v654 = vsel %vm479, %v652, 0
      %v657 = vsel %vm495, %v647, 0
      %659 = vmatprep.subr.bf16.mxu0 0
      %660 = vmatpush1.bf16.msra.mxu0 %v657
      %661 = vmatprep.subr.bf16.mxu0 0
      %662 = vmatpush1.bf16.msra.mxu0 0
      %663 = vmatprep.subr.bf16.mxu0 0
      %664 = vmatpush1.bf16.msra.mxu0 0
      %665 = vmatprep.subr.bf16.mxu0 0
      %666 = vmatpush1.bf16.msra.mxu0 0
      %667 = vmatprep.subr.bf16.mxu0 0
      %668 = vmatpush1.bf16.msra.mxu0 0
      %669 = vmatprep.subr.bf16.mxu0 0
      %670 = vmatpush1.bf16.msra.mxu0 0
      %671 = vmatprep.subr.bf16.mxu0 0
      %672 = vmatpush1.bf16.msra.mxu0 0
      %673 = vmatprep.subr.bf16.mxu0 0
      %674 = vmatpush1.bf16.msra.mxu0 0
      %675 = vmatprep.subr.bf16.mxu0 0
      %676 = vmatpush1.bf16.msra.mxu0 0
      %677 = vmatprep.subr.bf16.mxu0 0
      %678 = vmatpush1.bf16.msra.mxu0 0
      %679 = vmatprep.subr.bf16.mxu0 0
      %680 = vmatpush1.bf16.msra.mxu0 0
      %681 = vmatprep.subr.bf16.mxu0 0
      %682 = vmatpush1.bf16.msra.mxu0 0
      %683 = vmatprep.subr.bf16.mxu0 0
      %684 = vmatpush1.bf16.msra.mxu0 0
      %685 = vmatprep.subr.bf16.mxu0 0
      %686 = vmatpush1.bf16.msra.mxu0 0
      %687 = vmatprep.subr.bf16.mxu0 0
      %688 = vmatpush1.bf16.msra.mxu0 0
      %689 = vmatprep.subr.bf16.mxu0 0
      %690 = vmatpush1.bf16.msra.mxu0 0
      %691 = vmatprep.mubr.bf16.mxu0 0
      %692 = vmatmul.mubr.bf16.gmra.mrb[0].mxu0 %v484
      %v693 = vpop.f32.mrb[0].mxu0
      %v694 = vadd.f32 0.0, %v693
      %v695 = vpop.f32.mrb[0].mxu0
      %v696 = vpop.f32.mrb[0].mxu0
      %v697 = vpop.f32.mrb[0].mxu0
      %698 = vmatprep.mubr.bf16.mxu0 0
      %699 = vmatmul.mubr.bf16.gmra.mrb[0].mxu0 %v487
      %v700 = vpop.f32.mrb[0].mxu0
      %v701 = vadd.f32 0.0, %v700
      %v702 = vpop.f32.mrb[0].mxu0
      %v703 = vpop.f32.mrb[0].mxu0
      %v704 = vpop.f32.mrb[0].mxu0
      %705 = vmatprep.mubr.bf16.mxu0 0
      %706 = vmatmul.mubr.bf16.gmra.mrb[0].mxu0 %v490
      %v707 = vpop.f32.mrb[0].mxu0
      %v708 = vadd.f32 0.0, %v707
      %v709 = vpop.f32.mrb[0].mxu0
      %v710 = vpop.f32.mrb[0].mxu0
      %v711 = vpop.f32.mrb[0].mxu0
      %712 = vmatprep.mubr.bf16.mxu0 0
      %713 = vmatmul.mubr.bf16.gmra.mrb[0].mxu0 %v493
      %v714 = vpop.f32.mrb[0].mxu0
      %v715 = vadd.f32 0.0, %v714
      %v716 = vpop.f32.mrb[0].mxu0
      %v717 = vpop.f32.mrb[0].mxu0
      %v718 = vpop.f32.mrb[0].mxu0
      %719 = vmatprep.mubr.bf16.mxu0 0
      %720 = vmatmul.mubr.bf16.gmra.mrb[0].mxu0 %v654
      %v721 = vpop.f32.mrb[0].mxu0
      %v722 = vadd.f32 0.0, %v721
      %v723 = vpop.f32.mrb[0].mxu0
      %v724 = vpop.f32.mrb[0].mxu0
      %v725 = vpop.f32.mrb[0].mxu0
      %726 = vdwg.mxu0
      %v727 = vadd.f32 %v613, %v694
      %v728 = vadd.f32 %v620, %v701
      %v729 = vadd.f32 %v627, %v708
      %v730 = vadd.f32 %v634, %v715
      %v731 = vadd.f32 %v641, %v722
      %s732 = scalar_lea.vmem %s423, 56
      %v733 = vld [vmem:[%s732] sm:$0xf]
      %v734 = vld [vmem:[%s732 + $0x4] sm:$0xf]
      %v735 = vld [vmem:[%s732 + $0x8] sm:$0xf]
      %v736 = vld [vmem:[%s732 + $0xc] sm:$0xf]
      %v737 = vld [vmem:[%s732 + $0x10] sm:$0xf]
      %v738 = vld [vmem:[%s732 + $0x14] sm:$0xf]
      %v739 = vld [vmem:[%s732 + $0x18] sm:$0xf]
      %v740 = vld [vmem:[%s732 + $0x1c] sm:$0xf]
      %v741 = vld [vmem:[%s732 + $0x20] sm:$0xf]
      %v742 = vld [vmem:[%s732 + $0x24] sm:$0xf]
      %v743 = vld [vmem:[%s732 + $0x28] sm:$0xf]
      %v744 = vld [vmem:[%s732 + $0x2c] sm:$0xf]
      %v745 = vld [vmem:[%s732 + $0x30] sm:$0xf]
      %v746 = vld [vmem:[%s732 + $0x34] sm:$0xf]
      %s747 = scalar_lea.vmem %s2, 4
      %v748 = vld [vmem:[%s747] sm:$0xf]
      %v759 = vunpack.c.l.b16 %v733
      %v760 = vunpack.c.l.b16 %v734
      %v761 = vunpack.c.l.b16 %v735
      %v762 = vunpack.c.l.b16 %v736
      %v763 = vunpack.c.l.b16 %v737
      %v764 = vunpack.c.l.b16 %v738
      %v765 = vunpack.c.l.b16 %v739
      %v766 = vunpack.c.l.b16 %v740
      %v767 = vunpack.c.l.b16 %v741
      %v768 = vunpack.c.l.b16 %v742
      %v769 = vpack.c.b16 %v760, %v759
      %v770 = vpack.c.b16 %v762, %v761
      %v771 = vpack.c.b16 %v764, %v763
      %v772 = vpack.c.b16 %v766, %v765
      %v773 = vpack.c.b16 %v768, %v767
      %v775 = vsel %vm479, %v769, 0
      %v778 = vsel %vm479, %v770, 0
      %v781 = vsel %vm479, %v771, 0
      %v784 = vsel %vm479, %v772, 0
      %v787 = vsel %vm479, %v773, 0
      %v790 = vsel %vm495, %v748, 0
      %792 = vmatprep.subr.bf16.mxu0 0
      %793 = vmatpush1.bf16.msra.mxu0 %v790
      %794 = vmatprep.subr.bf16.mxu0 0
      %795 = vmatpush1.bf16.msra.mxu0 0
      %796 = vmatprep.subr.bf16.mxu0 0
      %797 = vmatpush1.bf16.msra.mxu0 0
      %798 = vmatprep.subr.bf16.mxu0 0
      %799 = vmatpush1.bf16.msra.mxu0 0
      %800 = vmatprep.subr.bf16.mxu0 0
      %801 = vmatpush1.bf16.msra.mxu0 0
      %802 = vmatprep.subr.bf16.mxu0 0
      %803 = vmatpush1.bf16.msra.mxu0 0
      %804 = vmatprep.subr.bf16.mxu0 0
      %805 = vmatpush1.bf16.msra.mxu0 0
      %806 = vmatprep.subr.bf16.mxu0 0
      %807 = vmatpush1.bf16.msra.mxu0 0
      %808 = vmatprep.subr.bf16.mxu0 0
      %809 = vmatpush1.bf16.msra.mxu0 0
      %810 = vmatprep.subr.bf16.mxu0 0
      %811 = vmatpush1.bf16.msra.mxu0 0
      %812 = vmatprep.subr.bf16.mxu0 0
      %813 = vmatpush1.bf16.msra.mxu0 0
      %814 = vmatprep.subr.bf16.mxu0 0
      %815 = vmatpush1.bf16.msra.mxu0 0
      %816 = vmatprep.subr.bf16.mxu0 0
      %817 = vmatpush1.bf16.msra.mxu0 0
      %818 = vmatprep.subr.bf16.mxu0 0
      %819 = vmatpush1.bf16.msra.mxu0 0
      %820 = vmatprep.subr.bf16.mxu0 0
      %821 = vmatpush1.bf16.msra.mxu0 0
      %822 = vmatprep.subr.bf16.mxu0 0
      %823 = vmatpush1.bf16.msra.mxu0 0
      %824 = vmatprep.mubr.bf16.mxu0 0
      %825 = vmatmul.mubr.bf16.gmra.mrb[0].mxu0 %v775
      %v826 = vpop.f32.mrb[0].mxu0
      %v827 = vadd.f32 0.0, %v826
      %v828 = vpop.f32.mrb[0].mxu0
      %v829 = vpop.f32.mrb[0].mxu0
      %v830 = vpop.f32.mrb[0].mxu0
      %831 = vmatprep.mubr.bf16.mxu0 0
      %832 = vmatmul.mubr.bf16.gmra.mrb[0].mxu0 %v778
      %v833 = vpop.f32.mrb[0].mxu0
      %v834 = vadd.f32 0.0, %v833
      %v835 = vpop.f32.mrb[0].mxu0
      %v836 = vpop.f32.mrb[0].mxu0
      %v837 = vpop.f32.mrb[0].mxu0
      %838 = vmatprep.mubr.bf16.mxu0 0
      %839 = vmatmul.mubr.bf16.gmra.mrb[0].mxu0 %v781
      %v840 = vpop.f32.mrb[0].mxu0
      %v841 = vadd.f32 0.0, %v840
      %v842 = vpop.f32.mrb[0].mxu0
      %v843 = vpop.f32.mrb[0].mxu0
      %v844 = vpop.f32.mrb[0].mxu0
      %845 = vmatprep.mubr.bf16.mxu0 0
      %846 = vmatmul.mubr.bf16.gmra.mrb[0].mxu0 %v784
      %v847 = vpop.f32.mrb[0].mxu0
      %v848 = vadd.f32 0.0, %v847
      %v849 = vpop.f32.mrb[0].mxu0
      %v850 = vpop.f32.mrb[0].mxu0
      %v851 = vpop.f32.mrb[0].mxu0
      %852 = vmatprep.mubr.bf16.mxu0 0
      %853 = vmatmul.mubr.bf16.gmra.mrb[0].mxu0 %v787
      %v854 = vpop.f32.mrb[0].mxu0
      %v855 = vadd.f32 0.0, %v854
      %v856 = vpop.f32.mrb[0].mxu0
      %v857 = vpop.f32.mrb[0].mxu0
      %v858 = vpop.f32.mrb[0].mxu0
      %859 = vdwg.mxu0
      %v860 = vadd.f32 %v727, %v827
      %v861 = vadd.f32 %v728, %v834
      %v862 = vadd.f32 %v729, %v841
      %v863 = vadd.f32 %v730, %v848
      %v864 = vadd.f32 %v731, %v855
      %s865 = scalar_lea.vmem %s2, 16
      %v866 = vld [vmem:[%s865] sm:$0xf]
      %v869 = vunpack.c.l.b16 %v743
      %v870 = vunpack.c.l.b16 %v744
      %v871 = vpack.c.b16 %v870, %v869
      %v873 = vsel %vm479, %v871, 0
      %v876 = vsel %vm495, %v866, 0
      %878 = vmatprep.subr.bf16.mxu0 0
      %879 = vmatpush1.bf16.msra.mxu0 %v876
      %880 = vmatprep.subr.bf16.mxu0 0
      %881 = vmatpush1.bf16.msra.mxu0 0
      %882 = vmatprep.subr.bf16.mxu0 0
      %883 = vmatpush1.bf16.msra.mxu0 0
      %884 = vmatprep.subr.bf16.mxu0 0
      %885 = vmatpush1.bf16.msra.mxu0 0
      %886 = vmatprep.subr.bf16.mxu0 0
      %887 = vmatpush1.bf16.msra.mxu0 0
      %888 = vmatprep.subr.bf16.mxu0 0
      %889 = vmatpush1.bf16.msra.mxu0 0
      %890 = vmatprep.subr.bf16.mxu0 0
      %891 = vmatpush1.bf16.msra.mxu0 0
      %892 = vmatprep.subr.bf16.mxu0 0
      %893 = vmatpush1.bf16.msra.mxu0 0
      %894 = vmatprep.subr.bf16.mxu0 0
      %895 = vmatpush1.bf16.msra.mxu0 0
      %896 = vmatprep.subr.bf16.mxu0 0
      %897 = vmatpush1.bf16.msra.mxu0 0
      %898 = vmatprep.subr.bf16.mxu0 0
      %899 = vmatpush1.bf16.msra.mxu0 0
      %900 = vmatprep.subr.bf16.mxu0 0
      %901 = vmatpush1.bf16.msra.mxu0 0
      %902 = vmatprep.subr.bf16.mxu0 0
      %903 = vmatpush1.bf16.msra.mxu0 0
      %904 = vmatprep.subr.bf16.mxu0 0
      %905 = vmatpush1.bf16.msra.mxu0 0
      %906 = vmatprep.subr.bf16.mxu0 0
      %907 = vmatpush1.bf16.msra.mxu0 0
      %908 = vmatprep.subr.bf16.mxu0 0
      %909 = vmatpush1.bf16.msra.mxu0 0
      %910 = vmatprep.mubr.bf16.mxu0 0
      %911 = vmatmul.mubr.bf16.gmra.mrb[0].mxu0 %v778
      %v912 = vpop.f32.mrb[0].mxu0
      %v913 = vadd.f32 0.0, %v912
      %v914 = vpop.f32.mrb[0].mxu0
      %v915 = vpop.f32.mrb[0].mxu0
      %v916 = vpop.f32.mrb[0].mxu0
      %917 = vmatprep.mubr.bf16.mxu0 0
      %918 = vmatmul.mubr.bf16.gmra.mrb[0].mxu0 %v781
      %v919 = vpop.f32.mrb[0].mxu0
      %v920 = vadd.f32 0.0, %v919
      %v921 = vpop.f32.mrb[0].mxu0
      %v922 = vpop.f32.mrb[0].mxu0
      %v923 = vpop.f32.mrb[0].mxu0
      %924 = vmatprep.mubr.bf16.mxu0 0
      %925 = vmatmul.mubr.bf16.gmra.mrb[0].mxu0 %v784
      %v926 = vpop.f32.mrb[0].mxu0
      %v927 = vadd.f32 0.0, %v926
      %v928 = vpop.f32.mrb[0].mxu0
      %v929 = vpop.f32.mrb[0].mxu0
      %v930 = vpop.f32.mrb[0].mxu0
      %931 = vmatprep.mubr.bf16.mxu0 0
      %932 = vmatmul.mubr.bf16.gmra.mrb[0].mxu0 %v787
      %v933 = vpop.f32.mrb[0].mxu0
      %v934 = vadd.f32 0.0, %v933
      %v935 = vpop.f32.mrb[0].mxu0
      %v936 = vpop.f32.mrb[0].mxu0
      %v937 = vpop.f32.mrb[0].mxu0
      %938 = vmatprep.mubr.bf16.mxu0 0
      %939 = vmatmul.mubr.bf16.gmra.mrb[0].mxu0 %v873
      %v940 = vpop.f32.mrb[0].mxu0
      %v941 = vadd.f32 0.0, %v940
      %v942 = vpop.f32.mrb[0].mxu0
      %v943 = vpop.f32.mrb[0].mxu0
      %v944 = vpop.f32.mrb[0].mxu0
      %945 = vdwg.mxu0
      %v946 = vadd.f32 %v860, %v913
      %v947 = vadd.f32 %v861, %v920
      %v948 = vadd.f32 %v862, %v927
      %v949 = vadd.f32 %v863, %v934
      %v950 = vadd.f32 %v864, %v941
      %s951 = scalar_lea.vmem %s2, 28
      %v952 = vld [vmem:[%s951] sm:$0xf]
      %v955 = vunpack.c.l.b16 %v745
      %v956 = vunpack.c.l.b16 %v746
      %v957 = vpack.c.b16 %v956, %v955
      %v959 = vsel %vm479, %v957, 0
      %v962 = vsel %vm495, %v952, 0
      %964 = vmatprep.subr.bf16.mxu0 0
      %965 = vmatpush1.bf16.msra.mxu0 %v962
      %966 = vmatprep.subr.bf16.mxu0 0
      %967 = vmatpush1.bf16.msra.mxu0 0
      %968 = vmatprep.subr.bf16.mxu0 0
      %969 = vmatpush1.bf16.msra.mxu0 0
      %970 = vmatprep.subr.bf16.mxu0 0
      %971 = vmatpush1.bf16.msra.mxu0 0
      %972 = vmatprep.subr.bf16.mxu0 0
      %973 = vmatpush1.bf16.msra.mxu0 0
      %974 = vmatprep.subr.bf16.mxu0 0
      %975 = vmatpush1.bf16.msra.mxu0 0
      %976 = vmatprep.subr.bf16.mxu0 0
      %977 = vmatpush1.bf16.msra.mxu0 0
      %978 = vmatprep.subr.bf16.mxu0 0
      %979 = vmatpush1.bf16.msra.mxu0 0
      %980 = vmatprep.subr.bf16.mxu0 0
      %981 = vmatpush1.bf16.msra.mxu0 0
      %982 = vmatprep.subr.bf16.mxu0 0
      %983 = vmatpush1.bf16.msra.mxu0 0
      %984 = vmatprep.subr.bf16.mxu0 0
      %985 = vmatpush1.bf16.msra.mxu0 0
      %986 = vmatprep.subr.bf16.mxu0 0
      %987 = vmatpush1.bf16.msra.mxu0 0
      %988 = vmatprep.subr.bf16.mxu0 0
      %989 = vmatpush1.bf16.msra.mxu0 0
      %990 = vmatprep.subr.bf16.mxu0 0
      %991 = vmatpush1.bf16.msra.mxu0 0
      %992 = vmatprep.subr.bf16.mxu0 0
      %993 = vmatpush1.bf16.msra.mxu0 0
      %994 = vmatprep.subr.bf16.mxu0 0
      %995 = vmatpush1.bf16.msra.mxu0 0
      %996 = vmatprep.mubr.bf16.mxu0 0
      %997 = vmatmul.mubr.bf16.gmra.mrb[0].mxu0 %v781
      %v998 = vpop.f32.mrb[0].mxu0
      %v999 = vadd.f32 0.0, %v998
      %v1000 = vpop.f32.mrb[0].mxu0
      %v1001 = vpop.f32.mrb[0].mxu0
      %v1002 = vpop.f32.mrb[0].mxu0
      %1003 = vmatprep.mubr.bf16.mxu0 0
      %1004 = vmatmul.mubr.bf16.gmra.mrb[0].mxu0 %v784
      %v1005 = vpop.f32.mrb[0].mxu0
      %v1006 = vadd.f32 0.0, %v1005
      %v1007 = vpop.f32.mrb[0].mxu0
      %v1008 = vpop.f32.mrb[0].mxu0
      %v1009 = vpop.f32.mrb[0].mxu0
      %1010 = vmatprep.mubr.bf16.mxu0 0
      %1011 = vmatmul.mubr.bf16.gmra.mrb[0].mxu0 %v787
      %v1012 = vpop.f32.mrb[0].mxu0
      %v1013 = vadd.f32 0.0, %v1012
      %v1014 = vpop.f32.mrb[0].mxu0
      %v1015 = vpop.f32.mrb[0].mxu0
      %v1016 = vpop.f32.mrb[0].mxu0
      %1017 = vmatprep.mubr.bf16.mxu0 0
      %1018 = vmatmul.mubr.bf16.gmra.mrb[0].mxu0 %v873
      %v1019 = vpop.f32.mrb[0].mxu0
      %v1020 = vadd.f32 0.0, %v1019
      %v1021 = vpop.f32.mrb[0].mxu0
      %v1022 = vpop.f32.mrb[0].mxu0
      %v1023 = vpop.f32.mrb[0].mxu0
      %1024 = vmatprep.mubr.bf16.mxu0 0
      %1025 = vmatmul.mubr.bf16.gmra.mrb[0].mxu0 %v959
      %v1026 = vpop.f32.mrb[0].mxu0
      %v1027 = vadd.f32 0.0, %v1026
      %v1028 = vpop.f32.mrb[0].mxu0
      %v1029 = vpop.f32.mrb[0].mxu0
      %v1030 = vpop.f32.mrb[0].mxu0
      %1031 = vdwg.mxu0
      %v1032 = vadd.f32 %v946, %v999
      %v1033 = vadd.f32 %v947, %v1006
      %v1034 = vadd.f32 %v948, %v1013
      %v1035 = vadd.f32 %v949, %v1020
      %v1036 = vadd.f32 %v950, %v1027
      %s1037 = scalar_lea.vmem %s423, 112
      %v1038 = vld [vmem:[%s1037] sm:$0xf]
      %v1039 = vld [vmem:[%s1037 + $0x4] sm:$0xf]
      %v1040 = vld [vmem:[%s1037 + $0x8] sm:$0xf]
      %v1041 = vld [vmem:[%s1037 + $0xc] sm:$0xf]
      %v1042 = vld [vmem:[%s1037 + $0x10] sm:$0xf]
      %v1043 = vld [vmem:[%s1037 + $0x14] sm:$0xf]
      %v1044 = vld [vmem:[%s1037 + $0x18] sm:$0xf]
      %v1045 = vld [vmem:[%s1037 + $0x1c] sm:$0xf]
      %v1046 = vld [vmem:[%s1037 + $0x20] sm:$0xf]
      %v1047 = vld [vmem:[%s1037 + $0x24] sm:$0xf]
      %v1048 = vld [vmem:[%s1037 + $0x28] sm:$0xf]
      %v1049 = vld [vmem:[%s1037 + $0x2c] sm:$0xf]
      %v1050 = vld [vmem:[%s1037 + $0x30] sm:$0xf]
      %v1051 = vld [vmem:[%s1037 + $0x34] sm:$0xf]
      %s1052 = scalar_lea.vmem %s2, 8
      %v1053 = vld [vmem:[%s1052] sm:$0xf]
      %v1064 = vunpack.c.l.b16 %v1038
      %v1065 = vunpack.c.l.b16 %v1039
      %v1066 = vunpack.c.l.b16 %v1040
      %v1067 = vunpack.c.l.b16 %v1041
      %v1068 = vunpack.c.l.b16 %v1042
      %v1069 = vunpack.c.l.b16 %v1043
      %v1070 = vunpack.c.l.b16 %v1044
      %v1071 = vunpack.c.l.b16 %v1045
      %v1072 = vunpack.c.l.b16 %v1046
      %v1073 = vunpack.c.l.b16 %v1047
      %v1074 = vpack.c.b16 %v1065, %v1064
      %v1075 = vpack.c.b16 %v1067, %v1066
      %v1076 = vpack.c.b16 %v1069, %v1068
      %v1077 = vpack.c.b16 %v1071, %v1070
      %v1078 = vpack.c.b16 %v1073, %v1072
      %v1080 = vsel %vm479, %v1074, 0
      %v1083 = vsel %vm479, %v1075, 0
      %v1086 = vsel %vm479, %v1076, 0
      %v1089 = vsel %vm479, %v1077, 0
      %v1092 = vsel %vm479, %v1078, 0
      %v1095 = vsel %vm495, %v1053, 0
      %1097 = vmatprep.subr.bf16.mxu0 0
      %1098 = vmatpush1.bf16.msra.mxu0 %v1095
      %1099 = vmatprep.subr.bf16.mxu0 0
      %1100 = vmatpush1.bf16.msra.mxu0 0
      %1101 = vmatprep.subr.bf16.mxu0 0
      %1102 = vmatpush1.bf16.msra.mxu0 0
      %1103 = vmatprep.subr.bf16.mxu0 0
      %1104 = vmatpush1.bf16.msra.mxu0 0
      %1105 = vmatprep.subr.bf16.mxu0 0
      %1106 = vmatpush1.bf16.msra.mxu0 0
      %1107 = vmatprep.subr.bf16.mxu0 0
      %1108 = vmatpush1.bf16.msra.mxu0 0
      %1109 = vmatprep.subr.bf16.mxu0 0
      %1110 = vmatpush1.bf16.msra.mxu0 0
      %1111 = vmatprep.subr.bf16.mxu0 0
      %1112 = vmatpush1.bf16.msra.mxu0 0
      %1113 = vmatprep.subr.bf16.mxu0 0
      %1114 = vmatpush1.bf16.msra.mxu0 0
      %1115 = vmatprep.subr.bf16.mxu0 0
      %1116 = vmatpush1.bf16.msra.mxu0 0
      %1117 = vmatprep.subr.bf16.mxu0 0
      %1118 = vmatpush1.bf16.msra.mxu0 0
      %1119 = vmatprep.subr.bf16.mxu0 0
      %1120 = vmatpush1.bf16.msra.mxu0 0
      %1121 = vmatprep.subr.bf16.mxu0 0
      %1122 = vmatpush1.bf16.msra.mxu0 0
      %1123 = vmatprep.subr.bf16.mxu0 0
      %1124 = vmatpush1.bf16.msra.mxu0 0
      %1125 = vmatprep.subr.bf16.mxu0 0
      %1126 = vmatpush1.bf16.msra.mxu0 0
      %1127 = vmatprep.subr.bf16.mxu0 0
      %1128 = vmatpush1.bf16.msra.mxu0 0
      %1129 = vmatprep.mubr.bf16.mxu0 0
      %1130 = vmatmul.mubr.bf16.gmra.mrb[0].mxu0 %v1080
      %v1131 = vpop.f32.mrb[0].mxu0
      %v1132 = vadd.f32 0.0, %v1131
      %v1133 = vpop.f32.mrb[0].mxu0
      %v1134 = vpop.f32.mrb[0].mxu0
      %v1135 = vpop.f32.mrb[0].mxu0
      %1136 = vmatprep.mubr.bf16.mxu0 0
      %1137 = vmatmul.mubr.bf16.gmra.mrb[0].mxu0 %v1083
      %v1138 = vpop.f32.mrb[0].mxu0
      %v1139 = vadd.f32 0.0, %v1138
      %v1140 = vpop.f32.mrb[0].mxu0
      %v1141 = vpop.f32.mrb[0].mxu0
      %v1142 = vpop.f32.mrb[0].mxu0
      %1143 = vmatprep.mubr.bf16.mxu0 0
      %1144 = vmatmul.mubr.bf16.gmra.mrb[0].mxu0 %v1086
      %v1145 = vpop.f32.mrb[0].mxu0
      %v1146 = vadd.f32 0.0, %v1145
      %v1147 = vpop.f32.mrb[0].mxu0
      %v1148 = vpop.f32.mrb[0].mxu0
      %v1149 = vpop.f32.mrb[0].mxu0
      %1150 = vmatprep.mubr.bf16.mxu0 0
      %1151 = vmatmul.mubr.bf16.gmra.mrb[0].mxu0 %v1089
      %v1152 = vpop.f32.mrb[0].mxu0
      %v1153 = vadd.f32 0.0, %v1152
      %v1154 = vpop.f32.mrb[0].mxu0
      %v1155 = vpop.f32.mrb[0].mxu0
      %v1156 = vpop.f32.mrb[0].mxu0
      %1157 = vmatprep.mubr.bf16.mxu0 0
      %1158 = vmatmul.mubr.bf16.gmra.mrb[0].mxu0 %v1092
      %v1159 = vpop.f32.mrb[0].mxu0
      %v1160 = vadd.f32 0.0, %v1159
      %v1161 = vpop.f32.mrb[0].mxu0
      %v1162 = vpop.f32.mrb[0].mxu0
      %v1163 = vpop.f32.mrb[0].mxu0
      %1164 = vdwg.mxu0
      %v1165 = vadd.f32 %v1032, %v1132
      %v1166 = vadd.f32 %v1033, %v1139
      %v1167 = vadd.f32 %v1034, %v1146
      %v1168 = vadd.f32 %v1035, %v1153
      %v1169 = vadd.f32 %v1036, %v1160
      %s1170 = scalar_lea.vmem %s2, 20
      %v1171 = vld [vmem:[%s1170] sm:$0xf]
      %v1174 = vunpack.c.l.b16 %v1048
      %v1175 = vunpack.c.l.b16 %v1049
      %v1176 = vpack.c.b16 %v1175, %v1174
      %v1178 = vsel %vm479, %v1176, 0
      %v1181 = vsel %vm495, %v1171, 0
      %1183 = vmatprep.subr.bf16.mxu0 0
      %1184 = vmatpush1.bf16.msra.mxu0 %v1181
      %1185 = vmatprep.subr.bf16.mxu0 0
      %1186 = vmatpush1.bf16.msra.mxu0 0
      %1187 = vmatprep.subr.bf16.mxu0 0
      %1188 = vmatpush1.bf16.msra.mxu0 0
      %1189 = vmatprep.subr.bf16.mxu0 0
      %1190 = vmatpush1.bf16.msra.mxu0 0
      %1191 = vmatprep.subr.bf16.mxu0 0
      %1192 = vmatpush1.bf16.msra.mxu0 0
      %1193 = vmatprep.subr.bf16.mxu0 0
      %1194 = vmatpush1.bf16.msra.mxu0 0
      %1195 = vmatprep.subr.bf16.mxu0 0
      %1196 = vmatpush1.bf16.msra.mxu0 0
      %1197 = vmatprep.subr.bf16.mxu0 0
      %1198 = vmatpush1.bf16.msra.mxu0 0
      %1199 = vmatprep.subr.bf16.mxu0 0
      %1200 = vmatpush1.bf16.msra.mxu0 0
      %1201 = vmatprep.subr.bf16.mxu0 0
      %1202 = vmatpush1.bf16.msra.mxu0 0
      %1203 = vmatprep.subr.bf16.mxu0 0
      %1204 = vmatpush1.bf16.msra.mxu0 0
      %1205 = vmatprep.subr.bf16.mxu0 0
      %1206 = vmatpush1.bf16.msra.mxu0 0
      %1207 = vmatprep.subr.bf16.mxu0 0
      %1208 = vmatpush1.bf16.msra.mxu0 0
      %1209 = vmatprep.subr.bf16.mxu0 0
      %1210 = vmatpush1.bf16.msra.mxu0 0
      %1211 = vmatprep.subr.bf16.mxu0 0
      %1212 = vmatpush1.bf16.msra.mxu0 0
      %1213 = vmatprep.subr.bf16.mxu0 0
      %1214 = vmatpush1.bf16.msra.mxu0 0
      %1215 = vmatprep.mubr.bf16.mxu0 0
      %1216 = vmatmul.mubr.bf16.gmra.mrb[0].mxu0 %v1083
      %v1217 = vpop.f32.mrb[0].mxu0
      %v1218 = vadd.f32 0.0, %v1217
      %v1219 = vpop.f32.mrb[0].mxu0
      %v1220 = vpop.f32.mrb[0].mxu0
      %v1221 = vpop.f32.mrb[0].mxu0
      %1222 = vmatprep.mubr.bf16.mxu0 0
      %1223 = vmatmul.mubr.bf16.gmra.mrb[0].mxu0 %v1086
      %v1224 = vpop.f32.mrb[0].mxu0
      %v1225 = vadd.f32 0.0, %v1224
      %v1226 = vpop.f32.mrb[0].mxu0
      %v1227 = vpop.f32.mrb[0].mxu0
      %v1228 = vpop.f32.mrb[0].mxu0
      %1229 = vmatprep.mubr.bf16.mxu0 0
      %1230 = vmatmul.mubr.bf16.gmra.mrb[0].mxu0 %v1089
      %v1231 = vpop.f32.mrb[0].mxu0
      %v1232 = vadd.f32 0.0, %v1231
      %v1233 = vpop.f32.mrb[0].mxu0
      %v1234 = vpop.f32.mrb[0].mxu0
      %v1235 = vpop.f32.mrb[0].mxu0
      %1236 = vmatprep.mubr.bf16.mxu0 0
      %1237 = vmatmul.mubr.bf16.gmra.mrb[0].mxu0 %v1092
      %v1238 = vpop.f32.mrb[0].mxu0
      %v1239 = vadd.f32 0.0, %v1238
      %v1240 = vpop.f32.mrb[0].mxu0
      %v1241 = vpop.f32.mrb[0].mxu0
      %v1242 = vpop.f32.mrb[0].mxu0
      %1243 = vmatprep.mubr.bf16.mxu0 0
      %1244 = vmatmul.mubr.bf16.gmra.mrb[0].mxu0 %v1178
      %v1245 = vpop.f32.mrb[0].mxu0
      %v1246 = vadd.f32 0.0, %v1245
      %v1247 = vpop.f32.mrb[0].mxu0
      %v1248 = vpop.f32.mrb[0].mxu0
      %v1249 = vpop.f32.mrb[0].mxu0
      %1250 = vdwg.mxu0
      %v1251 = vadd.f32 %v1165, %v1218
      %v1252 = vadd.f32 %v1166, %v1225
      %v1253 = vadd.f32 %v1167, %v1232
      %v1254 = vadd.f32 %v1168, %v1239
      %v1255 = vadd.f32 %v1169, %v1246
      %s1256 = scalar_lea.vmem %s2, 32
      %v1257 = vld [vmem:[%s1256] sm:$0xf]
      %v1260 = vunpack.c.l.b16 %v1050
      %v1261 = vunpack.c.l.b16 %v1051
      %v1262 = vpack.c.b16 %v1261, %v1260
      %v1264 = vsel %vm479, %v1262, 0
      %v1267 = vsel %vm495, %v1257, 0
      %1269 = vmatprep.subr.bf16.mxu0 0
      %1270 = vmatpush1.bf16.msra.mxu0 %v1267
      %1271 = vmatprep.subr.bf16.mxu0 0
      %1272 = vmatpush1.bf16.msra.mxu0 0
      %1273 = vmatprep.subr.bf16.mxu0 0
      %1274 = vmatpush1.bf16.msra.mxu0 0
      %1275 = vmatprep.subr.bf16.mxu0 0
      %1276 = vmatpush1.bf16.msra.mxu0 0
      %1277 = vmatprep.subr.bf16.mxu0 0
      %1278 = vmatpush1.bf16.msra.mxu0 0
      %1279 = vmatprep.subr.bf16.mxu0 0
      %1280 = vmatpush1.bf16.msra.mxu0 0
      %1281 = vmatprep.subr.bf16.mxu0 0
      %1282 = vmatpush1.bf16.msra.mxu0 0
      %1283 = vmatprep.subr.bf16.mxu0 0
      %1284 = vmatpush1.bf16.msra.mxu0 0
      %1285 = vmatprep.subr.bf16.mxu0 0
      %1286 = vmatpush1.bf16.msra.mxu0 0
      %1287 = vmatprep.subr.bf16.mxu0 0
      %1288 = vmatpush1.bf16.msra.mxu0 0
      %1289 = vmatprep.subr.bf16.mxu0 0
      %1290 = vmatpush1.bf16.msra.mxu0 0
      %1291 = vmatprep.subr.bf16.mxu0 0
      %1292 = vmatpush1.bf16.msra.mxu0 0
      %1293 = vmatprep.subr.bf16.mxu0 0
      %1294 = vmatpush1.bf16.msra.mxu0 0
      %1295 = vmatprep.subr.bf16.mxu0 0
      %1296 = vmatpush1.bf16.msra.mxu0 0
      %1297 = vmatprep.subr.bf16.mxu0 0
      %1298 = vmatpush1.bf16.msra.mxu0 0
      %1299 = vmatprep.subr.bf16.mxu0 0
      %1300 = vmatpush1.bf16.msra.mxu0 0
      %1301 = vmatprep.mubr.bf16.mxu0 0
      %1302 = vmatmul.mubr.bf16.gmra.mrb[0].mxu0 %v1086
      %v1303 = vpop.f32.mrb[0].mxu0
      %v1304 = vadd.f32 0.0, %v1303
      %v1305 = vpop.f32.mrb[0].mxu0
      %v1306 = vpop.f32.mrb[0].mxu0
      %v1307 = vpop.f32.mrb[0].mxu0
      %1308 = vmatprep.mubr.bf16.mxu0 0
      %1309 = vmatmul.mubr.bf16.gmra.mrb[0].mxu0 %v1089
      %v1310 = vpop.f32.mrb[0].mxu0
      %v1311 = vadd.f32 0.0, %v1310
      %v1312 = vpop.f32.mrb[0].mxu0
      %v1313 = vpop.f32.mrb[0].mxu0
      %v1314 = vpop.f32.mrb[0].mxu0
      %1315 = vmatprep.mubr.bf16.mxu0 0
      %1316 = vmatmul.mubr.bf16.gmra.mrb[0].mxu0 %v1092
      %v1317 = vpop.f32.mrb[0].mxu0
      %v1318 = vadd.f32 0.0, %v1317
      %v1319 = vpop.f32.mrb[0].mxu0
      %v1320 = vpop.f32.mrb[0].mxu0
      %v1321 = vpop.f32.mrb[0].mxu0
      %1322 = vmatprep.mubr.bf16.mxu0 0
      %1323 = vmatmul.mubr.bf16.gmra.mrb[0].mxu0 %v1178
      %v1324 = vpop.f32.mrb[0].mxu0
      %v1325 = vadd.f32 0.0, %v1324
      %v1326 = vpop.f32.mrb[0].mxu0
      %v1327 = vpop.f32.mrb[0].mxu0
      %v1328 = vpop.f32.mrb[0].mxu0
      %1329 = vmatprep.mubr.bf16.mxu0 0
      %1330 = vmatmul.mubr.bf16.gmra.mrb[0].mxu0 %v1264
      %v1331 = vpop.f32.mrb[0].mxu0
      %v1332 = vadd.f32 0.0, %v1331
      %v1333 = vpop.f32.mrb[0].mxu0
      %v1334 = vpop.f32.mrb[0].mxu0
      %v1335 = vpop.f32.mrb[0].mxu0
      %1336 = vdwg.mxu0
      %v1337 = vadd.f32 %v1251, %v1304
      %v1338 = vadd.f32 %v1252, %v1311
      %v1339 = vadd.f32 %v1253, %v1318
      %v1340 = vadd.f32 %v1254, %v1325
      %v1341 = vadd.f32 %v1255, %v1332
      %v1343 = vlaneseq
      %v1344 = vshrl.u32 %v1343, 7
      %v1345 = vsub.s32 0, %v1344
      %v1346 = vrot.slane %v435, %v1345
      %v1348 = vmul.f32 %v1337, %v1346
      %v1349 = vmul.f32 %v1338, %v1346
      %v1350 = vmul.f32 %v1339, %v1346
      %v1351 = vmul.f32 %v1340, %v1346
      %v1352 = vmul.f32 %v1341, %v1346
      %v1354 = vlaneseq
      %v1355 = vshrl.u32 %v1354, 7
      %v1356 = vsub.s32 0, %v1355
      %v1357 = vrot.slane %v436, %v1356
      %v1359 = vadd.f32 %v1348, %v1357
      %v1360 = vadd.f32 %v1349, %v1357
      %v1361 = vadd.f32 %v1350, %v1357
      %v1362 = vadd.f32 %v1351, %v1357
      %v1363 = vadd.f32 %v1352, %v1357
      %v1364 = vmax.f32 %v1359, 0.0
      %v1365 = vmax.f32 %v1360, 0.0
      %v1366 = vmax.f32 %v1361, 0.0
      %v1367 = vmax.f32 %v1362, 0.0
      %v1368 = vmax.f32 %v1363, 0.0
      %v1369 = vld [vmem:[%s6] sm:$0x1]
      %v1370 = vld [vmem:[%s7] sm:$0x1]
      %v1371 = vld [vmem:[%s428] sm:$0xf]
      %v1372 = vld [vmem:[%s428 + $0x4] sm:$0xf]
      %v1373 = vld [vmem:[%s428 + $0x8] sm:$0xf]
      %v1374 = vld [vmem:[%s428 + $0xc] sm:$0xf]
      %v1375 = vld [vmem:[%s428 + $0x10] sm:$0xf]
      %v1376 = vld [vmem:[%s428 + $0x14] sm:$0xf]
      %v1377 = vld [vmem:[%s428 + $0x18] sm:$0xf]
      %v1378 = vld [vmem:[%s428 + $0x1c] sm:$0xf]
      %v1379 = vld [vmem:[%s428 + $0x20] sm:$0xf]
      %v1380 = vld [vmem:[%s428 + $0x24] sm:$0xf]
      %v1381 = vld [vmem:[%s428 + $0x28] sm:$0xf]
      %v1382 = vld [vmem:[%s428 + $0x2c] sm:$0xf]
      %v1383 = vld [vmem:[%s428 + $0x30] sm:$0xf]
      %v1384 = vld [vmem:[%s428 + $0x34] sm:$0xf]
      %v1385 = vld [vmem:[%s428 + $0x38] sm:$0xf]
      %v1386 = vld [vmem:[%s428 + $0x3c] sm:$0xf]
      %v1387 = vld [vmem:[%s428 + $0x40] sm:$0xf]
      %v1388 = vld [vmem:[%s428 + $0x44] sm:$0xf]
      %v1389 = vld [vmem:[%s428 + $0x48] sm:$0xf]
      %v1390 = vld [vmem:[%s428 + $0x4c] sm:$0xf]
      %v1391 = vld [vmem:[%s428 + $0x50] sm:$0xf]
      %v1392 = vld [vmem:[%s428 + $0x54] sm:$0xf]
      %v1393 = vld [vmem:[%s428 + $0x58] sm:$0xf]
      %v1394 = vld [vmem:[%s428 + $0x5c] sm:$0xf]
      %v1395 = vld [vmem:[%s428 + $0x60] sm:$0xf]
      %v1396 = vld [vmem:[%s428 + $0x64] sm:$0xf]
      %v1397 = vld [vmem:[%s428 + $0x68] sm:$0xf]
      %v1398 = vld [vmem:[%s428 + $0x6c] sm:$0xf]
      %v1399 = vld [vmem:[%s428 + $0x70] sm:$0xf]
      %v1400 = vld [vmem:[%s428 + $0x74] sm:$0xf]
      %v1401 = vld [vmem:[%s3] sm:$0xf]
      %s1402 = scalar_lea.vmem %s3, 12
      %v1403 = vld [vmem:[%s1402] sm:$0xf]
      %v1430 = vunpack.c.l.b16 %v1373
      %v1431 = vunpack.c.l.b16 %v1374
      %v1432 = vunpack.c.l.b16 %v1375
      %v1433 = vunpack.c.l.b16 %v1376
      %v1434 = vunpack.c.l.b16 %v1377
      %v1435 = vunpack.c.l.b16 %v1378
      %v1436 = vunpack.c.l.b16 %v1379
      %v1437 = vunpack.c.l.b16 %v1380
      %v1438 = vunpack.c.l.b16 %v1381
      %v1439 = vunpack.c.l.b16 %v1382
      %v1440 = vunpack.c.l.b16 %v1383
      %v1441 = vunpack.c.l.b16 %v1384
      %v1442 = vunpack.c.l.b16 %v1385
      %v1443 = vunpack.c.l.b16 %v1386
      %v1444 = vunpack.c.l.b16 %v1387
      %v1445 = vunpack.c.l.b16 %v1388
      %v1446 = vunpack.c.l.b16 %v1389
      %v1447 = vunpack.c.l.b16 %v1390
      %v1448 = vunpack.c.l.b16 %v1391
      %v1449 = vunpack.c.l.b16 %v1392
      %v1450 = vunpack.c.l.b16 %v1393
      %v1451 = vunpack.c.l.b16 %v1394
      %v1452 = vunpack.c.l.b16 %v1395
      %v1453 = vunpack.c.l.b16 %v1396
      %v1454 = vunpack.c.l.b16 %v1397
      %v1455 = vunpack.c.l.b16 %v1398
      %v1456 = vpack.c.b16 %v1431, %v1430
      %v1457 = vpack.c.b16 %v1433, %v1432
      %v1458 = vpack.c.b16 %v1435, %v1434
      %v1459 = vpack.c.b16 %v1437, %v1436
      %v1460 = vpack.c.b16 %v1439, %v1438
      %v1461 = vpack.c.b16 %v1441, %v1440
      %v1462 = vpack.c.b16 %v1443, %v1442
      %v1463 = vpack.c.b16 %v1445, %v1444
      %v1464 = vpack.c.b16 %v1447, %v1446
      %v1465 = vpack.c.b16 %v1449, %v1448
      %v1466 = vpack.c.b16 %v1451, %v1450
      %v1467 = vpack.c.b16 %v1453, %v1452
      %v1468 = vpack.c.b16 %v1455, %v1454
      %v1470 = vsel %vm479, %v1456, 0
      %v1473 = vsel %vm479, %v1457, 0
      %v1476 = vsel %vm479, %v1458, 0
      %v1479 = vsel %vm479, %v1459, 0
      %v1482 = vsel %vm479, %v1460, 0
      %v1485 = vsel %vm479, %v1461, 0
      %v1488 = vsel %vm479, %v1462, 0
      %v1491 = vsel %vm479, %v1463, 0
      %v1494 = vsel %vm479, %v1464, 0
      %v1497 = vsel %vm479, %v1465, 0
      %v1500 = vsel %vm479, %v1466, 0
      %v1503 = vsel %vm479, %v1467, 0
      %v1506 = vsel %vm479, %v1468, 0
      %v1509 = vsel %vm495, %v1403, 0
      %1511 = vmatprep.subr.bf16.mxu0 0
      %1512 = vmatpush1.bf16.msra.mxu0 %v1509
      %1513 = vmatprep.subr.bf16.mxu0 0
      %1514 = vmatpush1.bf16.msra.mxu0 0
      %1515 = vmatprep.subr.bf16.mxu0 0
      %1516 = vmatpush1.bf16.msra.mxu0 0
      %1517 = vmatprep.subr.bf16.mxu0 0
      %1518 = vmatpush1.bf16.msra.mxu0 0
      %1519 = vmatprep.subr.bf16.mxu0 0
      %1520 = vmatpush1.bf16.msra.mxu0 0
      %1521 = vmatprep.subr.bf16.mxu0 0
      %1522 = vmatpush1.bf16.msra.mxu0 0
      %1523 = vmatprep.subr.bf16.mxu0 0
      %1524 = vmatpush1.bf16.msra.mxu0 0
      %1525 = vmatprep.subr.bf16.mxu0 0
      %1526 = vmatpush1.bf16.msra.mxu0 0
      %1527 = vmatprep.subr.bf16.mxu0 0
      %1528 = vmatpush1.bf16.msra.mxu0 0
      %1529 = vmatprep.subr.bf16.mxu0 0
      %1530 = vmatpush1.bf16.msra.mxu0 0
      %1531 = vmatprep.subr.bf16.mxu0 0
      %1532 = vmatpush1.bf16.msra.mxu0 0
      %1533 = vmatprep.subr.bf16.mxu0 0
      %1534 = vmatpush1.bf16.msra.mxu0 0
      %1535 = vmatprep.subr.bf16.mxu0 0
      %1536 = vmatpush1.bf16.msra.mxu0 0
      %1537 = vmatprep.subr.bf16.mxu0 0
      %1538 = vmatpush1.bf16.msra.mxu0 0
      %1539 = vmatprep.subr.bf16.mxu0 0
      %1540 = vmatpush1.bf16.msra.mxu0 0
      %1541 = vmatprep.subr.bf16.mxu0 0
      %1542 = vmatpush1.bf16.msra.mxu0 0
      %1543 = vmatprep.mubr.bf16.mxu0 0
      %1544 = vmatmul.mubr.bf16.gmra.mrb[0].mxu0 %v1470
      %v1545 = vpop.f32.mrb[0].mxu0
      %v1546 = vadd.f32 0.0, %v1545
      %v1547 = vpop.f32.mrb[0].mxu0
      %v1548 = vpop.f32.mrb[0].mxu0
      %v1549 = vadd.f32 0.0, %v1548
      %v1550 = vpop.f32.mrb[0].mxu0
      %1551 = vmatprep.mubr.bf16.mxu0 0
      %1552 = vmatmul.mubr.bf16.gmra.mrb[0].mxu0 %v1473
      %v1553 = vpop.f32.mrb[0].mxu0
      %v1554 = vadd.f32 0.0, %v1553
      %v1555 = vpop.f32.mrb[0].mxu0
      %v1556 = vpop.f32.mrb[0].mxu0
      %v1557 = vadd.f32 0.0, %v1556
      %v1558 = vpop.f32.mrb[0].mxu0
      %1559 = vmatprep.mubr.bf16.mxu0 0
      %1560 = vmatmul.mubr.bf16.gmra.mrb[0].mxu0 %v1476
      %v1561 = vpop.f32.mrb[0].mxu0
      %v1562 = vadd.f32 0.0, %v1561
      %v1563 = vpop.f32.mrb[0].mxu0
      %v1564 = vpop.f32.mrb[0].mxu0
      %v1565 = vadd.f32 0.0, %v1564
      %v1566 = vpop.f32.mrb[0].mxu0
      %1567 = vmatprep.mubr.bf16.mxu0 0
      %1568 = vmatmul.mubr.bf16.gmra.mrb[0].mxu0 %v1479
      %v1569 = vpop.f32.mrb[0].mxu0
      %v1570 = vadd.f32 0.0, %v1569
      %v1571 = vpop.f32.mrb[0].mxu0
      %v1572 = vpop.f32.mrb[0].mxu0
      %v1573 = vadd.f32 0.0, %v1572
      %v1574 = vpop.f32.mrb[0].mxu0
      %1575 = vmatprep.mubr.bf16.mxu0 0
      %1576 = vmatmul.mubr.bf16.gmra.mrb[0].mxu0 %v1482
      %v1577 = vpop.f32.mrb[0].mxu0
      %v1578 = vadd.f32 0.0, %v1577
      %v1579 = vpop.f32.mrb[0].mxu0
      %v1580 = vpop.f32.mrb[0].mxu0
      %v1581 = vadd.f32 0.0, %v1580
      %v1582 = vpop.f32.mrb[0].mxu0
      %1583 = vmatprep.mubr.bf16.mxu0 0
      %1584 = vmatmul.mubr.bf16.gmra.mrb[0].mxu0 %v1485
      %v1585 = vpop.f32.mrb[0].mxu0
      %v1586 = vadd.f32 0.0, %v1585
      %v1587 = vpop.f32.mrb[0].mxu0
      %v1588 = vpop.f32.mrb[0].mxu0
      %v1589 = vadd.f32 0.0, %v1588
      %v1590 = vpop.f32.mrb[0].mxu0
      %1591 = vmatprep.mubr.bf16.mxu0 0
      %1592 = vmatmul.mubr.bf16.gmra.mrb[0].mxu0 %v1488
      %v1593 = vpop.f32.mrb[0].mxu0
      %v1594 = vadd.f32 0.0, %v1593
      %v1595 = vpop.f32.mrb[0].mxu0
      %v1596 = vpop.f32.mrb[0].mxu0
      %v1597 = vadd.f32 0.0, %v1596
      %v1598 = vpop.f32.mrb[0].mxu0
      %1599 = vmatprep.mubr.bf16.mxu0 0
      %1600 = vmatmul.mubr.bf16.gmra.mrb[0].mxu0 %v1491
      %v1601 = vpop.f32.mrb[0].mxu0
      %v1602 = vadd.f32 0.0, %v1601
      %v1603 = vpop.f32.mrb[0].mxu0
      %v1604 = vpop.f32.mrb[0].mxu0
      %v1605 = vadd.f32 0.0, %v1604
      %v1606 = vpop.f32.mrb[0].mxu0
      %1607 = vmatprep.mubr.bf16.mxu0 0
      %1608 = vmatmul.mubr.bf16.gmra.mrb[0].mxu0 %v1494
      %v1609 = vpop.f32.mrb[0].mxu0
      %v1610 = vadd.f32 0.0, %v1609
      %v1611 = vpop.f32.mrb[0].mxu0
      %v1612 = vpop.f32.mrb[0].mxu0
      %v1613 = vadd.f32 0.0, %v1612
      %v1614 = vpop.f32.mrb[0].mxu0
      %1615 = vmatprep.mubr.bf16.mxu0 0
      %1616 = vmatmul.mubr.bf16.gmra.mrb[0].mxu0 %v1497
      %v1617 = vpop.f32.mrb[0].mxu0
      %v1618 = vadd.f32 0.0, %v1617
      %v1619 = vpop.f32.mrb[0].mxu0
      %v1620 = vpop.f32.mrb[0].mxu0
      %v1621 = vadd.f32 0.0, %v1620
      %v1622 = vpop.f32.mrb[0].mxu0
      %1623 = vmatprep.mubr.bf16.mxu0 0
      %1624 = vmatmul.mubr.bf16.gmra.mrb[0].mxu0 %v1500
      %v1625 = vpop.f32.mrb[0].mxu0
      %v1626 = vadd.f32 0.0, %v1625
      %v1627 = vpop.f32.mrb[0].mxu0
      %v1628 = vpop.f32.mrb[0].mxu0
      %v1629 = vadd.f32 0.0, %v1628
      %v1630 = vpop.f32.mrb[0].mxu0
      %1631 = vmatprep.mubr.bf16.mxu0 0
      %1632 = vmatmul.mubr.bf16.gmra.mrb[0].mxu0 %v1503
      %v1633 = vpop.f32.mrb[0].mxu0
      %v1634 = vadd.f32 0.0, %v1633
      %v1635 = vpop.f32.mrb[0].mxu0
      %v1636 = vpop.f32.mrb[0].mxu0
      %v1637 = vadd.f32 0.0, %v1636
      %v1638 = vpop.f32.mrb[0].mxu0
      %1639 = vmatprep.mubr.bf16.mxu0 0
      %1640 = vmatmul.mubr.bf16.gmra.mrb[0].mxu0 %v1506
      %v1641 = vpop.f32.mrb[0].mxu0
      %v1642 = vadd.f32 0.0, %v1641
      %v1643 = vpop.f32.mrb[0].mxu0
      %v1644 = vpop.f32.mrb[0].mxu0
      %v1645 = vadd.f32 0.0, %v1644
      %v1646 = vpop.f32.mrb[0].mxu0
      %1647 = vdwg.mxu0
      %v1650 = vunpack.c.l.b16 %v1371
      %v1651 = vunpack.c.l.b16 %v1372
      %v1652 = vpack.c.b16 %v1651, %v1650
      %v1654 = vsel %vm479, %v1652, 0
      %v1657 = vsel %vm495, %v1401, 0
      %1659 = vmatprep.subr.bf16.mxu0 0
      %1660 = vmatpush1.bf16.msra.mxu0 %v1657
      %1661 = vmatprep.subr.bf16.mxu0 0
      %1662 = vmatpush1.bf16.msra.mxu0 0
      %1663 = vmatprep.subr.bf16.mxu0 0
      %1664 = vmatpush1.bf16.msra.mxu0 0
      %1665 = vmatprep.subr.bf16.mxu0 0
      %1666 = vmatpush1.bf16.msra.mxu0 0
      %1667 = vmatprep.subr.bf16.mxu0 0
      %1668 = vmatpush1.bf16.msra.mxu0 0
      %1669 = vmatprep.subr.bf16.mxu0 0
      %1670 = vmatpush1.bf16.msra.mxu0 0
      %1671 = vmatprep.subr.bf16.mxu0 0
      %1672 = vmatpush1.bf16.msra.mxu0 0
      %1673 = vmatprep.subr.bf16.mxu0 0
      %1674 = vmatpush1.bf16.msra.mxu0 0
      %1675 = vmatprep.subr.bf16.mxu0 0
      %1676 = vmatpush1.bf16.msra.mxu0 0
      %1677 = vmatprep.subr.bf16.mxu0 0
      %1678 = vmatpush1.bf16.msra.mxu0 0
      %1679 = vmatprep.subr.bf16.mxu0 0
      %1680 = vmatpush1.bf16.msra.mxu0 0
      %1681 = vmatprep.subr.bf16.mxu0 0
      %1682 = vmatpush1.bf16.msra.mxu0 0
      %1683 = vmatprep.subr.bf16.mxu0 0
      %1684 = vmatpush1.bf16.msra.mxu0 0
      %1685 = vmatprep.subr.bf16.mxu0 0
      %1686 = vmatpush1.bf16.msra.mxu0 0
      %1687 = vmatprep.subr.bf16.mxu0 0
      %1688 = vmatpush1.bf16.msra.mxu0 0
      %1689 = vmatprep.subr.bf16.mxu0 0
      %1690 = vmatpush1.bf16.msra.mxu0 0
      %1691 = vmatprep.mubr.bf16.mxu0 0
      %1692 = vmatmul.mubr.bf16.gmra.mrb[0].mxu0 %v1654
      %v1693 = vpop.f32.mrb[0].mxu0
      %v1694 = vadd.f32 %v1546, %v1693
      %v1695 = vpop.f32.mrb[0].mxu0
      %v1696 = vpop.f32.mrb[0].mxu0
      %v1697 = vadd.f32 %v1549, %v1696
      %v1698 = vpop.f32.mrb[0].mxu0
      %1699 = vmatprep.mubr.bf16.mxu0 0
      %1700 = vmatmul.mubr.bf16.gmra.mrb[0].mxu0 %v1470
      %v1701 = vpop.f32.mrb[0].mxu0
      %v1702 = vadd.f32 %v1554, %v1701
      %v1703 = vpop.f32.mrb[0].mxu0
      %v1704 = vpop.f32.mrb[0].mxu0
      %v1705 = vadd.f32 %v1557, %v1704
      %v1706 = vpop.f32.mrb[0].mxu0
      %1707 = vmatprep.mubr.bf16.mxu0 0
      %1708 = vmatmul.mubr.bf16.gmra.mrb[0].mxu0 %v1473
      %v1709 = vpop.f32.mrb[0].mxu0
      %v1710 = vadd.f32 %v1562, %v1709
      %v1711 = vpop.f32.mrb[0].mxu0
      %v1712 = vpop.f32.mrb[0].mxu0
      %v1713 = vadd.f32 %v1565, %v1712
      %v1714 = vpop.f32.mrb[0].mxu0
      %1715 = vmatprep.mubr.bf16.mxu0 0
      %1716 = vmatmul.mubr.bf16.gmra.mrb[0].mxu0 %v1476
      %v1717 = vpop.f32.mrb[0].mxu0
      %v1718 = vadd.f32 %v1570, %v1717
      %v1719 = vpop.f32.mrb[0].mxu0
      %v1720 = vpop.f32.mrb[0].mxu0
      %v1721 = vadd.f32 %v1573, %v1720
      %v1722 = vpop.f32.mrb[0].mxu0
      %1723 = vmatprep.mubr.bf16.mxu0 0
      %1724 = vmatmul.mubr.bf16.gmra.mrb[0].mxu0 %v1479
      %v1725 = vpop.f32.mrb[0].mxu0
      %v1726 = vadd.f32 %v1578, %v1725
      %v1727 = vpop.f32.mrb[0].mxu0
      %v1728 = vpop.f32.mrb[0].mxu0
      %v1729 = vadd.f32 %v1581, %v1728
      %v1730 = vpop.f32.mrb[0].mxu0
      %1731 = vmatprep.mubr.bf16.mxu0 0
      %1732 = vmatmul.mubr.bf16.gmra.mrb[0].mxu0 %v1482
      %v1733 = vpop.f32.mrb[0].mxu0
      %v1734 = vadd.f32 %v1586, %v1733
      %v1735 = vpop.f32.mrb[0].mxu0
      %v1736 = vpop.f32.mrb[0].mxu0
      %v1737 = vadd.f32 %v1589, %v1736
      %v1738 = vpop.f32.mrb[0].mxu0
      %1739 = vmatprep.mubr.bf16.mxu0 0
      %1740 = vmatmul.mubr.bf16.gmra.mrb[0].mxu0 %v1485
      %v1741 = vpop.f32.mrb[0].mxu0
      %v1742 = vadd.f32 %v1594, %v1741
      %v1743 = vpop.f32.mrb[0].mxu0
      %v1744 = vpop.f32.mrb[0].mxu0
      %v1745 = vadd.f32 %v1597, %v1744
      %v1746 = vpop.f32.mrb[0].mxu0
      %1747 = vmatprep.mubr.bf16.mxu0 0
      %1748 = vmatmul.mubr.bf16.gmra.mrb[0].mxu0 %v1488
      %v1749 = vpop.f32.mrb[0].mxu0
      %v1750 = vadd.f32 %v1602, %v1749
      %v1751 = vpop.f32.mrb[0].mxu0
      %v1752 = vpop.f32.mrb[0].mxu0
      %v1753 = vadd.f32 %v1605, %v1752
      %v1754 = vpop.f32.mrb[0].mxu0
      %1755 = vmatprep.mubr.bf16.mxu0 0
      %1756 = vmatmul.mubr.bf16.gmra.mrb[0].mxu0 %v1491
      %v1757 = vpop.f32.mrb[0].mxu0
      %v1758 = vadd.f32 %v1610, %v1757
      %v1759 = vpop.f32.mrb[0].mxu0
      %v1760 = vpop.f32.mrb[0].mxu0
      %v1761 = vadd.f32 %v1613, %v1760
      %v1762 = vpop.f32.mrb[0].mxu0
      %1763 = vmatprep.mubr.bf16.mxu0 0
      %1764 = vmatmul.mubr.bf16.gmra.mrb[0].mxu0 %v1494
      %v1765 = vpop.f32.mrb[0].mxu0
      %v1766 = vadd.f32 %v1618, %v1765
      %v1767 = vpop.f32.mrb[0].mxu0
      %v1768 = vpop.f32.mrb[0].mxu0
      %v1769 = vadd.f32 %v1621, %v1768
      %v1770 = vpop.f32.mrb[0].mxu0
      %1771 = vmatprep.mubr.bf16.mxu0 0
      %1772 = vmatmul.mubr.bf16.gmra.mrb[0].mxu0 %v1497
      %v1773 = vpop.f32.mrb[0].mxu0
      %v1774 = vadd.f32 %v1626, %v1773
      %v1775 = vpop.f32.mrb[0].mxu0
      %v1776 = vpop.f32.mrb[0].mxu0
      %v1777 = vadd.f32 %v1629, %v1776
      %v1778 = vpop.f32.mrb[0].mxu0
      %1779 = vmatprep.mubr.bf16.mxu0 0
      %1780 = vmatmul.mubr.bf16.gmra.mrb[0].mxu0 %v1500
      %v1781 = vpop.f32.mrb[0].mxu0
      %v1782 = vadd.f32 %v1634, %v1781
      %v1783 = vpop.f32.mrb[0].mxu0
      %v1784 = vpop.f32.mrb[0].mxu0
      %v1785 = vadd.f32 %v1637, %v1784
      %v1786 = vpop.f32.mrb[0].mxu0
      %1787 = vmatprep.mubr.bf16.mxu0 0
      %1788 = vmatmul.mubr.bf16.gmra.mrb[0].mxu0 %v1503
      %v1789 = vpop.f32.mrb[0].mxu0
      %v1790 = vadd.f32 %v1642, %v1789
      %v1791 = vpop.f32.mrb[0].mxu0
      %v1792 = vpop.f32.mrb[0].mxu0
      %v1793 = vadd.f32 %v1645, %v1792
      %v1794 = vpop.f32.mrb[0].mxu0
      %1795 = vdwg.mxu0
      %s1796 = scalar_lea.vmem %s3, 24
      %v1797 = vld [vmem:[%s1796] sm:$0xf]
      %v1800 = vunpack.c.l.b16 %v1399
      %v1801 = vunpack.c.l.b16 %v1400
      %v1802 = vpack.c.b16 %v1801, %v1800
      %v1804 = vsel %vm479, %v1802, 0
      %v1807 = vsel %vm495, %v1797, 0
      %1809 = vmatprep.subr.bf16.mxu0 0
      %1810 = vmatpush1.bf16.msra.mxu0 %v1807
      %1811 = vmatprep.subr.bf16.mxu0 0
      %1812 = vmatpush1.bf16.msra.mxu0 0
      %1813 = vmatprep.subr.bf16.mxu0 0
      %1814 = vmatpush1.bf16.msra.mxu0 0
      %1815 = vmatprep.subr.bf16.mxu0 0
      %1816 = vmatpush1.bf16.msra.mxu0 0
      %1817 = vmatprep.subr.bf16.mxu0 0
      %1818 = vmatpush1.bf16.msra.mxu0 0
      %1819 = vmatprep.subr.bf16.mxu0 0
      %1820 = vmatpush1.bf16.msra.mxu0 0
      %1821 = vmatprep.subr.bf16.mxu0 0
      %1822 = vmatpush1.bf16.msra.mxu0 0
      %1823 = vmatprep.subr.bf16.mxu0 0
      %1824 = vmatpush1.bf16.msra.mxu0 0
      %1825 = vmatprep.subr.bf16.mxu0 0
      %1826 = vmatpush1.bf16.msra.mxu0 0
      %1827 = vmatprep.subr.bf16.mxu0 0
      %1828 = vmatpush1.bf16.msra.mxu0 0
      %1829 = vmatprep.subr.bf16.mxu0 0
      %1830 = vmatpush1.bf16.msra.mxu0 0
      %1831 = vmatprep.subr.bf16.mxu0 0
      %1832 = vmatpush1.bf16.msra.mxu0 0
      %1833 = vmatprep.subr.bf16.mxu0 0
      %1834 = vmatpush1.bf16.msra.mxu0 0
      %1835 = vmatprep.subr.bf16.mxu0 0
      %1836 = vmatpush1.bf16.msra.mxu0 0
      %1837 = vmatprep.subr.bf16.mxu0 0
      %1838 = vmatpush1.bf16.msra.mxu0 0
      %1839 = vmatprep.subr.bf16.mxu0 0
      %1840 = vmatpush1.bf16.msra.mxu0 0
      %1841 = vmatprep.mubr.bf16.mxu0 0
      %1842 = vmatmul.mubr.bf16.gmra.mrb[0].mxu0 %v1473
      %v1843 = vpop.f32.mrb[0].mxu0
      %v1844 = vadd.f32 0.0, %v1843
      %v1845 = vpop.f32.mrb[0].mxu0
      %v1846 = vpop.f32.mrb[0].mxu0
      %v1847 = vadd.f32 0.0, %v1846
      %v1848 = vpop.f32.mrb[0].mxu0
      %1849 = vmatprep.mubr.bf16.mxu0 0
      %1850 = vmatmul.mubr.bf16.gmra.mrb[0].mxu0 %v1476
      %v1851 = vpop.f32.mrb[0].mxu0
      %v1852 = vadd.f32 0.0, %v1851
      %v1853 = vpop.f32.mrb[0].mxu0
      %v1854 = vpop.f32.mrb[0].mxu0
      %v1855 = vadd.f32 0.0, %v1854
      %v1856 = vpop.f32.mrb[0].mxu0
      %1857 = vmatprep.mubr.bf16.mxu0 0
      %1858 = vmatmul.mubr.bf16.gmra.mrb[0].mxu0 %v1479
      %v1859 = vpop.f32.mrb[0].mxu0
      %v1860 = vadd.f32 0.0, %v1859
      %v1861 = vpop.f32.mrb[0].mxu0
      %v1862 = vpop.f32.mrb[0].mxu0
      %v1863 = vadd.f32 0.0, %v1862
      %v1864 = vpop.f32.mrb[0].mxu0
      %1865 = vmatprep.mubr.bf16.mxu0 0
      %1866 = vmatmul.mubr.bf16.gmra.mrb[0].mxu0 %v1482
      %v1867 = vpop.f32.mrb[0].mxu0
      %v1868 = vadd.f32 0.0, %v1867
      %v1869 = vpop.f32.mrb[0].mxu0
      %v1870 = vpop.f32.mrb[0].mxu0
      %v1871 = vadd.f32 0.0, %v1870
      %v1872 = vpop.f32.mrb[0].mxu0
      %1873 = vmatprep.mubr.bf16.mxu0 0
      %1874 = vmatmul.mubr.bf16.gmra.mrb[0].mxu0 %v1485
      %v1875 = vpop.f32.mrb[0].mxu0
      %v1876 = vadd.f32 0.0, %v1875
      %v1877 = vpop.f32.mrb[0].mxu0
      %v1878 = vpop.f32.mrb[0].mxu0
      %v1879 = vadd.f32 0.0, %v1878
      %v1880 = vpop.f32.mrb[0].mxu0
      %1881 = vmatprep.mubr.bf16.mxu0 0
      %1882 = vmatmul.mubr.bf16.gmra.mrb[0].mxu0 %v1488
      %v1883 = vpop.f32.mrb[0].mxu0
      %v1884 = vadd.f32 0.0, %v1883
      %v1885 = vpop.f32.mrb[0].mxu0
      %v1886 = vpop.f32.mrb[0].mxu0
      %v1887 = vadd.f32 0.0, %v1886
      %v1888 = vpop.f32.mrb[0].mxu0
      %1889 = vmatprep.mubr.bf16.mxu0 0
      %1890 = vmatmul.mubr.bf16.gmra.mrb[0].mxu0 %v1491
      %v1891 = vpop.f32.mrb[0].mxu0
      %v1892 = vadd.f32 0.0, %v1891
      %v1893 = vpop.f32.mrb[0].mxu0
      %v1894 = vpop.f32.mrb[0].mxu0
      %v1895 = vadd.f32 0.0, %v1894
      %v1896 = vpop.f32.mrb[0].mxu0
      %1897 = vmatprep.mubr.bf16.mxu0 0
      %1898 = vmatmul.mubr.bf16.gmra.mrb[0].mxu0 %v1494
      %v1899 = vpop.f32.mrb[0].mxu0
      %v1900 = vadd.f32 0.0, %v1899
      %v1901 = vpop.f32.mrb[0].mxu0
      %v1902 = vpop.f32.mrb[0].mxu0
      %v1903 = vadd.f32 0.0, %v1902
      %v1904 = vpop.f32.mrb[0].mxu0
      %1905 = vmatprep.mubr.bf16.mxu0 0
      %1906 = vmatmul.mubr.bf16.gmra.mrb[0].mxu0 %v1497
      %v1907 = vpop.f32.mrb[0].mxu0
      %v1908 = vadd.f32 0.0, %v1907
      %v1909 = vpop.f32.mrb[0].mxu0
      %v1910 = vpop.f32.mrb[0].mxu0
      %v1911 = vadd.f32 0.0, %v1910
      %v1912 = vpop.f32.mrb[0].mxu0
      %1913 = vmatprep.mubr.bf16.mxu0 0
      %1914 = vmatmul.mubr.bf16.gmra.mrb[0].mxu0 %v1500
      %v1915 = vpop.f32.mrb[0].mxu0
      %v1916 = vadd.f32 0.0, %v1915
      %v1917 = vpop.f32.mrb[0].mxu0
      %v1918 = vpop.f32.mrb[0].mxu0
      %v1919 = vadd.f32 0.0, %v1918
      %v1920 = vpop.f32.mrb[0].mxu0
      %1921 = vmatprep.mubr.bf16.mxu0 0
      %1922 = vmatmul.mubr.bf16.gmra.mrb[0].mxu0 %v1503
      %v1923 = vpop.f32.mrb[0].mxu0
      %v1924 = vadd.f32 0.0, %v1923
      %v1925 = vpop.f32.mrb[0].mxu0
      %v1926 = vpop.f32.mrb[0].mxu0
      %v1927 = vadd.f32 0.0, %v1926
      %v1928 = vpop.f32.mrb[0].mxu0
      %1929 = vmatprep.mubr.bf16.mxu0 0
      %1930 = vmatmul.mubr.bf16.gmra.mrb[0].mxu0 %v1506
      %v1931 = vpop.f32.mrb[0].mxu0
      %v1932 = vadd.f32 0.0, %v1931
      %v1933 = vpop.f32.mrb[0].mxu0
      %v1934 = vpop.f32.mrb[0].mxu0
      %v1935 = vadd.f32 0.0, %v1934
      %v1936 = vpop.f32.mrb[0].mxu0
      %1937 = vmatprep.mubr.bf16.mxu0 0
      %1938 = vmatmul.mubr.bf16.gmra.mrb[0].mxu0 %v1804
      %v1939 = vpop.f32.mrb[0].mxu0
      %v1940 = vadd.f32 0.0, %v1939
      %v1941 = vpop.f32.mrb[0].mxu0
      %v1942 = vpop.f32.mrb[0].mxu0
      %v1943 = vadd.f32 0.0, %v1942
      %v1944 = vpop.f32.mrb[0].mxu0
      %1945 = vdwg.mxu0
      %v1946 = vadd.f32 %v1694, %v1844
      %v1947 = vadd.f32 %v1697, %v1847
      %v1948 = vadd.f32 %v1702, %v1852
      %v1949 = vadd.f32 %v1705, %v1855
      %v1950 = vadd.f32 %v1710, %v1860
      %v1951 = vadd.f32 %v1713, %v1863
      %v1952 = vadd.f32 %v1718, %v1868
      %v1953 = vadd.f32 %v1721, %v1871
      %v1954 = vadd.f32 %v1726, %v1876
      %v1955 = vadd.f32 %v1729, %v1879
      %v1956 = vadd.f32 %v1734, %v1884
      %v1957 = vadd.f32 %v1737, %v1887
      %v1958 = vadd.f32 %v1742, %v1892
      %v1959 = vadd.f32 %v1745, %v1895
      %v1960 = vadd.f32 %v1750, %v1900
      %v1961 = vadd.f32 %v1753, %v1903
      %v1962 = vadd.f32 %v1758, %v1908
      %v1963 = vadd.f32 %v1761, %v1911
      %v1964 = vadd.f32 %v1766, %v1916
      %v1965 = vadd.f32 %v1769, %v1919
      %v1966 = vadd.f32 %v1774, %v1924
      %v1967 = vadd.f32 %v1777, %v1927
      %v1968 = vadd.f32 %v1782, %v1932
      %v1969 = vadd.f32 %v1785, %v1935
      %v1970 = vadd.f32 %v1790, %v1940
      %v1971 = vadd.f32 %v1793, %v1943
      %s1972 = scalar_lea.vmem %s428, 120
      %v1973 = vld [vmem:[%s1972] sm:$0xf]
      %v1974 = vld [vmem:[%s1972 + $0x4] sm:$0xf]
      %v1975 = vld [vmem:[%s1972 + $0x8] sm:$0xf]
      %v1976 = vld [vmem:[%s1972 + $0xc] sm:$0xf]
      %v1977 = vld [vmem:[%s1972 + $0x10] sm:$0xf]
      %v1978 = vld [vmem:[%s1972 + $0x14] sm:$0xf]
      %v1979 = vld [vmem:[%s1972 + $0x18] sm:$0xf]
      %v1980 = vld [vmem:[%s1972 + $0x1c] sm:$0xf]
      %v1981 = vld [vmem:[%s1972 + $0x20] sm:$0xf]
      %v1982 = vld [vmem:[%s1972 + $0x24] sm:$0xf]
      %v1983 = vld [vmem:[%s1972 + $0x28] sm:$0xf]
      %v1984 = vld [vmem:[%s1972 + $0x2c] sm:$0xf]
      %v1985 = vld [vmem:[%s1972 + $0x30] sm:$0xf]
      %v1986 = vld [vmem:[%s1972 + $0x34] sm:$0xf]
      %v1987 = vld [vmem:[%s1972 + $0x38] sm:$0xf]
      %v1988 = vld [vmem:[%s1972 + $0x3c] sm:$0xf]
      %v1989 = vld [vmem:[%s1972 + $0x40] sm:$0xf]
      %v1990 = vld [vmem:[%s1972 + $0x44] sm:$0xf]
      %v1991 = vld [vmem:[%s1972 + $0x48] sm:$0xf]
      %v1992 = vld [vmem:[%s1972 + $0x4c] sm:$0xf]
      %v1993 = vld [vmem:[%s1972 + $0x50] sm:$0xf]
      %v1994 = vld [vmem:[%s1972 + $0x54] sm:$0xf]
      %v1995 = vld [vmem:[%s1972 + $0x58] sm:$0xf]
      %v1996 = vld [vmem:[%s1972 + $0x5c] sm:$0xf]
      %v1997 = vld [vmem:[%s1972 + $0x60] sm:$0xf]
      %v1998 = vld [vmem:[%s1972 + $0x64] sm:$0xf]
      %v1999 = vld [vmem:[%s1972 + $0x68] sm:$0xf]
      %v2000 = vld [vmem:[%s1972 + $0x6c] sm:$0xf]
      %v2001 = vld [vmem:[%s1972 + $0x70] sm:$0xf]
      %v2002 = vld [vmem:[%s1972 + $0x74] sm:$0xf]
      %s2003 = scalar_lea.vmem %s3, 4
      %v2004 = vld [vmem:[%s2003] sm:$0xf]
      %v2031 = vunpack.c.l.b16 %v1973
      %v2032 = vunpack.c.l.b16 %v1974
      %v2033 = vunpack.c.l.b16 %v1975
      %v2034 = vunpack.c.l.b16 %v1976
      %v2035 = vunpack.c.l.b16 %v1977
      %v2036 = vunpack.c.l.b16 %v1978
      %v2037 = vunpack.c.l.b16 %v1979
      %v2038 = vunpack.c.l.b16 %v1980
      %v2039 = vunpack.c.l.b16 %v1981
      %v2040 = vunpack.c.l.b16 %v1982
      %v2041 = vunpack.c.l.b16 %v1983
      %v2042 = vunpack.c.l.b16 %v1984
      %v2043 = vunpack.c.l.b16 %v1985
      %v2044 = vunpack.c.l.b16 %v1986
      %v2045 = vunpack.c.l.b16 %v1987
      %v2046 = vunpack.c.l.b16 %v1988
      %v2047 = vunpack.c.l.b16 %v1989
      %v2048 = vunpack.c.l.b16 %v1990
      %v2049 = vunpack.c.l.b16 %v1991
      %v2050 = vunpack.c.l.b16 %v1992
      %v2051 = vunpack.c.l.b16 %v1993
      %v2052 = vunpack.c.l.b16 %v1994
      %v2053 = vunpack.c.l.b16 %v1995
      %v2054 = vunpack.c.l.b16 %v1996
      %v2055 = vunpack.c.l.b16 %v1997
      %v2056 = vunpack.c.l.b16 %v1998
      %v2057 = vpack.c.b16 %v2032, %v2031
      %v2058 = vpack.c.b16 %v2034, %v2033
      %v2059 = vpack.c.b16 %v2036, %v2035
      %v2060 = vpack.c.b16 %v2038, %v2037
      %v2061 = vpack.c.b16 %v2040, %v2039
      %v2062 = vpack.c.b16 %v2042, %v2041
      %v2063 = vpack.c.b16 %v2044, %v2043
      %v2064 = vpack.c.b16 %v2046, %v2045
      %v2065 = vpack.c.b16 %v2048, %v2047
      %v2066 = vpack.c.b16 %v2050, %v2049
      %v2067 = vpack.c.b16 %v2052, %v2051
      %v2068 = vpack.c.b16 %v2054, %v2053
      %v2069 = vpack.c.b16 %v2056, %v2055
      %v2071 = vsel %vm479, %v2057, 0
      %v2074 = vsel %vm479, %v2058, 0
      %v2077 = vsel %vm479, %v2059, 0
      %v2080 = vsel %vm479, %v2060, 0
      %v2083 = vsel %vm479, %v2061, 0
      %v2086 = vsel %vm479, %v2062, 0
      %v2089 = vsel %vm479, %v2063, 0
      %v2092 = vsel %vm479, %v2064, 0
      %v2095 = vsel %vm479, %v2065, 0
      %v2098 = vsel %vm479, %v2066, 0
      %v2101 = vsel %vm479, %v2067, 0
      %v2104 = vsel %vm479, %v2068, 0
      %v2107 = vsel %vm479, %v2069, 0
      %v2110 = vsel %vm495, %v2004, 0
      %2112 = vmatprep.subr.bf16.mxu0 0
      %2113 = vmatpush1.bf16.msra.mxu0 %v2110
      %2114 = vmatprep.subr.bf16.mxu0 0
      %2115 = vmatpush1.bf16.msra.mxu0 0
      %2116 = vmatprep.subr.bf16.mxu0 0
      %2117 = vmatpush1.bf16.msra.mxu0 0
      %2118 = vmatprep.subr.bf16.mxu0 0
      %2119 = vmatpush1.bf16.msra.mxu0 0
      %2120 = vmatprep.subr.bf16.mxu0 0
      %2121 = vmatpush1.bf16.msra.mxu0 0
      %2122 = vmatprep.subr.bf16.mxu0 0
      %2123 = vmatpush1.bf16.msra.mxu0 0
      %2124 = vmatprep.subr.bf16.mxu0 0
      %2125 = vmatpush1.bf16.msra.mxu0 0
      %2126 = vmatprep.subr.bf16.mxu0 0
      %2127 = vmatpush1.bf16.msra.mxu0 0
      %2128 = vmatprep.subr.bf16.mxu0 0
      %2129 = vmatpush1.bf16.msra.mxu0 0
      %2130 = vmatprep.subr.bf16.mxu0 0
      %2131 = vmatpush1.bf16.msra.mxu0 0
      %2132 = vmatprep.subr.bf16.mxu0 0
      %2133 = vmatpush1.bf16.msra.mxu0 0
      %2134 = vmatprep.subr.bf16.mxu0 0
      %2135 = vmatpush1.bf16.msra.mxu0 0
      %2136 = vmatprep.subr.bf16.mxu0 0
      %2137 = vmatpush1.bf16.msra.mxu0 0
      %2138 = vmatprep.subr.bf16.mxu0 0
      %2139 = vmatpush1.bf16.msra.mxu0 0
      %2140 = vmatprep.subr.bf16.mxu0 0
      %2141 = vmatpush1.bf16.msra.mxu0 0
      %2142 = vmatprep.subr.bf16.mxu0 0
      %2143 = vmatpush1.bf16.msra.mxu0 0
      %2144 = vmatprep.mubr.bf16.mxu0 0
      %2145 = vmatmul.mubr.bf16.gmra.mrb[0].mxu0 %v2071
      %v2146 = vpop.f32.mrb[0].mxu0
      %v2147 = vadd.f32 0.0, %v2146
      %v2148 = vpop.f32.mrb[0].mxu0
      %v2149 = vpop.f32.mrb[0].mxu0
      %v2150 = vadd.f32 0.0, %v2149
      %v2151 = vpop.f32.mrb[0].mxu0
      %2152 = vmatprep.mubr.bf16.mxu0 0
      %2153 = vmatmul.mubr.bf16.gmra.mrb[0].mxu0 %v2074
      %v2154 = vpop.f32.mrb[0].mxu0
      %v2155 = vadd.f32 0.0, %v2154
      %v2156 = vpop.f32.mrb[0].mxu0
      %v2157 = vpop.f32.mrb[0].mxu0
      %v2158 = vadd.f32 0.0, %v2157
      %v2159 = vpop.f32.mrb[0].mxu0
      %2160 = vmatprep.mubr.bf16.mxu0 0
      %2161 = vmatmul.mubr.bf16.gmra.mrb[0].mxu0 %v2077
      %v2162 = vpop.f32.mrb[0].mxu0
      %v2163 = vadd.f32 0.0, %v2162
      %v2164 = vpop.f32.mrb[0].mxu0
      %v2165 = vpop.f32.mrb[0].mxu0
      %v2166 = vadd.f32 0.0, %v2165
      %v2167 = vpop.f32.mrb[0].mxu0
      %2168 = vmatprep.mubr.bf16.mxu0 0
      %2169 = vmatmul.mubr.bf16.gmra.mrb[0].mxu0 %v2080
      %v2170 = vpop.f32.mrb[0].mxu0
      %v2171 = vadd.f32 0.0, %v2170
      %v2172 = vpop.f32.mrb[0].mxu0
      %v2173 = vpop.f32.mrb[0].mxu0
      %v2174 = vadd.f32 0.0, %v2173
      %v2175 = vpop.f32.mrb[0].mxu0
      %2176 = vmatprep.mubr.bf16.mxu0 0
      %2177 = vmatmul.mubr.bf16.gmra.mrb[0].mxu0 %v2083
      %v2178 = vpop.f32.mrb[0].mxu0
      %v2179 = vadd.f32 0.0, %v2178
      %v2180 = vpop.f32.mrb[0].mxu0
      %v2181 = vpop.f32.mrb[0].mxu0
      %v2182 = vadd.f32 0.0, %v2181
      %v2183 = vpop.f32.mrb[0].mxu0
      %2184 = vmatprep.mubr.bf16.mxu0 0
      %2185 = vmatmul.mubr.bf16.gmra.mrb[0].mxu0 %v2086
      %v2186 = vpop.f32.mrb[0].mxu0
      %v2187 = vadd.f32 0.0, %v2186
      %v2188 = vpop.f32.mrb[0].mxu0
      %v2189 = vpop.f32.mrb[0].mxu0
      %v2190 = vadd.f32 0.0, %v2189
      %v2191 = vpop.f32.mrb[0].mxu0
      %2192 = vmatprep.mubr.bf16.mxu0 0
      %2193 = vmatmul.mubr.bf16.gmra.mrb[0].mxu0 %v2089
      %v2194 = vpop.f32.mrb[0].mxu0
      %v2195 = vadd.f32 0.0, %v2194
      %v2196 = vpop.f32.mrb[0].mxu0
      %v2197 = vpop.f32.mrb[0].mxu0
      %v2198 = vadd.f32 0.0, %v2197
      %v2199 = vpop.f32.mrb[0].mxu0
      %2200 = vmatprep.mubr.bf16.mxu0 0
      %2201 = vmatmul.mubr.bf16.gmra.mrb[0].mxu0 %v2092
      %v2202 = vpop.f32.mrb[0].mxu0
      %v2203 = vadd.f32 0.0, %v2202
      %v2204 = vpop.f32.mrb[0].mxu0
      %v2205 = vpop.f32.mrb[0].mxu0
      %v2206 = vadd.f32 0.0, %v2205
      %v2207 = vpop.f32.mrb[0].mxu0
      %2208 = vmatprep.mubr.bf16.mxu0 0
      %2209 = vmatmul.mubr.bf16.gmra.mrb[0].mxu0 %v2095
      %v2210 = vpop.f32.mrb[0].mxu0
      %v2211 = vadd.f32 0.0, %v2210
      %v2212 = vpop.f32.mrb[0].mxu0
      %v2213 = vpop.f32.mrb[0].mxu0
      %v2214 = vadd.f32 0.0, %v2213
      %v2215 = vpop.f32.mrb[0].mxu0
      %2216 = vmatprep.mubr.bf16.mxu0 0
      %2217 = vmatmul.mubr.bf16.gmra.mrb[0].mxu0 %v2098
      %v2218 = vpop.f32.mrb[0].mxu0
      %v2219 = vadd.f32 0.0, %v2218
      %v2220 = vpop.f32.mrb[0].mxu0
      %v2221 = vpop.f32.mrb[0].mxu0
      %v2222 = vadd.f32 0.0, %v2221
      %v2223 = vpop.f32.mrb[0].mxu0
      %2224 = vmatprep.mubr.bf16.mxu0 0
      %2225 = vmatmul.mubr.bf16.gmra.mrb[0].mxu0 %v2101
      %v2226 = vpop.f32.mrb[0].mxu0
      %v2227 = vadd.f32 0.0, %v2226
      %v2228 = vpop.f32.mrb[0].mxu0
      %v2229 = vpop.f32.mrb[0].mxu0
      %v2230 = vadd.f32 0.0, %v2229
      %v2231 = vpop.f32.mrb[0].mxu0
      %2232 = vmatprep.mubr.bf16.mxu0 0
      %2233 = vmatmul.mubr.bf16.gmra.mrb[0].mxu0 %v2104
      %v2234 = vpop.f32.mrb[0].mxu0
      %v2235 = vadd.f32 0.0, %v2234
      %v2236 = vpop.f32.mrb[0].mxu0
      %v2237 = vpop.f32.mrb[0].mxu0
      %v2238 = vadd.f32 0.0, %v2237
      %v2239 = vpop.f32.mrb[0].mxu0
      %2240 = vmatprep.mubr.bf16.mxu0 0
      %2241 = vmatmul.mubr.bf16.gmra.mrb[0].mxu0 %v2107
      %v2242 = vpop.f32.mrb[0].mxu0
      %v2243 = vadd.f32 0.0, %v2242
      %v2244 = vpop.f32.mrb[0].mxu0
      %v2245 = vpop.f32.mrb[0].mxu0
      %v2246 = vadd.f32 0.0, %v2245
      %v2247 = vpop.f32.mrb[0].mxu0
      %2248 = vdwg.mxu0
      %v2249 = vadd.f32 %v1946, %v2147
      %v2250 = vadd.f32 %v1947, %v2150
      %v2251 = vadd.f32 %v1948, %v2155
      %v2252 = vadd.f32 %v1949, %v2158
      %v2253 = vadd.f32 %v1950, %v2163
      %v2254 = vadd.f32 %v1951, %v2166
      %v2255 = vadd.f32 %v1952, %v2171
      %v2256 = vadd.f32 %v1953, %v2174
      %v2257 = vadd.f32 %v1954, %v2179
      %v2258 = vadd.f32 %v1955, %v2182
      %v2259 = vadd.f32 %v1956, %v2187
      %v2260 = vadd.f32 %v1957, %v2190
      %v2261 = vadd.f32 %v1958, %v2195
      %v2262 = vadd.f32 %v1959, %v2198
      %v2263 = vadd.f32 %v1960, %v2203
      %v2264 = vadd.f32 %v1961, %v2206
      %v2265 = vadd.f32 %v1962, %v2211
      %v2266 = vadd.f32 %v1963, %v2214
      %v2267 = vadd.f32 %v1964, %v2219
      %v2268 = vadd.f32 %v1965, %v2222
      %v2269 = vadd.f32 %v1966, %v2227
      %v2270 = vadd.f32 %v1967, %v2230
      %v2271 = vadd.f32 %v1968, %v2235
      %v2272 = vadd.f32 %v1969, %v2238
      %v2273 = vadd.f32 %v1970, %v2243
      %v2274 = vadd.f32 %v1971, %v2246
      %s2275 = scalar_lea.vmem %s3, 16
      %v2276 = vld [vmem:[%s2275] sm:$0xf]
      %v2279 = vunpack.c.l.b16 %v1999
      %v2280 = vunpack.c.l.b16 %v2000
      %v2281 = vpack.c.b16 %v2280, %v2279
      %v2283 = vsel %vm479, %v2281, 0
      %v2286 = vsel %vm495, %v2276, 0
      %2288 = vmatprep.subr.bf16.mxu0 0
      %2289 = vmatpush1.bf16.msra.mxu0 %v2286
      %2290 = vmatprep.subr.bf16.mxu0 0
      %2291 = vmatpush1.bf16.msra.mxu0 0
      %2292 = vmatprep.subr.bf16.mxu0 0
      %2293 = vmatpush1.bf16.msra.mxu0 0
      %2294 = vmatprep.subr.bf16.mxu0 0
      %2295 = vmatpush1.bf16.msra.mxu0 0
      %2296 = vmatprep.subr.bf16.mxu0 0
      %2297 = vmatpush1.bf16.msra.mxu0 0
      %2298 = vmatprep.subr.bf16.mxu0 0
      %2299 = vmatpush1.bf16.msra.mxu0 0
      %2300 = vmatprep.subr.bf16.mxu0 0
      %2301 = vmatpush1.bf16.msra.mxu0 0
      %2302 = vmatprep.subr.bf16.mxu0 0
      %2303 = vmatpush1.bf16.msra.mxu0 0
      %2304 = vmatprep.subr.bf16.mxu0 0
      %2305 = vmatpush1.bf16.msra.mxu0 0
      %2306 = vmatprep.subr.bf16.mxu0 0
      %2307 = vmatpush1.bf16.msra.mxu0 0
      %2308 = vmatprep.subr.bf16.mxu0 0
      %2309 = vmatpush1.bf16.msra.mxu0 0
      %2310 = vmatprep.subr.bf16.mxu0 0
      %2311 = vmatpush1.bf16.msra.mxu0 0
      %2312 = vmatprep.subr.bf16.mxu0 0
      %2313 = vmatpush1.bf16.msra.mxu0 0
      %2314 = vmatprep.subr.bf16.mxu0 0
      %2315 = vmatpush1.bf16.msra.mxu0 0
      %2316 = vmatprep.subr.bf16.mxu0 0
      %2317 = vmatpush1.bf16.msra.mxu0 0
      %2318 = vmatprep.subr.bf16.mxu0 0
      %2319 = vmatpush1.bf16.msra.mxu0 0
      %2320 = vmatprep.mubr.bf16.mxu0 0
      %2321 = vmatmul.mubr.bf16.gmra.mrb[0].mxu0 %v2074
      %v2322 = vpop.f32.mrb[0].mxu0
      %v2323 = vadd.f32 0.0, %v2322
      %v2324 = vpop.f32.mrb[0].mxu0
      %v2325 = vpop.f32.mrb[0].mxu0
      %v2326 = vadd.f32 0.0, %v2325
      %v2327 = vpop.f32.mrb[0].mxu0
      %2328 = vmatprep.mubr.bf16.mxu0 0
      %2329 = vmatmul.mubr.bf16.gmra.mrb[0].mxu0 %v2077
      %v2330 = vpop.f32.mrb[0].mxu0
      %v2331 = vadd.f32 0.0, %v2330
      %v2332 = vpop.f32.mrb[0].mxu0
      %v2333 = vpop.f32.mrb[0].mxu0
      %v2334 = vadd.f32 0.0, %v2333
      %v2335 = vpop.f32.mrb[0].mxu0
      %2336 = vmatprep.mubr.bf16.mxu0 0
      %2337 = vmatmul.mubr.bf16.gmra.mrb[0].mxu0 %v2080
      %v2338 = vpop.f32.mrb[0].mxu0
      %v2339 = vadd.f32 0.0, %v2338
      %v2340 = vpop.f32.mrb[0].mxu0
      %v2341 = vpop.f32.mrb[0].mxu0
      %v2342 = vadd.f32 0.0, %v2341
      %v2343 = vpop.f32.mrb[0].mxu0
      %2344 = vmatprep.mubr.bf16.mxu0 0
      %2345 = vmatmul.mubr.bf16.gmra.mrb[0].mxu0 %v2083
      %v2346 = vpop.f32.mrb[0].mxu0
      %v2347 = vadd.f32 0.0, %v2346
      %v2348 = vpop.f32.mrb[0].mxu0
      %v2349 = vpop.f32.mrb[0].mxu0
      %v2350 = vadd.f32 0.0, %v2349
      %v2351 = vpop.f32.mrb[0].mxu0
      %2352 = vmatprep.mubr.bf16.mxu0 0
      %2353 = vmatmul.mubr.bf16.gmra.mrb[0].mxu0 %v2086
      %v2354 = vpop.f32.mrb[0].mxu0
      %v2355 = vadd.f32 0.0, %v2354
      %v2356 = vpop.f32.mrb[0].mxu0
      %v2357 = vpop.f32.mrb[0].mxu0
      %v2358 = vadd.f32 0.0, %v2357
      %v2359 = vpop.f32.mrb[0].mxu0
      %2360 = vmatprep.mubr.bf16.mxu0 0
      %2361 = vmatmul.mubr.bf16.gmra.mrb[0].mxu0 %v2089
      %v2362 = vpop.f32.mrb[0].mxu0
      %v2363 = vadd.f32 0.0, %v2362
      %v2364 = vpop.f32.mrb[0].mxu0
      %v2365 = vpop.f32.mrb[0].mxu0
      %v2366 = vadd.f32 0.0, %v2365
      %v2367 = vpop.f32.mrb[0].mxu0
      %2368 = vmatprep.mubr.bf16.mxu0 0
      %2369 = vmatmul.mubr.bf16.gmra.mrb[0].mxu0 %v2092
      %v2370 = vpop.f32.mrb[0].mxu0
      %v2371 = vadd.f32 0.0, %v2370
      %v2372 = vpop.f32.mrb[0].mxu0
      %v2373 = vpop.f32.mrb[0].mxu0
      %v2374 = vadd.f32 0.0, %v2373
      %v2375 = vpop.f32.mrb[0].mxu0
      %2376 = vmatprep.mubr.bf16.mxu0 0
      %2377 = vmatmul.mubr.bf16.gmra.mrb[0].mxu0 %v2095
      %v2378 = vpop.f32.mrb[0].mxu0
      %v2379 = vadd.f32 0.0, %v2378
      %v2380 = vpop.f32.mrb[0].mxu0
      %v2381 = vpop.f32.mrb[0].mxu0
      %v2382 = vadd.f32 0.0, %v2381
      %v2383 = vpop.f32.mrb[0].mxu0
      %2384 = vmatprep.mubr.bf16.mxu0 0
      %2385 = vmatmul.mubr.bf16.gmra.mrb[0].mxu0 %v2098
      %v2386 = vpop.f32.mrb[0].mxu0
      %v2387 = vadd.f32 0.0, %v2386
      %v2388 = vpop.f32.mrb[0].mxu0
      %v2389 = vpop.f32.mrb[0].mxu0
      %v2390 = vadd.f32 0.0, %v2389
      %v2391 = vpop.f32.mrb[0].mxu0
      %2392 = vmatprep.mubr.bf16.mxu0 0
      %2393 = vmatmul.mubr.bf16.gmra.mrb[0].mxu0 %v2101
      %v2394 = vpop.f32.mrb[0].mxu0
      %v2395 = vadd.f32 0.0, %v2394
      %v2396 = vpop.f32.mrb[0].mxu0
      %v2397 = vpop.f32.mrb[0].mxu0
      %v2398 = vadd.f32 0.0, %v2397
      %v2399 = vpop.f32.mrb[0].mxu0
      %2400 = vmatprep.mubr.bf16.mxu0 0
      %2401 = vmatmul.mubr.bf16.gmra.mrb[0].mxu0 %v2104
      %v2402 = vpop.f32.mrb[0].mxu0
      %v2403 = vadd.f32 0.0, %v2402
      %v2404 = vpop.f32.mrb[0].mxu0
      %v2405 = vpop.f32.mrb[0].mxu0
      %v2406 = vadd.f32 0.0, %v2405
      %v2407 = vpop.f32.mrb[0].mxu0
      %2408 = vmatprep.mubr.bf16.mxu0 0
      %2409 = vmatmul.mubr.bf16.gmra.mrb[0].mxu0 %v2107
      %v2410 = vpop.f32.mrb[0].mxu0
      %v2411 = vadd.f32 0.0, %v2410
      %v2412 = vpop.f32.mrb[0].mxu0
      %v2413 = vpop.f32.mrb[0].mxu0
      %v2414 = vadd.f32 0.0, %v2413
      %v2415 = vpop.f32.mrb[0].mxu0
      %2416 = vmatprep.mubr.bf16.mxu0 0
      %2417 = vmatmul.mubr.bf16.gmra.mrb[0].mxu0 %v2283
      %v2418 = vpop.f32.mrb[0].mxu0
      %v2419 = vadd.f32 0.0, %v2418
      %v2420 = vpop.f32.mrb[0].mxu0
      %v2421 = vpop.f32.mrb[0].mxu0
      %v2422 = vadd.f32 0.0, %v2421
      %v2423 = vpop.f32.mrb[0].mxu0
      %2424 = vdwg.mxu0
      %v2425 = vadd.f32 %v2249, %v2323
      %v2426 = vadd.f32 %v2250, %v2326
      %v2427 = vadd.f32 %v2251, %v2331
      %v2428 = vadd.f32 %v2252, %v2334
      %v2429 = vadd.f32 %v2253, %v2339
      %v2430 = vadd.f32 %v2254, %v2342
      %v2431 = vadd.f32 %v2255, %v2347
      %v2432 = vadd.f32 %v2256, %v2350
      %v2433 = vadd.f32 %v2257, %v2355
      %v2434 = vadd.f32 %v2258, %v2358
      %v2435 = vadd.f32 %v2259, %v2363
      %v2436 = vadd.f32 %v2260, %v2366
      %v2437 = vadd.f32 %v2261, %v2371
      %v2438 = vadd.f32 %v2262, %v2374
      %v2439 = vadd.f32 %v2263, %v2379
      %v2440 = vadd.f32 %v2264, %v2382
      %v2441 = vadd.f32 %v2265, %v2387
      %v2442 = vadd.f32 %v2266, %v2390
      %v2443 = vadd.f32 %v2267, %v2395
      %v2444 = vadd.f32 %v2268, %v2398
      %v2445 = vadd.f32 %v2269, %v2403
      %v2446 = vadd.f32 %v2270, %v2406
      %v2447 = vadd.f32 %v2271, %v2411
      %v2448 = vadd.f32 %v2272, %v2414
      %v2449 = vadd.f32 %v2273, %v2419
      %v2450 = vadd.f32 %v2274, %v2422
      %s2451 = scalar_lea.vmem %s3, 28
      %v2452 = vld [vmem:[%s2451] sm:$0xf]
      %v2455 = vunpack.c.l.b16 %v2001
      %v2456 = vunpack.c.l.b16 %v2002
      %v2457 = vpack.c.b16 %v2456, %v2455
      %v2459 = vsel %vm479, %v2457, 0
      %v2462 = vsel %vm495, %v2452, 0
      %2464 = vmatprep.subr.bf16.mxu0 0
      %2465 = vmatpush1.bf16.msra.mxu0 %v2462
      %2466 = vmatprep.subr.bf16.mxu0 0
      %2467 = vmatpush1.bf16.msra.mxu0 0
      %2468 = vmatprep.subr.bf16.mxu0 0
      %2469 = vmatpush1.bf16.msra.mxu0 0
      %2470 = vmatprep.subr.bf16.mxu0 0
      %2471 = vmatpush1.bf16.msra.mxu0 0
      %2472 = vmatprep.subr.bf16.mxu0 0
      %2473 = vmatpush1.bf16.msra.mxu0 0
      %2474 = vmatprep.subr.bf16.mxu0 0
      %2475 = vmatpush1.bf16.msra.mxu0 0
      %2476 = vmatprep.subr.bf16.mxu0 0
      %2477 = vmatpush1.bf16.msra.mxu0 0
      %2478 = vmatprep.subr.bf16.mxu0 0
      %2479 = vmatpush1.bf16.msra.mxu0 0
      %2480 = vmatprep.subr.bf16.mxu0 0
      %2481 = vmatpush1.bf16.msra.mxu0 0
      %2482 = vmatprep.subr.bf16.mxu0 0
      %2483 = vmatpush1.bf16.msra.mxu0 0
      %2484 = vmatprep.subr.bf16.mxu0 0
      %2485 = vmatpush1.bf16.msra.mxu0 0
      %2486 = vmatprep.subr.bf16.mxu0 0
      %2487 = vmatpush1.bf16.msra.mxu0 0
      %2488 = vmatprep.subr.bf16.mxu0 0
      %2489 = vmatpush1.bf16.msra.mxu0 0
      %2490 = vmatprep.subr.bf16.mxu0 0
      %2491 = vmatpush1.bf16.msra.mxu0 0
      %2492 = vmatprep.subr.bf16.mxu0 0
      %2493 = vmatpush1.bf16.msra.mxu0 0
      %2494 = vmatprep.subr.bf16.mxu0 0
      %2495 = vmatpush1.bf16.msra.mxu0 0
      %2496 = vmatprep.mubr.bf16.mxu0 0
      %2497 = vmatmul.mubr.bf16.gmra.mrb[0].mxu0 %v2077
      %v2498 = vpop.f32.mrb[0].mxu0
      %v2499 = vadd.f32 0.0, %v2498
      %v2500 = vpop.f32.mrb[0].mxu0
      %v2501 = vpop.f32.mrb[0].mxu0
      %v2502 = vadd.f32 0.0, %v2501
      %v2503 = vpop.f32.mrb[0].mxu0
      %2504 = vmatprep.mubr.bf16.mxu0 0
      %2505 = vmatmul.mubr.bf16.gmra.mrb[0].mxu0 %v2080
      %v2506 = vpop.f32.mrb[0].mxu0
      %v2507 = vadd.f32 0.0, %v2506
      %v2508 = vpop.f32.mrb[0].mxu0
      %v2509 = vpop.f32.mrb[0].mxu0
      %v2510 = vadd.f32 0.0, %v2509
      %v2511 = vpop.f32.mrb[0].mxu0
      %2512 = vmatprep.mubr.bf16.mxu0 0
      %2513 = vmatmul.mubr.bf16.gmra.mrb[0].mxu0 %v2083
      %v2514 = vpop.f32.mrb[0].mxu0
      %v2515 = vadd.f32 0.0, %v2514
      %v2516 = vpop.f32.mrb[0].mxu0
      %v2517 = vpop.f32.mrb[0].mxu0
      %v2518 = vadd.f32 0.0, %v2517
      %v2519 = vpop.f32.mrb[0].mxu0
      %2520 = vmatprep.mubr.bf16.mxu0 0
      %2521 = vmatmul.mubr.bf16.gmra.mrb[0].mxu0 %v2086
      %v2522 = vpop.f32.mrb[0].mxu0
      %v2523 = vadd.f32 0.0, %v2522
      %v2524 = vpop.f32.mrb[0].mxu0
      %v2525 = vpop.f32.mrb[0].mxu0
      %v2526 = vadd.f32 0.0, %v2525
      %v2527 = vpop.f32.mrb[0].mxu0
      %2528 = vmatprep.mubr.bf16.mxu0 0
      %2529 = vmatmul.mubr.bf16.gmra.mrb[0].mxu0 %v2089
      %v2530 = vpop.f32.mrb[0].mxu0
      %v2531 = vadd.f32 0.0, %v2530
      %v2532 = vpop.f32.mrb[0].mxu0
      %v2533 = vpop.f32.mrb[0].mxu0
      %v2534 = vadd.f32 0.0, %v2533
      %v2535 = vpop.f32.mrb[0].mxu0
      %2536 = vmatprep.mubr.bf16.mxu0 0
      %2537 = vmatmul.mubr.bf16.gmra.mrb[0].mxu0 %v2092
      %v2538 = vpop.f32.mrb[0].mxu0
      %v2539 = vadd.f32 0.0, %v2538
      %v2540 = vpop.f32.mrb[0].mxu0
      %v2541 = vpop.f32.mrb[0].mxu0
      %v2542 = vadd.f32 0.0, %v2541
      %v2543 = vpop.f32.mrb[0].mxu0
      %2544 = vmatprep.mubr.bf16.mxu0 0
      %2545 = vmatmul.mubr.bf16.gmra.mrb[0].mxu0 %v2095
      %v2546 = vpop.f32.mrb[0].mxu0
      %v2547 = vadd.f32 0.0, %v2546
      %v2548 = vpop.f32.mrb[0].mxu0
      %v2549 = vpop.f32.mrb[0].mxu0
      %v2550 = vadd.f32 0.0, %v2549
      %v2551 = vpop.f32.mrb[0].mxu0
      %2552 = vmatprep.mubr.bf16.mxu0 0
      %2553 = vmatmul.mubr.bf16.gmra.mrb[0].mxu0 %v2098
      %v2554 = vpop.f32.mrb[0].mxu0
      %v2555 = vadd.f32 0.0, %v2554
      %v2556 = vpop.f32.mrb[0].mxu0
      %v2557 = vpop.f32.mrb[0].mxu0
      %v2558 = vadd.f32 0.0, %v2557
      %v2559 = vpop.f32.mrb[0].mxu0
      %2560 = vmatprep.mubr.bf16.mxu0 0
      %2561 = vmatmul.mubr.bf16.gmra.mrb[0].mxu0 %v2101
      %v2562 = vpop.f32.mrb[0].mxu0
      %v2563 = vadd.f32 0.0, %v2562
      %v2564 = vpop.f32.mrb[0].mxu0
      %v2565 = vpop.f32.mrb[0].mxu0
      %v2566 = vadd.f32 0.0, %v2565
      %v2567 = vpop.f32.mrb[0].mxu0
      %2568 = vmatprep.mubr.bf16.mxu0 0
      %2569 = vmatmul.mubr.bf16.gmra.mrb[0].mxu0 %v2104
      %v2570 = vpop.f32.mrb[0].mxu0
      %v2571 = vadd.f32 0.0, %v2570
      %v2572 = vpop.f32.mrb[0].mxu0
      %v2573 = vpop.f32.mrb[0].mxu0
      %v2574 = vadd.f32 0.0, %v2573
      %v2575 = vpop.f32.mrb[0].mxu0
      %2576 = vmatprep.mubr.bf16.mxu0 0
      %2577 = vmatmul.mubr.bf16.gmra.mrb[0].mxu0 %v2107
      %v2578 = vpop.f32.mrb[0].mxu0
      %v2579 = vadd.f32 0.0, %v2578
      %v2580 = vpop.f32.mrb[0].mxu0
      %v2581 = vpop.f32.mrb[0].mxu0
      %v2582 = vadd.f32 0.0, %v2581
      %v2583 = vpop.f32.mrb[0].mxu0
      %2584 = vmatprep.mubr.bf16.mxu0 0
      %2585 = vmatmul.mubr.bf16.gmra.mrb[0].mxu0 %v2283
      %v2586 = vpop.f32.mrb[0].mxu0
      %v2587 = vadd.f32 0.0, %v2586
      %v2588 = vpop.f32.mrb[0].mxu0
      %v2589 = vpop.f32.mrb[0].mxu0
      %v2590 = vadd.f32 0.0, %v2589
      %v2591 = vpop.f32.mrb[0].mxu0
      %2592 = vmatprep.mubr.bf16.mxu0 0
      %2593 = vmatmul.mubr.bf16.gmra.mrb[0].mxu0 %v2459
      %v2594 = vpop.f32.mrb[0].mxu0
      %v2595 = vadd.f32 0.0, %v2594
      %v2596 = vpop.f32.mrb[0].mxu0
      %v2597 = vpop.f32.mrb[0].mxu0
      %v2598 = vadd.f32 0.0, %v2597
      %v2599 = vpop.f32.mrb[0].mxu0
      %2600 = vdwg.mxu0
      %v2601 = vadd.f32 %v2425, %v2499
      %v2602 = vadd.f32 %v2426, %v2502
      %v2603 = vadd.f32 %v2427, %v2507
      %v2604 = vadd.f32 %v2428, %v2510
      %v2605 = vadd.f32 %v2429, %v2515
      %v2606 = vadd.f32 %v2430, %v2518
      %v2607 = vadd.f32 %v2431, %v2523
      %v2608 = vadd.f32 %v2432, %v2526
      %v2609 = vadd.f32 %v2433, %v2531
      %v2610 = vadd.f32 %v2434, %v2534
      %v2611 = vadd.f32 %v2435, %v2539
      %v2612 = vadd.f32 %v2436, %v2542
      %v2613 = vadd.f32 %v2437, %v2547
      %v2614 = vadd.f32 %v2438, %v2550
      %v2615 = vadd.f32 %v2439, %v2555
      %v2616 = vadd.f32 %v2440, %v2558
      %v2617 = vadd.f32 %v2441, %v2563
      %v2618 = vadd.f32 %v2442, %v2566
      %v2619 = vadd.f32 %v2443, %v2571
      %v2620 = vadd.f32 %v2444, %v2574
      %v2621 = vadd.f32 %v2445, %v2579
      %v2622 = vadd.f32 %v2446, %v2582
      %v2623 = vadd.f32 %v2447, %v2587
      %v2624 = vadd.f32 %v2448, %v2590
      %v2625 = vadd.f32 %v2449, %v2595
      %v2626 = vadd.f32 %v2450, %v2598
      %s2627 = scalar_lea.vmem %s428, 240
      %v2628 = vld [vmem:[%s2627] sm:$0xf]
      %v2629 = vld [vmem:[%s2627 + $0x4] sm:$0xf]
      %v2630 = vld [vmem:[%s2627 + $0x8] sm:$0xf]
      %v2631 = vld [vmem:[%s2627 + $0xc] sm:$0xf]
      %v2632 = vld [vmem:[%s2627 + $0x10] sm:$0xf]
      %v2633 = vld [vmem:[%s2627 + $0x14] sm:$0xf]
      %v2634 = vld [vmem:[%s2627 + $0x18] sm:$0xf]
      %v2635 = vld [vmem:[%s2627 + $0x1c] sm:$0xf]
      %v2636 = vld [vmem:[%s2627 + $0x20] sm:$0xf]
      %v2637 = vld [vmem:[%s2627 + $0x24] sm:$0xf]
      %v2638 = vld [vmem:[%s2627 + $0x28] sm:$0xf]
      %v2639 = vld [vmem:[%s2627 + $0x2c] sm:$0xf]
      %v2640 = vld [vmem:[%s2627 + $0x30] sm:$0xf]
      %v2641 = vld [vmem:[%s2627 + $0x34] sm:$0xf]
      %v2642 = vld [vmem:[%s2627 + $0x38] sm:$0xf]
      %v2643 = vld [vmem:[%s2627 + $0x3c] sm:$0xf]
      %v2644 = vld [vmem:[%s2627 + $0x40] sm:$0xf]
      %v2645 = vld [vmem:[%s2627 + $0x44] sm:$0xf]
      %v2646 = vld [vmem:[%s2627 + $0x48] sm:$0xf]
      %v2647 = vld [vmem:[%s2627 + $0x4c] sm:$0xf]
      %v2648 = vld [vmem:[%s2627 + $0x50] sm:$0xf]
      %v2649 = vld [vmem:[%s2627 + $0x54] sm:$0xf]
      %v2650 = vld [vmem:[%s2627 + $0x58] sm:$0xf]
      %v2651 = vld [vmem:[%s2627 + $0x5c] sm:$0xf]
      %v2652 = vld [vmem:[%s2627 + $0x60] sm:$0xf]
      %v2653 = vld [vmem:[%s2627 + $0x64] sm:$0xf]
      %v2654 = vld [vmem:[%s2627 + $0x68] sm:$0xf]
      %v2655 = vld [vmem:[%s2627 + $0x6c] sm:$0xf]
      %v2656 = vld [vmem:[%s2627 + $0x70] sm:$0xf]
      %v2657 = vld [vmem:[%s2627 + $0x74] sm:$0xf]
      %s2658 = scalar_lea.vmem %s3, 8
      %v2659 = vld [vmem:[%s2658] sm:$0xf]
      %v2686 = vunpack.c.l.b16 %v2628
      %v2687 = vunpack.c.l.b16 %v2629
      %v2688 = vunpack.c.l.b16 %v2630
      %v2689 = vunpack.c.l.b16 %v2631
      %v2690 = vunpack.c.l.b16 %v2632
      %v2691 = vunpack.c.l.b16 %v2633
      %v2692 = vunpack.c.l.b16 %v2634
      %v2693 = vunpack.c.l.b16 %v2635
      %v2694 = vunpack.c.l.b16 %v2636
      %v2695 = vunpack.c.l.b16 %v2637
      %v2696 = vunpack.c.l.b16 %v2638
      %v2697 = vunpack.c.l.b16 %v2639
      %v2698 = vunpack.c.l.b16 %v2640
      %v2699 = vunpack.c.l.b16 %v2641
      %v2700 = vunpack.c.l.b16 %v2642
      %v2701 = vunpack.c.l.b16 %v2643
      %v2702 = vunpack.c.l.b16 %v2644
      %v2703 = vunpack.c.l.b16 %v2645
      %v2704 = vunpack.c.l.b16 %v2646
      %v2705 = vunpack.c.l.b16 %v2647
      %v2706 = vunpack.c.l.b16 %v2648
      %v2707 = vunpack.c.l.b16 %v2649
      %v2708 = vunpack.c.l.b16 %v2650
      %v2709 = vunpack.c.l.b16 %v2651
      %v2710 = vunpack.c.l.b16 %v2652
      %v2711 = vunpack.c.l.b16 %v2653
      %v2712 = vpack.c.b16 %v2687, %v2686
      %v2713 = vpack.c.b16 %v2689, %v2688
      %v2714 = vpack.c.b16 %v2691, %v2690
      %v2715 = vpack.c.b16 %v2693, %v2692
      %v2716 = vpack.c.b16 %v2695, %v2694
      %v2717 = vpack.c.b16 %v2697, %v2696
      %v2718 = vpack.c.b16 %v2699, %v2698
      %v2719 = vpack.c.b16 %v2701, %v2700
      %v2720 = vpack.c.b16 %v2703, %v2702
      %v2721 = vpack.c.b16 %v2705, %v2704
      %v2722 = vpack.c.b16 %v2707, %v2706
      %v2723 = vpack.c.b16 %v2709, %v2708
      %v2724 = vpack.c.b16 %v2711, %v2710
      %v2726 = vsel %vm479, %v2712, 0
      %v2729 = vsel %vm479, %v2713, 0
      %v2732 = vsel %vm479, %v2714, 0
      %v2735 = vsel %vm479, %v2715, 0
      %v2738 = vsel %vm479, %v2716, 0
      %v2741 = vsel %vm479, %v2717, 0
      %v2744 = vsel %vm479, %v2718, 0
      %v2747 = vsel %vm479, %v2719, 0
      %v2750 = vsel %vm479, %v2720, 0
      %v2753 = vsel %vm479, %v2721, 0
      %v2756 = vsel %vm479, %v2722, 0
      %v2759 = vsel %vm479, %v2723, 0
      %v2762 = vsel %vm479, %v2724, 0
      %v2765 = vsel %vm495, %v2659, 0
      %2767 = vmatprep.subr.bf16.mxu0 0
      %2768 = vmatpush1.bf16.msra.mxu0 %v2765
      %2769 = vmatprep.subr.bf16.mxu0 0
      %2770 = vmatpush1.bf16.msra.mxu0 0
      %2771 = vmatprep.subr.bf16.mxu0 0
      %2772 = vmatpush1.bf16.msra.mxu0 0
      %2773 = vmatprep.subr.bf16.mxu0 0
      %2774 = vmatpush1.bf16.msra.mxu0 0
      %2775 = vmatprep.subr.bf16.mxu0 0
      %2776 = vmatpush1.bf16.msra.mxu0 0
      %2777 = vmatprep.subr.bf16.mxu0 0
      %2778 = vmatpush1.bf16.msra.mxu0 0
      %2779 = vmatprep.subr.bf16.mxu0 0
      %2780 = vmatpush1.bf16.msra.mxu0 0
      %2781 = vmatprep.subr.bf16.mxu0 0
      %2782 = vmatpush1.bf16.msra.mxu0 0
      %2783 = vmatprep.subr.bf16.mxu0 0
      %2784 = vmatpush1.bf16.msra.mxu0 0
      %2785 = vmatprep.subr.bf16.mxu0 0
      %2786 = vmatpush1.bf16.msra.mxu0 0
      %2787 = vmatprep.subr.bf16.mxu0 0
      %2788 = vmatpush1.bf16.msra.mxu0 0
      %2789 = vmatprep.subr.bf16.mxu0 0
      %2790 = vmatpush1.bf16.msra.mxu0 0
      %2791 = vmatprep.subr.bf16.mxu0 0
      %2792 = vmatpush1.bf16.msra.mxu0 0
      %2793 = vmatprep.subr.bf16.mxu0 0
      %2794 = vmatpush1.bf16.msra.mxu0 0
      %2795 = vmatprep.subr.bf16.mxu0 0
      %2796 = vmatpush1.bf16.msra.mxu0 0
      %2797 = vmatprep.subr.bf16.mxu0 0
      %2798 = vmatpush1.bf16.msra.mxu0 0
      %2799 = vmatprep.mubr.bf16.mxu0 0
      %2800 = vmatmul.mubr.bf16.gmra.mrb[0].mxu0 %v2726
      %v2801 = vpop.f32.mrb[0].mxu0
      %v2802 = vadd.f32 0.0, %v2801
      %v2803 = vpop.f32.mrb[0].mxu0
      %v2804 = vpop.f32.mrb[0].mxu0
      %v2805 = vadd.f32 0.0, %v2804
      %v2806 = vpop.f32.mrb[0].mxu0
      %2807 = vmatprep.mubr.bf16.mxu0 0
      %2808 = vmatmul.mubr.bf16.gmra.mrb[0].mxu0 %v2729
      %v2809 = vpop.f32.mrb[0].mxu0
      %v2810 = vadd.f32 0.0, %v2809
      %v2811 = vpop.f32.mrb[0].mxu0
      %v2812 = vpop.f32.mrb[0].mxu0
      %v2813 = vadd.f32 0.0, %v2812
      %v2814 = vpop.f32.mrb[0].mxu0
      %2815 = vmatprep.mubr.bf16.mxu0 0
      %2816 = vmatmul.mubr.bf16.gmra.mrb[0].mxu0 %v2732
      %v2817 = vpop.f32.mrb[0].mxu0
      %v2818 = vadd.f32 0.0, %v2817
      %v2819 = vpop.f32.mrb[0].mxu0
      %v2820 = vpop.f32.mrb[0].mxu0
      %v2821 = vadd.f32 0.0, %v2820
      %v2822 = vpop.f32.mrb[0].mxu0
      %2823 = vmatprep.mubr.bf16.mxu0 0
      %2824 = vmatmul.mubr.bf16.gmra.mrb[0].mxu0 %v2735
      %v2825 = vpop.f32.mrb[0].mxu0
      %v2826 = vadd.f32 0.0, %v2825
      %v2827 = vpop.f32.mrb[0].mxu0
      %v2828 = vpop.f32.mrb[0].mxu0
      %v2829 = vadd.f32 0.0, %v2828
      %v2830 = vpop.f32.mrb[0].mxu0
      %2831 = vmatprep.mubr.bf16.mxu0 0
      %2832 = vmatmul.mubr.bf16.gmra.mrb[0].mxu0 %v2738
      %v2833 = vpop.f32.mrb[0].mxu0
      %v2834 = vadd.f32 0.0, %v2833
      %v2835 = vpop.f32.mrb[0].mxu0
      %v2836 = vpop.f32.mrb[0].mxu0
      %v2837 = vadd.f32 0.0, %v2836
      %v2838 = vpop.f32.mrb[0].mxu0
      %2839 = vmatprep.mubr.bf16.mxu0 0
      %2840 = vmatmul.mubr.bf16.gmra.mrb[0].mxu0 %v2741
      %v2841 = vpop.f32.mrb[0].mxu0
      %v2842 = vadd.f32 0.0, %v2841
      %v2843 = vpop.f32.mrb[0].mxu0
      %v2844 = vpop.f32.mrb[0].mxu0
      %v2845 = vadd.f32 0.0, %v2844
      %v2846 = vpop.f32.mrb[0].mxu0
      %2847 = vmatprep.mubr.bf16.mxu0 0
      %2848 = vmatmul.mubr.bf16.gmra.mrb[0].mxu0 %v2744
      %v2849 = vpop.f32.mrb[0].mxu0
      %v2850 = vadd.f32 0.0, %v2849
      %v2851 = vpop.f32.mrb[0].mxu0
      %v2852 = vpop.f32.mrb[0].mxu0
      %v2853 = vadd.f32 0.0, %v2852
      %v2854 = vpop.f32.mrb[0].mxu0
      %2855 = vmatprep.mubr.bf16.mxu0 0
      %2856 = vmatmul.mubr.bf16.gmra.mrb[0].mxu0 %v2747
      %v2857 = vpop.f32.mrb[0].mxu0
      %v2858 = vadd.f32 0.0, %v2857
      %v2859 = vpop.f32.mrb[0].mxu0
      %v2860 = vpop.f32.mrb[0].mxu0
      %v2861 = vadd.f32 0.0, %v2860
      %v2862 = vpop.f32.mrb[0].mxu0
      %2863 = vmatprep.mubr.bf16.mxu0 0
      %2864 = vmatmul.mubr.bf16.gmra.mrb[0].mxu0 %v2750
      %v2865 = vpop.f32.mrb[0].mxu0
      %v2866 = vadd.f32 0.0, %v2865
      %v2867 = vpop.f32.mrb[0].mxu0
      %v2868 = vpop.f32.mrb[0].mxu0
      %v2869 = vadd.f32 0.0, %v2868
      %v2870 = vpop.f32.mrb[0].mxu0
      %2871 = vmatprep.mubr.bf16.mxu0 0
      %2872 = vmatmul.mubr.bf16.gmra.mrb[0].mxu0 %v2753
      %v2873 = vpop.f32.mrb[0].mxu0
      %v2874 = vadd.f32 0.0, %v2873
      %v2875 = vpop.f32.mrb[0].mxu0
      %v2876 = vpop.f32.mrb[0].mxu0
      %v2877 = vadd.f32 0.0, %v2876
      %v2878 = vpop.f32.mrb[0].mxu0
      %2879 = vmatprep.mubr.bf16.mxu0 0
      %2880 = vmatmul.mubr.bf16.gmra.mrb[0].mxu0 %v2756
      %v2881 = vpop.f32.mrb[0].mxu0
      %v2882 = vadd.f32 0.0, %v2881
      %v2883 = vpop.f32.mrb[0].mxu0
      %v2884 = vpop.f32.mrb[0].mxu0
      %v2885 = vadd.f32 0.0, %v2884
      %v2886 = vpop.f32.mrb[0].mxu0
      %2887 = vmatprep.mubr.bf16.mxu0 0
      %2888 = vmatmul.mubr.bf16.gmra.mrb[0].mxu0 %v2759
      %v2889 = vpop.f32.mrb[0].mxu0
      %v2890 = vadd.f32 0.0, %v2889
      %v2891 = vpop.f32.mrb[0].mxu0
      %v2892 = vpop.f32.mrb[0].mxu0
      %v2893 = vadd.f32 0.0, %v2892
      %v2894 = vpop.f32.mrb[0].mxu0
      %2895 = vmatprep.mubr.bf16.mxu0 0
      %2896 = vmatmul.mubr.bf16.gmra.mrb[0].mxu0 %v2762
      %v2897 = vpop.f32.mrb[0].mxu0
      %v2898 = vadd.f32 0.0, %v2897
      %v2899 = vpop.f32.mrb[0].mxu0
      %v2900 = vpop.f32.mrb[0].mxu0
      %v2901 = vadd.f32 0.0, %v2900
      %v2902 = vpop.f32.mrb[0].mxu0
      %2903 = vdwg.mxu0
      %v2904 = vadd.f32 %v2601, %v2802
      %v2905 = vadd.f32 %v2602, %v2805
      %v2906 = vadd.f32 %v2603, %v2810
      %v2907 = vadd.f32 %v2604, %v2813
      %v2908 = vadd.f32 %v2605, %v2818
      %v2909 = vadd.f32 %v2606, %v2821
      %v2910 = vadd.f32 %v2607, %v2826
      %v2911 = vadd.f32 %v2608, %v2829
      %v2912 = vadd.f32 %v2609, %v2834
      %v2913 = vadd.f32 %v2610, %v2837
      %v2914 = vadd.f32 %v2611, %v2842
      %v2915 = vadd.f32 %v2612, %v2845
      %v2916 = vadd.f32 %v2613, %v2850
      %v2917 = vadd.f32 %v2614, %v2853
      %v2918 = vadd.f32 %v2615, %v2858
      %v2919 = vadd.f32 %v2616, %v2861
      %v2920 = vadd.f32 %v2617, %v2866
      %v2921 = vadd.f32 %v2618, %v2869
      %v2922 = vadd.f32 %v2619, %v2874
      %v2923 = vadd.f32 %v2620, %v2877
      %v2924 = vadd.f32 %v2621, %v2882
      %v2925 = vadd.f32 %v2622, %v2885
      %v2926 = vadd.f32 %v2623, %v2890
      %v2927 = vadd.f32 %v2624, %v2893
      %v2928 = vadd.f32 %v2625, %v2898
      %v2929 = vadd.f32 %v2626, %v2901
      %s2930 = scalar_lea.vmem %s3, 20
      %v2931 = vld [vmem:[%s2930] sm:$0xf]
      %v2934 = vunpack.c.l.b16 %v2654
      %v2935 = vunpack.c.l.b16 %v2655
      %v2936 = vpack.c.b16 %v2935, %v2934
      %v2938 = vsel %vm479, %v2936, 0
      %v2941 = vsel %vm495, %v2931, 0
      %2943 = vmatprep.subr.bf16.mxu0 0
      %2944 = vmatpush1.bf16.msra.mxu0 %v2941
      %2945 = vmatprep.subr.bf16.mxu0 0
      %2946 = vmatpush1.bf16.msra.mxu0 0
      %2947 = vmatprep.subr.bf16.mxu0 0
      %2948 = vmatpush1.bf16.msra.mxu0 0
      %2949 = vmatprep.subr.bf16.mxu0 0
      %2950 = vmatpush1.bf16.msra.mxu0 0
      %2951 = vmatprep.subr.bf16.mxu0 0
      %2952 = vmatpush1.bf16.msra.mxu0 0
      %2953 = vmatprep.subr.bf16.mxu0 0
      %2954 = vmatpush1.bf16.msra.mxu0 0
      %2955 = vmatprep.subr.bf16.mxu0 0
      %2956 = vmatpush1.bf16.msra.mxu0 0
      %2957 = vmatprep.subr.bf16.mxu0 0
      %2958 = vmatpush1.bf16.msra.mxu0 0
      %2959 = vmatprep.subr.bf16.mxu0 0
      %2960 = vmatpush1.bf16.msra.mxu0 0
      %2961 = vmatprep.subr.bf16.mxu0 0
      %2962 = vmatpush1.bf16.msra.mxu0 0
      %2963 = vmatprep.subr.bf16.mxu0 0
      %2964 = vmatpush1.bf16.msra.mxu0 0
      %2965 = vmatprep.subr.bf16.mxu0 0
      %2966 = vmatpush1.bf16.msra.mxu0 0
      %2967 = vmatprep.subr.bf16.mxu0 0
      %2968 = vmatpush1.bf16.msra.mxu0 0
      %2969 = vmatprep.subr.bf16.mxu0 0
      %2970 = vmatpush1.bf16.msra.mxu0 0
      %2971 = vmatprep.subr.bf16.mxu0 0
      %2972 = vmatpush1.bf16.msra.mxu0 0
      %2973 = vmatprep.subr.bf16.mxu0 0
      %2974 = vmatpush1.bf16.msra.mxu0 0
      %2975 = vmatprep.mubr.bf16.mxu0 0
      %2976 = vmatmul.mubr.bf16.gmra.mrb[0].mxu0 %v2729
      %v2977 = vpop.f32.mrb[0].mxu0
      %v2978 = vadd.f32 0.0, %v2977
      %v2979 = vpop.f32.mrb[0].mxu0
      %v2980 = vpop.f32.mrb[0].mxu0
      %v2981 = vadd.f32 0.0, %v2980
      %v2982 = vpop.f32.mrb[0].mxu0
      %2983 = vmatprep.mubr.bf16.mxu0 0
      %2984 = vmatmul.mubr.bf16.gmra.mrb[0].mxu0 %v2732
      %v2985 = vpop.f32.mrb[0].mxu0
      %v2986 = vadd.f32 0.0, %v2985
      %v2987 = vpop.f32.mrb[0].mxu0
      %v2988 = vpop.f32.mrb[0].mxu0
      %v2989 = vadd.f32 0.0, %v2988
      %v2990 = vpop.f32.mrb[0].mxu0
      %2991 = vmatprep.mubr.bf16.mxu0 0
      %2992 = vmatmul.mubr.bf16.gmra.mrb[0].mxu0 %v2735
      %v2993 = vpop.f32.mrb[0].mxu0
      %v2994 = vadd.f32 0.0, %v2993
      %v2995 = vpop.f32.mrb[0].mxu0
      %v2996 = vpop.f32.mrb[0].mxu0
      %v2997 = vadd.f32 0.0, %v2996
      %v2998 = vpop.f32.mrb[0].mxu0
      %2999 = vmatprep.mubr.bf16.mxu0 0
      %3000 = vmatmul.mubr.bf16.gmra.mrb[0].mxu0 %v2738
      %v3001 = vpop.f32.mrb[0].mxu0
      %v3002 = vadd.f32 0.0, %v3001
      %v3003 = vpop.f32.mrb[0].mxu0
      %v3004 = vpop.f32.mrb[0].mxu0
      %v3005 = vadd.f32 0.0, %v3004
      %v3006 = vpop.f32.mrb[0].mxu0
      %3007 = vmatprep.mubr.bf16.mxu0 0
      %3008 = vmatmul.mubr.bf16.gmra.mrb[0].mxu0 %v2741
      %v3009 = vpop.f32.mrb[0].mxu0
      %v3010 = vadd.f32 0.0, %v3009
      %v3011 = vpop.f32.mrb[0].mxu0
      %v3012 = vpop.f32.mrb[0].mxu0
      %v3013 = vadd.f32 0.0, %v3012
      %v3014 = vpop.f32.mrb[0].mxu0
      %3015 = vmatprep.mubr.bf16.mxu0 0
      %3016 = vmatmul.mubr.bf16.gmra.mrb[0].mxu0 %v2744
      %v3017 = vpop.f32.mrb[0].mxu0
      %v3018 = vadd.f32 0.0, %v3017
      %v3019 = vpop.f32.mrb[0].mxu0
      %v3020 = vpop.f32.mrb[0].mxu0
      %v3021 = vadd.f32 0.0, %v3020
      %v3022 = vpop.f32.mrb[0].mxu0
      %3023 = vmatprep.mubr.bf16.mxu0 0
      %3024 = vmatmul.mubr.bf16.gmra.mrb[0].mxu0 %v2747
      %v3025 = vpop.f32.mrb[0].mxu0
      %v3026 = vadd.f32 0.0, %v3025
      %v3027 = vpop.f32.mrb[0].mxu0
      %v3028 = vpop.f32.mrb[0].mxu0
      %v3029 = vadd.f32 0.0, %v3028
      %v3030 = vpop.f32.mrb[0].mxu0
      %3031 = vmatprep.mubr.bf16.mxu0 0
      %3032 = vmatmul.mubr.bf16.gmra.mrb[0].mxu0 %v2750
      %v3033 = vpop.f32.mrb[0].mxu0
      %v3034 = vadd.f32 0.0, %v3033
      %v3035 = vpop.f32.mrb[0].mxu0
      %v3036 = vpop.f32.mrb[0].mxu0
      %v3037 = vadd.f32 0.0, %v3036
      %v3038 = vpop.f32.mrb[0].mxu0
      %3039 = vmatprep.mubr.bf16.mxu0 0
      %3040 = vmatmul.mubr.bf16.gmra.mrb[0].mxu0 %v2753
      %v3041 = vpop.f32.mrb[0].mxu0
      %v3042 = vadd.f32 0.0, %v3041
      %v3043 = vpop.f32.mrb[0].mxu0
      %v3044 = vpop.f32.mrb[0].mxu0
      %v3045 = vadd.f32 0.0, %v3044
      %v3046 = vpop.f32.mrb[0].mxu0
      %3047 = vmatprep.mubr.bf16.mxu0 0
      %3048 = vmatmul.mubr.bf16.gmra.mrb[0].mxu0 %v2756
      %v3049 = vpop.f32.mrb[0].mxu0
      %v3050 = vadd.f32 0.0, %v3049
      %v3051 = vpop.f32.mrb[0].mxu0
      %v3052 = vpop.f32.mrb[0].mxu0
      %v3053 = vadd.f32 0.0, %v3052
      %v3054 = vpop.f32.mrb[0].mxu0
      %3055 = vmatprep.mubr.bf16.mxu0 0
      %3056 = vmatmul.mubr.bf16.gmra.mrb[0].mxu0 %v2759
      %v3057 = vpop.f32.mrb[0].mxu0
      %v3058 = vadd.f32 0.0, %v3057
      %v3059 = vpop.f32.mrb[0].mxu0
      %v3060 = vpop.f32.mrb[0].mxu0
      %v3061 = vadd.f32 0.0, %v3060
      %v3062 = vpop.f32.mrb[0].mxu0
      %3063 = vmatprep.mubr.bf16.mxu0 0
      %3064 = vmatmul.mubr.bf16.gmra.mrb[0].mxu0 %v2762
      %v3065 = vpop.f32.mrb[0].mxu0
      %v3066 = vadd.f32 0.0, %v3065
      %v3067 = vpop.f32.mrb[0].mxu0
      %v3068 = vpop.f32.mrb[0].mxu0
      %v3069 = vadd.f32 0.0, %v3068
      %v3070 = vpop.f32.mrb[0].mxu0
      %3071 = vmatprep.mubr.bf16.mxu0 0
      %3072 = vmatmul.mubr.bf16.gmra.mrb[0].mxu0 %v2938
      %v3073 = vpop.f32.mrb[0].mxu0
      %v3074 = vadd.f32 0.0, %v3073
      %v3075 = vpop.f32.mrb[0].mxu0
      %v3076 = vpop.f32.mrb[0].mxu0
      %v3077 = vadd.f32 0.0, %v3076
      %v3078 = vpop.f32.mrb[0].mxu0
      %3079 = vdwg.mxu0
      %v3080 = vadd.f32 %v2904, %v2978
      %v3081 = vadd.f32 %v2905, %v2981
      %v3082 = vadd.f32 %v2906, %v2986
      %v3083 = vadd.f32 %v2907, %v2989
      %v3084 = vadd.f32 %v2908, %v2994
      %v3085 = vadd.f32 %v2909, %v2997
      %v3086 = vadd.f32 %v2910, %v3002
      %v3087 = vadd.f32 %v2911, %v3005
      %v3088 = vadd.f32 %v2912, %v3010
      %v3089 = vadd.f32 %v2913, %v3013
      %v3090 = vadd.f32 %v2914, %v3018
      %v3091 = vadd.f32 %v2915, %v3021
      %v3092 = vadd.f32 %v2916, %v3026
      %v3093 = vadd.f32 %v2917, %v3029
      %v3094 = vadd.f32 %v2918, %v3034
      %v3095 = vadd.f32 %v2919, %v3037
      %v3096 = vadd.f32 %v2920, %v3042
      %v3097 = vadd.f32 %v2921, %v3045
      %v3098 = vadd.f32 %v2922, %v3050
      %v3099 = vadd.f32 %v2923, %v3053
      %v3100 = vadd.f32 %v2924, %v3058
      %v3101 = vadd.f32 %v2925, %v3061
      %v3102 = vadd.f32 %v2926, %v3066
      %v3103 = vadd.f32 %v2927, %v3069
      %v3104 = vadd.f32 %v2928, %v3074
      %v3105 = vadd.f32 %v2929, %v3077
      %s3106 = scalar_lea.vmem %s3, 32
      %v3107 = vld [vmem:[%s3106] sm:$0xf]
      %v3110 = vunpack.c.l.b16 %v2656
      %v3111 = vunpack.c.l.b16 %v2657
      %v3112 = vpack.c.b16 %v3111, %v3110
      %v3114 = vsel %vm479, %v3112, 0
      %v3117 = vsel %vm495, %v3107, 0
      %3119 = vmatprep.subr.bf16.mxu0 0
      %3120 = vmatpush1.bf16.msra.mxu0 %v3117
      %3121 = vmatprep.subr.bf16.mxu0 0
      %3122 = vmatpush1.bf16.msra.mxu0 0
      %3123 = vmatprep.subr.bf16.mxu0 0
      %3124 = vmatpush1.bf16.msra.mxu0 0
      %3125 = vmatprep.subr.bf16.mxu0 0
      %3126 = vmatpush1.bf16.msra.mxu0 0
      %3127 = vmatprep.subr.bf16.mxu0 0
      %3128 = vmatpush1.bf16.msra.mxu0 0
      %3129 = vmatprep.subr.bf16.mxu0 0
      %3130 = vmatpush1.bf16.msra.mxu0 0
      %3131 = vmatprep.subr.bf16.mxu0 0
      %3132 = vmatpush1.bf16.msra.mxu0 0
      %3133 = vmatprep.subr.bf16.mxu0 0
      %3134 = vmatpush1.bf16.msra.mxu0 0
      %3135 = vmatprep.subr.bf16.mxu0 0
      %3136 = vmatpush1.bf16.msra.mxu0 0
      %3137 = vmatprep.subr.bf16.mxu0 0
      %3138 = vmatpush1.bf16.msra.mxu0 0
      %3139 = vmatprep.subr.bf16.mxu0 0
      %3140 = vmatpush1.bf16.msra.mxu0 0
      %3141 = vmatprep.subr.bf16.mxu0 0
      %3142 = vmatpush1.bf16.msra.mxu0 0
      %3143 = vmatprep.subr.bf16.mxu0 0
      %3144 = vmatpush1.bf16.msra.mxu0 0
      %3145 = vmatprep.subr.bf16.mxu0 0
      %3146 = vmatpush1.bf16.msra.mxu0 0
      %3147 = vmatprep.subr.bf16.mxu0 0
      %3148 = vmatpush1.bf16.msra.mxu0 0
      %3149 = vmatprep.subr.bf16.mxu0 0
      %3150 = vmatpush1.bf16.msra.mxu0 0
      %3151 = vmatprep.mubr.bf16.mxu0 0
      %3152 = vmatmul.mubr.bf16.gmra.mrb[0].mxu0 %v2732
      %v3153 = vpop.f32.mrb[0].mxu0
      %v3154 = vadd.f32 0.0, %v3153
      %v3155 = vpop.f32.mrb[0].mxu0
      %v3156 = vpop.f32.mrb[0].mxu0
      %v3157 = vadd.f32 0.0, %v3156
      %v3158 = vpop.f32.mrb[0].mxu0
      %3159 = vmatprep.mubr.bf16.mxu0 0
      %3160 = vmatmul.mubr.bf16.gmra.mrb[0].mxu0 %v2735
      %v3161 = vpop.f32.mrb[0].mxu0
      %v3162 = vadd.f32 0.0, %v3161
      %v3163 = vpop.f32.mrb[0].mxu0
      %v3164 = vpop.f32.mrb[0].mxu0
      %v3165 = vadd.f32 0.0, %v3164
      %v3166 = vpop.f32.mrb[0].mxu0
      %3167 = vmatprep.mubr.bf16.mxu0 0
      %3168 = vmatmul.mubr.bf16.gmra.mrb[0].mxu0 %v2738
      %v3169 = vpop.f32.mrb[0].mxu0
      %v3170 = vadd.f32 0.0, %v3169
      %v3171 = vpop.f32.mrb[0].mxu0
      %v3172 = vpop.f32.mrb[0].mxu0
      %v3173 = vadd.f32 0.0, %v3172
      %v3174 = vpop.f32.mrb[0].mxu0
      %3175 = vmatprep.mubr.bf16.mxu0 0
      %3176 = vmatmul.mubr.bf16.gmra.mrb[0].mxu0 %v2741
      %v3177 = vpop.f32.mrb[0].mxu0
      %v3178 = vadd.f32 0.0, %v3177
      %v3179 = vpop.f32.mrb[0].mxu0
      %v3180 = vpop.f32.mrb[0].mxu0
      %v3181 = vadd.f32 0.0, %v3180
      %v3182 = vpop.f32.mrb[0].mxu0
      %3183 = vmatprep.mubr.bf16.mxu0 0
      %3184 = vmatmul.mubr.bf16.gmra.mrb[0].mxu0 %v2744
      %v3185 = vpop.f32.mrb[0].mxu0
      %v3186 = vadd.f32 0.0, %v3185
      %v3187 = vpop.f32.mrb[0].mxu0
      %v3188 = vpop.f32.mrb[0].mxu0
      %v3189 = vadd.f32 0.0, %v3188
      %v3190 = vpop.f32.mrb[0].mxu0
      %3191 = vmatprep.mubr.bf16.mxu0 0
      %3192 = vmatmul.mubr.bf16.gmra.mrb[0].mxu0 %v2747
      %v3193 = vpop.f32.mrb[0].mxu0
      %v3194 = vadd.f32 0.0, %v3193
      %v3195 = vpop.f32.mrb[0].mxu0
      %v3196 = vpop.f32.mrb[0].mxu0
      %v3197 = vadd.f32 0.0, %v3196
      %v3198 = vpop.f32.mrb[0].mxu0
      %3199 = vmatprep.mubr.bf16.mxu0 0
      %3200 = vmatmul.mubr.bf16.gmra.mrb[0].mxu0 %v2750
      %v3201 = vpop.f32.mrb[0].mxu0
      %v3202 = vadd.f32 0.0, %v3201
      %v3203 = vpop.f32.mrb[0].mxu0
      %v3204 = vpop.f32.mrb[0].mxu0
      %v3205 = vadd.f32 0.0, %v3204
      %v3206 = vpop.f32.mrb[0].mxu0
      %3207 = vmatprep.mubr.bf16.mxu0 0
      %3208 = vmatmul.mubr.bf16.gmra.mrb[0].mxu0 %v2753
      %v3209 = vpop.f32.mrb[0].mxu0
      %v3210 = vadd.f32 0.0, %v3209
      %v3211 = vpop.f32.mrb[0].mxu0
      %v3212 = vpop.f32.mrb[0].mxu0
      %v3213 = vadd.f32 0.0, %v3212
      %v3214 = vpop.f32.mrb[0].mxu0
      %3215 = vmatprep.mubr.bf16.mxu0 0
      %3216 = vmatmul.mubr.bf16.gmra.mrb[0].mxu0 %v2756
      %v3217 = vpop.f32.mrb[0].mxu0
      %v3218 = vadd.f32 0.0, %v3217
      %v3219 = vpop.f32.mrb[0].mxu0
      %v3220 = vpop.f32.mrb[0].mxu0
      %v3221 = vadd.f32 0.0, %v3220
      %v3222 = vpop.f32.mrb[0].mxu0
      %3223 = vmatprep.mubr.bf16.mxu0 0
      %3224 = vmatmul.mubr.bf16.gmra.mrb[0].mxu0 %v2759
      %v3225 = vpop.f32.mrb[0].mxu0
      %v3226 = vadd.f32 0.0, %v3225
      %v3227 = vpop.f32.mrb[0].mxu0
      %v3228 = vpop.f32.mrb[0].mxu0
      %v3229 = vadd.f32 0.0, %v3228
      %v3230 = vpop.f32.mrb[0].mxu0
      %3231 = vmatprep.mubr.bf16.mxu0 0
      %3232 = vmatmul.mubr.bf16.gmra.mrb[0].mxu0 %v2762
      %v3233 = vpop.f32.mrb[0].mxu0
      %v3234 = vadd.f32 0.0, %v3233
      %v3235 = vpop.f32.mrb[0].mxu0
      %v3236 = vpop.f32.mrb[0].mxu0
      %v3237 = vadd.f32 0.0, %v3236
      %v3238 = vpop.f32.mrb[0].mxu0
      %3239 = vmatprep.mubr.bf16.mxu0 0
      %3240 = vmatmul.mubr.bf16.gmra.mrb[0].mxu0 %v2938
      %v3241 = vpop.f32.mrb[0].mxu0
      %v3242 = vadd.f32 0.0, %v3241
      %v3243 = vpop.f32.mrb[0].mxu0
      %v3244 = vpop.f32.mrb[0].mxu0
      %v3245 = vadd.f32 0.0, %v3244
      %v3246 = vpop.f32.mrb[0].mxu0
      %3247 = vmatprep.mubr.bf16.mxu0 0
      %3248 = vmatmul.mubr.bf16.gmra.mrb[0].mxu0 %v3114
      %v3249 = vpop.f32.mrb[0].mxu0
      %v3250 = vadd.f32 0.0, %v3249
      %v3251 = vpop.f32.mrb[0].mxu0
      %v3252 = vpop.f32.mrb[0].mxu0
      %v3253 = vadd.f32 0.0, %v3252
      %v3254 = vpop.f32.mrb[0].mxu0
      %3255 = vdwg.mxu0
      %v3256 = vadd.f32 %v3080, %v3154
      %v3257 = vadd.f32 %v3081, %v3157
      %v3258 = vadd.f32 %v3082, %v3162
      %v3259 = vadd.f32 %v3083, %v3165
      %v3260 = vadd.f32 %v3084, %v3170
      %v3261 = vadd.f32 %v3085, %v3173
      %v3262 = vadd.f32 %v3086, %v3178
      %v3263 = vadd.f32 %v3087, %v3181
      %v3264 = vadd.f32 %v3088, %v3186
      %v3265 = vadd.f32 %v3089, %v3189
      %v3266 = vadd.f32 %v3090, %v3194
      %v3267 = vadd.f32 %v3091, %v3197
      %v3268 = vadd.f32 %v3092, %v3202
      %v3269 = vadd.f32 %v3093, %v3205
      %v3270 = vadd.f32 %v3094, %v3210
      %v3271 = vadd.f32 %v3095, %v3213
      %v3272 = vadd.f32 %v3096, %v3218
      %v3273 = vadd.f32 %v3097, %v3221
      %v3274 = vadd.f32 %v3098, %v3226
      %v3275 = vadd.f32 %v3099, %v3229
      %v3276 = vadd.f32 %v3100, %v3234
      %v3277 = vadd.f32 %v3101, %v3237
      %v3278 = vadd.f32 %v3102, %v3242
      %v3279 = vadd.f32 %v3103, %v3245
      %v3280 = vadd.f32 %v3104, %v3250
      %v3281 = vadd.f32 %v3105, %v3253
      %v3283 = vlaneseq
      %v3284 = vshrl.u32 %v3283, 7
      %v3285 = vsub.s32 0, %v3284
      %v3286 = vrot.slane %v1369, %v3285
      %v3288 = vmul.f32 %v3256, %v3286
      %v3289 = vmul.f32 %v3257, %v3286
      %v3290 = vmul.f32 %v3258, %v3286
      %v3291 = vmul.f32 %v3259, %v3286
      %v3292 = vmul.f32 %v3260, %v3286
      %v3293 = vmul.f32 %v3261, %v3286
      %v3294 = vmul.f32 %v3262, %v3286
      %v3295 = vmul.f32 %v3263, %v3286
      %v3296 = vmul.f32 %v3264, %v3286
      %v3297 = vmul.f32 %v3265, %v3286
      %v3298 = vmul.f32 %v3266, %v3286
      %v3299 = vmul.f32 %v3267, %v3286
      %v3300 = vmul.f32 %v3268, %v3286
      %v3301 = vmul.f32 %v3269, %v3286
      %v3302 = vmul.f32 %v3270, %v3286
      %v3303 = vmul.f32 %v3271, %v3286
      %v3304 = vmul.f32 %v3272, %v3286
      %v3305 = vmul.f32 %v3273, %v3286
      %v3306 = vmul.f32 %v3274, %v3286
      %v3307 = vmul.f32 %v3275, %v3286
      %v3308 = vmul.f32 %v3276, %v3286
      %v3309 = vmul.f32 %v3277, %v3286
      %v3310 = vmul.f32 %v3278, %v3286
      %v3311 = vmul.f32 %v3279, %v3286
      %v3312 = vmul.f32 %v3280, %v3286
      %v3313 = vmul.f32 %v3281, %v3286
      %v3315 = vlaneseq
      %v3316 = vshrl.u32 %v3315, 7
      %v3317 = vsub.s32 0, %v3316
      %v3318 = vrot.slane %v1370, %v3317
      %v3320 = vadd.f32 %v3288, %v3318
      %v3321 = vadd.f32 %v3289, %v3318
      %v3322 = vadd.f32 %v3290, %v3318
      %v3323 = vadd.f32 %v3291, %v3318
      %v3324 = vadd.f32 %v3292, %v3318
      %v3325 = vadd.f32 %v3293, %v3318
      %v3326 = vadd.f32 %v3294, %v3318
      %v3327 = vadd.f32 %v3295, %v3318
      %v3328 = vadd.f32 %v3296, %v3318
      %v3329 = vadd.f32 %v3297, %v3318
      %v3330 = vadd.f32 %v3298, %v3318
      %v3331 = vadd.f32 %v3299, %v3318
      %v3332 = vadd.f32 %v3300, %v3318
      %v3333 = vadd.f32 %v3301, %v3318
      %v3334 = vadd.f32 %v3302, %v3318
      %v3335 = vadd.f32 %v3303, %v3318
      %v3336 = vadd.f32 %v3304, %v3318
      %v3337 = vadd.f32 %v3305, %v3318
      %v3338 = vadd.f32 %v3306, %v3318
      %v3339 = vadd.f32 %v3307, %v3318
      %v3340 = vadd.f32 %v3308, %v3318
      %v3341 = vadd.f32 %v3309, %v3318
      %v3342 = vadd.f32 %v3310, %v3318
      %v3343 = vadd.f32 %v3311, %v3318
      %v3344 = vadd.f32 %v3312, %v3318
      %v3345 = vadd.f32 %v3313, %v3318
      %v3346 = vmax.f32 %v3320, 0.0
      %v3347 = vmax.f32 %v3321, 0.0
      %v3348 = vmax.f32 %v3322, 0.0
      %v3349 = vmax.f32 %v3323, 0.0
      %v3350 = vmax.f32 %v3324, 0.0
      %v3351 = vmax.f32 %v3325, 0.0
      %v3352 = vmax.f32 %v3326, 0.0
      %v3353 = vmax.f32 %v3327, 0.0
      %v3354 = vmax.f32 %v3328, 0.0
      %v3355 = vmax.f32 %v3329, 0.0
      %v3356 = vmax.f32 %v3330, 0.0
      %v3357 = vmax.f32 %v3331, 0.0
      %v3358 = vmax.f32 %v3332, 0.0
      %v3359 = vmax.f32 %v3333, 0.0
      %v3360 = vmax.f32 %v3334, 0.0
      %v3361 = vmax.f32 %v3335, 0.0
      %v3362 = vmax.f32 %v3336, 0.0
      %v3363 = vmax.f32 %v3337, 0.0
      %v3364 = vmax.f32 %v3338, 0.0
      %v3365 = vmax.f32 %v3339, 0.0
      %v3366 = vmax.f32 %v3340, 0.0
      %v3367 = vmax.f32 %v3341, 0.0
      %v3368 = vmax.f32 %v3342, 0.0
      %v3369 = vmax.f32 %v3343, 0.0
      %v3370 = vmax.f32 %v3344, 0.0
      %v3371 = vmax.f32 %v3345, 0.0
      %v3372 = vlaneseq
      %v3373 = vshrl.u32 %v3372, 7
      %v3374 = vsub.s32 0, %v3373
      %v3375 = vrot.slane %v1364, %v3374
      %v3376 = vmul.f32 %v3346, %v3375
      %v3377 = vmul.f32 %v3347, %v3375
      %v3378 = vmul.f32 %v3348, %v3375
      %v3379 = vmul.f32 %v3349, %v3375
      %v3380 = vmul.f32 %v3350, %v3375
      %v3381 = vmul.f32 %v3351, %v3375
      %v3382 = vmul.f32 %v3352, %v3375
      %v3383 = vmul.f32 %v3353, %v3375
      %v3384 = vmul.f32 %v3354, %v3375
      %v3385 = vmul.f32 %v3355, %v3375
      %v3386 = vmul.f32 %v3356, %v3375
      %v3387 = vmul.f32 %v3357, %v3375
      %v3388 = vmul.f32 %v3358, %v3375
      %v3389 = vmul.f32 %v3359, %v3375
      %v3390 = vmul.f32 %v3360, %v3375
      %v3391 = vmul.f32 %v3361, %v3375
      %v3392 = vmul.f32 %v3362, %v3375
      %v3393 = vmul.f32 %v3363, %v3375
      %v3394 = vlaneseq
      %v3395 = vshrl.u32 %v3394, 7
      %v3396 = vsub.s32 0, %v3395
      %v3397 = vrot.slane %v1365, %v3396
      %v3398 = vmul.f32 %v3348, %v3397
      %v3399 = vmul.f32 %v3349, %v3397
      %v3400 = vmul.f32 %v3350, %v3397
      %v3401 = vmul.f32 %v3351, %v3397
      %v3402 = vmul.f32 %v3352, %v3397
      %v3403 = vmul.f32 %v3353, %v3397
      %v3404 = vmul.f32 %v3354, %v3397
      %v3405 = vmul.f32 %v3355, %v3397
      %v3406 = vmul.f32 %v3356, %v3397
      %v3407 = vmul.f32 %v3357, %v3397
      %v3408 = vmul.f32 %v3358, %v3397
      %v3409 = vmul.f32 %v3359, %v3397
      %v3410 = vmul.f32 %v3360, %v3397
      %v3411 = vmul.f32 %v3361, %v3397
      %v3412 = vmul.f32 %v3362, %v3397
      %v3413 = vmul.f32 %v3363, %v3397
      %v3414 = vmul.f32 %v3364, %v3397
      %v3415 = vmul.f32 %v3365, %v3397
      %v3416 = vadd.f32 %v3376, %v3398
      %v3417 = vadd.f32 %v3377, %v3399
      %v3418 = vadd.f32 %v3378, %v3400
      %v3419 = vadd.f32 %v3379, %v3401
      %v3420 = vadd.f32 %v3380, %v3402
      %v3421 = vadd.f32 %v3381, %v3403
      %v3422 = vadd.f32 %v3382, %v3404
      %v3423 = vadd.f32 %v3383, %v3405
      %v3424 = vadd.f32 %v3384, %v3406
      %v3425 = vadd.f32 %v3385, %v3407
      %v3426 = vadd.f32 %v3386, %v3408
      %v3427 = vadd.f32 %v3387, %v3409
      %v3428 = vadd.f32 %v3388, %v3410
      %v3429 = vadd.f32 %v3389, %v3411
      %v3430 = vadd.f32 %v3390, %v3412
      %v3431 = vadd.f32 %v3391, %v3413
      %v3432 = vadd.f32 %v3392, %v3414
      %v3433 = vadd.f32 %v3393, %v3415
      %v3434 = vlaneseq
      %v3435 = vshrl.u32 %v3434, 7
      %v3436 = vsub.s32 0, %v3435
      %v3437 = vrot.slane %v1366, %v3436
      %v3438 = vmul.f32 %v3350, %v3437
      %v3439 = vmul.f32 %v3351, %v3437
      %v3440 = vmul.f32 %v3352, %v3437
      %v3441 = vmul.f32 %v3353, %v3437
      %v3442 = vmul.f32 %v3354, %v3437
      %v3443 = vmul.f32 %v3355, %v3437
      %v3444 = vmul.f32 %v3356, %v3437
      %v3445 = vmul.f32 %v3357, %v3437
      %v3446 = vmul.f32 %v3358, %v3437
      %v3447 = vmul.f32 %v3359, %v3437
      %v3448 = vmul.f32 %v3360, %v3437
      %v3449 = vmul.f32 %v3361, %v3437
      %v3450 = vmul.f32 %v3362, %v3437
      %v3451 = vmul.f32 %v3363, %v3437
      %v3452 = vmul.f32 %v3364, %v3437
      %v3453 = vmul.f32 %v3365, %v3437
      %v3454 = vmul.f32 %v3366, %v3437
      %v3455 = vmul.f32 %v3367, %v3437
      %v3456 = vadd.f32 %v3416, %v3438
      %v3457 = vadd.f32 %v3417, %v3439
      %v3458 = vadd.f32 %v3418, %v3440
      %v3459 = vadd.f32 %v3419, %v3441
      %v3460 = vadd.f32 %v3420, %v3442
      %v3461 = vadd.f32 %v3421, %v3443
      %v3462 = vadd.f32 %v3422, %v3444
      %v3463 = vadd.f32 %v3423, %v3445
      %v3464 = vadd.f32 %v3424, %v3446
      %v3465 = vadd.f32 %v3425, %v3447
      %v3466 = vadd.f32 %v3426, %v3448
      %v3467 = vadd.f32 %v3427, %v3449
      %v3468 = vadd.f32 %v3428, %v3450
      %v3469 = vadd.f32 %v3429, %v3451
      %v3470 = vadd.f32 %v3430, %v3452
      %v3471 = vadd.f32 %v3431, %v3453
      %v3472 = vadd.f32 %v3432, %v3454
      %v3473 = vadd.f32 %v3433, %v3455
      %v3474 = vlaneseq
      %v3475 = vshrl.u32 %v3474, 7
      %v3476 = vsub.s32 0, %v3475
      %v3477 = vrot.slane %v1367, %v3476
      %v3478 = vmul.f32 %v3352, %v3477
      %v3479 = vmul.f32 %v3353, %v3477
      %v3480 = vmul.f32 %v3354, %v3477
      %v3481 = vmul.f32 %v3355, %v3477
      %v3482 = vmul.f32 %v3356, %v3477
      %v3483 = vmul.f32 %v3357, %v3477
      %v3484 = vmul.f32 %v3358, %v3477
      %v3485 = vmul.f32 %v3359, %v3477
      %v3486 = vmul.f32 %v3360, %v3477
      %v3487 = vmul.f32 %v3361, %v3477
      %v3488 = vmul.f32 %v3362, %v3477
      %v3489 = vmul.f32 %v3363, %v3477
      %v3490 = vmul.f32 %v3364, %v3477
      %v3491 = vmul.f32 %v3365, %v3477
      %v3492 = vmul.f32 %v3366, %v3477
      %v3493 = vmul.f32 %v3367, %v3477
      %v3494 = vmul.f32 %v3368, %v3477
      %v3495 = vmul.f32 %v3369, %v3477
      %v3496 = vadd.f32 %v3456, %v3478
      %v3497 = vadd.f32 %v3457, %v3479
      %v3498 = vadd.f32 %v3458, %v3480
      %v3499 = vadd.f32 %v3459, %v3481
      %v3500 = vadd.f32 %v3460, %v3482
      %v3501 = vadd.f32 %v3461, %v3483
      %v3502 = vadd.f32 %v3462, %v3484
      %v3503 = vadd.f32 %v3463, %v3485
      %v3504 = vadd.f32 %v3464, %v3486
      %v3505 = vadd.f32 %v3465, %v3487
      %v3506 = vadd.f32 %v3466, %v3488
      %v3507 = vadd.f32 %v3467, %v3489
      %v3508 = vadd.f32 %v3468, %v3490
      %v3509 = vadd.f32 %v3469, %v3491
      %v3510 = vadd.f32 %v3470, %v3492
      %v3511 = vadd.f32 %v3471, %v3493
      %v3512 = vadd.f32 %v3472, %v3494
      %v3513 = vadd.f32 %v3473, %v3495
      %v3514 = vlaneseq
      %v3515 = vshrl.u32 %v3514, 7
      %v3516 = vsub.s32 0, %v3515
      %v3517 = vrot.slane %v1368, %v3516
      %v3518 = vmul.f32 %v3354, %v3517
      %v3519 = vmul.f32 %v3355, %v3517
      %v3520 = vmul.f32 %v3356, %v3517
      %v3521 = vmul.f32 %v3357, %v3517
      %v3522 = vmul.f32 %v3358, %v3517
      %v3523 = vmul.f32 %v3359, %v3517
      %v3524 = vmul.f32 %v3360, %v3517
      %v3525 = vmul.f32 %v3361, %v3517
      %v3526 = vmul.f32 %v3362, %v3517
      %v3527 = vmul.f32 %v3363, %v3517
      %v3528 = vmul.f32 %v3364, %v3517
      %v3529 = vmul.f32 %v3365, %v3517
      %v3530 = vmul.f32 %v3366, %v3517
      %v3531 = vmul.f32 %v3367, %v3517
      %v3532 = vmul.f32 %v3368, %v3517
      %v3533 = vmul.f32 %v3369, %v3517
      %v3534 = vmul.f32 %v3370, %v3517
      %v3535 = vmul.f32 %v3371, %v3517
      %v3536 = vadd.f32 %v3496, %v3518
      %v3537 = vadd.f32 %v3497, %v3519
      %v3538 = vadd.f32 %v3498, %v3520
      %v3539 = vadd.f32 %v3499, %v3521
      %v3540 = vadd.f32 %v3500, %v3522
      %v3541 = vadd.f32 %v3501, %v3523
      %v3542 = vadd.f32 %v3502, %v3524
      %v3543 = vadd.f32 %v3503, %v3525
      %v3544 = vadd.f32 %v3504, %v3526
      %v3545 = vadd.f32 %v3505, %v3527
      %v3546 = vadd.f32 %v3506, %v3528
      %v3547 = vadd.f32 %v3507, %v3529
      %v3548 = vadd.f32 %v3508, %v3530
      %v3549 = vadd.f32 %v3509, %v3531
      %v3550 = vadd.f32 %v3510, %v3532
      %v3551 = vadd.f32 %v3511, %v3533
      %v3552 = vadd.f32 %v3512, %v3534
      %v3553 = vadd.f32 %v3513, %v3535
      %v3554 = vlaneseq
      %v3555 = vshrl.u32 %v3554, 7
      %v3556 = vsub.s32 1, %v3555
      %v3557 = vrot.slane %v1364, %v3556
      %v3558 = vmul.f32 %v3346, %v3557
      %v3559 = vmul.f32 %v3347, %v3557
      %v3560 = vmul.f32 %v3348, %v3557
      %v3561 = vmul.f32 %v3349, %v3557
      %v3562 = vmul.f32 %v3350, %v3557
      %v3563 = vmul.f32 %v3351, %v3557
      %v3564 = vmul.f32 %v3352, %v3557
      %v3565 = vmul.f32 %v3353, %v3557
      %v3566 = vmul.f32 %v3354, %v3557
      %v3567 = vmul.f32 %v3355, %v3557
      %v3568 = vmul.f32 %v3356, %v3557
      %v3569 = vmul.f32 %v3357, %v3557
      %v3570 = vmul.f32 %v3358, %v3557
      %v3571 = vmul.f32 %v3359, %v3557
      %v3572 = vmul.f32 %v3360, %v3557
      %v3573 = vmul.f32 %v3361, %v3557
      %v3574 = vmul.f32 %v3362, %v3557
      %v3575 = vmul.f32 %v3363, %v3557
      %vm3594 = vcmask 1046528
      %v3595 = vrot.slane %v3558, 1
      %v3596 = vrot.slane %v3559, 1
      %v3597 = vsel %vm3594, %v3595, %v3596
      %v3598 = vrot.slane %v3560, 1
      %v3599 = vrot.slane %v3561, 1
      %v3600 = vsel %vm3594, %v3598, %v3599
      %v3601 = vrot.slane %v3562, 1
      %v3602 = vrot.slane %v3563, 1
      %v3603 = vsel %vm3594, %v3601, %v3602
      %v3604 = vrot.slane %v3564, 1
      %v3605 = vrot.slane %v3565, 1
      %v3606 = vsel %vm3594, %v3604, %v3605
      %v3607 = vrot.slane %v3566, 1
      %v3608 = vrot.slane %v3567, 1
      %v3609 = vsel %vm3594, %v3607, %v3608
      %v3610 = vrot.slane %v3568, 1
      %v3611 = vrot.slane %v3569, 1
      %v3612 = vsel %vm3594, %v3610, %v3611
      %v3613 = vrot.slane %v3570, 1
      %v3614 = vrot.slane %v3571, 1
      %v3615 = vsel %vm3594, %v3613, %v3614
      %v3616 = vrot.slane %v3572, 1
      %v3617 = vrot.slane %v3573, 1
      %v3618 = vsel %vm3594, %v3616, %v3617
      %v3619 = vrot.slane %v3574, 1
      %v3620 = vrot.slane %v3575, 1
      %v3621 = vsel %vm3594, %v3619, %v3620
      %v3640 = vadd.f32 %v3536, %v3597
      %v3641 = vadd.f32 %v3537, %v3596
      %v3642 = vadd.f32 %v3538, %v3600
      %v3643 = vadd.f32 %v3539, %v3599
      %v3644 = vadd.f32 %v3540, %v3603
      %v3645 = vadd.f32 %v3541, %v3602
      %v3646 = vadd.f32 %v3542, %v3606
      %v3647 = vadd.f32 %v3543, %v3605
      %v3648 = vadd.f32 %v3544, %v3609
      %v3649 = vadd.f32 %v3545, %v3608
      %v3650 = vadd.f32 %v3546, %v3612
      %v3651 = vadd.f32 %v3547, %v3611
      %v3652 = vadd.f32 %v3548, %v3615
      %v3653 = vadd.f32 %v3549, %v3614
      %v3654 = vadd.f32 %v3550, %v3618
      %v3655 = vadd.f32 %v3551, %v3617
      %v3656 = vadd.f32 %v3552, %v3621
      %v3657 = vadd.f32 %v3553, %v3620
      %v3658 = vlaneseq
      %v3659 = vshrl.u32 %v3658, 7
      %v3660 = vsub.s32 1, %v3659
      %v3661 = vrot.slane %v1365, %v3660
      %v3662 = vmul.f32 %v3348, %v3661
      %v3663 = vmul.f32 %v3349, %v3661
      %v3664 = vmul.f32 %v3350, %v3661
      %v3665 = vmul.f32 %v3351, %v3661
      %v3666 = vmul.f32 %v3352, %v3661
      %v3667 = vmul.f32 %v3353, %v3661
      %v3668 = vmul.f32 %v3354, %v3661
      %v3669 = vmul.f32 %v3355, %v3661
      %v3670 = vmul.f32 %v3356, %v3661
      %v3671 = vmul.f32 %v3357, %v3661
      %v3672 = vmul.f32 %v3358, %v3661
      %v3673 = vmul.f32 %v3359, %v3661
      %v3674 = vmul.f32 %v3360, %v3661
      %v3675 = vmul.f32 %v3361, %v3661
      %v3676 = vmul.f32 %v3362, %v3661
      %v3677 = vmul.f32 %v3363, %v3661
      %v3678 = vmul.f32 %v3364, %v3661
      %v3679 = vmul.f32 %v3365, %v3661
      %v3698 = vrot.slane %v3662, 1
      %v3699 = vrot.slane %v3663, 1
      %v3700 = vsel %vm3594, %v3698, %v3699
      %v3701 = vrot.slane %v3664, 1
      %v3702 = vrot.slane %v3665, 1
      %v3703 = vsel %vm3594, %v3701, %v3702
      %v3704 = vrot.slane %v3666, 1
      %v3705 = vrot.slane %v3667, 1
      %v3706 = vsel %vm3594, %v3704, %v3705
      %v3707 = vrot.slane %v3668, 1
      %v3708 = vrot.slane %v3669, 1
      %v3709 = vsel %vm3594, %v3707, %v3708
      %v3710 = vrot.slane %v3670, 1
      %v3711 = vrot.slane %v3671, 1
      %v3712 = vsel %vm3594, %v3710, %v3711
      %v3713 = vrot.slane %v3672, 1
      %v3714 = vrot.slane %v3673, 1
      %v3715 = vsel %vm3594, %v3713, %v3714
      %v3716 = vrot.slane %v3674, 1
      %v3717 = vrot.slane %v3675, 1
      %v3718 = vsel %vm3594, %v3716, %v3717
      %v3719 = vrot.slane %v3676, 1
      %v3720 = vrot.slane %v3677, 1
      %v3721 = vsel %vm3594, %v3719, %v3720
      %v3722 = vrot.slane %v3678, 1
      %v3723 = vrot.slane %v3679, 1
      %v3724 = vsel %vm3594, %v3722, %v3723
      %v3743 = vadd.f32 %v3640, %v3700
      %v3744 = vadd.f32 %v3641, %v3699
      %v3745 = vadd.f32 %v3642, %v3703
      %v3746 = vadd.f32 %v3643, %v3702
      %v3747 = vadd.f32 %v3644, %v3706
      %v3748 = vadd.f32 %v3645, %v3705
      %v3749 = vadd.f32 %v3646, %v3709
      %v3750 = vadd.f32 %v3647, %v3708
      %v3751 = vadd.f32 %v3648, %v3712
      %v3752 = vadd.f32 %v3649, %v3711
      %v3753 = vadd.f32 %v3650, %v3715
      %v3754 = vadd.f32 %v3651, %v3714
      %v3755 = vadd.f32 %v3652, %v3718
      %v3756 = vadd.f32 %v3653, %v3717
      %v3757 = vadd.f32 %v3654, %v3721
      %v3758 = vadd.f32 %v3655, %v3720
      %v3759 = vadd.f32 %v3656, %v3724
      %v3760 = vadd.f32 %v3657, %v3723
      %v3761 = vlaneseq
      %v3762 = vshrl.u32 %v3761, 7
      %v3763 = vsub.s32 1, %v3762
      %v3764 = vrot.slane %v1366, %v3763
      %v3765 = vmul.f32 %v3350, %v3764
      %v3766 = vmul.f32 %v3351, %v3764
      %v3767 = vmul.f32 %v3352, %v3764
      %v3768 = vmul.f32 %v3353, %v3764
      %v3769 = vmul.f32 %v3354, %v3764
      %v3770 = vmul.f32 %v3355, %v3764
      %v3771 = vmul.f32 %v3356, %v3764
      %v3772 = vmul.f32 %v3357, %v3764
      %v3773 = vmul.f32 %v3358, %v3764
      %v3774 = vmul.f32 %v3359, %v3764
      %v3775 = vmul.f32 %v3360, %v3764
      %v3776 = vmul.f32 %v3361, %v3764
      %v3777 = vmul.f32 %v3362, %v3764
      %v3778 = vmul.f32 %v3363, %v3764
      %v3779 = vmul.f32 %v3364, %v3764
      %v3780 = vmul.f32 %v3365, %v3764
      %v3781 = vmul.f32 %v3366, %v3764
      %v3782 = vmul.f32 %v3367, %v3764
      %v3801 = vrot.slane %v3765, 1
      %v3802 = vrot.slane %v3766, 1
      %v3803 = vsel %vm3594, %v3801, %v3802
      %v3804 = vrot.slane %v3767, 1
      %v3805 = vrot.slane %v3768, 1
      %v3806 = vsel %vm3594, %v3804, %v3805
      %v3807 = vrot.slane %v3769, 1
      %v3808 = vrot.slane %v3770, 1
      %v3809 = vsel %vm3594, %v3807, %v3808
      %v3810 = vrot.slane %v3771, 1
      %v3811 = vrot.slane %v3772, 1
      %v3812 = vsel %vm3594, %v3810, %v3811
      %v3813 = vrot.slane %v3773, 1
      %v3814 = vrot.slane %v3774, 1
      %v3815 = vsel %vm3594, %v3813, %v3814
      %v3816 = vrot.slane %v3775, 1
      %v3817 = vrot.slane %v3776, 1
      %v3818 = vsel %vm3594, %v3816, %v3817
      %v3819 = vrot.slane %v3777, 1
      %v3820 = vrot.slane %v3778, 1
      %v3821 = vsel %vm3594, %v3819, %v3820
      %v3822 = vrot.slane %v3779, 1
      %v3823 = vrot.slane %v3780, 1
      %v3824 = vsel %vm3594, %v3822, %v3823
      %v3825 = vrot.slane %v3781, 1
      %v3826 = vrot.slane %v3782, 1
      %v3827 = vsel %vm3594, %v3825, %v3826
      %v3846 = vadd.f32 %v3743, %v3803
      %v3847 = vadd.f32 %v3744, %v3802
      %v3848 = vadd.f32 %v3745, %v3806
      %v3849 = vadd.f32 %v3746, %v3805
      %v3850 = vadd.f32 %v3747, %v3809
      %v3851 = vadd.f32 %v3748, %v3808
      %v3852 = vadd.f32 %v3749, %v3812
      %v3853 = vadd.f32 %v3750, %v3811
      %v3854 = vadd.f32 %v3751, %v3815
      %v3855 = vadd.f32 %v3752, %v3814
      %v3856 = vadd.f32 %v3753, %v3818
      %v3857 = vadd.f32 %v3754, %v3817
      %v3858 = vadd.f32 %v3755, %v3821
      %v3859 = vadd.f32 %v3756, %v3820
      %v3860 = vadd.f32 %v3757, %v3824
      %v3861 = vadd.f32 %v3758, %v3823
      %v3862 = vadd.f32 %v3759, %v3827
      %v3863 = vadd.f32 %v3760, %v3826
      %v3864 = vlaneseq
      %v3865 = vshrl.u32 %v3864, 7
      %v3866 = vsub.s32 1, %v3865
      %v3867 = vrot.slane %v1367, %v3866
      %v3868 = vmul.f32 %v3352, %v3867
      %v3869 = vmul.f32 %v3353, %v3867
      %v3870 = vmul.f32 %v3354, %v3867
      %v3871 = vmul.f32 %v3355, %v3867
      %v3872 = vmul.f32 %v3356, %v3867
      %v3873 = vmul.f32 %v3357, %v3867
      %v3874 = vmul.f32 %v3358, %v3867
      %v3875 = vmul.f32 %v3359, %v3867
      %v3876 = vmul.f32 %v3360, %v3867
      %v3877 = vmul.f32 %v3361, %v3867
      %v3878 = vmul.f32 %v3362, %v3867
      %v3879 = vmul.f32 %v3363, %v3867
      %v3880 = vmul.f32 %v3364, %v3867
      %v3881 = vmul.f32 %v3365, %v3867
      %v3882 = vmul.f32 %v3366, %v3867
      %v3883 = vmul.f32 %v3367, %v3867
      %v3884 = vmul.f32 %v3368, %v3867
      %v3885 = vmul.f32 %v3369, %v3867
      %v3904 = vrot.slane %v3868, 1
      %v3905 = vrot.slane %v3869, 1
      %v3906 = vsel %vm3594, %v3904, %v3905
      %v3907 = vrot.slane %v3870, 1
      %v3908 = vrot.slane %v3871, 1
      %v3909 = vsel %vm3594, %v3907, %v3908
      %v3910 = vrot.slane %v3872, 1
      %v3911 = vrot.slane %v3873, 1
      %v3912 = vsel %vm3594, %v3910, %v3911
      %v3913 = vrot.slane %v3874, 1
      %v3914 = vrot.slane %v3875, 1
      %v3915 = vsel %vm3594, %v3913, %v3914
      %v3916 = vrot.slane %v3876, 1
      %v3917 = vrot.slane %v3877, 1
      %v3918 = vsel %vm3594, %v3916, %v3917
      %v3919 = vrot.slane %v3878, 1
      %v3920 = vrot.slane %v3879, 1
      %v3921 = vsel %vm3594, %v3919, %v3920
      %v3922 = vrot.slane %v3880, 1
      %v3923 = vrot.slane %v3881, 1
      %v3924 = vsel %vm3594, %v3922, %v3923
      %v3925 = vrot.slane %v3882, 1
      %v3926 = vrot.slane %v3883, 1
      %v3927 = vsel %vm3594, %v3925, %v3926
      %v3928 = vrot.slane %v3884, 1
      %v3929 = vrot.slane %v3885, 1
      %v3930 = vsel %vm3594, %v3928, %v3929
      %v3949 = vadd.f32 %v3846, %v3906
      %v3950 = vadd.f32 %v3847, %v3905
      %v3951 = vadd.f32 %v3848, %v3909
      %v3952 = vadd.f32 %v3849, %v3908
      %v3953 = vadd.f32 %v3850, %v3912
      %v3954 = vadd.f32 %v3851, %v3911
      %v3955 = vadd.f32 %v3852, %v3915
      %v3956 = vadd.f32 %v3853, %v3914
      %v3957 = vadd.f32 %v3854, %v3918
      %v3958 = vadd.f32 %v3855, %v3917
      %v3959 = vadd.f32 %v3856, %v3921
      %v3960 = vadd.f32 %v3857, %v3920
      %v3961 = vadd.f32 %v3858, %v3924
      %v3962 = vadd.f32 %v3859, %v3923
      %v3963 = vadd.f32 %v3860, %v3927
      %v3964 = vadd.f32 %v3861, %v3926
      %v3965 = vadd.f32 %v3862, %v3930
      %v3966 = vadd.f32 %v3863, %v3929
      %v3967 = vlaneseq
      %v3968 = vshrl.u32 %v3967, 7
      %v3969 = vsub.s32 1, %v3968
      %v3970 = vrot.slane %v1368, %v3969
      %v3971 = vmul.f32 %v3354, %v3970
      %v3972 = vmul.f32 %v3355, %v3970
      %v3973 = vmul.f32 %v3356, %v3970
      %v3974 = vmul.f32 %v3357, %v3970
      %v3975 = vmul.f32 %v3358, %v3970
      %v3976 = vmul.f32 %v3359, %v3970
      %v3977 = vmul.f32 %v3360, %v3970
      %v3978 = vmul.f32 %v3361, %v3970
      %v3979 = vmul.f32 %v3362, %v3970
      %v3980 = vmul.f32 %v3363, %v3970
      %v3981 = vmul.f32 %v3364, %v3970
      %v3982 = vmul.f32 %v3365, %v3970
      %v3983 = vmul.f32 %v3366, %v3970
      %v3984 = vmul.f32 %v3367, %v3970
      %v3985 = vmul.f32 %v3368, %v3970
      %v3986 = vmul.f32 %v3369, %v3970
      %v3987 = vmul.f32 %v3370, %v3970
      %v3988 = vmul.f32 %v3371, %v3970
      %v4007 = vrot.slane %v3971, 1
      %v4008 = vrot.slane %v3972, 1
      %v4009 = vsel %vm3594, %v4007, %v4008
      %v4010 = vrot.slane %v3973, 1
      %v4011 = vrot.slane %v3974, 1
      %v4012 = vsel %vm3594, %v4010, %v4011
      %v4013 = vrot.slane %v3975, 1
      %v4014 = vrot.slane %v3976, 1
      %v4015 = vsel %vm3594, %v4013, %v4014
      %v4016 = vrot.slane %v3977, 1
      %v4017 = vrot.slane %v3978, 1
      %v4018 = vsel %vm3594, %v4016, %v4017
      %v4019 = vrot.slane %v3979, 1
      %v4020 = vrot.slane %v3980, 1
      %v4021 = vsel %vm3594, %v4019, %v4020
      %v4022 = vrot.slane %v3981, 1
      %v4023 = vrot.slane %v3982, 1
      %v4024 = vsel %vm3594, %v4022, %v4023
      %v4025 = vrot.slane %v3983, 1
      %v4026 = vrot.slane %v3984, 1
      %v4027 = vsel %vm3594, %v4025, %v4026
      %v4028 = vrot.slane %v3985, 1
      %v4029 = vrot.slane %v3986, 1
      %v4030 = vsel %vm3594, %v4028, %v4029
      %v4031 = vrot.slane %v3987, 1
      %v4032 = vrot.slane %v3988, 1
      %v4033 = vsel %vm3594, %v4031, %v4032
      %v4052 = vadd.f32 %v3949, %v4009
      %v4053 = vadd.f32 %v3950, %v4008
      %v4054 = vadd.f32 %v3951, %v4012
      %v4055 = vadd.f32 %v3952, %v4011
      %v4056 = vadd.f32 %v3953, %v4015
      %v4057 = vadd.f32 %v3954, %v4014
      %v4058 = vadd.f32 %v3955, %v4018
      %v4059 = vadd.f32 %v3956, %v4017
      %v4060 = vadd.f32 %v3957, %v4021
      %v4061 = vadd.f32 %v3958, %v4020
      %v4062 = vadd.f32 %v3959, %v4024
      %v4063 = vadd.f32 %v3960, %v4023
      %v4064 = vadd.f32 %v3961, %v4027
      %v4065 = vadd.f32 %v3962, %v4026
      %v4066 = vadd.f32 %v3963, %v4030
      %v4067 = vadd.f32 %v3964, %v4029
      %v4068 = vadd.f32 %v3965, %v4033
      %v4069 = vadd.f32 %v3966, %v4032
      %v4070 = vlaneseq
      %v4071 = vshrl.u32 %v4070, 7
      %v4072 = vsub.s32 2, %v4071
      %v4073 = vrot.slane %v1364, %v4072
      %v4074 = vmul.f32 %v3346, %v4073
      %v4075 = vmul.f32 %v3347, %v4073
      %v4076 = vmul.f32 %v3348, %v4073
      %v4077 = vmul.f32 %v3349, %v4073
      %v4078 = vmul.f32 %v3350, %v4073
      %v4079 = vmul.f32 %v3351, %v4073
      %v4080 = vmul.f32 %v3352, %v4073
      %v4081 = vmul.f32 %v3353, %v4073
      %v4082 = vmul.f32 %v3354, %v4073
      %v4083 = vmul.f32 %v3355, %v4073
      %v4084 = vmul.f32 %v3356, %v4073
      %v4085 = vmul.f32 %v3357, %v4073
      %v4086 = vmul.f32 %v3358, %v4073
      %v4087 = vmul.f32 %v3359, %v4073
      %v4088 = vmul.f32 %v3360, %v4073
      %v4089 = vmul.f32 %v3361, %v4073
      %v4090 = vmul.f32 %v3362, %v4073
      %v4091 = vmul.f32 %v3363, %v4073
      %vm4110 = vcmask 1045504
      %v4111 = vrot.slane %v4074, 2
      %v4112 = vrot.slane %v4075, 2
      %v4113 = vsel %vm4110, %v4111, %v4112
      %v4114 = vrot.slane %v4076, 2
      %v4115 = vrot.slane %v4077, 2
      %v4116 = vsel %vm4110, %v4114, %v4115
      %v4117 = vrot.slane %v4078, 2
      %v4118 = vrot.slane %v4079, 2
      %v4119 = vsel %vm4110, %v4117, %v4118
      %v4120 = vrot.slane %v4080, 2
      %v4121 = vrot.slane %v4081, 2
      %v4122 = vsel %vm4110, %v4120, %v4121
      %v4123 = vrot.slane %v4082, 2
      %v4124 = vrot.slane %v4083, 2
      %v4125 = vsel %vm4110, %v4123, %v4124
      %v4126 = vrot.slane %v4084, 2
      %v4127 = vrot.slane %v4085, 2
      %v4128 = vsel %vm4110, %v4126, %v4127
      %v4129 = vrot.slane %v4086, 2
      %v4130 = vrot.slane %v4087, 2
      %v4131 = vsel %vm4110, %v4129, %v4130
      %v4132 = vrot.slane %v4088, 2
      %v4133 = vrot.slane %v4089, 2
      %v4134 = vsel %vm4110, %v4132, %v4133
      %v4135 = vrot.slane %v4090, 2
      %v4136 = vrot.slane %v4091, 2
      %v4137 = vsel %vm4110, %v4135, %v4136
      %v4156 = vadd.f32 %v4052, %v4113
      %v4157 = vadd.f32 %v4053, %v4112
      %v4158 = vadd.f32 %v4054, %v4116
      %v4159 = vadd.f32 %v4055, %v4115
      %v4160 = vadd.f32 %v4056, %v4119
      %v4161 = vadd.f32 %v4057, %v4118
      %v4162 = vadd.f32 %v4058, %v4122
      %v4163 = vadd.f32 %v4059, %v4121
      %v4164 = vadd.f32 %v4060, %v4125
      %v4165 = vadd.f32 %v4061, %v4124
      %v4166 = vadd.f32 %v4062, %v4128
      %v4167 = vadd.f32 %v4063, %v4127
      %v4168 = vadd.f32 %v4064, %v4131
      %v4169 = vadd.f32 %v4065, %v4130
      %v4170 = vadd.f32 %v4066, %v4134
      %v4171 = vadd.f32 %v4067, %v4133
      %v4172 = vadd.f32 %v4068, %v4137
      %v4173 = vadd.f32 %v4069, %v4136
      %v4174 = vlaneseq
      %v4175 = vshrl.u32 %v4174, 7
      %v4176 = vsub.s32 2, %v4175
      %v4177 = vrot.slane %v1365, %v4176
      %v4178 = vmul.f32 %v3348, %v4177
      %v4179 = vmul.f32 %v3349, %v4177
      %v4180 = vmul.f32 %v3350, %v4177
      %v4181 = vmul.f32 %v3351, %v4177
      %v4182 = vmul.f32 %v3352, %v4177
      %v4183 = vmul.f32 %v3353, %v4177
      %v4184 = vmul.f32 %v3354, %v4177
      %v4185 = vmul.f32 %v3355, %v4177
      %v4186 = vmul.f32 %v3356, %v4177
      %v4187 = vmul.f32 %v3357, %v4177
      %v4188 = vmul.f32 %v3358, %v4177
      %v4189 = vmul.f32 %v3359, %v4177
      %v4190 = vmul.f32 %v3360, %v4177
      %v4191 = vmul.f32 %v3361, %v4177
      %v4192 = vmul.f32 %v3362, %v4177
      %v4193 = vmul.f32 %v3363, %v4177
      %v4194 = vmul.f32 %v3364, %v4177
      %v4195 = vmul.f32 %v3365, %v4177
      %v4214 = vrot.slane %v4178, 2
      %v4215 = vrot.slane %v4179, 2
      %v4216 = vsel %vm4110, %v4214, %v4215
      %v4217 = vrot.slane %v4180, 2
      %v4218 = vrot.slane %v4181, 2
      %v4219 = vsel %vm4110, %v4217, %v4218
      %v4220 = vrot.slane %v4182, 2
      %v4221 = vrot.slane %v4183, 2
      %v4222 = vsel %vm4110, %v4220, %v4221
      %v4223 = vrot.slane %v4184, 2
      %v4224 = vrot.slane %v4185, 2
      %v4225 = vsel %vm4110, %v4223, %v4224
      %v4226 = vrot.slane %v4186, 2
      %v4227 = vrot.slane %v4187, 2
      %v4228 = vsel %vm4110, %v4226, %v4227
      %v4229 = vrot.slane %v4188, 2
      %v4230 = vrot.slane %v4189, 2
      %v4231 = vsel %vm4110, %v4229, %v4230
      %v4232 = vrot.slane %v4190, 2
      %v4233 = vrot.slane %v4191, 2
      %v4234 = vsel %vm4110, %v4232, %v4233
      %v4235 = vrot.slane %v4192, 2
      %v4236 = vrot.slane %v4193, 2
      %v4237 = vsel %vm4110, %v4235, %v4236
      %v4238 = vrot.slane %v4194, 2
      %v4239 = vrot.slane %v4195, 2
      %v4240 = vsel %vm4110, %v4238, %v4239
      %v4259 = vadd.f32 %v4156, %v4216
      %v4260 = vadd.f32 %v4157, %v4215
      %v4261 = vadd.f32 %v4158, %v4219
      %v4262 = vadd.f32 %v4159, %v4218
      %v4263 = vadd.f32 %v4160, %v4222
      %v4264 = vadd.f32 %v4161, %v4221
      %v4265 = vadd.f32 %v4162, %v4225
      %v4266 = vadd.f32 %v4163, %v4224
      %v4267 = vadd.f32 %v4164, %v4228
      %v4268 = vadd.f32 %v4165, %v4227
      %v4269 = vadd.f32 %v4166, %v4231
      %v4270 = vadd.f32 %v4167, %v4230
      %v4271 = vadd.f32 %v4168, %v4234
      %v4272 = vadd.f32 %v4169, %v4233
      %v4273 = vadd.f32 %v4170, %v4237
      %v4274 = vadd.f32 %v4171, %v4236
      %v4275 = vadd.f32 %v4172, %v4240
      %v4276 = vadd.f32 %v4173, %v4239
      %v4277 = vlaneseq
      %v4278 = vshrl.u32 %v4277, 7
      %v4279 = vsub.s32 2, %v4278
      %v4280 = vrot.slane %v1366, %v4279
      %v4281 = vmul.f32 %v3350, %v4280
      %v4282 = vmul.f32 %v3351, %v4280
      %v4283 = vmul.f32 %v3352, %v4280
      %v4284 = vmul.f32 %v3353, %v4280
      %v4285 = vmul.f32 %v3354, %v4280
      %v4286 = vmul.f32 %v3355, %v4280
      %v4287 = vmul.f32 %v3356, %v4280
      %v4288 = vmul.f32 %v3357, %v4280
      %v4289 = vmul.f32 %v3358, %v4280
      %v4290 = vmul.f32 %v3359, %v4280
      %v4291 = vmul.f32 %v3360, %v4280
      %v4292 = vmul.f32 %v3361, %v4280
      %v4293 = vmul.f32 %v3362, %v4280
      %v4294 = vmul.f32 %v3363, %v4280
      %v4295 = vmul.f32 %v3364, %v4280
      %v4296 = vmul.f32 %v3365, %v4280
      %v4297 = vmul.f32 %v3366, %v4280
      %v4298 = vmul.f32 %v3367, %v4280
      %v4317 = vrot.slane %v4281, 2
      %v4318 = vrot.slane %v4282, 2
      %v4319 = vsel %vm4110, %v4317, %v4318
      %v4320 = vrot.slane %v4283, 2
      %v4321 = vrot.slane %v4284, 2
      %v4322 = vsel %vm4110, %v4320, %v4321
      %v4323 = vrot.slane %v4285, 2
      %v4324 = vrot.slane %v4286, 2
      %v4325 = vsel %vm4110, %v4323, %v4324
      %v4326 = vrot.slane %v4287, 2
      %v4327 = vrot.slane %v4288, 2
      %v4328 = vsel %vm4110, %v4326, %v4327
      %v4329 = vrot.slane %v4289, 2
      %v4330 = vrot.slane %v4290, 2
      %v4331 = vsel %vm4110, %v4329, %v4330
      %v4332 = vrot.slane %v4291, 2
      %v4333 = vrot.slane %v4292, 2
      %v4334 = vsel %vm4110, %v4332, %v4333
      %v4335 = vrot.slane %v4293, 2
      %v4336 = vrot.slane %v4294, 2
      %v4337 = vsel %vm4110, %v4335, %v4336
      %v4338 = vrot.slane %v4295, 2
      %v4339 = vrot.slane %v4296, 2
      %v4340 = vsel %vm4110, %v4338, %v4339
      %v4341 = vrot.slane %v4297, 2
      %v4342 = vrot.slane %v4298, 2
      %v4343 = vsel %vm4110, %v4341, %v4342
      %v4362 = vadd.f32 %v4259, %v4319
      %v4363 = vadd.f32 %v4260, %v4318
      %v4364 = vadd.f32 %v4261, %v4322
      %v4365 = vadd.f32 %v4262, %v4321
      %v4366 = vadd.f32 %v4263, %v4325
      %v4367 = vadd.f32 %v4264, %v4324
      %v4368 = vadd.f32 %v4265, %v4328
      %v4369 = vadd.f32 %v4266, %v4327
      %v4370 = vadd.f32 %v4267, %v4331
      %v4371 = vadd.f32 %v4268, %v4330
      %v4372 = vadd.f32 %v4269, %v4334
      %v4373 = vadd.f32 %v4270, %v4333
      %v4374 = vadd.f32 %v4271, %v4337
      %v4375 = vadd.f32 %v4272, %v4336
      %v4376 = vadd.f32 %v4273, %v4340
      %v4377 = vadd.f32 %v4274, %v4339
      %v4378 = vadd.f32 %v4275, %v4343
      %v4379 = vadd.f32 %v4276, %v4342
      %v4380 = vlaneseq
      %v4381 = vshrl.u32 %v4380, 7
      %v4382 = vsub.s32 2, %v4381
      %v4383 = vrot.slane %v1367, %v4382
      %v4384 = vmul.f32 %v3352, %v4383
      %v4385 = vmul.f32 %v3353, %v4383
      %v4386 = vmul.f32 %v3354, %v4383
      %v4387 = vmul.f32 %v3355, %v4383
      %v4388 = vmul.f32 %v3356, %v4383
      %v4389 = vmul.f32 %v3357, %v4383
      %v4390 = vmul.f32 %v3358, %v4383
      %v4391 = vmul.f32 %v3359, %v4383
      %v4392 = vmul.f32 %v3360, %v4383
      %v4393 = vmul.f32 %v3361, %v4383
      %v4394 = vmul.f32 %v3362, %v4383
      %v4395 = vmul.f32 %v3363, %v4383
      %v4396 = vmul.f32 %v3364, %v4383
      %v4397 = vmul.f32 %v3365, %v4383
      %v4398 = vmul.f32 %v3366, %v4383
      %v4399 = vmul.f32 %v3367, %v4383
      %v4400 = vmul.f32 %v3368, %v4383
      %v4401 = vmul.f32 %v3369, %v4383
      %v4420 = vrot.slane %v4384, 2
      %v4421 = vrot.slane %v4385, 2
      %v4422 = vsel %vm4110, %v4420, %v4421
      %v4423 = vrot.slane %v4386, 2
      %v4424 = vrot.slane %v4387, 2
      %v4425 = vsel %vm4110, %v4423, %v4424
      %v4426 = vrot.slane %v4388, 2
      %v4427 = vrot.slane %v4389, 2
      %v4428 = vsel %vm4110, %v4426, %v4427
      %v4429 = vrot.slane %v4390, 2
      %v4430 = vrot.slane %v4391, 2
      %v4431 = vsel %vm4110, %v4429, %v4430
      %v4432 = vrot.slane %v4392, 2
      %v4433 = vrot.slane %v4393, 2
      %v4434 = vsel %vm4110, %v4432, %v4433
      %v4435 = vrot.slane %v4394, 2
      %v4436 = vrot.slane %v4395, 2
      %v4437 = vsel %vm4110, %v4435, %v4436
      %v4438 = vrot.slane %v4396, 2
      %v4439 = vrot.slane %v4397, 2
      %v4440 = vsel %vm4110, %v4438, %v4439
      %v4441 = vrot.slane %v4398, 2
      %v4442 = vrot.slane %v4399, 2
      %v4443 = vsel %vm4110, %v4441, %v4442
      %v4444 = vrot.slane %v4400, 2
      %v4445 = vrot.slane %v4401, 2
      %v4446 = vsel %vm4110, %v4444, %v4445
      %v4465 = vadd.f32 %v4362, %v4422
      %v4466 = vadd.f32 %v4363, %v4421
      %v4467 = vadd.f32 %v4364, %v4425
      %v4468 = vadd.f32 %v4365, %v4424
      %v4469 = vadd.f32 %v4366, %v4428
      %v4470 = vadd.f32 %v4367, %v4427
      %v4471 = vadd.f32 %v4368, %v4431
      %v4472 = vadd.f32 %v4369, %v4430
      %v4473 = vadd.f32 %v4370, %v4434
      %v4474 = vadd.f32 %v4371, %v4433
      %v4475 = vadd.f32 %v4372, %v4437
      %v4476 = vadd.f32 %v4373, %v4436
      %v4477 = vadd.f32 %v4374, %v4440
      %v4478 = vadd.f32 %v4375, %v4439
      %v4479 = vadd.f32 %v4376, %v4443
      %v4480 = vadd.f32 %v4377, %v4442
      %v4481 = vadd.f32 %v4378, %v4446
      %v4482 = vadd.f32 %v4379, %v4445
      %v4483 = vlaneseq
      %v4484 = vshrl.u32 %v4483, 7
      %v4485 = vsub.s32 2, %v4484
      %v4486 = vrot.slane %v1368, %v4485
      %v4487 = vmul.f32 %v3354, %v4486
      %v4488 = vmul.f32 %v3355, %v4486
      %v4489 = vmul.f32 %v3356, %v4486
      %v4490 = vmul.f32 %v3357, %v4486
      %v4491 = vmul.f32 %v3358, %v4486
      %v4492 = vmul.f32 %v3359, %v4486
      %v4493 = vmul.f32 %v3360, %v4486
      %v4494 = vmul.f32 %v3361, %v4486
      %v4495 = vmul.f32 %v3362, %v4486
      %v4496 = vmul.f32 %v3363, %v4486
      %v4497 = vmul.f32 %v3364, %v4486
      %v4498 = vmul.f32 %v3365, %v4486
      %v4499 = vmul.f32 %v3366, %v4486
      %v4500 = vmul.f32 %v3367, %v4486
      %v4501 = vmul.f32 %v3368, %v4486
      %v4502 = vmul.f32 %v3369, %v4486
      %v4503 = vmul.f32 %v3370, %v4486
      %v4504 = vmul.f32 %v3371, %v4486
      %v4523 = vrot.slane %v4487, 2
      %v4524 = vrot.slane %v4488, 2
      %v4525 = vsel %vm4110, %v4523, %v4524
      %v4526 = vrot.slane %v4489, 2
      %v4527 = vrot.slane %v4490, 2
      %v4528 = vsel %vm4110, %v4526, %v4527
      %v4529 = vrot.slane %v4491, 2
      %v4530 = vrot.slane %v4492, 2
      %v4531 = vsel %vm4110, %v4529, %v4530
      %v4532 = vrot.slane %v4493, 2
      %v4533 = vrot.slane %v4494, 2
      %v4534 = vsel %vm4110, %v4532, %v4533
      %v4535 = vrot.slane %v4495, 2
      %v4536 = vrot.slane %v4496, 2
      %v4537 = vsel %vm4110, %v4535, %v4536
      %v4538 = vrot.slane %v4497, 2
      %v4539 = vrot.slane %v4498, 2
      %v4540 = vsel %vm4110, %v4538, %v4539
      %v4541 = vrot.slane %v4499, 2
      %v4542 = vrot.slane %v4500, 2
      %v4543 = vsel %vm4110, %v4541, %v4542
      %v4544 = vrot.slane %v4501, 2
      %v4545 = vrot.slane %v4502, 2
      %v4546 = vsel %vm4110, %v4544, %v4545
      %v4547 = vrot.slane %v4503, 2
      %v4548 = vrot.slane %v4504, 2
      %v4549 = vsel %vm4110, %v4547, %v4548
      %v4568 = vadd.f32 %v4465, %v4525
      %v4569 = vadd.f32 %v4466, %v4524
      %v4570 = vadd.f32 %v4467, %v4528
      %v4571 = vadd.f32 %v4468, %v4527
      %v4572 = vadd.f32 %v4469, %v4531
      %v4573 = vadd.f32 %v4470, %v4530
      %v4574 = vadd.f32 %v4471, %v4534
      %v4575 = vadd.f32 %v4472, %v4533
      %v4576 = vadd.f32 %v4473, %v4537
      %v4577 = vadd.f32 %v4474, %v4536
      %v4578 = vadd.f32 %v4475, %v4540
      %v4579 = vadd.f32 %v4476, %v4539
      %v4580 = vadd.f32 %v4477, %v4543
      %v4581 = vadd.f32 %v4478, %v4542
      %v4582 = vadd.f32 %v4479, %v4546
      %v4583 = vadd.f32 %v4480, %v4545
      %v4584 = vadd.f32 %v4481, %v4549
      %v4585 = vadd.f32 %v4482, %v4548
      %v4586 = vlaneseq
      %v4587 = vshrl.u32 %v4586, 7
      %v4588 = vsub.s32 3, %v4587
      %v4589 = vrot.slane %v1364, %v4588
      %v4590 = vmul.f32 %v3346, %v4589
      %v4591 = vmul.f32 %v3347, %v4589
      %v4592 = vmul.f32 %v3348, %v4589
      %v4593 = vmul.f32 %v3349, %v4589
      %v4594 = vmul.f32 %v3350, %v4589
      %v4595 = vmul.f32 %v3351, %v4589
      %v4596 = vmul.f32 %v3352, %v4589
      %v4597 = vmul.f32 %v3353, %v4589
      %v4598 = vmul.f32 %v3354, %v4589
      %v4599 = vmul.f32 %v3355, %v4589
      %v4600 = vmul.f32 %v3356, %v4589
      %v4601 = vmul.f32 %v3357, %v4589
      %v4602 = vmul.f32 %v3358, %v4589
      %v4603 = vmul.f32 %v3359, %v4589
      %v4604 = vmul.f32 %v3360, %v4589
      %v4605 = vmul.f32 %v3361, %v4589
      %v4606 = vmul.f32 %v3362, %v4589
      %v4607 = vmul.f32 %v3363, %v4589
      %vm4626 = vcmask 1044480
      %v4627 = vrot.slane %v4590, 3
      %v4628 = vrot.slane %v4591, 3
      %v4629 = vsel %vm4626, %v4627, %v4628
      %v4630 = vrot.slane %v4592, 3
      %v4631 = vrot.slane %v4593, 3
      %v4632 = vsel %vm4626, %v4630, %v4631
      %v4633 = vrot.slane %v4594, 3
      %v4634 = vrot.slane %v4595, 3
      %v4635 = vsel %vm4626, %v4633, %v4634
      %v4636 = vrot.slane %v4596, 3
      %v4637 = vrot.slane %v4597, 3
      %v4638 = vsel %vm4626, %v4636, %v4637
      %v4639 = vrot.slane %v4598, 3
      %v4640 = vrot.slane %v4599, 3
      %v4641 = vsel %vm4626, %v4639, %v4640
      %v4642 = vrot.slane %v4600, 3
      %v4643 = vrot.slane %v4601, 3
      %v4644 = vsel %vm4626, %v4642, %v4643
      %v4645 = vrot.slane %v4602, 3
      %v4646 = vrot.slane %v4603, 3
      %v4647 = vsel %vm4626, %v4645, %v4646
      %v4648 = vrot.slane %v4604, 3
      %v4649 = vrot.slane %v4605, 3
      %v4650 = vsel %vm4626, %v4648, %v4649
      %v4651 = vrot.slane %v4606, 3
      %v4652 = vrot.slane %v4607, 3
      %v4653 = vsel %vm4626, %v4651, %v4652
      %v4672 = vadd.f32 %v4568, %v4629
      %v4673 = vadd.f32 %v4569, %v4628
      %v4674 = vadd.f32 %v4570, %v4632
      %v4675 = vadd.f32 %v4571, %v4631
      %v4676 = vadd.f32 %v4572, %v4635
      %v4677 = vadd.f32 %v4573, %v4634
      %v4678 = vadd.f32 %v4574, %v4638
      %v4679 = vadd.f32 %v4575, %v4637
      %v4680 = vadd.f32 %v4576, %v4641
      %v4681 = vadd.f32 %v4577, %v4640
      %v4682 = vadd.f32 %v4578, %v4644
      %v4683 = vadd.f32 %v4579, %v4643
      %v4684 = vadd.f32 %v4580, %v4647
      %v4685 = vadd.f32 %v4581, %v4646
      %v4686 = vadd.f32 %v4582, %v4650
      %v4687 = vadd.f32 %v4583, %v4649
      %v4688 = vadd.f32 %v4584, %v4653
      %v4689 = vadd.f32 %v4585, %v4652
      %v4690 = vlaneseq
      %v4691 = vshrl.u32 %v4690, 7
      %v4692 = vsub.s32 3, %v4691
      %v4693 = vrot.slane %v1365, %v4692
      %v4694 = vmul.f32 %v3348, %v4693
      %v4695 = vmul.f32 %v3349, %v4693
      %v4696 = vmul.f32 %v3350, %v4693
      %v4697 = vmul.f32 %v3351, %v4693
      %v4698 = vmul.f32 %v3352, %v4693
      %v4699 = vmul.f32 %v3353, %v4693
      %v4700 = vmul.f32 %v3354, %v4693
      %v4701 = vmul.f32 %v3355, %v4693
      %v4702 = vmul.f32 %v3356, %v4693
      %v4703 = vmul.f32 %v3357, %v4693
      %v4704 = vmul.f32 %v3358, %v4693
      %v4705 = vmul.f32 %v3359, %v4693
      %v4706 = vmul.f32 %v3360, %v4693
      %v4707 = vmul.f32 %v3361, %v4693
      %v4708 = vmul.f32 %v3362, %v4693
      %v4709 = vmul.f32 %v3363, %v4693
      %v4710 = vmul.f32 %v3364, %v4693
      %v4711 = vmul.f32 %v3365, %v4693
      %v4730 = vrot.slane %v4694, 3
      %v4731 = vrot.slane %v4695, 3
      %v4732 = vsel %vm4626, %v4730, %v4731
      %v4733 = vrot.slane %v4696, 3
      %v4734 = vrot.slane %v4697, 3
      %v4735 = vsel %vm4626, %v4733, %v4734
      %v4736 = vrot.slane %v4698, 3
      %v4737 = vrot.slane %v4699, 3
      %v4738 = vsel %vm4626, %v4736, %v4737
      %v4739 = vrot.slane %v4700, 3
      %v4740 = vrot.slane %v4701, 3
      %v4741 = vsel %vm4626, %v4739, %v4740
      %v4742 = vrot.slane %v4702, 3
      %v4743 = vrot.slane %v4703, 3
      %v4744 = vsel %vm4626, %v4742, %v4743
      %v4745 = vrot.slane %v4704, 3
      %v4746 = vrot.slane %v4705, 3
      %v4747 = vsel %vm4626, %v4745, %v4746
      %v4748 = vrot.slane %v4706, 3
      %v4749 = vrot.slane %v4707, 3
      %v4750 = vsel %vm4626, %v4748, %v4749
      %v4751 = vrot.slane %v4708, 3
      %v4752 = vrot.slane %v4709, 3
      %v4753 = vsel %vm4626, %v4751, %v4752
      %v4754 = vrot.slane %v4710, 3
      %v4755 = vrot.slane %v4711, 3
      %v4756 = vsel %vm4626, %v4754, %v4755
      %v4775 = vadd.f32 %v4672, %v4732
      %v4776 = vadd.f32 %v4673, %v4731
      %v4777 = vadd.f32 %v4674, %v4735
      %v4778 = vadd.f32 %v4675, %v4734
      %v4779 = vadd.f32 %v4676, %v4738
      %v4780 = vadd.f32 %v4677, %v4737
      %v4781 = vadd.f32 %v4678, %v4741
      %v4782 = vadd.f32 %v4679, %v4740
      %v4783 = vadd.f32 %v4680, %v4744
      %v4784 = vadd.f32 %v4681, %v4743
      %v4785 = vadd.f32 %v4682, %v4747
      %v4786 = vadd.f32 %v4683, %v4746
      %v4787 = vadd.f32 %v4684, %v4750
      %v4788 = vadd.f32 %v4685, %v4749
      %v4789 = vadd.f32 %v4686, %v4753
      %v4790 = vadd.f32 %v4687, %v4752
      %v4791 = vadd.f32 %v4688, %v4756
      %v4792 = vadd.f32 %v4689, %v4755
      %v4793 = vlaneseq
      %v4794 = vshrl.u32 %v4793, 7
      %v4795 = vsub.s32 3, %v4794
      %v4796 = vrot.slane %v1366, %v4795
      %v4797 = vmul.f32 %v3350, %v4796
      %v4798 = vmul.f32 %v3351, %v4796
      %v4799 = vmul.f32 %v3352, %v4796
      %v4800 = vmul.f32 %v3353, %v4796
      %v4801 = vmul.f32 %v3354, %v4796
      %v4802 = vmul.f32 %v3355, %v4796
      %v4803 = vmul.f32 %v3356, %v4796
      %v4804 = vmul.f32 %v3357, %v4796
      %v4805 = vmul.f32 %v3358, %v4796
      %v4806 = vmul.f32 %v3359, %v4796
      %v4807 = vmul.f32 %v3360, %v4796
      %v4808 = vmul.f32 %v3361, %v4796
      %v4809 = vmul.f32 %v3362, %v4796
      %v4810 = vmul.f32 %v3363, %v4796
      %v4811 = vmul.f32 %v3364, %v4796
      %v4812 = vmul.f32 %v3365, %v4796
      %v4813 = vmul.f32 %v3366, %v4796
      %v4814 = vmul.f32 %v3367, %v4796
      %v4833 = vrot.slane %v4797, 3
      %v4834 = vrot.slane %v4798, 3
      %v4835 = vsel %vm4626, %v4833, %v4834
      %v4836 = vrot.slane %v4799, 3
      %v4837 = vrot.slane %v4800, 3
      %v4838 = vsel %vm4626, %v4836, %v4837
      %v4839 = vrot.slane %v4801, 3
      %v4840 = vrot.slane %v4802, 3
      %v4841 = vsel %vm4626, %v4839, %v4840
      %v4842 = vrot.slane %v4803, 3
      %v4843 = vrot.slane %v4804, 3
      %v4844 = vsel %vm4626, %v4842, %v4843
      %v4845 = vrot.slane %v4805, 3
      %v4846 = vrot.slane %v4806, 3
      %v4847 = vsel %vm4626, %v4845, %v4846
      %v4848 = vrot.slane %v4807, 3
      %v4849 = vrot.slane %v4808, 3
      %v4850 = vsel %vm4626, %v4848, %v4849
      %v4851 = vrot.slane %v4809, 3
      %v4852 = vrot.slane %v4810, 3
      %v4853 = vsel %vm4626, %v4851, %v4852
      %v4854 = vrot.slane %v4811, 3
      %v4855 = vrot.slane %v4812, 3
      %v4856 = vsel %vm4626, %v4854, %v4855
      %v4857 = vrot.slane %v4813, 3
      %v4858 = vrot.slane %v4814, 3
      %v4859 = vsel %vm4626, %v4857, %v4858
      %v4878 = vadd.f32 %v4775, %v4835
      %v4879 = vadd.f32 %v4776, %v4834
      %v4880 = vadd.f32 %v4777, %v4838
      %v4881 = vadd.f32 %v4778, %v4837
      %v4882 = vadd.f32 %v4779, %v4841
      %v4883 = vadd.f32 %v4780, %v4840
      %v4884 = vadd.f32 %v4781, %v4844
      %v4885 = vadd.f32 %v4782, %v4843
      %v4886 = vadd.f32 %v4783, %v4847
      %v4887 = vadd.f32 %v4784, %v4846
      %v4888 = vadd.f32 %v4785, %v4850
      %v4889 = vadd.f32 %v4786, %v4849
      %v4890 = vadd.f32 %v4787, %v4853
      %v4891 = vadd.f32 %v4788, %v4852
      %v4892 = vadd.f32 %v4789, %v4856
      %v4893 = vadd.f32 %v4790, %v4855
      %v4894 = vadd.f32 %v4791, %v4859
      %v4895 = vadd.f32 %v4792, %v4858
      %v4896 = vlaneseq
      %v4897 = vshrl.u32 %v4896, 7
      %v4898 = vsub.s32 3, %v4897
      %v4899 = vrot.slane %v1367, %v4898
      %v4900 = vmul.f32 %v3352, %v4899
      %v4901 = vmul.f32 %v3353, %v4899
      %v4902 = vmul.f32 %v3354, %v4899
      %v4903 = vmul.f32 %v3355, %v4899
      %v4904 = vmul.f32 %v3356, %v4899
      %v4905 = vmul.f32 %v3357, %v4899
      %v4906 = vmul.f32 %v3358, %v4899
      %v4907 = vmul.f32 %v3359, %v4899
      %v4908 = vmul.f32 %v3360, %v4899
      %v4909 = vmul.f32 %v3361, %v4899
      %v4910 = vmul.f32 %v3362, %v4899
      %v4911 = vmul.f32 %v3363, %v4899
      %v4912 = vmul.f32 %v3364, %v4899
      %v4913 = vmul.f32 %v3365, %v4899
      %v4914 = vmul.f32 %v3366, %v4899
      %v4915 = vmul.f32 %v3367, %v4899
      %v4916 = vmul.f32 %v3368, %v4899
      %v4917 = vmul.f32 %v3369, %v4899
      %v4936 = vrot.slane %v4900, 3
      %v4937 = vrot.slane %v4901, 3
      %v4938 = vsel %vm4626, %v4936, %v4937
      %v4939 = vrot.slane %v4902, 3
      %v4940 = vrot.slane %v4903, 3
      %v4941 = vsel %vm4626, %v4939, %v4940
      %v4942 = vrot.slane %v4904, 3
      %v4943 = vrot.slane %v4905, 3
      %v4944 = vsel %vm4626, %v4942, %v4943
      %v4945 = vrot.slane %v4906, 3
      %v4946 = vrot.slane %v4907, 3
      %v4947 = vsel %vm4626, %v4945, %v4946
      %v4948 = vrot.slane %v4908, 3
      %v4949 = vrot.slane %v4909, 3
      %v4950 = vsel %vm4626, %v4948, %v4949
      %v4951 = vrot.slane %v4910, 3
      %v4952 = vrot.slane %v4911, 3
      %v4953 = vsel %vm4626, %v4951, %v4952
      %v4954 = vrot.slane %v4912, 3
      %v4955 = vrot.slane %v4913, 3
      %v4956 = vsel %vm4626, %v4954, %v4955
      %v4957 = vrot.slane %v4914, 3
      %v4958 = vrot.slane %v4915, 3
      %v4959 = vsel %vm4626, %v4957, %v4958
      %v4960 = vrot.slane %v4916, 3
      %v4961 = vrot.slane %v4917, 3
      %v4962 = vsel %vm4626, %v4960, %v4961
      %v4981 = vadd.f32 %v4878, %v4938
      %v4982 = vadd.f32 %v4879, %v4937
      %v4983 = vadd.f32 %v4880, %v4941
      %v4984 = vadd.f32 %v4881, %v4940
      %v4985 = vadd.f32 %v4882, %v4944
      %v4986 = vadd.f32 %v4883, %v4943
      %v4987 = vadd.f32 %v4884, %v4947
      %v4988 = vadd.f32 %v4885, %v4946
      %v4989 = vadd.f32 %v4886, %v4950
      %v4990 = vadd.f32 %v4887, %v4949
      %v4991 = vadd.f32 %v4888, %v4953
      %v4992 = vadd.f32 %v4889, %v4952
      %v4993 = vadd.f32 %v4890, %v4956
      %v4994 = vadd.f32 %v4891, %v4955
      %v4995 = vadd.f32 %v4892, %v4959
      %v4996 = vadd.f32 %v4893, %v4958
      %v4997 = vadd.f32 %v4894, %v4962
      %v4998 = vadd.f32 %v4895, %v4961
      %v4999 = vlaneseq
      %v5000 = vshrl.u32 %v4999, 7
      %v5001 = vsub.s32 3, %v5000
      %v5002 = vrot.slane %v1368, %v5001
      %v5003 = vmul.f32 %v3354, %v5002
      %v5004 = vmul.f32 %v3355, %v5002
      %v5005 = vmul.f32 %v3356, %v5002
      %v5006 = vmul.f32 %v3357, %v5002
      %v5007 = vmul.f32 %v3358, %v5002
      %v5008 = vmul.f32 %v3359, %v5002
      %v5009 = vmul.f32 %v3360, %v5002
      %v5010 = vmul.f32 %v3361, %v5002
      %v5011 = vmul.f32 %v3362, %v5002
      %v5012 = vmul.f32 %v3363, %v5002
      %v5013 = vmul.f32 %v3364, %v5002
      %v5014 = vmul.f32 %v3365, %v5002
      %v5015 = vmul.f32 %v3366, %v5002
      %v5016 = vmul.f32 %v3367, %v5002
      %v5017 = vmul.f32 %v3368, %v5002
      %v5018 = vmul.f32 %v3369, %v5002
      %v5019 = vmul.f32 %v3370, %v5002
      %v5020 = vmul.f32 %v3371, %v5002
      %v5039 = vrot.slane %v5003, 3
      %v5040 = vrot.slane %v5004, 3
      %v5041 = vsel %vm4626, %v5039, %v5040
      %v5042 = vrot.slane %v5005, 3
      %v5043 = vrot.slane %v5006, 3
      %v5044 = vsel %vm4626, %v5042, %v5043
      %v5045 = vrot.slane %v5007, 3
      %v5046 = vrot.slane %v5008, 3
      %v5047 = vsel %vm4626, %v5045, %v5046
      %v5048 = vrot.slane %v5009, 3
      %v5049 = vrot.slane %v5010, 3
      %v5050 = vsel %vm4626, %v5048, %v5049
      %v5051 = vrot.slane %v5011, 3
      %v5052 = vrot.slane %v5012, 3
      %v5053 = vsel %vm4626, %v5051, %v5052
      %v5054 = vrot.slane %v5013, 3
      %v5055 = vrot.slane %v5014, 3
      %v5056 = vsel %vm4626, %v5054, %v5055
      %v5057 = vrot.slane %v5015, 3
      %v5058 = vrot.slane %v5016, 3
      %v5059 = vsel %vm4626, %v5057, %v5058
      %v5060 = vrot.slane %v5017, 3
      %v5061 = vrot.slane %v5018, 3
      %v5062 = vsel %vm4626, %v5060, %v5061
      %v5063 = vrot.slane %v5019, 3
      %v5064 = vrot.slane %v5020, 3
      %v5065 = vsel %vm4626, %v5063, %v5064
      %v5084 = vadd.f32 %v4981, %v5041
      %v5085 = vadd.f32 %v4982, %v5040
      %v5086 = vadd.f32 %v4983, %v5044
      %v5087 = vadd.f32 %v4984, %v5043
      %v5088 = vadd.f32 %v4985, %v5047
      %v5089 = vadd.f32 %v4986, %v5046
      %v5090 = vadd.f32 %v4987, %v5050
      %v5091 = vadd.f32 %v4988, %v5049
      %v5092 = vadd.f32 %v4989, %v5053
      %v5093 = vadd.f32 %v4990, %v5052
      %v5094 = vadd.f32 %v4991, %v5056
      %v5095 = vadd.f32 %v4992, %v5055
      %v5096 = vadd.f32 %v4993, %v5059
      %v5097 = vadd.f32 %v4994, %v5058
      %v5098 = vadd.f32 %v4995, %v5062
      %v5099 = vadd.f32 %v4996, %v5061
      %v5100 = vadd.f32 %v4997, %v5065
      %v5101 = vadd.f32 %v4998, %v5064
      %v5102 = vlaneseq
      %v5103 = vshrl.u32 %v5102, 7
      %v5104 = vsub.s32 4, %v5103
      %v5105 = vrot.slane %v1364, %v5104
      %v5106 = vmul.f32 %v3346, %v5105
      %v5107 = vmul.f32 %v3347, %v5105
      %v5108 = vmul.f32 %v3348, %v5105
      %v5109 = vmul.f32 %v3349, %v5105
      %v5110 = vmul.f32 %v3350, %v5105
      %v5111 = vmul.f32 %v3351, %v5105
      %v5112 = vmul.f32 %v3352, %v5105
      %v5113 = vmul.f32 %v3353, %v5105
      %v5114 = vmul.f32 %v3354, %v5105
      %v5115 = vmul.f32 %v3355, %v5105
      %v5116 = vmul.f32 %v3356, %v5105
      %v5117 = vmul.f32 %v3357, %v5105
      %v5118 = vmul.f32 %v3358, %v5105
      %v5119 = vmul.f32 %v3359, %v5105
      %v5120 = vmul.f32 %v3360, %v5105
      %v5121 = vmul.f32 %v3361, %v5105
      %v5122 = vmul.f32 %v3362, %v5105
      %v5123 = vmul.f32 %v3363, %v5105
      %v5142 = vrot.slane %v5106, 4
      %v5143 = vrot.slane %v5107, 4
      %v5144 = vsel %vm495, %v5142, %v5143
      %v5145 = vrot.slane %v5108, 4
      %v5146 = vrot.slane %v5109, 4
      %v5147 = vsel %vm495, %v5145, %v5146
      %v5148 = vrot.slane %v5110, 4
      %v5149 = vrot.slane %v5111, 4
      %v5150 = vsel %vm495, %v5148, %v5149
      %v5151 = vrot.slane %v5112, 4
      %v5152 = vrot.slane %v5113, 4
      %v5153 = vsel %vm495, %v5151, %v5152
      %v5154 = vrot.slane %v5114, 4
      %v5155 = vrot.slane %v5115, 4
      %v5156 = vsel %vm495, %v5154, %v5155
      %v5157 = vrot.slane %v5116, 4
      %v5158 = vrot.slane %v5117, 4
      %v5159 = vsel %vm495, %v5157, %v5158
      %v5160 = vrot.slane %v5118, 4
      %v5161 = vrot.slane %v5119, 4
      %v5162 = vsel %vm495, %v5160, %v5161
      %v5163 = vrot.slane %v5120, 4
      %v5164 = vrot.slane %v5121, 4
      %v5165 = vsel %vm495, %v5163, %v5164
      %v5166 = vrot.slane %v5122, 4
      %v5167 = vrot.slane %v5123, 4
      %v5168 = vsel %vm495, %v5166, %v5167
      %v5187 = vadd.f32 %v5084, %v5144
      %v5188 = vadd.f32 %v5085, %v5143
      %v5189 = vadd.f32 %v5086, %v5147
      %v5190 = vadd.f32 %v5087, %v5146
      %v5191 = vadd.f32 %v5088, %v5150
      %v5192 = vadd.f32 %v5089, %v5149
      %v5193 = vadd.f32 %v5090, %v5153
      %v5194 = vadd.f32 %v5091, %v5152
      %v5195 = vadd.f32 %v5092, %v5156
      %v5196 = vadd.f32 %v5093, %v5155
      %v5197 = vadd.f32 %v5094, %v5159
      %v5198 = vadd.f32 %v5095, %v5158
      %v5199 = vadd.f32 %v5096, %v5162
      %v5200 = vadd.f32 %v5097, %v5161
      %v5201 = vadd.f32 %v5098, %v5165
      %v5202 = vadd.f32 %v5099, %v5164
      %v5203 = vadd.f32 %v5100, %v5168
      %v5204 = vadd.f32 %v5101, %v5167
      %v5205 = vlaneseq
      %v5206 = vshrl.u32 %v5205, 7
      %v5207 = vsub.s32 4, %v5206
      %v5208 = vrot.slane %v1365, %v5207
      %v5209 = vmul.f32 %v3348, %v5208
      %v5210 = vmul.f32 %v3349, %v5208
      %v5211 = vmul.f32 %v3350, %v5208
      %v5212 = vmul.f32 %v3351, %v5208
      %v5213 = vmul.f32 %v3352, %v5208
      %v5214 = vmul.f32 %v3353, %v5208
      %v5215 = vmul.f32 %v3354, %v5208
      %v5216 = vmul.f32 %v3355, %v5208
      %v5217 = vmul.f32 %v3356, %v5208
      %v5218 = vmul.f32 %v3357, %v5208
      %v5219 = vmul.f32 %v3358, %v5208
      %v5220 = vmul.f32 %v3359, %v5208
      %v5221 = vmul.f32 %v3360, %v5208
      %v5222 = vmul.f32 %v3361, %v5208
      %v5223 = vmul.f32 %v3362, %v5208
      %v5224 = vmul.f32 %v3363, %v5208
      %v5225 = vmul.f32 %v3364, %v5208
      %v5226 = vmul.f32 %v3365, %v5208
      %v5245 = vrot.slane %v5209, 4
      %v5246 = vrot.slane %v5210, 4
      %v5247 = vsel %vm495, %v5245, %v5246
      %v5248 = vrot.slane %v5211, 4
      %v5249 = vrot.slane %v5212, 4
      %v5250 = vsel %vm495, %v5248, %v5249
      %v5251 = vrot.slane %v5213, 4
      %v5252 = vrot.slane %v5214, 4
      %v5253 = vsel %vm495, %v5251, %v5252
      %v5254 = vrot.slane %v5215, 4
      %v5255 = vrot.slane %v5216, 4
      %v5256 = vsel %vm495, %v5254, %v5255
      %v5257 = vrot.slane %v5217, 4
      %v5258 = vrot.slane %v5218, 4
      %v5259 = vsel %vm495, %v5257, %v5258
      %v5260 = vrot.slane %v5219, 4
      %v5261 = vrot.slane %v5220, 4
      %v5262 = vsel %vm495, %v5260, %v5261
      %v5263 = vrot.slane %v5221, 4
      %v5264 = vrot.slane %v5222, 4
      %v5265 = vsel %vm495, %v5263, %v5264
      %v5266 = vrot.slane %v5223, 4
      %v5267 = vrot.slane %v5224, 4
      %v5268 = vsel %vm495, %v5266, %v5267
      %v5269 = vrot.slane %v5225, 4
      %v5270 = vrot.slane %v5226, 4
      %v5271 = vsel %vm495, %v5269, %v5270
      %v5290 = vadd.f32 %v5187, %v5247
      %v5291 = vadd.f32 %v5188, %v5246
      %v5292 = vadd.f32 %v5189, %v5250
      %v5293 = vadd.f32 %v5190, %v5249
      %v5294 = vadd.f32 %v5191, %v5253
      %v5295 = vadd.f32 %v5192, %v5252
      %v5296 = vadd.f32 %v5193, %v5256
      %v5297 = vadd.f32 %v5194, %v5255
      %v5298 = vadd.f32 %v5195, %v5259
      %v5299 = vadd.f32 %v5196, %v5258
      %v5300 = vadd.f32 %v5197, %v5262
      %v5301 = vadd.f32 %v5198, %v5261
      %v5302 = vadd.f32 %v5199, %v5265
      %v5303 = vadd.f32 %v5200, %v5264
      %v5304 = vadd.f32 %v5201, %v5268
      %v5305 = vadd.f32 %v5202, %v5267
      %v5306 = vadd.f32 %v5203, %v5271
      %v5307 = vadd.f32 %v5204, %v5270
      %v5308 = vlaneseq
      %v5309 = vshrl.u32 %v5308, 7
      %v5310 = vsub.s32 4, %v5309
      %v5311 = vrot.slane %v1366, %v5310
      %v5312 = vmul.f32 %v3350, %v5311
      %v5313 = vmul.f32 %v3351, %v5311
      %v5314 = vmul.f32 %v3352, %v5311
      %v5315 = vmul.f32 %v3353, %v5311
      %v5316 = vmul.f32 %v3354, %v5311
      %v5317 = vmul.f32 %v3355, %v5311
      %v5318 = vmul.f32 %v3356, %v5311
      %v5319 = vmul.f32 %v3357, %v5311
      %v5320 = vmul.f32 %v3358, %v5311
      %v5321 = vmul.f32 %v3359, %v5311
      %v5322 = vmul.f32 %v3360, %v5311
      %v5323 = vmul.f32 %v3361, %v5311
      %v5324 = vmul.f32 %v3362, %v5311
      %v5325 = vmul.f32 %v3363, %v5311
      %v5326 = vmul.f32 %v3364, %v5311
      %v5327 = vmul.f32 %v3365, %v5311
      %v5328 = vmul.f32 %v3366, %v5311
      %v5329 = vmul.f32 %v3367, %v5311
      %v5348 = vrot.slane %v5312, 4
      %v5349 = vrot.slane %v5313, 4
      %v5350 = vsel %vm495, %v5348, %v5349
      %v5351 = vrot.slane %v5314, 4
      %v5352 = vrot.slane %v5315, 4
      %v5353 = vsel %vm495, %v5351, %v5352
      %v5354 = vrot.slane %v5316, 4
      %v5355 = vrot.slane %v5317, 4
      %v5356 = vsel %vm495, %v5354, %v5355
      %v5357 = vrot.slane %v5318, 4
      %v5358 = vrot.slane %v5319, 4
      %v5359 = vsel %vm495, %v5357, %v5358
      %v5360 = vrot.slane %v5320, 4
      %v5361 = vrot.slane %v5321, 4
      %v5362 = vsel %vm495, %v5360, %v5361
      %v5363 = vrot.slane %v5322, 4
      %v5364 = vrot.slane %v5323, 4
      %v5365 = vsel %vm495, %v5363, %v5364
      %v5366 = vrot.slane %v5324, 4
      %v5367 = vrot.slane %v5325, 4
      %v5368 = vsel %vm495, %v5366, %v5367
      %v5369 = vrot.slane %v5326, 4
      %v5370 = vrot.slane %v5327, 4
      %v5371 = vsel %vm495, %v5369, %v5370
      %v5372 = vrot.slane %v5328, 4
      %v5373 = vrot.slane %v5329, 4
      %v5374 = vsel %vm495, %v5372, %v5373
      %v5393 = vadd.f32 %v5290, %v5350
      %v5394 = vadd.f32 %v5291, %v5349
      %v5395 = vadd.f32 %v5292, %v5353
      %v5396 = vadd.f32 %v5293, %v5352
      %v5397 = vadd.f32 %v5294, %v5356
      %v5398 = vadd.f32 %v5295, %v5355
      %v5399 = vadd.f32 %v5296, %v5359
      %v5400 = vadd.f32 %v5297, %v5358
      %v5401 = vadd.f32 %v5298, %v5362
      %v5402 = vadd.f32 %v5299, %v5361
      %v5403 = vadd.f32 %v5300, %v5365
      %v5404 = vadd.f32 %v5301, %v5364
      %v5405 = vadd.f32 %v5302, %v5368
      %v5406 = vadd.f32 %v5303, %v5367
      %v5407 = vadd.f32 %v5304, %v5371
      %v5408 = vadd.f32 %v5305, %v5370
      %v5409 = vadd.f32 %v5306, %v5374
      %v5410 = vadd.f32 %v5307, %v5373
      %v5411 = vlaneseq
      %v5412 = vshrl.u32 %v5411, 7
      %v5413 = vsub.s32 4, %v5412
      %v5414 = vrot.slane %v1367, %v5413
      %v5415 = vmul.f32 %v3352, %v5414
      %v5416 = vmul.f32 %v3353, %v5414
      %v5417 = vmul.f32 %v3354, %v5414
      %v5418 = vmul.f32 %v3355, %v5414
      %v5419 = vmul.f32 %v3356, %v5414
      %v5420 = vmul.f32 %v3357, %v5414
      %v5421 = vmul.f32 %v3358, %v5414
      %v5422 = vmul.f32 %v3359, %v5414
      %v5423 = vmul.f32 %v3360, %v5414
      %v5424 = vmul.f32 %v3361, %v5414
      %v5425 = vmul.f32 %v3362, %v5414
      %v5426 = vmul.f32 %v3363, %v5414
      %v5427 = vmul.f32 %v3364, %v5414
      %v5428 = vmul.f32 %v3365, %v5414
      %v5429 = vmul.f32 %v3366, %v5414
      %v5430 = vmul.f32 %v3367, %v5414
      %v5431 = vmul.f32 %v3368, %v5414
      %v5432 = vmul.f32 %v3369, %v5414
      %v5451 = vrot.slane %v5415, 4
      %v5452 = vrot.slane %v5416, 4
      %v5453 = vsel %vm495, %v5451, %v5452
      %v5454 = vrot.slane %v5417, 4
      %v5455 = vrot.slane %v5418, 4
      %v5456 = vsel %vm495, %v5454, %v5455
      %v5457 = vrot.slane %v5419, 4
      %v5458 = vrot.slane %v5420, 4
      %v5459 = vsel %vm495, %v5457, %v5458
      %v5460 = vrot.slane %v5421, 4
      %v5461 = vrot.slane %v5422, 4
      %v5462 = vsel %vm495, %v5460, %v5461
      %v5463 = vrot.slane %v5423, 4
      %v5464 = vrot.slane %v5424, 4
      %v5465 = vsel %vm495, %v5463, %v5464
      %v5466 = vrot.slane %v5425, 4
      %v5467 = vrot.slane %v5426, 4
      %v5468 = vsel %vm495, %v5466, %v5467
      %v5469 = vrot.slane %v5427, 4
      %v5470 = vrot.slane %v5428, 4
      %v5471 = vsel %vm495, %v5469, %v5470
      %v5472 = vrot.slane %v5429, 4
      %v5473 = vrot.slane %v5430, 4
      %v5474 = vsel %vm495, %v5472, %v5473
      %v5475 = vrot.slane %v5431, 4
      %v5476 = vrot.slane %v5432, 4
      %v5477 = vsel %vm495, %v5475, %v5476
      %v5496 = vadd.f32 %v5393, %v5453
      %v5497 = vadd.f32 %v5394, %v5452
      %v5498 = vadd.f32 %v5395, %v5456
      %v5499 = vadd.f32 %v5396, %v5455
      %v5500 = vadd.f32 %v5397, %v5459
      %v5501 = vadd.f32 %v5398, %v5458
      %v5502 = vadd.f32 %v5399, %v5462
      %v5503 = vadd.f32 %v5400, %v5461
      %v5504 = vadd.f32 %v5401, %v5465
      %v5505 = vadd.f32 %v5402, %v5464
      %v5506 = vadd.f32 %v5403, %v5468
      %v5507 = vadd.f32 %v5404, %v5467
      %v5508 = vadd.f32 %v5405, %v5471
      %v5509 = vadd.f32 %v5406, %v5470
      %v5510 = vadd.f32 %v5407, %v5474
      %v5511 = vadd.f32 %v5408, %v5473
      %v5512 = vadd.f32 %v5409, %v5477
      %v5513 = vadd.f32 %v5410, %v5476
      %v5514 = vlaneseq
      %v5515 = vshrl.u32 %v5514, 7
      %v5516 = vsub.s32 4, %v5515
      %v5517 = vrot.slane %v1368, %v5516
      %v5518 = vmul.f32 %v3354, %v5517
      %v5519 = vmul.f32 %v3355, %v5517
      %v5520 = vmul.f32 %v3356, %v5517
      %v5521 = vmul.f32 %v3357, %v5517
      %v5522 = vmul.f32 %v3358, %v5517
      %v5523 = vmul.f32 %v3359, %v5517
      %v5524 = vmul.f32 %v3360, %v5517
      %v5525 = vmul.f32 %v3361, %v5517
      %v5526 = vmul.f32 %v3362, %v5517
      %v5527 = vmul.f32 %v3363, %v5517
      %v5528 = vmul.f32 %v3364, %v5517
      %v5529 = vmul.f32 %v3365, %v5517
      %v5530 = vmul.f32 %v3366, %v5517
      %v5531 = vmul.f32 %v3367, %v5517
      %v5532 = vmul.f32 %v3368, %v5517
      %v5533 = vmul.f32 %v3369, %v5517
      %v5534 = vmul.f32 %v3370, %v5517
      %v5535 = vmul.f32 %v3371, %v5517
      %v5554 = vrot.slane %v5518, 4
      %v5555 = vrot.slane %v5519, 4
      %v5556 = vsel %vm495, %v5554, %v5555
      %v5557 = vrot.slane %v5520, 4
      %v5558 = vrot.slane %v5521, 4
      %v5559 = vsel %vm495, %v5557, %v5558
      %v5560 = vrot.slane %v5522, 4
      %v5561 = vrot.slane %v5523, 4
      %v5562 = vsel %vm495, %v5560, %v5561
      %v5563 = vrot.slane %v5524, 4
      %v5564 = vrot.slane %v5525, 4
      %v5565 = vsel %vm495, %v5563, %v5564
      %v5566 = vrot.slane %v5526, 4
      %v5567 = vrot.slane %v5527, 4
      %v5568 = vsel %vm495, %v5566, %v5567
      %v5569 = vrot.slane %v5528, 4
      %v5570 = vrot.slane %v5529, 4
      %v5571 = vsel %vm495, %v5569, %v5570
      %v5572 = vrot.slane %v5530, 4
      %v5573 = vrot.slane %v5531, 4
      %v5574 = vsel %vm495, %v5572, %v5573
      %v5575 = vrot.slane %v5532, 4
      %v5576 = vrot.slane %v5533, 4
      %v5577 = vsel %vm495, %v5575, %v5576
      %v5578 = vrot.slane %v5534, 4
      %v5579 = vrot.slane %v5535, 4
      %v5580 = vsel %vm495, %v5578, %v5579
      %v5599 = vadd.f32 %v5496, %v5556
      %v5600 = vadd.f32 %v5497, %v5555
      %v5601 = vadd.f32 %v5498, %v5559
      %v5602 = vadd.f32 %v5499, %v5558
      %v5603 = vadd.f32 %v5500, %v5562
      %v5604 = vadd.f32 %v5501, %v5561
      %v5605 = vadd.f32 %v5502, %v5565
      %v5606 = vadd.f32 %v5503, %v5564
      %v5607 = vadd.f32 %v5504, %v5568
      %v5608 = vadd.f32 %v5505, %v5567
      %v5609 = vadd.f32 %v5506, %v5571
      %v5610 = vadd.f32 %v5507, %v5570
      %v5611 = vadd.f32 %v5508, %v5574
      %v5612 = vadd.f32 %v5509, %v5573
      %v5613 = vadd.f32 %v5510, %v5577
      %v5614 = vadd.f32 %v5511, %v5576
      %v5615 = vadd.f32 %v5512, %v5580
      %v5616 = vadd.f32 %v5513, %v5579
      %v5635 = vcombine.high %v5599, %v5599
      %v5637 = vunpack.c.l.s4 1966171168
      %v5638 = vunpack.c.0.s8 %v5637
      %v5639 = vlaneseq
      %v5640 = vshrl.u32 %v5639, 7
      %v5641 = vsub.s32 %v5638, %v5640
      %v5642 = vrot.slane %v5599, %v5641
      %v5644 = vunpack.c.l.s4 1966171168
      %v5645 = vunpack.c.0.s8 %v5644
      %v5646 = vlaneseq
      %v5647 = vshrl.u32 %v5646, 7
      %v5648 = vsub.s32 %v5645, %v5647
      %v5649 = vrot.slane %v5635, %v5648
      %v5650 = vcombine.high %v5642, %v5642
      %v5651 = vcombine.high %v5649, %v5649
      %v5653 = vunpack.c.l.s4 1966171168
      %v5654 = vunpack.c.0.s8 %v5653
      %v5655 = vlaneseq
      %v5656 = vshrl.u32 %v5655, 7
      %v5657 = vsub.s32 %v5654, %v5656
      %v5658 = vrot.slane %v5642, %v5657
      %v5660 = vunpack.c.l.s4 1966171168
      %v5661 = vunpack.c.0.s8 %v5660
      %v5662 = vlaneseq
      %v5663 = vshrl.u32 %v5662, 7
      %v5664 = vsub.s32 %v5661, %v5663
      %v5665 = vrot.slane %v5649, %v5664
      %v5667 = vunpack.c.l.s4 1966171168
      %v5668 = vunpack.c.0.s8 %v5667
      %v5669 = vlaneseq
      %v5670 = vshrl.u32 %v5669, 7
      %v5671 = vsub.s32 %v5668, %v5670
      %v5672 = vrot.slane %v5650, %v5671
      %v5674 = vunpack.c.l.s4 1966171168
      %v5675 = vunpack.c.0.s8 %v5674
      %v5676 = vlaneseq
      %v5677 = vshrl.u32 %v5676, 7
      %v5678 = vsub.s32 %v5675, %v5677
      %v5679 = vrot.slane %v5651, %v5678
      %v5680 = vcombine.high %v5658, %v5658
      %v5681 = vcombine.high %v5665, %v5665
      %v5682 = vcombine.high %v5672, %v5672
      %v5683 = vcombine.high %v5679, %v5679
      %v5685 = vunpack.c.l.s4 1966171168
      %v5686 = vunpack.c.0.s8 %v5685
      %v5687 = vlaneseq
      %v5688 = vshrl.u32 %v5687, 7
      %v5689 = vsub.s32 %v5686, %v5688
      %v5690 = vrot.slane %v5600, %v5689
      %v5692 = vunpack.c.l.s4 1966171168
      %v5693 = vunpack.c.0.s8 %v5692
      %v5694 = vlaneseq
      %v5695 = vshrl.u32 %v5694, 7
      %v5696 = vsub.s32 %v5693, %v5695
      %v5697 = vrot.slane %v5690, %v5696
      %v5698 = vcombine.high %v5601, %v5601
      %v5700 = vunpack.c.l.s4 1966171168
      %v5701 = vunpack.c.0.s8 %v5700
      %v5702 = vlaneseq
      %v5703 = vshrl.u32 %v5702, 7
      %v5704 = vsub.s32 %v5701, %v5703
      %v5705 = vrot.slane %v5601, %v5704
      %v5707 = vunpack.c.l.s4 1966171168
      %v5708 = vunpack.c.0.s8 %v5707
      %v5709 = vlaneseq
      %v5710 = vshrl.u32 %v5709, 7
      %v5711 = vsub.s32 %v5708, %v5710
      %v5712 = vrot.slane %v5698, %v5711
      %v5713 = vcombine.high %v5705, %v5705
      %v5714 = vcombine.high %v5712, %v5712
      %v5716 = vunpack.c.l.s4 1966171168
      %v5717 = vunpack.c.0.s8 %v5716
      %v5718 = vlaneseq
      %v5719 = vshrl.u32 %v5718, 7
      %v5720 = vsub.s32 %v5717, %v5719
      %v5721 = vrot.slane %v5705, %v5720
      %v5723 = vunpack.c.l.s4 1966171168
      %v5724 = vunpack.c.0.s8 %v5723
      %v5725 = vlaneseq
      %v5726 = vshrl.u32 %v5725, 7
      %v5727 = vsub.s32 %v5724, %v5726
      %v5728 = vrot.slane %v5712, %v5727
      %v5730 = vunpack.c.l.s4 1966171168
      %v5731 = vunpack.c.0.s8 %v5730
      %v5732 = vlaneseq
      %v5733 = vshrl.u32 %v5732, 7
      %v5734 = vsub.s32 %v5731, %v5733
      %v5735 = vrot.slane %v5713, %v5734
      %v5737 = vunpack.c.l.s4 1966171168
      %v5738 = vunpack.c.0.s8 %v5737
      %v5739 = vlaneseq
      %v5740 = vshrl.u32 %v5739, 7
      %v5741 = vsub.s32 %v5738, %v5740
      %v5742 = vrot.slane %v5714, %v5741
      %v5743 = vcombine.high %v5721, %v5721
      %v5744 = vcombine.high %v5728, %v5728
      %v5745 = vcombine.high %v5735, %v5735
      %v5746 = vcombine.high %v5742, %v5742
      %v5748 = vunpack.c.l.s4 1966171168
      %v5749 = vunpack.c.0.s8 %v5748
      %v5750 = vlaneseq
      %v5751 = vshrl.u32 %v5750, 7
      %v5752 = vsub.s32 %v5749, %v5751
      %v5753 = vrot.slane %v5602, %v5752
      %v5755 = vunpack.c.l.s4 1966171168
      %v5756 = vunpack.c.0.s8 %v5755
      %v5757 = vlaneseq
      %v5758 = vshrl.u32 %v5757, 7
      %v5759 = vsub.s32 %v5756, %v5758
      %v5760 = vrot.slane %v5753, %v5759
      %v5761 = vcombine.high %v5603, %v5603
      %v5763 = vunpack.c.l.s4 1966171168
      %v5764 = vunpack.c.0.s8 %v5763
      %v5765 = vlaneseq
      %v5766 = vshrl.u32 %v5765, 7
      %v5767 = vsub.s32 %v5764, %v5766
      %v5768 = vrot.slane %v5603, %v5767
      %v5770 = vunpack.c.l.s4 1966171168
      %v5771 = vunpack.c.0.s8 %v5770
      %v5772 = vlaneseq
      %v5773 = vshrl.u32 %v5772, 7
      %v5774 = vsub.s32 %v5771, %v5773
      %v5775 = vrot.slane %v5761, %v5774
      %v5776 = vcombine.high %v5768, %v5768
      %v5777 = vcombine.high %v5775, %v5775
      %v5779 = vunpack.c.l.s4 1966171168
      %v5780 = vunpack.c.0.s8 %v5779
      %v5781 = vlaneseq
      %v5782 = vshrl.u32 %v5781, 7
      %v5783 = vsub.s32 %v5780, %v5782
      %v5784 = vrot.slane %v5768, %v5783
      %v5786 = vunpack.c.l.s4 1966171168
      %v5787 = vunpack.c.0.s8 %v5786
      %v5788 = vlaneseq
      %v5789 = vshrl.u32 %v5788, 7
      %v5790 = vsub.s32 %v5787, %v5789
      %v5791 = vrot.slane %v5775, %v5790
      %v5793 = vunpack.c.l.s4 1966171168
      %v5794 = vunpack.c.0.s8 %v5793
      %v5795 = vlaneseq
      %v5796 = vshrl.u32 %v5795, 7
      %v5797 = vsub.s32 %v5794, %v5796
      %v5798 = vrot.slane %v5776, %v5797
      %v5800 = vunpack.c.l.s4 1966171168
      %v5801 = vunpack.c.0.s8 %v5800
      %v5802 = vlaneseq
      %v5803 = vshrl.u32 %v5802, 7
      %v5804 = vsub.s32 %v5801, %v5803
      %v5805 = vrot.slane %v5777, %v5804
      %v5806 = vcombine.high %v5784, %v5784
      %v5807 = vcombine.high %v5791, %v5791
      %v5808 = vcombine.high %v5798, %v5798
      %v5809 = vcombine.high %v5805, %v5805
      %v5811 = vunpack.c.l.s4 1966171168
      %v5812 = vunpack.c.0.s8 %v5811
      %v5813 = vlaneseq
      %v5814 = vshrl.u32 %v5813, 7
      %v5815 = vsub.s32 %v5812, %v5814
      %v5816 = vrot.slane %v5604, %v5815
      %v5818 = vunpack.c.l.s4 1966171168
      %v5819 = vunpack.c.0.s8 %v5818
      %v5820 = vlaneseq
      %v5821 = vshrl.u32 %v5820, 7
      %v5822 = vsub.s32 %v5819, %v5821
      %v5823 = vrot.slane %v5816, %v5822
      %v5824 = vcombine.high %v5605, %v5605
      %v5826 = vunpack.c.l.s4 1966171168
      %v5827 = vunpack.c.0.s8 %v5826
      %v5828 = vlaneseq
      %v5829 = vshrl.u32 %v5828, 7
      %v5830 = vsub.s32 %v5827, %v5829
      %v5831 = vrot.slane %v5605, %v5830
      %v5833 = vunpack.c.l.s4 1966171168
      %v5834 = vunpack.c.0.s8 %v5833
      %v5835 = vlaneseq
      %v5836 = vshrl.u32 %v5835, 7
      %v5837 = vsub.s32 %v5834, %v5836
      %v5838 = vrot.slane %v5824, %v5837
      %v5839 = vcombine.high %v5831, %v5831
      %v5840 = vcombine.high %v5838, %v5838
      %v5842 = vunpack.c.l.s4 1966171168
      %v5843 = vunpack.c.0.s8 %v5842
      %v5844 = vlaneseq
      %v5845 = vshrl.u32 %v5844, 7
      %v5846 = vsub.s32 %v5843, %v5845
      %v5847 = vrot.slane %v5831, %v5846
      %v5849 = vunpack.c.l.s4 1966171168
      %v5850 = vunpack.c.0.s8 %v5849
      %v5851 = vlaneseq
      %v5852 = vshrl.u32 %v5851, 7
      %v5853 = vsub.s32 %v5850, %v5852
      %v5854 = vrot.slane %v5838, %v5853
      %v5856 = vunpack.c.l.s4 1966171168
      %v5857 = vunpack.c.0.s8 %v5856
      %v5858 = vlaneseq
      %v5859 = vshrl.u32 %v5858, 7
      %v5860 = vsub.s32 %v5857, %v5859
      %v5861 = vrot.slane %v5839, %v5860
      %v5863 = vunpack.c.l.s4 1966171168
      %v5864 = vunpack.c.0.s8 %v5863
      %v5865 = vlaneseq
      %v5866 = vshrl.u32 %v5865, 7
      %v5867 = vsub.s32 %v5864, %v5866
      %v5868 = vrot.slane %v5840, %v5867
      %v5869 = vcombine.high %v5847, %v5847
      %v5870 = vcombine.high %v5854, %v5854
      %v5871 = vcombine.high %v5861, %v5861
      %v5872 = vcombine.high %v5868, %v5868
      %v5874 = vunpack.c.l.s4 1966171168
      %v5875 = vunpack.c.0.s8 %v5874
      %v5876 = vlaneseq
      %v5877 = vshrl.u32 %v5876, 7
      %v5878 = vsub.s32 %v5875, %v5877
      %v5879 = vrot.slane %v5606, %v5878
      %v5881 = vunpack.c.l.s4 1966171168
      %v5882 = vunpack.c.0.s8 %v5881
      %v5883 = vlaneseq
      %v5884 = vshrl.u32 %v5883, 7
      %v5885 = vsub.s32 %v5882, %v5884
      %v5886 = vrot.slane %v5879, %v5885
      %v5887 = vcombine.high %v5607, %v5607
      %v5889 = vunpack.c.l.s4 1966171168
      %v5890 = vunpack.c.0.s8 %v5889
      %v5891 = vlaneseq
      %v5892 = vshrl.u32 %v5891, 7
      %v5893 = vsub.s32 %v5890, %v5892
      %v5894 = vrot.slane %v5607, %v5893
      %v5896 = vunpack.c.l.s4 1966171168
      %v5897 = vunpack.c.0.s8 %v5896
      %v5898 = vlaneseq
      %v5899 = vshrl.u32 %v5898, 7
      %v5900 = vsub.s32 %v5897, %v5899
      %v5901 = vrot.slane %v5887, %v5900
      %v5902 = vcombine.high %v5894, %v5894
      %v5903 = vcombine.high %v5901, %v5901
      %v5905 = vunpack.c.l.s4 1966171168
      %v5906 = vunpack.c.0.s8 %v5905
      %v5907 = vlaneseq
      %v5908 = vshrl.u32 %v5907, 7
      %v5909 = vsub.s32 %v5906, %v5908
      %v5910 = vrot.slane %v5894, %v5909
      %v5912 = vunpack.c.l.s4 1966171168
      %v5913 = vunpack.c.0.s8 %v5912
      %v5914 = vlaneseq
      %v5915 = vshrl.u32 %v5914, 7
      %v5916 = vsub.s32 %v5913, %v5915
      %v5917 = vrot.slane %v5901, %v5916
      %v5919 = vunpack.c.l.s4 1966171168
      %v5920 = vunpack.c.0.s8 %v5919
      %v5921 = vlaneseq
      %v5922 = vshrl.u32 %v5921, 7
      %v5923 = vsub.s32 %v5920, %v5922
      %v5924 = vrot.slane %v5902, %v5923
      %v5926 = vunpack.c.l.s4 1966171168
      %v5927 = vunpack.c.0.s8 %v5926
      %v5928 = vlaneseq
      %v5929 = vshrl.u32 %v5928, 7
      %v5930 = vsub.s32 %v5927, %v5929
      %v5931 = vrot.slane %v5903, %v5930
      %v5932 = vcombine.high %v5910, %v5910
      %v5933 = vcombine.high %v5917, %v5917
      %v5934 = vcombine.high %v5924, %v5924
      %v5935 = vcombine.high %v5931, %v5931
      %v5937 = vunpack.c.l.s4 1966171168
      %v5938 = vunpack.c.0.s8 %v5937
      %v5939 = vlaneseq
      %v5940 = vshrl.u32 %v5939, 7
      %v5941 = vsub.s32 %v5938, %v5940
      %v5942 = vrot.slane %v5608, %v5941
      %v5944 = vunpack.c.l.s4 1966171168
      %v5945 = vunpack.c.0.s8 %v5944
      %v5946 = vlaneseq
      %v5947 = vshrl.u32 %v5946, 7
      %v5948 = vsub.s32 %v5945, %v5947
      %v5949 = vrot.slane %v5942, %v5948
      %v5950 = vcombine.high %v5609, %v5609
      %v5952 = vunpack.c.l.s4 1966171168
      %v5953 = vunpack.c.0.s8 %v5952
      %v5954 = vlaneseq
      %v5955 = vshrl.u32 %v5954, 7
      %v5956 = vsub.s32 %v5953, %v5955
      %v5957 = vrot.slane %v5609, %v5956
      %v5959 = vunpack.c.l.s4 1966171168
      %v5960 = vunpack.c.0.s8 %v5959
      %v5961 = vlaneseq
      %v5962 = vshrl.u32 %v5961, 7
      %v5963 = vsub.s32 %v5960, %v5962
      %v5964 = vrot.slane %v5950, %v5963
      %v5965 = vcombine.high %v5957, %v5957
      %v5966 = vcombine.high %v5964, %v5964
      %v5968 = vunpack.c.l.s4 1966171168
      %v5969 = vunpack.c.0.s8 %v5968
      %v5970 = vlaneseq
      %v5971 = vshrl.u32 %v5970, 7
      %v5972 = vsub.s32 %v5969, %v5971
      %v5973 = vrot.slane %v5957, %v5972
      %v5975 = vunpack.c.l.s4 1966171168
      %v5976 = vunpack.c.0.s8 %v5975
      %v5977 = vlaneseq
      %v5978 = vshrl.u32 %v5977, 7
      %v5979 = vsub.s32 %v5976, %v5978
      %v5980 = vrot.slane %v5964, %v5979
      %v5982 = vunpack.c.l.s4 1966171168
      %v5983 = vunpack.c.0.s8 %v5982
      %v5984 = vlaneseq
      %v5985 = vshrl.u32 %v5984, 7
      %v5986 = vsub.s32 %v5983, %v5985
      %v5987 = vrot.slane %v5965, %v5986
      %v5989 = vunpack.c.l.s4 1966171168
      %v5990 = vunpack.c.0.s8 %v5989
      %v5991 = vlaneseq
      %v5992 = vshrl.u32 %v5991, 7
      %v5993 = vsub.s32 %v5990, %v5992
      %v5994 = vrot.slane %v5966, %v5993
      %v5995 = vcombine.high %v5973, %v5973
      %v5996 = vcombine.high %v5980, %v5980
      %v5997 = vcombine.high %v5987, %v5987
      %v5998 = vcombine.high %v5994, %v5994
      %v6000 = vunpack.c.l.s4 1966171168
      %v6001 = vunpack.c.0.s8 %v6000
      %v6002 = vlaneseq
      %v6003 = vshrl.u32 %v6002, 7
      %v6004 = vsub.s32 %v6001, %v6003
      %v6005 = vrot.slane %v5610, %v6004
      %v6007 = vunpack.c.l.s4 1966171168
      %v6008 = vunpack.c.0.s8 %v6007
      %v6009 = vlaneseq
      %v6010 = vshrl.u32 %v6009, 7
      %v6011 = vsub.s32 %v6008, %v6010
      %v6012 = vrot.slane %v6005, %v6011
      %v6013 = vcombine.high %v5611, %v5611
      %v6015 = vunpack.c.l.s4 1966171168
      %v6016 = vunpack.c.0.s8 %v6015
      %v6017 = vlaneseq
      %v6018 = vshrl.u32 %v6017, 7
      %v6019 = vsub.s32 %v6016, %v6018
      %v6020 = vrot.slane %v5611, %v6019
      %v6022 = vunpack.c.l.s4 1966171168
      %v6023 = vunpack.c.0.s8 %v6022
      %v6024 = vlaneseq
      %v6025 = vshrl.u32 %v6024, 7
      %v6026 = vsub.s32 %v6023, %v6025
      %v6027 = vrot.slane %v6013, %v6026
      %v6028 = vcombine.high %v6020, %v6020
      %v6029 = vcombine.high %v6027, %v6027
      %v6031 = vunpack.c.l.s4 1966171168
      %v6032 = vunpack.c.0.s8 %v6031
      %v6033 = vlaneseq
      %v6034 = vshrl.u32 %v6033, 7
      %v6035 = vsub.s32 %v6032, %v6034
      %v6036 = vrot.slane %v6020, %v6035
      %v6038 = vunpack.c.l.s4 1966171168
      %v6039 = vunpack.c.0.s8 %v6038
      %v6040 = vlaneseq
      %v6041 = vshrl.u32 %v6040, 7
      %v6042 = vsub.s32 %v6039, %v6041
      %v6043 = vrot.slane %v6027, %v6042
      %v6045 = vunpack.c.l.s4 1966171168
      %v6046 = vunpack.c.0.s8 %v6045
      %v6047 = vlaneseq
      %v6048 = vshrl.u32 %v6047, 7
      %v6049 = vsub.s32 %v6046, %v6048
      %v6050 = vrot.slane %v6028, %v6049
      %v6052 = vunpack.c.l.s4 1966171168
      %v6053 = vunpack.c.0.s8 %v6052
      %v6054 = vlaneseq
      %v6055 = vshrl.u32 %v6054, 7
      %v6056 = vsub.s32 %v6053, %v6055
      %v6057 = vrot.slane %v6029, %v6056
      %v6058 = vcombine.high %v6036, %v6036
      %v6059 = vcombine.high %v6043, %v6043
      %v6060 = vcombine.high %v6050, %v6050
      %v6061 = vcombine.high %v6057, %v6057
      %v6063 = vunpack.c.l.s4 1966171168
      %v6064 = vunpack.c.0.s8 %v6063
      %v6065 = vlaneseq
      %v6066 = vshrl.u32 %v6065, 7
      %v6067 = vsub.s32 %v6064, %v6066
      %v6068 = vrot.slane %v5612, %v6067
      %v6070 = vunpack.c.l.s4 1966171168
      %v6071 = vunpack.c.0.s8 %v6070
      %v6072 = vlaneseq
      %v6073 = vshrl.u32 %v6072, 7
      %v6074 = vsub.s32 %v6071, %v6073
      %v6075 = vrot.slane %v6068, %v6074
      %v6076 = vcombine.high %v5613, %v5613
      %v6078 = vunpack.c.l.s4 1966171168
      %v6079 = vunpack.c.0.s8 %v6078
      %v6080 = vlaneseq
      %v6081 = vshrl.u32 %v6080, 7
      %v6082 = vsub.s32 %v6079, %v6081
      %v6083 = vrot.slane %v5613, %v6082
      %v6085 = vunpack.c.l.s4 1966171168
      %v6086 = vunpack.c.0.s8 %v6085
      %v6087 = vlaneseq
      %v6088 = vshrl.u32 %v6087, 7
      %v6089 = vsub.s32 %v6086, %v6088
      %v6090 = vrot.slane %v6076, %v6089
      %v6091 = vcombine.high %v6083, %v6083
      %v6092 = vcombine.high %v6090, %v6090
      %v6094 = vunpack.c.l.s4 1966171168
      %v6095 = vunpack.c.0.s8 %v6094
      %v6096 = vlaneseq
      %v6097 = vshrl.u32 %v6096, 7
      %v6098 = vsub.s32 %v6095, %v6097
      %v6099 = vrot.slane %v6083, %v6098
      %v6101 = vunpack.c.l.s4 1966171168
      %v6102 = vunpack.c.0.s8 %v6101
      %v6103 = vlaneseq
      %v6104 = vshrl.u32 %v6103, 7
      %v6105 = vsub.s32 %v6102, %v6104
      %v6106 = vrot.slane %v6090, %v6105
      %v6108 = vunpack.c.l.s4 1966171168
      %v6109 = vunpack.c.0.s8 %v6108
      %v6110 = vlaneseq
      %v6111 = vshrl.u32 %v6110, 7
      %v6112 = vsub.s32 %v6109, %v6111
      %v6113 = vrot.slane %v6091, %v6112
      %v6115 = vunpack.c.l.s4 1966171168
      %v6116 = vunpack.c.0.s8 %v6115
      %v6117 = vlaneseq
      %v6118 = vshrl.u32 %v6117, 7
      %v6119 = vsub.s32 %v6116, %v6118
      %v6120 = vrot.slane %v6092, %v6119
      %v6121 = vcombine.high %v6099, %v6099
      %v6122 = vcombine.high %v6106, %v6106
      %v6123 = vcombine.high %v6113, %v6113
      %v6124 = vcombine.high %v6120, %v6120
      %v6126 = vunpack.c.l.s4 1966171168
      %v6127 = vunpack.c.0.s8 %v6126
      %v6128 = vlaneseq
      %v6129 = vshrl.u32 %v6128, 7
      %v6130 = vsub.s32 %v6127, %v6129
      %v6131 = vrot.slane %v5614, %v6130
      %v6133 = vunpack.c.l.s4 1966171168
      %v6134 = vunpack.c.0.s8 %v6133
      %v6135 = vlaneseq
      %v6136 = vshrl.u32 %v6135, 7
      %v6137 = vsub.s32 %v6134, %v6136
      %v6138 = vrot.slane %v6131, %v6137
      %v6139 = vcombine.high %v5615, %v5615
      %v6141 = vunpack.c.l.s4 1966171168
      %v6142 = vunpack.c.0.s8 %v6141
      %v6143 = vlaneseq
      %v6144 = vshrl.u32 %v6143, 7
      %v6145 = vsub.s32 %v6142, %v6144
      %v6146 = vrot.slane %v5615, %v6145
      %v6148 = vunpack.c.l.s4 1966171168
      %v6149 = vunpack.c.0.s8 %v6148
      %v6150 = vlaneseq
      %v6151 = vshrl.u32 %v6150, 7
      %v6152 = vsub.s32 %v6149, %v6151
      %v6153 = vrot.slane %v6139, %v6152
      %v6154 = vcombine.high %v6146, %v6146
      %v6155 = vcombine.high %v6153, %v6153
      %v6157 = vunpack.c.l.s4 1966171168
      %v6158 = vunpack.c.0.s8 %v6157
      %v6159 = vlaneseq
      %v6160 = vshrl.u32 %v6159, 7
      %v6161 = vsub.s32 %v6158, %v6160
      %v6162 = vrot.slane %v6146, %v6161
      %v6164 = vunpack.c.l.s4 1966171168
      %v6165 = vunpack.c.0.s8 %v6164
      %v6166 = vlaneseq
      %v6167 = vshrl.u32 %v6166, 7
      %v6168 = vsub.s32 %v6165, %v6167
      %v6169 = vrot.slane %v6153, %v6168
      %v6171 = vunpack.c.l.s4 1966171168
      %v6172 = vunpack.c.0.s8 %v6171
      %v6173 = vlaneseq
      %v6174 = vshrl.u32 %v6173, 7
      %v6175 = vsub.s32 %v6172, %v6174
      %v6176 = vrot.slane %v6154, %v6175
      %v6178 = vunpack.c.l.s4 1966171168
      %v6179 = vunpack.c.0.s8 %v6178
      %v6180 = vlaneseq
      %v6181 = vshrl.u32 %v6180, 7
      %v6182 = vsub.s32 %v6179, %v6181
      %v6183 = vrot.slane %v6155, %v6182
      %v6184 = vcombine.high %v6162, %v6162
      %v6185 = vcombine.high %v6169, %v6169
      %v6186 = vcombine.high %v6176, %v6176
      %v6187 = vcombine.high %v6183, %v6183
      %v6189 = vunpack.c.l.s4 1966171168
      %v6190 = vunpack.c.0.s8 %v6189
      %v6191 = vlaneseq
      %v6192 = vshrl.u32 %v6191, 7
      %v6193 = vsub.s32 %v6190, %v6192
      %v6194 = vrot.slane %v5616, %v6193
      %v6196 = vunpack.c.l.s4 1966171168
      %v6197 = vunpack.c.0.s8 %v6196
      %v6198 = vlaneseq
      %v6199 = vshrl.u32 %v6198, 7
      %v6200 = vsub.s32 %v6197, %v6199
      %v6201 = vrot.slane %v6194, %v6200
      %v6202 = vld [vmem:[%s8] sm:$0xff]
      %v6203 = vld [vmem:[%s8 + $0x8] sm:$0xff]
      %v6204 = vld [vmem:[%s8 + $0x10] sm:$0xff]
      %v6205 = vld [vmem:[%s8 + $0x18] sm:$0xff]
      %v6206 = vld [vmem:[%s9] sm:$0x1]
      %v6208 = vlaneseq
      %v6209 = vshrl.u32 %v6208, 7
      %v6210 = vsub.s32 0, %v6209
      %v6211 = vrot.slane %v6206, %v6210
      %v6213 = vcombine.low %v5658, %v5672
      %v6214 = vcombine.low %v5680, %v5682
      %v6215 = vcombine.low %v5665, %v5679
      %v6216 = vcombine.low %v5681, %v5683
      %v6218 = vunpack.c.l.s4 1966171168
      %v6219 = vunpack.c.0.s8 %v6218
      %v6220 = vlaneseq
      %v6221 = vshrl.u32 %v6220, 7
      %v6222 = vsub.s32 %v6219, %v6221
      %v6223 = vrot.slane %v6213, %v6222
      %v6225 = vunpack.c.l.s4 1966171168
      %v6226 = vunpack.c.0.s8 %v6225
      %v6227 = vlaneseq
      %v6228 = vshrl.u32 %v6227, 7
      %v6229 = vsub.s32 %v6226, %v6228
      %v6230 = vrot.slane %v6214, %v6229
      %v6232 = vunpack.c.l.s4 1966171168
      %v6233 = vunpack.c.0.s8 %v6232
      %v6234 = vlaneseq
      %v6235 = vshrl.u32 %v6234, 7
      %v6236 = vsub.s32 %v6233, %v6235
      %v6237 = vrot.slane %v6215, %v6236
      %v6239 = vunpack.c.l.s4 1966171168
      %v6240 = vunpack.c.0.s8 %v6239
      %v6241 = vlaneseq
      %v6242 = vshrl.u32 %v6241, 7
      %v6243 = vsub.s32 %v6240, %v6242
      %v6244 = vrot.slane %v6216, %v6243
      %v6245 = vcombine.low %v6223, %v6230
      %v6246 = vcombine.low %v6237, %v6244
      %v6248 = vunpack.c.l.s4 1966171168
      %v6249 = vunpack.c.0.s8 %v6248
      %v6250 = vlaneseq
      %v6251 = vshrl.u32 %v6250, 7
      %v6252 = vsub.s32 %v6249, %v6251
      %v6253 = vrot.slane %v6245, %v6252
      %v6255 = vunpack.c.l.s4 1966171168
      %v6256 = vunpack.c.0.s8 %v6255
      %v6257 = vlaneseq
      %v6258 = vshrl.u32 %v6257, 7
      %v6259 = vsub.s32 %v6256, %v6258
      %v6260 = vrot.slane %v6246, %v6259
      %v6261 = vcombine.low %v6253, %v6260
      %v6262 = vcombine.low %v5697, %v5721
      %v6263 = vcombine.low %v5735, %v5743
      %v6264 = vcombine.low %v5745, %v5728
      %v6265 = vcombine.low %v5742, %v5744
      %v6267 = vunpack.c.l.s4 1966171168
      %v6268 = vunpack.c.0.s8 %v6267
      %v6269 = vlaneseq
      %v6270 = vshrl.u32 %v6269, 7
      %v6271 = vsub.s32 %v6268, %v6270
      %v6272 = vrot.slane %v6262, %v6271
      %v6274 = vunpack.c.l.s4 1966171168
      %v6275 = vunpack.c.0.s8 %v6274
      %v6276 = vlaneseq
      %v6277 = vshrl.u32 %v6276, 7
      %v6278 = vsub.s32 %v6275, %v6277
      %v6279 = vrot.slane %v6263, %v6278
      %v6281 = vunpack.c.l.s4 1966171168
      %v6282 = vunpack.c.0.s8 %v6281
      %v6283 = vlaneseq
      %v6284 = vshrl.u32 %v6283, 7
      %v6285 = vsub.s32 %v6282, %v6284
      %v6286 = vrot.slane %v6264, %v6285
      %v6288 = vunpack.c.l.s4 1966171168
      %v6289 = vunpack.c.0.s8 %v6288
      %v6290 = vlaneseq
      %v6291 = vshrl.u32 %v6290, 7
      %v6292 = vsub.s32 %v6289, %v6291
      %v6293 = vrot.slane %v6265, %v6292
      %v6294 = vcombine.low %v6272, %v6279
      %v6295 = vcombine.low %v6286, %v6293
      %v6297 = vunpack.c.l.s4 1966171168
      %v6298 = vunpack.c.0.s8 %v6297
      %v6299 = vlaneseq
      %v6300 = vshrl.u32 %v6299, 7
      %v6301 = vsub.s32 %v6298, %v6300
      %v6302 = vrot.slane %v6294, %v6301
      %v6304 = vunpack.c.l.s4 1966171168
      %v6305 = vunpack.c.0.s8 %v6304
      %v6306 = vlaneseq
      %v6307 = vshrl.u32 %v6306, 7
      %v6308 = vsub.s32 %v6305, %v6307
      %v6309 = vrot.slane %v6295, %v6308
      %v6310 = vcombine.low %v6302, %v6309
      %v6311 = vcombine.low %v5746, %v5760
      %v6312 = vcombine.low %v5784, %v5798
      %v6313 = vcombine.low %v5806, %v5808
      %v6314 = vcombine.low %v5791, %v5805
      %v6316 = vunpack.c.l.s4 1966171168
      %v6317 = vunpack.c.0.s8 %v6316
      %v6318 = vlaneseq
      %v6319 = vshrl.u32 %v6318, 7
      %v6320 = vsub.s32 %v6317, %v6319
      %v6321 = vrot.slane %v6311, %v6320
      %v6323 = vunpack.c.l.s4 1966171168
      %v6324 = vunpack.c.0.s8 %v6323
      %v6325 = vlaneseq
      %v6326 = vshrl.u32 %v6325, 7
      %v6327 = vsub.s32 %v6324, %v6326
      %v6328 = vrot.slane %v6312, %v6327
      %v6330 = vunpack.c.l.s4 1966171168
      %v6331 = vunpack.c.0.s8 %v6330
      %v6332 = vlaneseq
      %v6333 = vshrl.u32 %v6332, 7
      %v6334 = vsub.s32 %v6331, %v6333
      %v6335 = vrot.slane %v6313, %v6334
      %v6337 = vunpack.c.l.s4 1966171168
      %v6338 = vunpack.c.0.s8 %v6337
      %v6339 = vlaneseq
      %v6340 = vshrl.u32 %v6339, 7
      %v6341 = vsub.s32 %v6338, %v6340
      %v6342 = vrot.slane %v6314, %v6341
      %v6343 = vcombine.low %v6321, %v6328
      %v6344 = vcombine.low %v6335, %v6342
      %v6346 = vunpack.c.l.s4 1966171168
      %v6347 = vunpack.c.0.s8 %v6346
      %v6348 = vlaneseq
      %v6349 = vshrl.u32 %v6348, 7
      %v6350 = vsub.s32 %v6347, %v6349
      %v6351 = vrot.slane %v6343, %v6350
      %v6353 = vunpack.c.l.s4 1966171168
      %v6354 = vunpack.c.0.s8 %v6353
      %v6355 = vlaneseq
      %v6356 = vshrl.u32 %v6355, 7
      %v6357 = vsub.s32 %v6354, %v6356
      %v6358 = vrot.slane %v6344, %v6357
      %v6359 = vcombine.low %v6351, %v6358
      %v6360 = vcombine.low %v5807, %v5809
      %v6361 = vcombine.low %v5823, %v5847
      %v6362 = vcombine.low %v5861, %v5869
      %v6363 = vcombine.low %v5871, %v5854
      %v6365 = vunpack.c.l.s4 1966171168
      %v6366 = vunpack.c.0.s8 %v6365
      %v6367 = vlaneseq
      %v6368 = vshrl.u32 %v6367, 7
      %v6369 = vsub.s32 %v6366, %v6368
      %v6370 = vrot.slane %v6360, %v6369
      %v6372 = vunpack.c.l.s4 1966171168
      %v6373 = vunpack.c.0.s8 %v6372
      %v6374 = vlaneseq
      %v6375 = vshrl.u32 %v6374, 7
      %v6376 = vsub.s32 %v6373, %v6375
      %v6377 = vrot.slane %v6361, %v6376
      %v6379 = vunpack.c.l.s4 1966171168
      %v6380 = vunpack.c.0.s8 %v6379
      %v6381 = vlaneseq
      %v6382 = vshrl.u32 %v6381, 7
      %v6383 = vsub.s32 %v6380, %v6382
      %v6384 = vrot.slane %v6362, %v6383
      %v6386 = vunpack.c.l.s4 1966171168
      %v6387 = vunpack.c.0.s8 %v6386
      %v6388 = vlaneseq
      %v6389 = vshrl.u32 %v6388, 7
      %v6390 = vsub.s32 %v6387, %v6389
      %v6391 = vrot.slane %v6363, %v6390
      %v6392 = vcombine.low %v6370, %v6377
      %v6393 = vcombine.low %v6384, %v6391
      %v6395 = vunpack.c.l.s4 1966171168
      %v6396 = vunpack.c.0.s8 %v6395
      %v6397 = vlaneseq
      %v6398 = vshrl.u32 %v6397, 7
      %v6399 = vsub.s32 %v6396, %v6398
      %v6400 = vrot.slane %v6392, %v6399
      %v6402 = vunpack.c.l.s4 1966171168
      %v6403 = vunpack.c.0.s8 %v6402
      %v6404 = vlaneseq
      %v6405 = vshrl.u32 %v6404, 7
      %v6406 = vsub.s32 %v6403, %v6405
      %v6407 = vrot.slane %v6393, %v6406
      %v6408 = vcombine.low %v6400, %v6407
      %v6409 = vcombine.low %v5868, %v5870
      %v6410 = vcombine.low %v5872, %v5886
      %v6411 = vcombine.low %v5910, %v5924
      %v6412 = vcombine.low %v5932, %v5934
      %v6414 = vunpack.c.l.s4 1966171168
      %v6415 = vunpack.c.0.s8 %v6414
      %v6416 = vlaneseq
      %v6417 = vshrl.u32 %v6416, 7
      %v6418 = vsub.s32 %v6415, %v6417
      %v6419 = vrot.slane %v6409, %v6418
      %v6421 = vunpack.c.l.s4 1966171168
      %v6422 = vunpack.c.0.s8 %v6421
      %v6423 = vlaneseq
      %v6424 = vshrl.u32 %v6423, 7
      %v6425 = vsub.s32 %v6422, %v6424
      %v6426 = vrot.slane %v6410, %v6425
      %v6428 = vunpack.c.l.s4 1966171168
      %v6429 = vunpack.c.0.s8 %v6428
      %v6430 = vlaneseq
      %v6431 = vshrl.u32 %v6430, 7
      %v6432 = vsub.s32 %v6429, %v6431
      %v6433 = vrot.slane %v6411, %v6432
      %v6435 = vunpack.c.l.s4 1966171168
      %v6436 = vunpack.c.0.s8 %v6435
      %v6437 = vlaneseq
      %v6438 = vshrl.u32 %v6437, 7
      %v6439 = vsub.s32 %v6436, %v6438
      %v6440 = vrot.slane %v6412, %v6439
      %v6441 = vcombine.low %v6419, %v6426
      %v6442 = vcombine.low %v6433, %v6440
      %v6444 = vunpack.c.l.s4 1966171168
      %v6445 = vunpack.c.0.s8 %v6444
      %v6446 = vlaneseq
      %v6447 = vshrl.u32 %v6446, 7
      %v6448 = vsub.s32 %v6445, %v6447
      %v6449 = vrot.slane %v6441, %v6448
      %v6451 = vunpack.c.l.s4 1966171168
      %v6452 = vunpack.c.0.s8 %v6451
      %v6453 = vlaneseq
      %v6454 = vshrl.u32 %v6453, 7
      %v6455 = vsub.s32 %v6452, %v6454
      %v6456 = vrot.slane %v6442, %v6455
      %v6457 = vcombine.low %v6449, %v6456
      %v6458 = vcombine.low %v5917, %v5931
      %v6459 = vcombine.low %v5933, %v5935
      %v6460 = vcombine.low %v5949, %v5973
      %v6461 = vcombine.low %v5987, %v5995
      %v6463 = vunpack.c.l.s4 1966171168
      %v6464 = vunpack.c.0.s8 %v6463
      %v6465 = vlaneseq
      %v6466 = vshrl.u32 %v6465, 7
      %v6467 = vsub.s32 %v6464, %v6466
      %v6468 = vrot.slane %v6458, %v6467
      %v6470 = vunpack.c.l.s4 1966171168
      %v6471 = vunpack.c.0.s8 %v6470
      %v6472 = vlaneseq
      %v6473 = vshrl.u32 %v6472, 7
      %v6474 = vsub.s32 %v6471, %v6473
      %v6475 = vrot.slane %v6459, %v6474
      %v6477 = vunpack.c.l.s4 1966171168
      %v6478 = vunpack.c.0.s8 %v6477
      %v6479 = vlaneseq
      %v6480 = vshrl.u32 %v6479, 7
      %v6481 = vsub.s32 %v6478, %v6480
      %v6482 = vrot.slane %v6460, %v6481
      %v6484 = vunpack.c.l.s4 1966171168
      %v6485 = vunpack.c.0.s8 %v6484
      %v6486 = vlaneseq
      %v6487 = vshrl.u32 %v6486, 7
      %v6488 = vsub.s32 %v6485, %v6487
      %v6489 = vrot.slane %v6461, %v6488
      %v6490 = vcombine.low %v6468, %v6475
      %v6491 = vcombine.low %v6482, %v6489
      %v6493 = vunpack.c.l.s4 1966171168
      %v6494 = vunpack.c.0.s8 %v6493
      %v6495 = vlaneseq
      %v6496 = vshrl.u32 %v6495, 7
      %v6497 = vsub.s32 %v6494, %v6496
      %v6498 = vrot.slane %v6490, %v6497
      %v6500 = vunpack.c.l.s4 1966171168
      %v6501 = vunpack.c.0.s8 %v6500
      %v6502 = vlaneseq
      %v6503 = vshrl.u32 %v6502, 7
      %v6504 = vsub.s32 %v6501, %v6503
      %v6505 = vrot.slane %v6491, %v6504
      %v6506 = vcombine.low %v6498, %v6505
      %v6507 = vcombine.low %v5997, %v5980
      %v6508 = vcombine.low %v5994, %v5996
      %v6509 = vcombine.low %v5998, %v6012
      %v6510 = vcombine.low %v6036, %v6050
      %v6512 = vunpack.c.l.s4 1966171168
      %v6513 = vunpack.c.0.s8 %v6512
      %v6514 = vlaneseq
      %v6515 = vshrl.u32 %v6514, 7
      %v6516 = vsub.s32 %v6513, %v6515
      %v6517 = vrot.slane %v6507, %v6516
      %v6519 = vunpack.c.l.s4 1966171168
      %v6520 = vunpack.c.0.s8 %v6519
      %v6521 = vlaneseq
      %v6522 = vshrl.u32 %v6521, 7
      %v6523 = vsub.s32 %v6520, %v6522
      %v6524 = vrot.slane %v6508, %v6523
      %v6526 = vunpack.c.l.s4 1966171168
      %v6527 = vunpack.c.0.s8 %v6526
      %v6528 = vlaneseq
      %v6529 = vshrl.u32 %v6528, 7
      %v6530 = vsub.s32 %v6527, %v6529
      %v6531 = vrot.slane %v6509, %v6530
      %v6533 = vunpack.c.l.s4 1966171168
      %v6534 = vunpack.c.0.s8 %v6533
      %v6535 = vlaneseq
      %v6536 = vshrl.u32 %v6535, 7
      %v6537 = vsub.s32 %v6534, %v6536
      %v6538 = vrot.slane %v6510, %v6537
      %v6539 = vcombine.low %v6517, %v6524
      %v6540 = vcombine.low %v6531, %v6538
      %v6542 = vunpack.c.l.s4 1966171168
      %v6543 = vunpack.c.0.s8 %v6542
      %v6544 = vlaneseq
      %v6545 = vshrl.u32 %v6544, 7
      %v6546 = vsub.s32 %v6543, %v6545
      %v6547 = vrot.slane %v6539, %v6546
      %v6549 = vunpack.c.l.s4 1966171168
      %v6550 = vunpack.c.0.s8 %v6549
      %v6551 = vlaneseq
      %v6552 = vshrl.u32 %v6551, 7
      %v6553 = vsub.s32 %v6550, %v6552
      %v6554 = vrot.slane %v6540, %v6553
      %v6555 = vcombine.low %v6547, %v6554
      %v6556 = vcombine.low %v6058, %v6060
      %v6557 = vcombine.low %v6043, %v6057
      %v6558 = vcombine.low %v6059, %v6061
      %v6559 = vcombine.low %v6075, %v6099
      %v6561 = vunpack.c.l.s4 1966171168
      %v6562 = vunpack.c.0.s8 %v6561
      %v6563 = vlaneseq
      %v6564 = vshrl.u32 %v6563, 7
      %v6565 = vsub.s32 %v6562, %v6564
      %v6566 = vrot.slane %v6556, %v6565
      %v6568 = vunpack.c.l.s4 1966171168
      %v6569 = vunpack.c.0.s8 %v6568
      %v6570 = vlaneseq
      %v6571 = vshrl.u32 %v6570, 7
      %v6572 = vsub.s32 %v6569, %v6571
      %v6573 = vrot.slane %v6557, %v6572
      %v6575 = vunpack.c.l.s4 1966171168
      %v6576 = vunpack.c.0.s8 %v6575
      %v6577 = vlaneseq
      %v6578 = vshrl.u32 %v6577, 7
      %v6579 = vsub.s32 %v6576, %v6578
      %v6580 = vrot.slane %v6558, %v6579
      %v6582 = vunpack.c.l.s4 1966171168
      %v6583 = vunpack.c.0.s8 %v6582
      %v6584 = vlaneseq
      %v6585 = vshrl.u32 %v6584, 7
      %v6586 = vsub.s32 %v6583, %v6585
      %v6587 = vrot.slane %v6559, %v6586
      %v6588 = vcombine.low %v6566, %v6573
      %v6589 = vcombine.low %v6580, %v6587
      %v6591 = vunpack.c.l.s4 1966171168
      %v6592 = vunpack.c.0.s8 %v6591
      %v6593 = vlaneseq
      %v6594 = vshrl.u32 %v6593, 7
      %v6595 = vsub.s32 %v6592, %v6594
      %v6596 = vrot.slane %v6588, %v6595
      %v6598 = vunpack.c.l.s4 1966171168
      %v6599 = vunpack.c.0.s8 %v6598
      %v6600 = vlaneseq
      %v6601 = vshrl.u32 %v6600, 7
      %v6602 = vsub.s32 %v6599, %v6601
      %v6603 = vrot.slane %v6589, %v6602
      %v6604 = vcombine.low %v6596, %v6603
      %v6605 = vcombine.low %v6113, %v6121
      %v6606 = vcombine.low %v6123, %v6106
      %v6607 = vcombine.low %v6120, %v6122
      %v6608 = vcombine.low %v6124, %v6138
      %v6610 = vunpack.c.l.s4 1966171168
      %v6611 = vunpack.c.0.s8 %v6610
      %v6612 = vlaneseq
      %v6613 = vshrl.u32 %v6612, 7
      %v6614 = vsub.s32 %v6611, %v6613
      %v6615 = vrot.slane %v6605, %v6614
      %v6617 = vunpack.c.l.s4 1966171168
      %v6618 = vunpack.c.0.s8 %v6617
      %v6619 = vlaneseq
      %v6620 = vshrl.u32 %v6619, 7
      %v6621 = vsub.s32 %v6618, %v6620
      %v6622 = vrot.slane %v6606, %v6621
      %v6624 = vunpack.c.l.s4 1966171168
      %v6625 = vunpack.c.0.s8 %v6624
      %v6626 = vlaneseq
      %v6627 = vshrl.u32 %v6626, 7
      %v6628 = vsub.s32 %v6625, %v6627
      %v6629 = vrot.slane %v6607, %v6628
      %v6631 = vunpack.c.l.s4 1966171168
      %v6632 = vunpack.c.0.s8 %v6631
      %v6633 = vlaneseq
      %v6634 = vshrl.u32 %v6633, 7
      %v6635 = vsub.s32 %v6632, %v6634
      %v6636 = vrot.slane %v6608, %v6635
      %v6637 = vcombine.low %v6615, %v6622
      %v6638 = vcombine.low %v6629, %v6636
      %v6640 = vunpack.c.l.s4 1966171168
      %v6641 = vunpack.c.0.s8 %v6640
      %v6642 = vlaneseq
      %v6643 = vshrl.u32 %v6642, 7
      %v6644 = vsub.s32 %v6641, %v6643
      %v6645 = vrot.slane %v6637, %v6644
      %v6647 = vunpack.c.l.s4 1966171168
      %v6648 = vunpack.c.0.s8 %v6647
      %v6649 = vlaneseq
      %v6650 = vshrl.u32 %v6649, 7
      %v6651 = vsub.s32 %v6648, %v6650
      %v6652 = vrot.slane %v6638, %v6651
      %v6653 = vcombine.low %v6645, %v6652
      %v6654 = vcombine.low %v6162, %v6176
      %v6655 = vcombine.low %v6184, %v6186
      %v6656 = vcombine.low %v6169, %v6183
      %v6657 = vcombine.low %v6185, %v6187
      %v6659 = vunpack.c.l.s4 1966171168
      %v6660 = vunpack.c.0.s8 %v6659
      %v6661 = vlaneseq
      %v6662 = vshrl.u32 %v6661, 7
      %v6663 = vsub.s32 %v6660, %v6662
      %v6664 = vrot.slane %v6654, %v6663
      %v6666 = vunpack.c.l.s4 1966171168
      %v6667 = vunpack.c.0.s8 %v6666
      %v6668 = vlaneseq
      %v6669 = vshrl.u32 %v6668, 7
      %v6670 = vsub.s32 %v6667, %v6669
      %v6671 = vrot.slane %v6655, %v6670
      %v6673 = vunpack.c.l.s4 1966171168
      %v6674 = vunpack.c.0.s8 %v6673
      %v6675 = vlaneseq
      %v6676 = vshrl.u32 %v6675, 7
      %v6677 = vsub.s32 %v6674, %v6676
      %v6678 = vrot.slane %v6656, %v6677
      %v6680 = vunpack.c.l.s4 1966171168
      %v6681 = vunpack.c.0.s8 %v6680
      %v6682 = vlaneseq
      %v6683 = vshrl.u32 %v6682, 7
      %v6684 = vsub.s32 %v6681, %v6683
      %v6685 = vrot.slane %v6657, %v6684
      %v6686 = vcombine.low %v6664, %v6671
      %v6687 = vcombine.low %v6678, %v6685
      %v6689 = vunpack.c.l.s4 1966171168
      %v6690 = vunpack.c.0.s8 %v6689
      %v6691 = vlaneseq
      %v6692 = vshrl.u32 %v6691, 7
      %v6693 = vsub.s32 %v6690, %v6692
      %v6694 = vrot.slane %v6686, %v6693
      %v6696 = vunpack.c.l.s4 1966171168
      %v6697 = vunpack.c.0.s8 %v6696
      %v6698 = vlaneseq
      %v6699 = vshrl.u32 %v6698, 7
      %v6700 = vsub.s32 %v6697, %v6699
      %v6701 = vrot.slane %v6687, %v6700
      %v6702 = vcombine.low %v6694, %v6701
      %v6704 = vunpack.c.l.s4 1966171168
      %v6705 = vunpack.c.0.s8 %v6704
      %v6706 = vlaneseq
      %v6707 = vshrl.u32 %v6706, 7
      %v6708 = vsub.s32 %v6705, %v6707
      %v6709 = vrot.slane %v6201, %v6708
      %v6711 = vunpack.c.l.s4 1966171168
      %v6712 = vunpack.c.0.s8 %v6711
      %v6713 = vlaneseq
      %v6714 = vshrl.u32 %v6713, 7
      %v6715 = vsub.s32 %v6712, %v6714
      %v6716 = vrot.slane %v6709, %v6715
      %vm6717 = vcmask 261120
      %v6718 = vsel %vm6717, %v6261, 0
      %v6720 = vsel %vm6717, %v6310, 0
      %v6722 = vsel %vm6717, %v6359, 0
      %v6724 = vsel %vm6717, %v6408, 0
      %v6726 = vsel %vm6717, %v6457, 0
      %v6728 = vsel %vm6717, %v6506, 0
      %v6730 = vsel %vm6717, %v6555, 0
      %v6732 = vsel %vm6717, %v6604, 0
      %v6734 = vsel %vm6717, %v6653, 0
      %v6736 = vsel %vm6717, %v6702, 0
      %v6738 = vsel %vm6717, %v6716, 0
      %6740 = vmatprep.subr.mxu0 0.0
      %6741 = vmatpush1.msra.mxu0 %v6202
      %6742 = vmatprep.subr.mxu0 0.0
      %6743 = vmatpush1.msra.mxu0 %v6203
      %6744 = vmatprep.subr.mxu0 0.0
      %6745 = vmatpush1.msra.mxu0 %v6204
      %6746 = vmatprep.subr.mxu0 0.0
      %6747 = vmatpush1.msra.mxu0 %v6205
      %6748 = vmatprep.subr.mxu0 0.0
      %6749 = vmatpush1.msra.mxu0 0.0
      %6750 = vmatprep.subr.mxu0 0.0
      %6751 = vmatpush1.msra.mxu0 0.0
      %6752 = vmatprep.subr.mxu0 0.0
      %6753 = vmatpush1.msra.mxu0 0.0
      %6754 = vmatprep.subr.mxu0 0.0
      %6755 = vmatpush1.msra.mxu0 0.0
      %6756 = vmatprep.subr.mxu0 0.0
      %6757 = vmatpush1.msra.mxu0 0.0
      %6758 = vmatprep.subr.mxu0 0.0
      %6759 = vmatpush1.msra.mxu0 0.0
      %6760 = vmatprep.subr.mxu0 0.0
      %6761 = vmatpush1.msra.mxu0 0.0
      %6762 = vmatprep.subr.mxu0 0.0
      %6763 = vmatpush1.msra.mxu0 0.0
      %6764 = vmatprep.subr.mxu0 0.0
      %6765 = vmatpush1.msra.mxu0 0.0
      %6766 = vmatprep.subr.mxu0 0.0
      %6767 = vmatpush1.msra.mxu0 0.0
      %6768 = vmatprep.subr.mxu0 0.0
      %6769 = vmatpush1.msra.mxu0 0.0
      %6770 = vmatprep.subr.mxu0 0.0
      %6771 = vmatpush1.msra.mxu0 0.0
      %6772 = vmatprep.subr.mxu0 0.0
      %6773 = vmatpush1.msra.mxu0 0.0
      %6774 = vmatprep.subr.mxu0 0.0
      %6775 = vmatpush1.msra.mxu0 0.0
      %6776 = vmatprep.subr.mxu0 0.0
      %6777 = vmatpush1.msra.mxu0 0.0
      %6778 = vmatprep.subr.mxu0 0.0
      %6779 = vmatpush1.msra.mxu0 0.0
      %6780 = vmatprep.subr.mxu0 0.0
      %6781 = vmatpush1.msra.mxu0 0.0
      %6782 = vmatprep.subr.mxu0 0.0
      %6783 = vmatpush1.msra.mxu0 0.0
      %6784 = vmatprep.subr.mxu0 0.0
      %6785 = vmatpush1.msra.mxu0 0.0
      %6786 = vmatprep.subr.mxu0 0.0
      %6787 = vmatpush1.msra.mxu0 0.0
      %6788 = vmatprep.subr.mxu0 0.0
      %6789 = vmatpush1.msra.mxu0 0.0
      %6790 = vmatprep.subr.mxu0 0.0
      %6791 = vmatpush1.msra.mxu0 0.0
      %6792 = vmatprep.subr.mxu0 0.0
      %6793 = vmatpush1.msra.mxu0 0.0
      %6794 = vmatprep.subr.mxu0 0.0
      %6795 = vmatpush1.msra.mxu0 0.0
      %6796 = vmatprep.subr.mxu0 0.0
      %6797 = vmatpush1.msra.mxu0 0.0
      %6798 = vmatprep.subr.mxu0 0.0
      %6799 = vmatpush1.msra.mxu0 0.0
      %6800 = vmatprep.subr.mxu0 0.0
      %6801 = vmatpush1.msra.mxu0 0.0
      %6802 = vmatprep.subr.mxu0 0.0
      %6803 = vmatpush1.msra.mxu0 0.0
      %6804 = vmatprep.mubr.f32.mxu0 0.0
      %6805 = vmatmul.mubr.f32.gmra.mrb[0].mxu0 %v6718
      %v6806 = vpop.f32.mrb[0].mxu0
      %v6807 = vadd.f32 %v6211, %v6806
      %v6808 = vpop.f32.mrb[0].mxu0
      %6809 = vmatprep.mubr.f32.mxu0 0.0
      %6810 = vmatmul.mubr.f32.gmra.mrb[0].mxu0 %v6720
      %v6811 = vpop.f32.mrb[0].mxu0
      %v6812 = vadd.f32 %v6211, %v6811
      %v6813 = vpop.f32.mrb[0].mxu0
      %6814 = vmatprep.mubr.f32.mxu0 0.0
      %6815 = vmatmul.mubr.f32.gmra.mrb[0].mxu0 %v6722
      %v6816 = vpop.f32.mrb[0].mxu0
      %v6817 = vadd.f32 %v6211, %v6816
      %v6818 = vpop.f32.mrb[0].mxu0
      %6819 = vmatprep.mubr.f32.mxu0 0.0
      %6820 = vmatmul.mubr.f32.gmra.mrb[0].mxu0 %v6724
      %v6821 = vpop.f32.mrb[0].mxu0
      %v6822 = vadd.f32 %v6211, %v6821
      %v6823 = vpop.f32.mrb[0].mxu0
      %6824 = vmatprep.mubr.f32.mxu0 0.0
      %6825 = vmatmul.mubr.f32.gmra.mrb[0].mxu0 %v6726
      %v6826 = vpop.f32.mrb[0].mxu0
      %v6827 = vadd.f32 %v6211, %v6826
      %v6828 = vpop.f32.mrb[0].mxu0
      %6829 = vmatprep.mubr.f32.mxu0 0.0
      %6830 = vmatmul.mubr.f32.gmra.mrb[0].mxu0 %v6728
      %v6831 = vpop.f32.mrb[0].mxu0
      %v6832 = vadd.f32 %v6211, %v6831
      %v6833 = vpop.f32.mrb[0].mxu0
      %6834 = vmatprep.mubr.f32.mxu0 0.0
      %6835 = vmatmul.mubr.f32.gmra.mrb[0].mxu0 %v6730
      %v6836 = vpop.f32.mrb[0].mxu0
      %v6837 = vadd.f32 %v6211, %v6836
      %v6838 = vpop.f32.mrb[0].mxu0
      %6839 = vmatprep.mubr.f32.mxu0 0.0
      %6840 = vmatmul.mubr.f32.gmra.mrb[0].mxu0 %v6732
      %v6841 = vpop.f32.mrb[0].mxu0
      %v6842 = vadd.f32 %v6211, %v6841
      %v6843 = vpop.f32.mrb[0].mxu0
      %6844 = vmatprep.mubr.f32.mxu0 0.0
      %6845 = vmatmul.mubr.f32.gmra.mrb[0].mxu0 %v6734
      %v6846 = vpop.f32.mrb[0].mxu0
      %v6847 = vadd.f32 %v6211, %v6846
      %v6848 = vpop.f32.mrb[0].mxu0
      %6849 = vmatprep.mubr.f32.mxu0 0.0
      %6850 = vmatmul.mubr.f32.gmra.mrb[0].mxu0 %v6736
      %v6851 = vpop.f32.mrb[0].mxu0
      %v6852 = vadd.f32 %v6211, %v6851
      %v6853 = vpop.f32.mrb[0].mxu0
      %6854 = vmatprep.mubr.f32.mxu0 0.0
      %6855 = vmatmul.mubr.f32.gmra.mrb[0].mxu0 %v6738
      %v6856 = vpop.f32.mrb[0].mxu0
      %v6857 = vadd.f32 %v6211, %v6856
      %v6858 = vpop.f32.mrb[0].mxu0
      %6859 = vdwg.mxu0
      %v6860 = vmax.f32 %v6807, 0.0
      %v6861 = vmax.f32 %v6812, 0.0
      %v6862 = vmax.f32 %v6817, 0.0
      %v6863 = vmax.f32 %v6822, 0.0
      %v6864 = vmax.f32 %v6827, 0.0
      %v6865 = vmax.f32 %v6832, 0.0
      %v6866 = vmax.f32 %v6837, 0.0
      %v6867 = vmax.f32 %v6842, 0.0
      %v6868 = vmax.f32 %v6847, 0.0
      %v6869 = vmax.f32 %v6852, 0.0
      %v6870 = vmax.f32 %v6857, 0.0
      %v6871 = vld [vmem:[%s10] sm:$0xff]
      %v6872 = vld [vmem:[%s10 + $0x8] sm:$0xff]
      %v6873 = vld [vmem:[%s10 + $0x10] sm:$0xff]
      %v6874 = vld [vmem:[%s10 + $0x18] sm:$0xff]
      %v6875 = vld [vmem:[%s11] sm:$0x1]
      %v6877 = vlaneseq
      %v6878 = vshrl.u32 %v6877, 7
      %v6879 = vsub.s32 0, %v6878
      %v6880 = vrot.slane %v6875, %v6879
      %v6883 = vsel %vm6717, %v6860, 0
      %v6886 = vsel %vm6717, %v6861, 0
      %v6889 = vsel %vm6717, %v6862, 0
      %v6892 = vsel %vm6717, %v6863, 0
      %v6895 = vsel %vm6717, %v6864, 0
      %v6898 = vsel %vm6717, %v6865, 0
      %v6901 = vsel %vm6717, %v6866, 0
      %v6904 = vsel %vm6717, %v6867, 0
      %v6907 = vsel %vm6717, %v6868, 0
      %v6910 = vsel %vm6717, %v6869, 0
      %v6913 = vsel %vm6717, %v6870, 0
      %6915 = vmatprep.subr.mxu0 0.0
      %6916 = vmatpush1.msra.mxu0 %v6871
      %6917 = vmatprep.subr.mxu0 0.0
      %6918 = vmatpush1.msra.mxu0 %v6872
      %6919 = vmatprep.subr.mxu0 0.0
      %6920 = vmatpush1.msra.mxu0 %v6873
      %6921 = vmatprep.subr.mxu0 0.0
      %6922 = vmatpush1.msra.mxu0 %v6874
      %6923 = vmatprep.subr.mxu0 0.0
      %6924 = vmatpush1.msra.mxu0 0.0
      %6925 = vmatprep.subr.mxu0 0.0
      %6926 = vmatpush1.msra.mxu0 0.0
      %6927 = vmatprep.subr.mxu0 0.0
      %6928 = vmatpush1.msra.mxu0 0.0
      %6929 = vmatprep.subr.mxu0 0.0
      %6930 = vmatpush1.msra.mxu0 0.0
      %6931 = vmatprep.subr.mxu0 0.0
      %6932 = vmatpush1.msra.mxu0 0.0
      %6933 = vmatprep.subr.mxu0 0.0
      %6934 = vmatpush1.msra.mxu0 0.0
      %6935 = vmatprep.subr.mxu0 0.0
      %6936 = vmatpush1.msra.mxu0 0.0
      %6937 = vmatprep.subr.mxu0 0.0
      %6938 = vmatpush1.msra.mxu0 0.0
      %6939 = vmatprep.subr.mxu0 0.0
      %6940 = vmatpush1.msra.mxu0 0.0
      %6941 = vmatprep.subr.mxu0 0.0
      %6942 = vmatpush1.msra.mxu0 0.0
      %6943 = vmatprep.subr.mxu0 0.0
      %6944 = vmatpush1.msra.mxu0 0.0
      %6945 = vmatprep.subr.mxu0 0.0
      %6946 = vmatpush1.msra.mxu0 0.0
      %6947 = vmatprep.subr.mxu0 0.0
      %6948 = vmatpush1.msra.mxu0 0.0
      %6949 = vmatprep.subr.mxu0 0.0
      %6950 = vmatpush1.msra.mxu0 0.0
      %6951 = vmatprep.subr.mxu0 0.0
      %6952 = vmatpush1.msra.mxu0 0.0
      %6953 = vmatprep.subr.mxu0 0.0
      %6954 = vmatpush1.msra.mxu0 0.0
      %6955 = vmatprep.subr.mxu0 0.0
      %6956 = vmatpush1.msra.mxu0 0.0
      %6957 = vmatprep.subr.mxu0 0.0
      %6958 = vmatpush1.msra.mxu0 0.0
      %6959 = vmatprep.subr.mxu0 0.0
      %6960 = vmatpush1.msra.mxu0 0.0
      %6961 = vmatprep.subr.mxu0 0.0
      %6962 = vmatpush1.msra.mxu0 0.0
      %6963 = vmatprep.subr.mxu0 0.0
      %6964 = vmatpush1.msra.mxu0 0.0
      %6965 = vmatprep.subr.mxu0 0.0
      %6966 = vmatpush1.msra.mxu0 0.0
      %6967 = vmatprep.subr.mxu0 0.0
      %6968 = vmatpush1.msra.mxu0 0.0
      %6969 = vmatprep.subr.mxu0 0.0
      %6970 = vmatpush1.msra.mxu0 0.0
      %6971 = vmatprep.subr.mxu0 0.0
      %6972 = vmatpush1.msra.mxu0 0.0
      %6973 = vmatprep.subr.mxu0 0.0
      %6974 = vmatpush1.msra.mxu0 0.0
      %6975 = vmatprep.subr.mxu0 0.0
      %6976 = vmatpush1.msra.mxu0 0.0
      %6977 = vmatprep.subr.mxu0 0.0
      %6978 = vmatpush1.msra.mxu0 0.0
      %6979 = vmatprep.mubr.f32.mxu0 0.0
      %6980 = vmatmul.mubr.f32.gmra.mrb[0].mxu0 %v6883
      %v6981 = vpop.f32.mrb[0].mxu0
      %v6982 = vadd.f32 %v6880, %v6981
      %v6983 = vpop.f32.mrb[0].mxu0
      %6984 = vmatprep.mubr.f32.mxu0 0.0
      %6985 = vmatmul.mubr.f32.gmra.mrb[0].mxu0 %v6886
      %v6986 = vpop.f32.mrb[0].mxu0
      %v6987 = vadd.f32 %v6880, %v6986
      %v6988 = vpop.f32.mrb[0].mxu0
      %6989 = vmatprep.mubr.f32.mxu0 0.0
      %6990 = vmatmul.mubr.f32.gmra.mrb[0].mxu0 %v6889
      %v6991 = vpop.f32.mrb[0].mxu0
      %v6992 = vadd.f32 %v6880, %v6991
      %v6993 = vpop.f32.mrb[0].mxu0
      %6994 = vmatprep.mubr.f32.mxu0 0.0
      %6995 = vmatmul.mubr.f32.gmra.mrb[0].mxu0 %v6892
      %v6996 = vpop.f32.mrb[0].mxu0
      %v6997 = vadd.f32 %v6880, %v6996
      %v6998 = vpop.f32.mrb[0].mxu0
      %6999 = vmatprep.mubr.f32.mxu0 0.0
      %7000 = vmatmul.mubr.f32.gmra.mrb[0].mxu0 %v6895
      %v7001 = vpop.f32.mrb[0].mxu0
      %v7002 = vadd.f32 %v6880, %v7001
      %v7003 = vpop.f32.mrb[0].mxu0
      %7004 = vmatprep.mubr.f32.mxu0 0.0
      %7005 = vmatmul.mubr.f32.gmra.mrb[0].mxu0 %v6898
      %v7006 = vpop.f32.mrb[0].mxu0
      %v7007 = vadd.f32 %v6880, %v7006
      %v7008 = vpop.f32.mrb[0].mxu0
      %7009 = vmatprep.mubr.f32.mxu0 0.0
      %7010 = vmatmul.mubr.f32.gmra.mrb[0].mxu0 %v6901
      %v7011 = vpop.f32.mrb[0].mxu0
      %v7012 = vadd.f32 %v6880, %v7011
      %v7013 = vpop.f32.mrb[0].mxu0
      %7014 = vmatprep.mubr.f32.mxu0 0.0
      %7015 = vmatmul.mubr.f32.gmra.mrb[0].mxu0 %v6904
      %v7016 = vpop.f32.mrb[0].mxu0
      %v7017 = vadd.f32 %v6880, %v7016
      %v7018 = vpop.f32.mrb[0].mxu0
      %7019 = vmatprep.mubr.f32.mxu0 0.0
      %7020 = vmatmul.mubr.f32.gmra.mrb[0].mxu0 %v6907
      %v7021 = vpop.f32.mrb[0].mxu0
      %v7022 = vadd.f32 %v6880, %v7021
      %v7023 = vpop.f32.mrb[0].mxu0
      %7024 = vmatprep.mubr.f32.mxu0 0.0
      %7025 = vmatmul.mubr.f32.gmra.mrb[0].mxu0 %v6910
      %v7026 = vpop.f32.mrb[0].mxu0
      %v7027 = vadd.f32 %v6880, %v7026
      %v7028 = vpop.f32.mrb[0].mxu0
      %7029 = vmatprep.mubr.f32.mxu0 0.0
      %7030 = vmatmul.mubr.f32.gmra.mrb[0].mxu0 %v6913
      %v7031 = vpop.f32.mrb[0].mxu0
      %v7032 = vadd.f32 %v6880, %v7031
      %v7033 = vpop.f32.mrb[0].mxu0
      %7034 = vdwg.mxu0
      %7035 = vst [vmem:[%s433] sm:$0xff] %v6982
      %7036 = vst [vmem:[%s433 + $0x8] sm:$0xff] %v6987
      %7037 = vst [vmem:[%s433 + $0x10] sm:$0xff] %v6992
      %7038 = vst [vmem:[%s433 + $0x18] sm:$0xff] %v6997
      %7039 = vst [vmem:[%s433 + $0x20] sm:$0xff] %v7002
      %7040 = vst [vmem:[%s433 + $0x28] sm:$0xff] %v7007
      %7041 = vst [vmem:[%s433 + $0x30] sm:$0xff] %v7012
      %7042 = vst [vmem:[%s433 + $0x38] sm:$0xff] %v7017
      %7043 = vst [vmem:[%s433 + $0x40] sm:$0xff] %v7022
      %7044 = vst [vmem:[%s433 + $0x48] sm:$0xff] %v7027
      %7045 = vst [vmem:[%s433 + $0x50] sm:$0x1] %v7032
      %p7046 = scmp.lt.s32.totalorder %s23, 1
      %s7047 = scalar_select %p7046, %s23, 1
      %s7048 = smul.addr %s7047, 11
      %s7049 = smul.addr %s7048, 8
      %s7050 = scalar_lea.vmem %s12, %s7049
      // Predicated region
      $region69: #{depthwise_rpn_forward.1} parent=67 // pred_check
        %p7051 = pneg %p303
      $region70: #{depthwise_rpn_forward.1} parent=67 // pred_check_branch
        %7053 = sbr.rel (%p7051) target = $region72
      $region71: #{depthwise_rpn_forward.1} parent=67 // pred_region
        _
      $region72: #{depthwise_rpn_forward.1} parent=67 // pred_fallthru
        _
    $region68: #{depthwise_rpn_forward.1} parent=5 // pred_fallthru
      _
    %p7054 = scmp.le.s32.totalorder 2, %s18
    // Predicated region
    $region73: #{depthwise_rpn_forward.1} parent=5 // pred_check
      %p7055 = pneg %p7054
    $region74: #{depthwise_rpn_forward.1} parent=5 // pred_check_branch
      %7057 = sbr.rel (%p7055) target = $region76
    $region75: #{depthwise_rpn_forward.1} parent=5 // pred_region
      %s7058 = ssub.s32 %s18, 2
      // Predicated region
      $region77: #{depthwise_rpn_forward.1} parent=75 // pred_check
        %p7059 = pneg %p309
      $region78: #{depthwise_rpn_forward.1} parent=75 // pred_check_branch
        %7061 = sbr.rel (%p7059) target = $region80
      $region79: #{depthwise_rpn_forward.1} parent=75 // pred_region
        %p7062 = scmp.lt.s32.totalorder %s24, 1
        %s7063 = scalar_select %p7062, %s24, 1
        %s7064 = smul.addr %s7063, 11
        %s7065 = smul.addr %s7064, 8
        %s7066 = scalar_lea.vmem %s12, %s7065
      $region80: #{depthwise_rpn_forward.1} parent=75 // pred_fallthru
        _
    $region76: #{depthwise_rpn_forward.1} parent=5 // pred_fallthru
      _
  $region6: #{depthwise_rpn_forward.1} parent=0 // loop_footer
    %s22 = sadd.s32 1, %s18
  $region7: #{depthwise_rpn_forward.1} parent=0 // loop_footer_branch
    %17 = sbr.rel target = $region3
  $region8: #{depthwise_rpn_forward.1} parent=0 // loop_exit
    _

</llo_original>
